<compile_context>
chip_gen: v7x
topology: tpu7x:2x2x1
jax: 0.10.0
libtpu: 0.0.40
codegen_flags: <defaults>
</compile_context>

<pallas_src>
import jax
import jax.numpy as jnp
from jax import lax
from jax.experimental import pallas as pl
from jax.experimental.pallas import tpu as pltpu


def _pick_co_tile(c_out):
    # Lane-dense output tiles, capped at 256 (matches MXU N on v6e/v7x, keeps
    # the f32 accumulator small for v7x's 64 MiB VMEM).
    for cand in (256, 128):
        if c_out % cand == 0:
            return cand
    return c_out


# ----------------------------------------------------------------------------
# Fused kernel: one batch element = conv3x3+ReLU -> conv3x3+ReLU -> flatten.
# ----------------------------------------------------------------------------
def _fused_proj_kernel(x_ref, w1_ref, w2_ref, o_ref, xsh1_ref, xsh2_ref):
    # x_ref   : (1, H, W, C_in)     bf16 input image
    # w1_ref  : (3, 3*C_in, C_mid)  bf16, kw packed along K (index dw*C_in + ci)
    # w2_ref  : (3, 3*C_mid, C_out) bf16, kw packed along K
    # o_ref   : (1, H*W, C_out)     f32 output (already flattened)
    # xsh1_ref: (H+2, W, 3*C_in)    bf16; xsh1[i, w, dw*C + c] == xpad[i, w+dw, c]
    # xsh2_ref: (H+2, W, 3*C_mid)   bf16; same packing for the hidden activation
    _, H, W, C_in = x_ref.shape
    C_mid = w1_ref.shape[-1]
    C_out = o_ref.shape[-1]
    t1 = _pick_co_tile(C_mid)
    t2 = _pick_co_tile(C_out)

    def zero_halo(dst_ref, c):
        # Zero ONLY the halo: top/bottom rows plus the shifted-out edge column
        # of the dw=0 / dw=2 copies (the interior is fully overwritten later).
        c3 = dst_ref.shape[-1]
        zrow = jnp.zeros((1, W, c3), dst_ref.dtype)
        dst_ref[0:1] = zrow
        dst_ref[H + 1:H + 2] = zrow
        zcol = jnp.zeros((H, 1, c), dst_ref.dtype)
        if W > 1:
            dst_ref[1:H + 1, 0:1, 0:c] = zcol                     # dw = 0 left edge
            dst_ref[1:H + 1, W - 1:W, 2 * c:3 * c] = zcol         # dw = 2 right edge
        else:
            dst_ref[1:H + 1, :, 0:c] = zcol
            dst_ref[1:H + 1, :, 2 * c:3 * c] = zcol

    def scatter_shifted(dst_ref, src, c, lane_off):
        # Write src (H, W, cw) into rows 1..H at lane offsets
        # {lane_off, c + lane_off, 2*c + lane_off}, column-shifted by dw - 1.
        cw = src.shape[-1]
        dst_ref[1:H + 1, :, c + lane_off:c + lane_off + cw] = src            # dw = 1
        if W > 1:
            dst_ref[1:H + 1, 1:W, lane_off:lane_off + cw] = src[:, 0:W - 1, :]            # dw = 0
            dst_ref[1:H + 1, 0:W - 1,
                    2 * c + lane_off:2 * c + lane_off + cw] = src[:, 1:W, :]              # dw = 2

    def conv3x3(src_ref, w_ref, n_tiles, t, emit):
        # out[h, w, :] = sum_dh xsh[h+dh, w, :] @ Wp[dh]  -> 3 MXU matmuls/tile,
        # K = 3*C, value-form f32 accumulation (no acc scratch, no zero-fill).
        c3 = src_ref.shape[-1]
        taps = [src_ref[dh:dh + H, :, :].reshape(H * W, c3) for dh in range(3)]
        for i in range(n_tiles):
            lo = i * t
            acc = jnp.dot(taps[0], w_ref[0, :, lo:lo + t],
                          preferred_element_type=jnp.float32)
            acc = acc + jnp.dot(taps[1], w_ref[1, :, lo:lo + t],
                                preferred_element_type=jnp.float32)
            acc = acc + jnp.dot(taps[2], w_ref[2, :, lo:lo + t],
                                preferred_element_type=jnp.float32)
            emit(lo, acc)

    # ---- conv1: x -> hidden (written shifted-packed into xsh2) --------------
    zero_halo(xsh1_ref, C_in)
    scatter_shifted(xsh1_ref, x_ref[0], C_in, 0)
    zero_halo(xsh2_ref, C_mid)

    def emit_hidden(lo, acc):
        # ReLU commutes with the monotone cast; bf16 max halves VALU work on
        # v6e/v7x epilogues.
        h = jnp.maximum(acc.astype(xsh2_ref.dtype), 0).reshape(H, W, t1)
        scatter_shifted(xsh2_ref, h, C_mid, lo)

    conv3x3(xsh1_ref, w1_ref, C_mid // t1, t1, emit_hidden)

    # ---- conv2: hidden -> output, already flattened to (H*W, C_out) ---------
    def emit_out(lo, acc):
        o_ref[0, :, lo:lo + t2] = jnp.maximum(acc.astype(o_ref.dtype), 0)

    conv3x3(xsh2_ref, w2_ref, C_out // t2, t2, emit_out)


# ----------------------------------------------------------------------------
# Module forward: matches `conv.forward(x)` of the PyTorch spec.
# ----------------------------------------------------------------------------
def conv_forward(x_nchw, w1_hwio, w2_hwio):
    """x_nchw: (B, C_in, H, W) f32; w*_hwio: (3,3,Cin,Cout). Returns (B, H*W, C_emb) f32."""
    B, C_in, H, W = x_nchw.shape
    kh1, kw1, ci1, C_mid = w1_hwio.shape
    kh2, kw2, ci2, C_out = w2_hwio.shape
    assert (kh1, kw1) == (3, 3) and (kh2, kw2) == (3, 3)
    assert ci1 == C_in and ci2 == C_mid
    # Free-view / lane-alignment guarantees of the kernel.
    assert W % 8 == 0, "W must be a multiple of 8 sublanes"
    assert C_in % 128 == 0 and C_mid % 128 == 0 and C_out % 128 == 0, \
        "channel dims must be multiples of 128 lanes"

    # TODO(synk): producer should emit NHWC bf16 directly (saves one HBM pass).
    x_nhwc = jnp.transpose(x_nchw, (0, 2, 3, 1)).astype(jnp.bfloat16)
    # Pack the kw taps along K: (3,3,C,Co) -> (3, 3*C, Co); K index = dw*C + ci,
    # matching the lane layout of the shifted-copy scratch.
    w1p = w1_hwio.astype(jnp.bfloat16).reshape(3, 3 * C_in, C_mid)
    w2p = w2_hwio.astype(jnp.bfloat16).reshape(3, 3 * C_mid, C_out)

    # Scoped-VMEM budget from the real working set (with headroom).
    t_max = max(_pick_co_tile(C_mid), _pick_co_tile(C_out))
    bf = 2
    working_set = (
        2 * H * W * C_in * bf                 # double-buffered input block
        + 2 * 3 * 3 * C_in * C_mid * bf       # w1 (buffered, fetched once)
        + 2 * 3 * 3 * C_mid * C_out * bf      # w2 (buffered, fetched once)
        + 2 * H * W * C_out * 4               # double-buffered f32 output block
        + (H + 2) * W * 3 * C_in * bf         # xsh1 scratch
        + (H + 2) * W * 3 * C_mid * bf        # xsh2 scratch
        + 2 * H * W * t_max * 4               # live f32 accumulators
        + 3 * H * W * 3 * C_mid * bf          # hoisted conv2 tap values
    )
    vmem_limit = min(max(int(working_set * 3 // 2), 32 * 1024 * 1024),
                     100 * 1024 * 1024)

    return pl.pallas_call(
        _fused_proj_kernel,
        out_shape=jax.ShapeDtypeStruct((B, H * W, C_out), jnp.float32),
        grid_spec=pltpu.PrefetchScalarGridSpec(
            num_scalar_prefetch=0,
            grid=(B,),
            in_specs=[
                pl.BlockSpec((1, H, W, C_in), lambda b: (b, 0, 0, 0)),
                # Constant block index -> weights are DMA'd once and kept in VMEM.
                pl.BlockSpec((3, 3 * C_in, C_mid), lambda b: (0, 0, 0)),
                pl.BlockSpec((3, 3 * C_mid, C_out), lambda b: (0, 0, 0)),
            ],
            out_specs=pl.BlockSpec((1, H * W, C_out), lambda b: (b, 0, 0)),
            scratch_shapes=[
                pltpu.VMEM((H + 2, W, 3 * C_in), jnp.bfloat16),   # shifted input
                pltpu.VMEM((H + 2, W, 3 * C_mid), jnp.bfloat16),  # shifted hidden
            ],
        ),
        compiler_params=pltpu.CompilerParams(
            dimension_semantics=("parallel",),
            vmem_limit_bytes=vmem_limit,
        ),
    )(x_nhwc, w1p, w2p)


# ----------------------------------------------------------------------------
# Pure-JAX references (for correctness checks)
# ----------------------------------------------------------------------------
def _conv_relu_ref(x_nhwc, w_hwio):
    y = lax.conv_general_dilated(
        x_nhwc, w_hwio, window_strides=(1, 1), padding="SAME",
        dimension_numbers=("NHWC", "HWIO", "NHWC"),
        preferred_element_type=jnp.float32)
    return jnp.maximum(y, 0.0)


def conv_forward_reference(x_nchw, w1, w2, cast=None):
    x = jnp.transpose(x_nchw, (0, 2, 3, 1))
    if cast is not None:
        x, w1, w2 = x.astype(cast), w1.astype(cast), w2.astype(cast)
    h = _conv_relu_ref(x, w1)
    if cast is not None:
        h = h.astype(cast)
    y = _conv_relu_ref(h, w2)
    B, H, W, C = y.shape
    return y.reshape(B, H * W, C).astype(jnp.float32)


if __name__ == "__main__":
    # Small, lane-aligned shapes consistent with the module (input_dim -> embed_dim).
    B, H, W = 2, 16, 16
    input_dim, embed_dim = 128, 256

    key = jax.random.PRNGKey(0)
    kx, k1, k2 = jax.random.split(key, 3)
    x = jax.random.normal(kx, (B, input_dim, H, W), jnp.float32)
    # Conv2d weights stored in HWIO layout, Kaiming-style scale, no bias.
    std1 = (2.0 / (9.0 * input_dim)) ** 0.5
    std2 = (2.0 / (9.0 * embed_dim)) ** 0.5
    w1 = std1 * jax.random.normal(k1, (3, 3, input_dim, embed_dim), jnp.float32)
    w2 = std2 * jax.random.normal(k2, (3, 3, embed_dim, embed_dim), jnp.float32)

    out = jax.jit(conv_forward)(x, w1, w2)
    out = jax.block_until_ready(out)
    assert out.shape == (B, H * W, embed_dim)

    # Tight check vs a reference with identical bf16-operand / f32-accumulate numerics.
    ref_bf16 = conv_forward_reference(x, w1, w2, cast=jnp.bfloat16)
    assert jnp.allclose(out, ref_bf16, atol=2e-2, rtol=2e-2), "mismatch vs bf16 reference"

    # Loose check vs the full-f32 PyTorch-semantics reference (bf16 operand rounding).
    ref_f32 = conv_forward_reference(x, w1, w2, cast=None)
    assert jnp.allclose(out, ref_f32, atol=1e-1, rtol=1e-1), "mismatch vs f32 reference"

    print("KERNEL_OK")
</pallas_src>

<mosaic_0001>
module attributes {stable_mosaic.version = 11 : i64} {
  func.func @_fused_proj_kernel(%arg0: i32, %arg1: memref<1x16x16x128xbf16, #tpu.memory_space<vmem>>, %arg2: memref<3x384x256xbf16, #tpu.memory_space<vmem>>, %arg3: memref<3x768x256xbf16, #tpu.memory_space<vmem>>, %arg4: memref<1x256x256xf32, #tpu.memory_space<vmem>>, %arg5: memref<18x16x384xbf16, #tpu.memory_space<vmem>>, %arg6: memref<18x16x768xbf16, #tpu.memory_space<vmem>>) attributes {dimension_semantics = [#tpu.dimension_semantics<parallel>], iteration_bounds = array<i64: 2>, scalar_prefetch = 0 : i64, scratch_operands = 2 : i64, tpu.core_type = #tpu.core_type<tc>, window_params = [{transform_indices = @transform_0, window_bounds = array<i64: 1, 16, 16, 128>}, {pipeline_mode = #tpu.pipeline_mode<synchronous>, transform_indices = @transform_1, window_bounds = array<i64: 3, 384, 256>}, {pipeline_mode = #tpu.pipeline_mode<synchronous>, transform_indices = @transform_2, window_bounds = array<i64: 3, 768, 256>}, {transform_indices = @transform_3, window_bounds = array<i64: 1, 256, 256>}]} {
    %cst = arith.constant 0.000000e+00 : bf16
    %0 = vector.broadcast %cst : bf16 to vector<1x16x384xbf16>
    %c0 = arith.constant 0 : index
    %c0_0 = arith.constant 0 : index
    %c0_1 = arith.constant 0 : index
    %1 = vector.load %arg5[%c0, %c0_0, %c0_1] : memref<18x16x384xbf16, #tpu.memory_space<vmem>>, vector<1x16x384xbf16>
    tpu.vector_store %arg5[%c0, %c0_0, %c0_1], %0 {strides = array<i32>} : memref<18x16x384xbf16, #tpu.memory_space<vmem>>, vector<1x16x384xbf16>,
    %c17 = arith.constant 17 : index
    %c0_2 = arith.constant 0 : index
    %c0_3 = arith.constant 0 : index
    %2 = vector.load %arg5[%c17, %c0_2, %c0_3] : memref<18x16x384xbf16, #tpu.memory_space<vmem>>, vector<1x16x384xbf16>
    tpu.vector_store %arg5[%c17, %c0_2, %c0_3], %0 {strides = array<i32>} : memref<18x16x384xbf16, #tpu.memory_space<vmem>>, vector<1x16x384xbf16>,
    %cst_4 = arith.constant 0.000000e+00 : bf16
    %3 = vector.broadcast %cst_4 : bf16 to vector<16x1x128xbf16>
    %c1 = arith.constant 1 : index
    %c0_5 = arith.constant 0 : index
    %c0_6 = arith.constant 0 : index
    %4 = vector.load %arg5[%c1, %c0_5, %c0_6] : memref<18x16x384xbf16, #tpu.memory_space<vmem>>, vector<16x1x128xbf16>
    tpu.vector_store %arg5[%c1, %c0_5, %c0_6], %3 {strides = array<i32>} : memref<18x16x384xbf16, #tpu.memory_space<vmem>>, vector<16x1x128xbf16>,
    %c1_7 = arith.constant 1 : index
    %c15 = arith.constant 15 : index
    %c256 = arith.constant 256 : index
    %5 = vector.load %arg5[%c1_7, %c15, %c256] : memref<18x16x384xbf16, #tpu.memory_space<vmem>>, vector<16x1x128xbf16>
    tpu.vector_store %arg5[%c1_7, %c15, %c256], %3 {strides = array<i32>} : memref<18x16x384xbf16, #tpu.memory_space<vmem>>, vector<16x1x128xbf16>,
    %c0_8 = arith.constant 0 : index
    %c0_9 = arith.constant 0 : index
    %c0_10 = arith.constant 0 : index
    %c0_11 = arith.constant 0 : index
    %6 = vector.load %arg1[%c0_8, %c0_9, %c0_10, %c0_11] : memref<1x16x16x128xbf16, #tpu.memory_space<vmem>>, vector<1x16x16x128xbf16>
    %7 = vector.shape_cast %6 : vector<1x16x16x128xbf16> to vector<16x16x128xbf16>
    %c1_12 = arith.constant 1 : index
    %c0_13 = arith.constant 0 : index
    %c128 = arith.constant 128 : index
    %8 = vector.load %arg5[%c1_12, %c0_13, %c128] : memref<18x16x384xbf16, #tpu.memory_space<vmem>>, vector<16x16x128xbf16>
    tpu.vector_store %arg5[%c1_12, %c0_13, %c128], %7 {strides = array<i32>} : memref<18x16x384xbf16, #tpu.memory_space<vmem>>, vector<16x16x128xbf16>,
    %9 = vector.extract_strided_slice %7 {offsets = [0, 0, 0], sizes = [16, 15, 128], strides = [1, 1, 1]} : vector<16x16x128xbf16> to vector<16x15x128xbf16>
    %c1_14 = arith.constant 1 : index
    %c1_15 = arith.constant 1 : index
    %c0_16 = arith.constant 0 : index
    %10 = vector.load %arg5[%c1_14, %c1_15, %c0_16] : memref<18x16x384xbf16, #tpu.memory_space<vmem>>, vector<16x15x128xbf16>
    tpu.vector_store %arg5[%c1_14, %c1_15, %c0_16], %9 {strides = array<i32>} : memref<18x16x384xbf16, #tpu.memory_space<vmem>>, vector<16x15x128xbf16>,
    %11 = vector.extract_strided_slice %7 {offsets = [0, 1, 0], sizes = [16, 15, 128], strides = [1, 1, 1]} : vector<16x16x128xbf16> to vector<16x15x128xbf16>
    %c1_17 = arith.constant 1 : index
    %c0_18 = arith.constant 0 : index
    %c256_19 = arith.constant 256 : index
    %12 = vector.load %arg5[%c1_17, %c0_18, %c256_19] : memref<18x16x384xbf16, #tpu.memory_space<vmem>>, vector<16x15x128xbf16>
    tpu.vector_store %arg5[%c1_17, %c0_18, %c256_19], %11 {strides = array<i32>} : memref<18x16x384xbf16, #tpu.memory_space<vmem>>, vector<16x15x128xbf16>,
    %cst_20 = arith.constant 0.000000e+00 : bf16
    %13 = vector.broadcast %cst_20 : bf16 to vector<1x16x768xbf16>
    %c0_21 = arith.constant 0 : index
    %c0_22 = arith.constant 0 : index
    %c0_23 = arith.constant 0 : index
    %14 = vector.load %arg6[%c0_21, %c0_22, %c0_23] : memref<18x16x768xbf16, #tpu.memory_space<vmem>>, vector<1x16x768xbf16>
    tpu.vector_store %arg6[%c0_21, %c0_22, %c0_23], %13 {strides = array<i32>} : memref<18x16x768xbf16, #tpu.memory_space<vmem>>, vector<1x16x768xbf16>,
    %c17_24 = arith.constant 17 : index
    %c0_25 = arith.constant 0 : index
    %c0_26 = arith.constant 0 : index
    %15 = vector.load %arg6[%c17_24, %c0_25, %c0_26] : memref<18x16x768xbf16, #tpu.memory_space<vmem>>, vector<1x16x768xbf16>
    tpu.vector_store %arg6[%c17_24, %c0_25, %c0_26], %13 {strides = array<i32>} : memref<18x16x768xbf16, #tpu.memory_space<vmem>>, vector<1x16x768xbf16>,
    %cst_27 = arith.constant 0.000000e+00 : bf16
    %16 = vector.broadcast %cst_27 : bf16 to vector<16x1x256xbf16>
    %c1_28 = arith.constant 1 : index
    %c0_29 = arith.constant 0 : index
    %c0_30 = arith.constant 0 : index
    %17 = vector.load %arg6[%c1_28, %c0_29, %c0_30] : memref<18x16x768xbf16, #tpu.memory_space<vmem>>, vector<16x1x256xbf16>
    tpu.vector_store %arg6[%c1_28, %c0_29, %c0_30], %16 {strides = array<i32>} : memref<18x16x768xbf16, #tpu.memory_space<vmem>>, vector<16x1x256xbf16>,
    %c1_31 = arith.constant 1 : index
    %c15_32 = arith.constant 15 : index
    %c512 = arith.constant 512 : index
    %18 = vector.load %arg6[%c1_31, %c15_32, %c512] : memref<18x16x768xbf16, #tpu.memory_space<vmem>>, vector<16x1x256xbf16>
    tpu.vector_store %arg6[%c1_31, %c15_32, %c512], %16 {strides = array<i32>} : memref<18x16x768xbf16, #tpu.memory_space<vmem>>, vector<16x1x256xbf16>,
    %c0_33 = arith.constant 0 : index
    %c0_34 = arith.constant 0 : index
    %c0_35 = arith.constant 0 : index
    %19 = vector.load %arg5[%c0_33, %c0_34, %c0_35] : memref<18x16x384xbf16, #tpu.memory_space<vmem>>, vector<16x16x384xbf16>
    %20 = vector.shape_cast %19 : vector<16x16x384xbf16> to vector<256x384xbf16>
    %c1_36 = arith.constant 1 : index
    %c0_37 = arith.constant 0 : index
    %c0_38 = arith.constant 0 : index
    %21 = vector.load %arg5[%c1_36, %c0_37, %c0_38] : memref<18x16x384xbf16, #tpu.memory_space<vmem>>, vector<16x16x384xbf16>
    %22 = vector.shape_cast %21 : vector<16x16x384xbf16> to vector<256x384xbf16>
    %c2 = arith.constant 2 : index
    %c0_39 = arith.constant 0 : index
    %c0_40 = arith.constant 0 : index
    %23 = vector.load %arg5[%c2, %c0_39, %c0_40] : memref<18x16x384xbf16, #tpu.memory_space<vmem>>, vector<16x16x384xbf16>
    %24 = vector.shape_cast %23 : vector<16x16x384xbf16> to vector<256x384xbf16>
    %c0_41 = arith.constant 0 : index
    %c0_42 = arith.constant 0 : index
    %c0_43 = arith.constant 0 : index
    %25 = vector.load %arg2[%c0_41, %c0_42, %c0_43] : memref<3x384x256xbf16, #tpu.memory_space<vmem>>, vector<1x384x256xbf16>
    %26 = vector.shape_cast %25 : vector<1x384x256xbf16> to vector<384x256xbf16>
    %cst_44 = arith.constant dense<0.000000e+00> : vector<256x256xf32>
    %27 = tpu.matmul %20, %26, %cst_44 {dimension_numbers = #tpu.dot_dimension_numbers<[1], [0], [0], [1], [0, 0, 1, 1], [], []>} : vector<256x384xbf16>, vector<384x256xbf16>, vector<256x256xf32> -> vector<256x256xf32>
    %c1_45 = arith.constant 1 : index
    %c0_46 = arith.constant 0 : index
    %c0_47 = arith.constant 0 : index
    %28 = vector.load %arg2[%c1_45, %c0_46, %c0_47] : memref<3x384x256xbf16, #tpu.memory_space<vmem>>, vector<1x384x256xbf16>
    %29 = vector.shape_cast %28 : vector<1x384x256xbf16> to vector<384x256xbf16>
    %cst_48 = arith.constant dense<0.000000e+00> : vector<256x256xf32>
    %30 = tpu.matmul %22, %29, %cst_48 {dimension_numbers = #tpu.dot_dimension_numbers<[1], [0], [0], [1], [0, 0, 1, 1], [], []>} : vector<256x384xbf16>, vector<384x256xbf16>, vector<256x256xf32> -> vector<256x256xf32>
    %31 = arith.addf %27, %30 : vector<256x256xf32>
    %c2_49 = arith.constant 2 : index
    %c0_50 = arith.constant 0 : index
    %c0_51 = arith.constant 0 : index
    %32 = vector.load %arg2[%c2_49, %c0_50, %c0_51] : memref<3x384x256xbf16, #tpu.memory_space<vmem>>, vector<1x384x256xbf16>
    %33 = vector.shape_cast %32 : vector<1x384x256xbf16> to vector<384x256xbf16>
    %cst_52 = arith.constant dense<0.000000e+00> : vector<256x256xf32>
    %34 = tpu.matmul %24, %33, %cst_52 {dimension_numbers = #tpu.dot_dimension_numbers<[1], [0], [0], [1], [0, 0, 1, 1], [], []>} : vector<256x384xbf16>, vector<384x256xbf16>, vector<256x256xf32> -> vector<256x256xf32>
    %35 = arith.addf %31, %34 : vector<256x256xf32>
    %36 = arith.truncf %35 : vector<256x256xf32> to vector<256x256xbf16>
    %cst_53 = arith.constant 0.000000e+00 : bf16
    %37 = vector.broadcast %cst_53 : bf16 to vector<256x256xbf16>
    %38 = arith.maximumf %36, %37 : vector<256x256xbf16>
    %39 = vector.shape_cast %38 : vector<256x256xbf16> to vector<16x16x256xbf16>
    %c1_54 = arith.constant 1 : index
    %c0_55 = arith.constant 0 : index
    %c256_56 = arith.constant 256 : index
    %40 = vector.load %arg6[%c1_54, %c0_55, %c256_56] : memref<18x16x768xbf16, #tpu.memory_space<vmem>>, vector<16x16x256xbf16>
    tpu.vector_store %arg6[%c1_54, %c0_55, %c256_56], %39 {strides = array<i32>} : memref<18x16x768xbf16, #tpu.memory_space<vmem>>, vector<16x16x256xbf16>,
    %41 = vector.extract_strided_slice %39 {offsets = [0, 0, 0], sizes = [16, 15, 256], strides = [1, 1, 1]} : vector<16x16x256xbf16> to vector<16x15x256xbf16>
    %c1_57 = arith.constant 1 : index
    %c1_58 = arith.constant 1 : index
    %c0_59 = arith.constant 0 : index
    %42 = vector.load %arg6[%c1_57, %c1_58, %c0_59] : memref<18x16x768xbf16, #tpu.memory_space<vmem>>, vector<16x15x256xbf16>
    tpu.vector_store %arg6[%c1_57, %c1_58, %c0_59], %41 {strides = array<i32>} : memref<18x16x768xbf16, #tpu.memory_space<vmem>>, vector<16x15x256xbf16>,
    %43 = vector.extract_strided_slice %39 {offsets = [0, 1, 0], sizes = [16, 15, 256], strides = [1, 1, 1]} : vector<16x16x256xbf16> to vector<16x15x256xbf16>
    %c1_60 = arith.constant 1 : index
    %c0_61 = arith.constant 0 : index
    %c512_62 = arith.constant 512 : index
    %44 = vector.load %arg6[%c1_60, %c0_61, %c512_62] : memref<18x16x768xbf16, #tpu.memory_space<vmem>>, vector<16x15x256xbf16>
    tpu.vector_store %arg6[%c1_60, %c0_61, %c512_62], %43 {strides = array<i32>} : memref<18x16x768xbf16, #tpu.memory_space<vmem>>, vector<16x15x256xbf16>,
    %c0_63 = arith.constant 0 : index
    %c0_64 = arith.constant 0 : index
    %c0_65 = arith.constant 0 : index
    %45 = vector.load %arg6[%c0_63, %c0_64, %c0_65] : memref<18x16x768xbf16, #tpu.memory_space<vmem>>, vector<16x16x768xbf16>
    %46 = vector.shape_cast %45 : vector<16x16x768xbf16> to vector<256x768xbf16>
    %c1_66 = arith.constant 1 : index
    %c0_67 = arith.constant 0 : index
    %c0_68 = arith.constant 0 : index
    %47 = vector.load %arg6[%c1_66, %c0_67, %c0_68] : memref<18x16x768xbf16, #tpu.memory_space<vmem>>, vector<16x16x768xbf16>
    %48 = vector.shape_cast %47 : vector<16x16x768xbf16> to vector<256x768xbf16>
    %c2_69 = arith.constant 2 : index
    %c0_70 = arith.constant 0 : index
    %c0_71 = arith.constant 0 : index
    %49 = vector.load %arg6[%c2_69, %c0_70, %c0_71] : memref<18x16x768xbf16, #tpu.memory_space<vmem>>, vector<16x16x768xbf16>
    %50 = vector.shape_cast %49 : vector<16x16x768xbf16> to vector<256x768xbf16>
    %c0_72 = arith.constant 0 : index
    %c0_73 = arith.constant 0 : index
    %c0_74 = arith.constant 0 : index
    %51 = vector.load %arg3[%c0_72, %c0_73, %c0_74] : memref<3x768x256xbf16, #tpu.memory_space<vmem>>, vector<1x768x256xbf16>
    %52 = vector.shape_cast %51 : vector<1x768x256xbf16> to vector<768x256xbf16>
    %cst_75 = arith.constant dense<0.000000e+00> : vector<256x256xf32>
    %53 = tpu.matmul %46, %52, %cst_75 {dimension_numbers = #tpu.dot_dimension_numbers<[1], [0], [0], [1], [0, 0, 1, 1], [], []>} : vector<256x768xbf16>, vector<768x256xbf16>, vector<256x256xf32> -> vector<256x256xf32>
    %c1_76 = arith.constant 1 : index
    %c0_77 = arith.constant 0 : index
    %c0_78 = arith.constant 0 : index
    %54 = vector.load %arg3[%c1_76, %c0_77, %c0_78] : memref<3x768x256xbf16, #tpu.memory_space<vmem>>, vector<1x768x256xbf16>
    %55 = vector.shape_cast %54 : vector<1x768x256xbf16> to vector<768x256xbf16>
    %cst_79 = arith.constant dense<0.000000e+00> : vector<256x256xf32>
    %56 = tpu.matmul %48, %55, %cst_79 {dimension_numbers = #tpu.dot_dimension_numbers<[1], [0], [0], [1], [0, 0, 1, 1], [], []>} : vector<256x768xbf16>, vector<768x256xbf16>, vector<256x256xf32> -> vector<256x256xf32>
    %57 = arith.addf %53, %56 : vector<256x256xf32>
    %c2_80 = arith.constant 2 : index
    %c0_81 = arith.constant 0 : index
    %c0_82 = arith.constant 0 : index
    %58 = vector.load %arg3[%c2_80, %c0_81, %c0_82] : memref<3x768x256xbf16, #tpu.memory_space<vmem>>, vector<1x768x256xbf16>
    %59 = vector.shape_cast %58 : vector<1x768x256xbf16> to vector<768x256xbf16>
    %cst_83 = arith.constant dense<0.000000e+00> : vector<256x256xf32>
    %60 = tpu.matmul %50, %59, %cst_83 {dimension_numbers = #tpu.dot_dimension_numbers<[1], [0], [0], [1], [0, 0, 1, 1], [], []>} : vector<256x768xbf16>, vector<768x256xbf16>, vector<256x256xf32> -> vector<256x256xf32>
    %61 = arith.addf %57, %60 : vector<256x256xf32>
    %cst_84 = arith.constant 0.000000e+00 : f32
    %62 = vector.broadcast %cst_84 : f32 to vector<256x256xf32>
    %63 = arith.maximumf %61, %62 : vector<256x256xf32>
    %c0_85 = arith.constant 0 : index
    %c0_86 = arith.constant 0 : index
    %c0_87 = arith.constant 0 : index
    %64 = vector.load %arg4[%c0_85, %c0_86, %c0_87] : memref<1x256x256xf32, #tpu.memory_space<vmem>>, vector<1x256x256xf32>
    %65 = vector.shape_cast %64 : vector<1x256x256xf32> to vector<256x256xf32>
    %66 = vector.shape_cast %63 : vector<256x256xf32> to vector<1x256x256xf32>
    tpu.vector_store %arg4[%c0_85, %c0_86, %c0_87], %66 {strides = array<i32>} : memref<1x256x256xf32, #tpu.memory_space<vmem>>, vector<1x256x256xf32>,
    return
  }
  func.func @transform_0(%arg0: i32) -> (i32, i32, i32, i32) {
    %c0_i32 = arith.constant 0 : i32
    %c0_i32_0 = arith.constant 0 : i32
    %c0_i32_1 = arith.constant 0 : i32
    %c0_i32_2 = arith.constant 0 : i32
    return %arg0, %c0_i32, %c0_i32_0, %c0_i32_1 : i32, i32, i32, i32
  }
  func.func @transform_1(%arg0: i32) -> (i32, i32, i32) {
    %c0_i32 = arith.constant 0 : i32
    %c0_i32_0 = arith.constant 0 : i32
    %c0_i32_1 = arith.constant 0 : i32
    %c0_i32_2 = arith.constant 0 : i32
    return %c0_i32, %c0_i32_0, %c0_i32_1 : i32, i32, i32
  }
  func.func @transform_2(%arg0: i32) -> (i32, i32, i32) {
    %c0_i32 = arith.constant 0 : i32
    %c0_i32_0 = arith.constant 0 : i32
    %c0_i32_1 = arith.constant 0 : i32
    %c0_i32_2 = arith.constant 0 : i32
    return %c0_i32, %c0_i32_0, %c0_i32_1 : i32, i32, i32
  }
  func.func @transform_3(%arg0: i32) -> (i32, i32, i32) {
    %c0_i32 = arith.constant 0 : i32
    %c0_i32_0 = arith.constant 0 : i32
    %c0_i32_1 = arith.constant 0 : i32
    return %arg0, %c0_i32, %c0_i32_0 : i32, i32, i32
  }
}

</mosaic_0001>

<llo_original>
// kernel: conv_forward.1
$region0: #{conv_forward.1}
  #allocation0 [shape = 'u32[]', space=smem, size = 0x4, offset = 0x4, fixed_abs, tag = 'smem constant byte address 0x4 - core index']
  #allocation1 [shape = 'u32[144,128]{1,0:T(1,128)}', space=vmem, size = 0x12000, scoped, tag = 'internal scratch']
  #allocation2 [shape = 'bf16[18,16,384]{2,1,0:T(16,128)(2,1)}', space=vmem, size = 0x36000, scoped, tag = 'scratch operand']
  #allocation3 [shape = 'bf16[18,16,768]{2,1,0:T(16,128)(2,1)}', space=vmem, size = 0x6c000, scoped, tag = 'scratch operand']
  %s0 = inlined_call_operand.vmem [shape: bf16[2,16,16,128], index: 0, kind: input, shape index: {}]
  %s1 = inlined_call_operand.vmem [shape: bf16[3,384,256], index: 1, kind: input, shape index: {}]
  %s2 = inlined_call_operand.vmem [shape: bf16[3,768,256], index: 2, kind: input, shape index: {}]
  %s3 = inlined_call_operand.hbm [shape: f32[2,256,256], index: 3, kind: output, shape index: {}]
  %s4 = sld [smem:[#allocation0]]
  $region45: #{conv_forward.1} parent=0
    _
  %s6 = ssub.s32 1, %s4
  %s7 = scalar_select 0, %s6, %s4
  $region1: #{conv_forward.1} parent=0
    #allocation4 [shape = 'u8[524288]{0}', space=vmem, size = 0x80000, scoped, tag = 'output window, operand 0']
    #allocation5 [shape = 's32[2]{0}', space=sflag, size = 0x8, scoped, tag = 'scoped memory for conv_forward.1']
    %8 = vsyncpa [#allocation5], 0
    %s9 = scalar_lea.sflag [#allocation5], 1
    %10 = vsyncpa %s9, 0
    loop: start=0, step=1, limit=4
    $region2: #{conv_forward.1} parent=1 // loop_pre_header
      _
    $region3: #{conv_forward.1} parent=1 // loop_header
      %s12 = sphi 0, %s16
      %p13 = scmp.ge.s32.totalorder %s12, 4
      %s22 = sphi 0, %s24
      %s25 = sphi 0, %s22
      %s26 = sphi 0, %s25
      %s42 = sphi 0, %s26
      %s46 = sphi 0, %s46
      %s48 = sphi 0, %s46
      %s49 = sphi 0, %s48
      %s63 = sphi 0, %s49
      %s67 = sphi 0, %s67
      %s69 = sphi 0, %s67
      %s70 = sphi 0, %s69
      %s84 = sphi 0, %s70
      %s90 = sphi 0, %s92
      %s93 = sphi 0, %s90
      %s94 = sphi 0, %s93
      %s110 = sphi 0, %s94
    $region4: #{conv_forward.1} parent=1 // loop_header_branch
      %15 = sbr.rel (%p13) target = $region8
    $region5: #{conv_forward.1} parent=1 // loop_body
      %s17 = ssub.s32 %s12, 1
      %s18 = ssub.s32 %s12, 2
      %s19 = sadd.s32 %s12, 1
      %s20 = ssub.s32 %s12, %s19
      %p21 = scmp.eq.s32.totalorder %s20, 0
      %s23 = sadd.s32 %s22, 1
      %s24 = scalar_select %p21, %s22, %s23
      %p27 = pneg %p21
      %p28 = scmp.eq.s32.totalorder %s12, 1
      %p29 = por %p27, %p28
      %p30 = scmp.ne.s32.totalorder %s22, %s25
      %p31 = scmp.eq.s32.totalorder %s12, 0
      %p32 = por %p30, %p31
      %p33 = scmp.ne.s32.totalorder %s22, %s25
      %p34 = scmp.eq.s32.totalorder %s17, 1
      %p35 = por %p33, %p34
      %p36 = scmp.ne.s32.totalorder %s25, %s26
      %p37 = scmp.eq.s32.totalorder %s17, 0
      %p38 = por %p36, %p37
      %p39 = scmp.ne.s32.totalorder %s25, %s26
      %p40 = scmp.eq.s32.totalorder %s18, 1
      %p41 = por %p39, %p40
      %p43 = scmp.ne.s32.totalorder %s26, %s42
      %p44 = scmp.eq.s32.totalorder %s18, 0
      %p45 = por %p43, %p44
      %s47 = sadd.s32 %s46, 1
      %p50 = scmp.eq.s32.totalorder %s12, 1
      %p51 = scmp.ne.s32.totalorder %s46, %s48
      %p52 = scmp.eq.s32.totalorder %s12, 0
      %p53 = por %p51, %p52
      %p54 = scmp.ne.s32.totalorder %s46, %s48
      %p55 = scmp.eq.s32.totalorder %s17, 1
      %p56 = por %p54, %p55
      %p57 = scmp.ne.s32.totalorder %s48, %s49
      %p58 = scmp.eq.s32.totalorder %s17, 0
      %p59 = por %p57, %p58
      %p60 = scmp.ne.s32.totalorder %s48, %s49
      %p61 = scmp.eq.s32.totalorder %s18, 1
      %p62 = por %p60, %p61
      %p64 = scmp.ne.s32.totalorder %s49, %s63
      %p65 = scmp.eq.s32.totalorder %s18, 0
      %p66 = por %p64, %p65
      %s68 = sadd.s32 %s67, 1
      %p71 = scmp.eq.s32.totalorder %s12, 1
      %p72 = scmp.ne.s32.totalorder %s67, %s69
      %p73 = scmp.eq.s32.totalorder %s12, 0
      %p74 = por %p72, %p73
      %p75 = scmp.ne.s32.totalorder %s67, %s69
      %p76 = scmp.eq.s32.totalorder %s17, 1
      %p77 = por %p75, %p76
      %p78 = scmp.ne.s32.totalorder %s69, %s70
      %p79 = scmp.eq.s32.totalorder %s17, 0
      %p80 = por %p78, %p79
      %p81 = scmp.ne.s32.totalorder %s69, %s70
      %p82 = scmp.eq.s32.totalorder %s18, 1
      %p83 = por %p81, %p82
      %p85 = scmp.ne.s32.totalorder %s70, %s84
      %p86 = scmp.eq.s32.totalorder %s18, 0
      %p87 = por %p85, %p86
      %s88 = ssub.s32 %s12, %s19
      %p89 = scmp.eq.s32.totalorder %s88, 0
      %s91 = sadd.s32 %s90, 1
      %s92 = scalar_select %p89, %s90, %s91
      %p95 = pneg %p89
      %p96 = scmp.eq.s32.totalorder %s12, 1
      %p97 = por %p95, %p96
      %p98 = scmp.ne.s32.totalorder %s90, %s93
      %p99 = scmp.eq.s32.totalorder %s12, 0
      %p100 = por %p98, %p99
      %p101 = scmp.ne.s32.totalorder %s90, %s93
      %p102 = scmp.eq.s32.totalorder %s17, 1
      %p103 = por %p101, %p102
      %p104 = scmp.ne.s32.totalorder %s93, %s94
      %p105 = scmp.eq.s32.totalorder %s17, 0
      %p106 = por %p104, %p105
      %p107 = scmp.ne.s32.totalorder %s93, %s94
      %p108 = scmp.eq.s32.totalorder %s18, 1
      %p109 = por %p107, %p108
      %p111 = scmp.ne.s32.totalorder %s94, %s110
      %p112 = scmp.eq.s32.totalorder %s18, 0
      %p113 = por %p111, %p112
      %p114 = scmp.le.s32.totalorder 1, %s12
      %p115 = scmp.lt.s32.totalorder %s12, 3
      %p116 = pnand %p114, %p115
      %p117 = pneg %p116
      // Predicated region
      $region9: #{conv_forward.1} parent=5 // pred_check
        _
      $region10: #{conv_forward.1} parent=5 // pred_check_branch
        %119 = sbr.rel (%p116) target = $region12
      $region11: #{conv_forward.1} parent=5 // pred_region
        %s120 = ssub.s32 %s12, 1
        // Predicated region
        $region13: #{conv_forward.1} parent=11 // pred_check
          %p121 = pneg %p59
        $region14: #{conv_forward.1} parent=11 // pred_check_branch
          %123 = sbr.rel (%p121) target = $region16
        $region15: #{conv_forward.1} parent=11 // pred_region
          _
        $region16: #{conv_forward.1} parent=11 // pred_fallthru
          _
        // Predicated region
        $region17: #{conv_forward.1} parent=11 // pred_check
          %p124 = pneg %p80
        $region18: #{conv_forward.1} parent=11 // pred_check_branch
          %126 = sbr.rel (%p124) target = $region20
        $region19: #{conv_forward.1} parent=11 // pred_region
          _
        $region20: #{conv_forward.1} parent=11 // pred_fallthru
          _
      $region12: #{conv_forward.1} parent=5 // pred_fallthru
        _
      %p127 = scmp.lt.s32.totalorder %s12, 2
      // Predicated region
      $region21: #{conv_forward.1} parent=5 // pred_check
        %p128 = pneg %p127
      $region22: #{conv_forward.1} parent=5 // pred_check_branch
        %130 = sbr.rel (%p128) target = $region24
      $region23: #{conv_forward.1} parent=5 // pred_region
        // Predicated region
        $region25: #{conv_forward.1} parent=23 // pred_check
          %p131 = pneg %p32
        $region26: #{conv_forward.1} parent=23 // pred_check_branch
          %133 = sbr.rel (%p131) target = $region28
        $region27: #{conv_forward.1} parent=23 // pred_region
          %p134 = scmp.lt.s32.totalorder %s12, 1
          %s135 = scalar_select %p134, %s12, 1
          %s136 = smul.addr %s135, 32
          %s137 = smul.addr %s136, 4
          %s138 = scalar_lea.vmem %s0, %s137
        $region28: #{conv_forward.1} parent=23 // pred_fallthru
          _
      $region24: #{conv_forward.1} parent=5 // pred_fallthru
        _
      %p139 = scmp.le.s32.totalorder 1, %s12
      %p140 = scmp.lt.s32.totalorder %s12, 3
      %p141 = pnand %p139, %p140
      %p142 = pneg %p141
      // Predicated region
      $region29: #{conv_forward.1} parent=5 // pred_check
        _
      $region30: #{conv_forward.1} parent=5 // pred_check_branch
        %144 = sbr.rel (%p141) target = $region32
      $region31: #{conv_forward.1} parent=5 // pred_region
        %s145 = ssub.s32 %s12, 1
        %p146 = scmp.lt.s32.totalorder %s17, 1
        %s147 = scalar_select %p146, %s17, 1
        %s148 = smul.addr %s147, 32
        %s149 = smul.addr %s148, 4
        %s150 = scalar_lea.vmem %s0, %s149
        %p151 = pneg %p38
        %p152 = pneg %p35
        %p153 = pneg %p59
        %p154 = pneg %p56
        %p155 = pneg %p80
        %p156 = pneg %p77
        %p157 = pneg %p106
        %p158 = pneg %p103
        %s159 = sand.u32 %s93, 1
        %s160 = scalar_lea.sflag [#allocation5], %s159
        %s161 = sand.u32 %s93, 1
        %s162 = smul.addr %s161, 512
        %s163 = scalar_lea.vmem [#allocation4], %s162
        %p164 = scmp.lt.s32.totalorder %s17, 1
        %s165 = scalar_select %p164, %s17, 1
        %s166 = smul.addr %s165, 32
        %s167 = smul.addr %s166, 4
        %s168 = scalar_lea.vmem %s0, %s167
        %170 = vst [vmem:[#allocation2] sm:$0xff] 0
        %171 = vst [vmem:[#allocation2 + $0x8] sm:$0xff] 0
        %172 = vst [vmem:[#allocation2 + $0x10] sm:$0xff] 0
        %s173 = scalar_lea.vmem [#allocation2], 408
        %174 = vst [vmem:[%s173] sm:$0xff] 0
        %175 = vst [vmem:[%s173 + $0x8] sm:$0xff] 0
        %176 = vst [vmem:[%s173 + $0x10] sm:$0xff] 0
        %s177 = scalar_lea.vmem [#allocation2], 24
        %vm178 = vcmask 1040384
        %vm179 = vsmask.f32 256
        %vm180 = vmand %vm178, %vm179
        %v181 = vld [vmem:[%s177] sm:$0x1]
        %v182 = vsel %vm180, 0, %v181
        %183 = vst [vmem:[%s177] sm:$0x1] %v182
        %v184 = vld [vmem:[%s177 + $0x18] sm:$0x1]
        %v185 = vsel %vm180, 0, %v184
        %186 = vst [vmem:[%s177 + $0x18] sm:$0x1] %v185
        %v187 = vld [vmem:[%s177 + $0x30] sm:$0x1]
        %v188 = vsel %vm180, 0, %v187
        %189 = vst [vmem:[%s177 + $0x30] sm:$0x1] %v188
        %v190 = vld [vmem:[%s177 + $0x48] sm:$0x1]
        %v191 = vsel %vm180, 0, %v190
        %192 = vst [vmem:[%s177 + $0x48] sm:$0x1] %v191
        %v193 = vld [vmem:[%s177 + $0x60] sm:$0x1]
        %v194 = vsel %vm180, 0, %v193
        %195 = vst [vmem:[%s177 + $0x60] sm:$0x1] %v194
        %v196 = vld [vmem:[%s177 + $0x78] sm:$0x1]
        %v197 = vsel %vm180, 0, %v196
        %198 = vst [vmem:[%s177 + $0x78] sm:$0x1] %v197
        %v199 = vld [vmem:[%s177 + $0x90] sm:$0x1]
        %v200 = vsel %vm180, 0, %v199
        %201 = vst [vmem:[%s177 + $0x90] sm:$0x1] %v200
        %v202 = vld [vmem:[%s177 + $0xa8] sm:$0x1]
        %v203 = vsel %vm180, 0, %v202
        %204 = vst [vmem:[%s177 + $0xa8] sm:$0x1] %v203
        %v205 = vld [vmem:[%s177 + $0xc0] sm:$0x1]
        %v206 = vsel %vm180, 0, %v205
        %207 = vst [vmem:[%s177 + $0xc0] sm:$0x1] %v206
        %v208 = vld [vmem:[%s177 + $0xd8] sm:$0x1]
        %v209 = vsel %vm180, 0, %v208
        %210 = vst [vmem:[%s177 + $0xd8] sm:$0x1] %v209
        %v211 = vld [vmem:[%s177 + $0xf0] sm:$0x1]
        %v212 = vsel %vm180, 0, %v211
        %213 = vst [vmem:[%s177 + $0xf0] sm:$0x1] %v212
        %v214 = vld [vmem:[%s177 + $0x108] sm:$0x1]
        %v215 = vsel %vm180, 0, %v214
        %216 = vst [vmem:[%s177 + $0x108] sm:$0x1] %v215
        %v217 = vld [vmem:[%s177 + $0x120] sm:$0x1]
        %v218 = vsel %vm180, 0, %v217
        %219 = vst [vmem:[%s177 + $0x120] sm:$0x1] %v218
        %v220 = vld [vmem:[%s177 + $0x138] sm:$0x1]
        %v221 = vsel %vm180, 0, %v220
        %222 = vst [vmem:[%s177 + $0x138] sm:$0x1] %v221
        %v223 = vld [vmem:[%s177 + $0x150] sm:$0x1]
        %v224 = vsel %vm180, 0, %v223
        %225 = vst [vmem:[%s177 + $0x150] sm:$0x1] %v224
        %v226 = vld [vmem:[%s177 + $0x168] sm:$0x1]
        %v227 = vsel %vm180, 0, %v226
        %228 = vst [vmem:[%s177 + $0x168] sm:$0x1] %v227
        %vm229 = vcmask 1047559
        %vm230 = vsmask.f32 7966
        %vm231 = vmand %vm229, %vm230
        %v232 = vld [vmem:[%s177 + $0x10] sm:$0x80]
        %v233 = vsel %vm231, 0, %v232
        %234 = vst [vmem:[%s177 + $0x10] sm:$0x80] %v233
        %v235 = vld [vmem:[%s177 + $0x28] sm:$0x80]
        %v236 = vsel %vm231, 0, %v235
        %237 = vst [vmem:[%s177 + $0x28] sm:$0x80] %v236
        %v238 = vld [vmem:[%s177 + $0x40] sm:$0x80]
        %v239 = vsel %vm231, 0, %v238
        %240 = vst [vmem:[%s177 + $0x40] sm:$0x80] %v239
        %v241 = vld [vmem:[%s177 + $0x58] sm:$0x80]
        %v242 = vsel %vm231, 0, %v241
        %243 = vst [vmem:[%s177 + $0x58] sm:$0x80] %v242
        %v244 = vld [vmem:[%s177 + $0x70] sm:$0x80]
        %v245 = vsel %vm231, 0, %v244
        %246 = vst [vmem:[%s177 + $0x70] sm:$0x80] %v245
        %v247 = vld [vmem:[%s177 + $0x88] sm:$0x80]
        %v248 = vsel %vm231, 0, %v247
        %249 = vst [vmem:[%s177 + $0x88] sm:$0x80] %v248
        %v250 = vld [vmem:[%s177 + $0xa0] sm:$0x80]
        %v251 = vsel %vm231, 0, %v250
        %252 = vst [vmem:[%s177 + $0xa0] sm:$0x80] %v251
        %v253 = vld [vmem:[%s177 + $0xb8] sm:$0x80]
        %v254 = vsel %vm231, 0, %v253
        %255 = vst [vmem:[%s177 + $0xb8] sm:$0x80] %v254
        %v256 = vld [vmem:[%s177 + $0xd0] sm:$0x80]
        %v257 = vsel %vm231, 0, %v256
        %258 = vst [vmem:[%s177 + $0xd0] sm:$0x80] %v257
        %v259 = vld [vmem:[%s177 + $0xe8] sm:$0x80]
        %v260 = vsel %vm231, 0, %v259
        %261 = vst [vmem:[%s177 + $0xe8] sm:$0x80] %v260
        %v262 = vld [vmem:[%s177 + $0x100] sm:$0x80]
        %v263 = vsel %vm231, 0, %v262
        %264 = vst [vmem:[%s177 + $0x100] sm:$0x80] %v263
        %v265 = vld [vmem:[%s177 + $0x118] sm:$0x80]
        %v266 = vsel %vm231, 0, %v265
        %267 = vst [vmem:[%s177 + $0x118] sm:$0x80] %v266
        %v268 = vld [vmem:[%s177 + $0x130] sm:$0x80]
        %v269 = vsel %vm231, 0, %v268
        %270 = vst [vmem:[%s177 + $0x130] sm:$0x80] %v269
        %v271 = vld [vmem:[%s177 + $0x148] sm:$0x80]
        %v272 = vsel %vm231, 0, %v271
        %273 = vst [vmem:[%s177 + $0x148] sm:$0x80] %v272
        %v274 = vld [vmem:[%s177 + $0x160] sm:$0x80]
        %v275 = vsel %vm231, 0, %v274
        %276 = vst [vmem:[%s177 + $0x160] sm:$0x80] %v275
        %v277 = vld [vmem:[%s177 + $0x178] sm:$0x80]
        %v278 = vsel %vm231, 0, %v277
        %279 = vst [vmem:[%s177 + $0x178] sm:$0x80] %v278
        %v280 = vld [vmem:[%s168] sm:$0xf]
        %v281 = vld [vmem:[%s168 + $0x4] sm:$0xf]
        %v282 = vld [vmem:[%s168 + $0x8] sm:$0xf]
        %v283 = vld [vmem:[%s168 + $0xc] sm:$0xf]
        %v284 = vld [vmem:[%s168 + $0x10] sm:$0xf]
        %v285 = vld [vmem:[%s168 + $0x14] sm:$0xf]
        %v286 = vld [vmem:[%s168 + $0x18] sm:$0xf]
        %v287 = vld [vmem:[%s168 + $0x1c] sm:$0xf]
        %v288 = vld [vmem:[%s168 + $0x20] sm:$0xf]
        %v289 = vld [vmem:[%s168 + $0x24] sm:$0xf]
        %v290 = vld [vmem:[%s168 + $0x28] sm:$0xf]
        %v291 = vld [vmem:[%s168 + $0x2c] sm:$0xf]
        %v292 = vld [vmem:[%s168 + $0x30] sm:$0xf]
        %v293 = vld [vmem:[%s168 + $0x34] sm:$0xf]
        %v294 = vld [vmem:[%s168 + $0x38] sm:$0xf]
        %v295 = vld [vmem:[%s168 + $0x3c] sm:$0xf]
        %v296 = vld [vmem:[%s168 + $0x40] sm:$0xf]
        %v297 = vld [vmem:[%s168 + $0x44] sm:$0xf]
        %v298 = vld [vmem:[%s168 + $0x48] sm:$0xf]
        %v299 = vld [vmem:[%s168 + $0x4c] sm:$0xf]
        %v300 = vld [vmem:[%s168 + $0x50] sm:$0xf]
        %v301 = vld [vmem:[%s168 + $0x54] sm:$0xf]
        %v302 = vld [vmem:[%s168 + $0x58] sm:$0xf]
        %v303 = vld [vmem:[%s168 + $0x5c] sm:$0xf]
        %v304 = vld [vmem:[%s168 + $0x60] sm:$0xf]
        %v305 = vld [vmem:[%s168 + $0x64] sm:$0xf]
        %v306 = vld [vmem:[%s168 + $0x68] sm:$0xf]
        %v307 = vld [vmem:[%s168 + $0x6c] sm:$0xf]
        %v308 = vld [vmem:[%s168 + $0x70] sm:$0xf]
        %v309 = vld [vmem:[%s168 + $0x74] sm:$0xf]
        %v310 = vld [vmem:[%s168 + $0x78] sm:$0xf]
        %v311 = vld [vmem:[%s168 + $0x7c] sm:$0xf]
        %v344 = vunpack.c.l.b16 %v280
        %v345 = vunpack.c.l.b16 %v281
        %v346 = vunpack.c.l.b16 %v282
        %v347 = vunpack.c.l.b16 %v283
        %v348 = vunpack.c.l.b16 %v284
        %v349 = vunpack.c.l.b16 %v285
        %v350 = vunpack.c.l.b16 %v286
        %v351 = vunpack.c.l.b16 %v287
        %v352 = vunpack.c.l.b16 %v288
        %v353 = vunpack.c.l.b16 %v289
        %v354 = vunpack.c.l.b16 %v290
        %v355 = vunpack.c.l.b16 %v291
        %v356 = vunpack.c.l.b16 %v292
        %v357 = vunpack.c.l.b16 %v293
        %v358 = vunpack.c.l.b16 %v294
        %v359 = vunpack.c.l.b16 %v295
        %v360 = vunpack.c.l.b16 %v296
        %v361 = vunpack.c.l.b16 %v297
        %v362 = vunpack.c.l.b16 %v298
        %v363 = vunpack.c.l.b16 %v299
        %v364 = vunpack.c.l.b16 %v300
        %v365 = vunpack.c.l.b16 %v301
        %v366 = vunpack.c.l.b16 %v302
        %v367 = vunpack.c.l.b16 %v303
        %v368 = vunpack.c.l.b16 %v304
        %v369 = vunpack.c.l.b16 %v305
        %v370 = vunpack.c.l.b16 %v306
        %v371 = vunpack.c.l.b16 %v307
        %v372 = vunpack.c.l.b16 %v308
        %v373 = vunpack.c.l.b16 %v309
        %v374 = vunpack.c.l.b16 %v310
        %v375 = vunpack.c.l.b16 %v311
        %v376 = vpack.c.b16 %v345, %v344
        %v377 = vpack.c.b16 %v347, %v346
        %v378 = vpack.c.b16 %v349, %v348
        %v379 = vpack.c.b16 %v351, %v350
        %v380 = vpack.c.b16 %v353, %v352
        %v381 = vpack.c.b16 %v355, %v354
        %v382 = vpack.c.b16 %v357, %v356
        %v383 = vpack.c.b16 %v359, %v358
        %v384 = vpack.c.b16 %v361, %v360
        %v385 = vpack.c.b16 %v363, %v362
        %v386 = vpack.c.b16 %v365, %v364
        %v387 = vpack.c.b16 %v367, %v366
        %v388 = vpack.c.b16 %v369, %v368
        %v389 = vpack.c.b16 %v371, %v370
        %v390 = vpack.c.b16 %v373, %v372
        %v391 = vpack.c.b16 %v375, %v374
        %408 = vst [vmem:[%s177 + $0x8] sm:$0xff] %v376
        %409 = vst [vmem:[%s177 + $0x20] sm:$0xff] %v377
        %410 = vst [vmem:[%s177 + $0x38] sm:$0xff] %v378
        %411 = vst [vmem:[%s177 + $0x50] sm:$0xff] %v379
        %412 = vst [vmem:[%s177 + $0x68] sm:$0xff] %v380
        %413 = vst [vmem:[%s177 + $0x80] sm:$0xff] %v381
        %414 = vst [vmem:[%s177 + $0x98] sm:$0xff] %v382
        %415 = vst [vmem:[%s177 + $0xb0] sm:$0xff] %v383
        %416 = vst [vmem:[%s177 + $0xc8] sm:$0xff] %v384
        %417 = vst [vmem:[%s177 + $0xe0] sm:$0xff] %v385
        %418 = vst [vmem:[%s177 + $0xf8] sm:$0xff] %v386
        %419 = vst [vmem:[%s177 + $0x110] sm:$0xff] %v387
        %420 = vst [vmem:[%s177 + $0x128] sm:$0xff] %v388
        %421 = vst [vmem:[%s177 + $0x140] sm:$0xff] %v389
        %422 = vst [vmem:[%s177 + $0x158] sm:$0xff] %v390
        %423 = vst [vmem:[%s177 + $0x170] sm:$0xff] %v391
        %v425 = vshrl.u32 %v376, 16
        %v427 = vrot.slane %v425, 7
        %v428 = vshll.u32 %v376, 16
        %v430 = vor.u32 %v427, %v428
        %v432 = vshrl.u32 %v377, 16
        %v434 = vrot.slane %v432, 7
        %v435 = vshll.u32 %v377, 16
        %v437 = vor.u32 %v434, %v435
        %v439 = vshrl.u32 %v378, 16
        %v441 = vrot.slane %v439, 7
        %v442 = vshll.u32 %v378, 16
        %v444 = vor.u32 %v441, %v442
        %v446 = vshrl.u32 %v379, 16
        %v448 = vrot.slane %v446, 7
        %v449 = vshll.u32 %v379, 16
        %v451 = vor.u32 %v448, %v449
        %v453 = vshrl.u32 %v380, 16
        %v455 = vrot.slane %v453, 7
        %v456 = vshll.u32 %v380, 16
        %v458 = vor.u32 %v455, %v456
        %v460 = vshrl.u32 %v381, 16
        %v462 = vrot.slane %v460, 7
        %v463 = vshll.u32 %v381, 16
        %v465 = vor.u32 %v462, %v463
        %v467 = vshrl.u32 %v382, 16
        %v469 = vrot.slane %v467, 7
        %v470 = vshll.u32 %v382, 16
        %v472 = vor.u32 %v469, %v470
        %v474 = vshrl.u32 %v383, 16
        %v476 = vrot.slane %v474, 7
        %v477 = vshll.u32 %v383, 16
        %v479 = vor.u32 %v476, %v477
        %v481 = vshrl.u32 %v384, 16
        %v483 = vrot.slane %v481, 7
        %v484 = vshll.u32 %v384, 16
        %v486 = vor.u32 %v483, %v484
        %v488 = vshrl.u32 %v385, 16
        %v490 = vrot.slane %v488, 7
        %v491 = vshll.u32 %v385, 16
        %v493 = vor.u32 %v490, %v491
        %v495 = vshrl.u32 %v386, 16
        %v497 = vrot.slane %v495, 7
        %v498 = vshll.u32 %v386, 16
        %v500 = vor.u32 %v497, %v498
        %v502 = vshrl.u32 %v387, 16
        %v504 = vrot.slane %v502, 7
        %v505 = vshll.u32 %v387, 16
        %v507 = vor.u32 %v504, %v505
        %v509 = vshrl.u32 %v388, 16
        %v511 = vrot.slane %v509, 7
        %v512 = vshll.u32 %v388, 16
        %v514 = vor.u32 %v511, %v512
        %v516 = vshrl.u32 %v389, 16
        %v518 = vrot.slane %v516, 7
        %v519 = vshll.u32 %v389, 16
        %v521 = vor.u32 %v518, %v519
        %v523 = vshrl.u32 %v390, 16
        %v525 = vrot.slane %v523, 7
        %v526 = vshll.u32 %v390, 16
        %v528 = vor.u32 %v525, %v526
        %v530 = vshrl.u32 %v391, 16
        %v532 = vrot.slane %v530, 7
        %v533 = vshll.u32 %v391, 16
        %v535 = vor.u32 %v532, %v533
        %vm552 = vcmask 1047552
        %vm553 = vsmask.f32 7938
        %vm554 = vmand %vm552, %vm553
        %v555 = vld [vmem:[%s177] sm:$0xff]
        %v556 = vsel %vm554, %v430, %v555
        %557 = vst [vmem:[%s177] sm:$0xff] %v556
        %v558 = vld [vmem:[%s177 + $0x18] sm:$0xff]
        %v559 = vsel %vm554, %v437, %v558
        %560 = vst [vmem:[%s177 + $0x18] sm:$0xff] %v559
        %v561 = vld [vmem:[%s177 + $0x30] sm:$0xff]
        %v562 = vsel %vm554, %v444, %v561
        %563 = vst [vmem:[%s177 + $0x30] sm:$0xff] %v562
        %v564 = vld [vmem:[%s177 + $0x48] sm:$0xff]
        %v565 = vsel %vm554, %v451, %v564
        %566 = vst [vmem:[%s177 + $0x48] sm:$0xff] %v565
        %v567 = vld [vmem:[%s177 + $0x60] sm:$0xff]
        %v568 = vsel %vm554, %v458, %v567
        %569 = vst [vmem:[%s177 + $0x60] sm:$0xff] %v568
        %v570 = vld [vmem:[%s177 + $0x78] sm:$0xff]
        %v571 = vsel %vm554, %v465, %v570
        %572 = vst [vmem:[%s177 + $0x78] sm:$0xff] %v571
        %v573 = vld [vmem:[%s177 + $0x90] sm:$0xff]
        %v574 = vsel %vm554, %v472, %v573
        %575 = vst [vmem:[%s177 + $0x90] sm:$0xff] %v574
        %v576 = vld [vmem:[%s177 + $0xa8] sm:$0xff]
        %v577 = vsel %vm554, %v479, %v576
        %578 = vst [vmem:[%s177 + $0xa8] sm:$0xff] %v577
        %v579 = vld [vmem:[%s177 + $0xc0] sm:$0xff]
        %v580 = vsel %vm554, %v486, %v579
        %581 = vst [vmem:[%s177 + $0xc0] sm:$0xff] %v580
        %v582 = vld [vmem:[%s177 + $0xd8] sm:$0xff]
        %v583 = vsel %vm554, %v493, %v582
        %584 = vst [vmem:[%s177 + $0xd8] sm:$0xff] %v583
        %v585 = vld [vmem:[%s177 + $0xf0] sm:$0xff]
        %v586 = vsel %vm554, %v500, %v585
        %587 = vst [vmem:[%s177 + $0xf0] sm:$0xff] %v586
        %v588 = vld [vmem:[%s177 + $0x108] sm:$0xff]
        %v589 = vsel %vm554, %v507, %v588
        %590 = vst [vmem:[%s177 + $0x108] sm:$0xff] %v589
        %v591 = vld [vmem:[%s177 + $0x120] sm:$0xff]
        %v592 = vsel %vm554, %v514, %v591
        %593 = vst [vmem:[%s177 + $0x120] sm:$0xff] %v592
        %v594 = vld [vmem:[%s177 + $0x138] sm:$0xff]
        %v595 = vsel %vm554, %v521, %v594
        %596 = vst [vmem:[%s177 + $0x138] sm:$0xff] %v595
        %v597 = vld [vmem:[%s177 + $0x150] sm:$0xff]
        %v598 = vsel %vm554, %v528, %v597
        %599 = vst [vmem:[%s177 + $0x150] sm:$0xff] %v598
        %v600 = vld [vmem:[%s177 + $0x168] sm:$0xff]
        %v601 = vsel %vm554, %v535, %v600
        %602 = vst [vmem:[%s177 + $0x168] sm:$0xff] %v601
        %v603 = vrot.slane %v428, 1
        %v604 = vor.u32 %v425, %v603
        %v605 = vrot.slane %v435, 1
        %v606 = vor.u32 %v432, %v605
        %v607 = vrot.slane %v442, 1
        %v608 = vor.u32 %v439, %v607
        %v609 = vrot.slane %v449, 1
        %v610 = vor.u32 %v446, %v609
        %v611 = vrot.slane %v456, 1
        %v612 = vor.u32 %v453, %v611
        %v613 = vrot.slane %v463, 1
        %v614 = vor.u32 %v460, %v613
        %v615 = vrot.slane %v470, 1
        %v616 = vor.u32 %v467, %v615
        %v617 = vrot.slane %v477, 1
        %v618 = vor.u32 %v474, %v617
        %v619 = vrot.slane %v484, 1
        %v620 = vor.u32 %v481, %v619
        %v621 = vrot.slane %v491, 1
        %v622 = vor.u32 %v488, %v621
        %v623 = vrot.slane %v498, 1
        %v624 = vor.u32 %v495, %v623
        %v625 = vrot.slane %v505, 1
        %v626 = vor.u32 %v502, %v625
        %v627 = vrot.slane %v512, 1
        %v628 = vor.u32 %v509, %v627
        %v629 = vrot.slane %v519, 1
        %v630 = vor.u32 %v516, %v629
        %v631 = vrot.slane %v526, 1
        %v632 = vor.u32 %v523, %v631
        %v633 = vrot.slane %v533, 1
        %v634 = vor.u32 %v530, %v633
        %vm651 = vsmask.f32 7424
        %vm652 = vmand %vm552, %vm651
        %v653 = vld [vmem:[%s177 + $0x10] sm:$0xff]
        %v654 = vsel %vm652, %v604, %v653
        %655 = vst [vmem:[%s177 + $0x10] sm:$0xff] %v654
        %v656 = vld [vmem:[%s177 + $0x28] sm:$0xff]
        %v657 = vsel %vm652, %v606, %v656
        %658 = vst [vmem:[%s177 + $0x28] sm:$0xff] %v657
        %v659 = vld [vmem:[%s177 + $0x40] sm:$0xff]
        %v660 = vsel %vm652, %v608, %v659
        %661 = vst [vmem:[%s177 + $0x40] sm:$0xff] %v660
        %v662 = vld [vmem:[%s177 + $0x58] sm:$0xff]
        %v663 = vsel %vm652, %v610, %v662
        %664 = vst [vmem:[%s177 + $0x58] sm:$0xff] %v663
        %v665 = vld [vmem:[%s177 + $0x70] sm:$0xff]
        %v666 = vsel %vm652, %v612, %v665
        %667 = vst [vmem:[%s177 + $0x70] sm:$0xff] %v666
        %v668 = vld [vmem:[%s177 + $0x88] sm:$0xff]
        %v669 = vsel %vm652, %v614, %v668
        %670 = vst [vmem:[%s177 + $0x88] sm:$0xff] %v669
        %v671 = vld [vmem:[%s177 + $0xa0] sm:$0xff]
        %v672 = vsel %vm652, %v616, %v671
        %673 = vst [vmem:[%s177 + $0xa0] sm:$0xff] %v672
        %v674 = vld [vmem:[%s177 + $0xb8] sm:$0xff]
        %v675 = vsel %vm652, %v618, %v674
        %676 = vst [vmem:[%s177 + $0xb8] sm:$0xff] %v675
        %v677 = vld [vmem:[%s177 + $0xd0] sm:$0xff]
        %v678 = vsel %vm652, %v620, %v677
        %679 = vst [vmem:[%s177 + $0xd0] sm:$0xff] %v678
        %v680 = vld [vmem:[%s177 + $0xe8] sm:$0xff]
        %v681 = vsel %vm652, %v622, %v680
        %682 = vst [vmem:[%s177 + $0xe8] sm:$0xff] %v681
        %v683 = vld [vmem:[%s177 + $0x100] sm:$0xff]
        %v684 = vsel %vm652, %v624, %v683
        %685 = vst [vmem:[%s177 + $0x100] sm:$0xff] %v684
        %v686 = vld [vmem:[%s177 + $0x118] sm:$0xff]
        %v687 = vsel %vm652, %v626, %v686
        %688 = vst [vmem:[%s177 + $0x118] sm:$0xff] %v687
        %v689 = vld [vmem:[%s177 + $0x130] sm:$0xff]
        %v690 = vsel %vm652, %v628, %v689
        %691 = vst [vmem:[%s177 + $0x130] sm:$0xff] %v690
        %v692 = vld [vmem:[%s177 + $0x148] sm:$0xff]
        %v693 = vsel %vm652, %v630, %v692
        %694 = vst [vmem:[%s177 + $0x148] sm:$0xff] %v693
        %v695 = vld [vmem:[%s177 + $0x160] sm:$0xff]
        %v696 = vsel %vm652, %v632, %v695
        %697 = vst [vmem:[%s177 + $0x160] sm:$0xff] %v696
        %v698 = vld [vmem:[%s177 + $0x178] sm:$0xff]
        %v699 = vsel %vm652, %v634, %v698
        %700 = vst [vmem:[%s177 + $0x178] sm:$0xff] %v699
        %701 = vst [vmem:[#allocation3] sm:$0xff] 0
        %702 = vst [vmem:[#allocation3 + $0x8] sm:$0xff] 0
        %703 = vst [vmem:[#allocation3 + $0x10] sm:$0xff] 0
        %704 = vst [vmem:[#allocation3 + $0x18] sm:$0xff] 0
        %705 = vst [vmem:[#allocation3 + $0x20] sm:$0xff] 0
        %706 = vst [vmem:[#allocation3 + $0x28] sm:$0xff] 0
        %s707 = scalar_lea.vmem [#allocation3], 816
        %708 = vst [vmem:[%s707] sm:$0xff] 0
        %709 = vst [vmem:[%s707 + $0x8] sm:$0xff] 0
        %710 = vst [vmem:[%s707 + $0x10] sm:$0xff] 0
        %711 = vst [vmem:[%s707 + $0x18] sm:$0xff] 0
        %712 = vst [vmem:[%s707 + $0x20] sm:$0xff] 0
        %713 = vst [vmem:[%s707 + $0x28] sm:$0xff] 0
        %s714 = scalar_lea.vmem [#allocation3], 48
        %v715 = vld [vmem:[%s714] sm:$0x1]
        %v716 = vsel %vm180, 0, %v715
        %717 = vst [vmem:[%s714] sm:$0x1] %v716
        %v718 = vld [vmem:[%s714 + $0x8] sm:$0x1]
        %v719 = vsel %vm180, 0, %v718
        %720 = vst [vmem:[%s714 + $0x8] sm:$0x1] %v719
        %v721 = vld [vmem:[%s714 + $0x30] sm:$0x1]
        %v722 = vsel %vm180, 0, %v721
        %723 = vst [vmem:[%s714 + $0x30] sm:$0x1] %v722
        %v724 = vld [vmem:[%s714 + $0x38] sm:$0x1]
        %v725 = vsel %vm180, 0, %v724
        %726 = vst [vmem:[%s714 + $0x38] sm:$0x1] %v725
        %v727 = vld [vmem:[%s714 + $0x60] sm:$0x1]
        %v728 = vsel %vm180, 0, %v727
        %729 = vst [vmem:[%s714 + $0x60] sm:$0x1] %v728
        %v730 = vld [vmem:[%s714 + $0x68] sm:$0x1]
        %v731 = vsel %vm180, 0, %v730
        %732 = vst [vmem:[%s714 + $0x68] sm:$0x1] %v731
        %v733 = vld [vmem:[%s714 + $0x90] sm:$0x1]
        %v734 = vsel %vm180, 0, %v733
        %735 = vst [vmem:[%s714 + $0x90] sm:$0x1] %v734
        %v736 = vld [vmem:[%s714 + $0x98] sm:$0x1]
        %v737 = vsel %vm180, 0, %v736
        %738 = vst [vmem:[%s714 + $0x98] sm:$0x1] %v737
        %v739 = vld [vmem:[%s714 + $0xc0] sm:$0x1]
        %v740 = vsel %vm180, 0, %v739
        %741 = vst [vmem:[%s714 + $0xc0] sm:$0x1] %v740
        %v742 = vld [vmem:[%s714 + $0xc8] sm:$0x1]
        %v743 = vsel %vm180, 0, %v742
        %744 = vst [vmem:[%s714 + $0xc8] sm:$0x1] %v743
        %v745 = vld [vmem:[%s714 + $0xf0] sm:$0x1]
        %v746 = vsel %vm180, 0, %v745
        %747 = vst [vmem:[%s714 + $0xf0] sm:$0x1] %v746
        %v748 = vld [vmem:[%s714 + $0xf8] sm:$0x1]
        %v749 = vsel %vm180, 0, %v748
        %750 = vst [vmem:[%s714 + $0xf8] sm:$0x1] %v749
        %v751 = vld [vmem:[%s714 + $0x120] sm:$0x1]
        %v752 = vsel %vm180, 0, %v751
        %753 = vst [vmem:[%s714 + $0x120] sm:$0x1] %v752
        %v754 = vld [vmem:[%s714 + $0x128] sm:$0x1]
        %v755 = vsel %vm180, 0, %v754
        %756 = vst [vmem:[%s714 + $0x128] sm:$0x1] %v755
        %v757 = vld [vmem:[%s714 + $0x150] sm:$0x1]
        %v758 = vsel %vm180, 0, %v757
        %759 = vst [vmem:[%s714 + $0x150] sm:$0x1] %v758
        %v760 = vld [vmem:[%s714 + $0x158] sm:$0x1]
        %v761 = vsel %vm180, 0, %v760
        %762 = vst [vmem:[%s714 + $0x158] sm:$0x1] %v761
        %v763 = vld [vmem:[%s714 + $0x180] sm:$0x1]
        %v764 = vsel %vm180, 0, %v763
        %765 = vst [vmem:[%s714 + $0x180] sm:$0x1] %v764
        %v766 = vld [vmem:[%s714 + $0x188] sm:$0x1]
        %v767 = vsel %vm180, 0, %v766
        %768 = vst [vmem:[%s714 + $0x188] sm:$0x1] %v767
        %v769 = vld [vmem:[%s714 + $0x1b0] sm:$0x1]
        %v770 = vsel %vm180, 0, %v769
        %771 = vst [vmem:[%s714 + $0x1b0] sm:$0x1] %v770
        %v772 = vld [vmem:[%s714 + $0x1b8] sm:$0x1]
        %v773 = vsel %vm180, 0, %v772
        %774 = vst [vmem:[%s714 + $0x1b8] sm:$0x1] %v773
        %v775 = vld [vmem:[%s714 + $0x1e0] sm:$0x1]
        %v776 = vsel %vm180, 0, %v775
        %777 = vst [vmem:[%s714 + $0x1e0] sm:$0x1] %v776
        %v778 = vld [vmem:[%s714 + $0x1e8] sm:$0x1]
        %v779 = vsel %vm180, 0, %v778
        %780 = vst [vmem:[%s714 + $0x1e8] sm:$0x1] %v779
        %v781 = vld [vmem:[%s714 + $0x210] sm:$0x1]
        %v782 = vsel %vm180, 0, %v781
        %783 = vst [vmem:[%s714 + $0x210] sm:$0x1] %v782
        %v784 = vld [vmem:[%s714 + $0x218] sm:$0x1]
        %v785 = vsel %vm180, 0, %v784
        %786 = vst [vmem:[%s714 + $0x218] sm:$0x1] %v785
        %v787 = vld [vmem:[%s714 + $0x240] sm:$0x1]
        %v788 = vsel %vm180, 0, %v787
        %789 = vst [vmem:[%s714 + $0x240] sm:$0x1] %v788
        %v790 = vld [vmem:[%s714 + $0x248] sm:$0x1]
        %v791 = vsel %vm180, 0, %v790
        %792 = vst [vmem:[%s714 + $0x248] sm:$0x1] %v791
        %v793 = vld [vmem:[%s714 + $0x270] sm:$0x1]
        %v794 = vsel %vm180, 0, %v793
        %795 = vst [vmem:[%s714 + $0x270] sm:$0x1] %v794
        %v796 = vld [vmem:[%s714 + $0x278] sm:$0x1]
        %v797 = vsel %vm180, 0, %v796
        %798 = vst [vmem:[%s714 + $0x278] sm:$0x1] %v797
        %v799 = vld [vmem:[%s714 + $0x2a0] sm:$0x1]
        %v800 = vsel %vm180, 0, %v799
        %801 = vst [vmem:[%s714 + $0x2a0] sm:$0x1] %v800
        %v802 = vld [vmem:[%s714 + $0x2a8] sm:$0x1]
        %v803 = vsel %vm180, 0, %v802
        %804 = vst [vmem:[%s714 + $0x2a8] sm:$0x1] %v803
        %v805 = vld [vmem:[%s714 + $0x2d0] sm:$0x1]
        %v806 = vsel %vm180, 0, %v805
        %807 = vst [vmem:[%s714 + $0x2d0] sm:$0x1] %v806
        %v808 = vld [vmem:[%s714 + $0x2d8] sm:$0x1]
        %v809 = vsel %vm180, 0, %v808
        %810 = vst [vmem:[%s714 + $0x2d8] sm:$0x1] %v809
        %v811 = vld [vmem:[%s714 + $0x20] sm:$0x80]
        %v812 = vsel %vm231, 0, %v811
        %813 = vst [vmem:[%s714 + $0x20] sm:$0x80] %v812
        %v814 = vld [vmem:[%s714 + $0x28] sm:$0x80]
        %v815 = vsel %vm231, 0, %v814
        %816 = vst [vmem:[%s714 + $0x28] sm:$0x80] %v815
        %v817 = vld [vmem:[%s714 + $0x50] sm:$0x80]
        %v818 = vsel %vm231, 0, %v817
        %819 = vst [vmem:[%s714 + $0x50] sm:$0x80] %v818
        %v820 = vld [vmem:[%s714 + $0x58] sm:$0x80]
        %v821 = vsel %vm231, 0, %v820
        %822 = vst [vmem:[%s714 + $0x58] sm:$0x80] %v821
        %v823 = vld [vmem:[%s714 + $0x80] sm:$0x80]
        %v824 = vsel %vm231, 0, %v823
        %825 = vst [vmem:[%s714 + $0x80] sm:$0x80] %v824
        %v826 = vld [vmem:[%s714 + $0x88] sm:$0x80]
        %v827 = vsel %vm231, 0, %v826
        %828 = vst [vmem:[%s714 + $0x88] sm:$0x80] %v827
        %v829 = vld [vmem:[%s714 + $0xb0] sm:$0x80]
        %v830 = vsel %vm231, 0, %v829
        %831 = vst [vmem:[%s714 + $0xb0] sm:$0x80] %v830
        %v832 = vld [vmem:[%s714 + $0xb8] sm:$0x80]
        %v833 = vsel %vm231, 0, %v832
        %834 = vst [vmem:[%s714 + $0xb8] sm:$0x80] %v833
        %v835 = vld [vmem:[%s714 + $0xe0] sm:$0x80]
        %v836 = vsel %vm231, 0, %v835
        %837 = vst [vmem:[%s714 + $0xe0] sm:$0x80] %v836
        %v838 = vld [vmem:[%s714 + $0xe8] sm:$0x80]
        %v839 = vsel %vm231, 0, %v838
        %840 = vst [vmem:[%s714 + $0xe8] sm:$0x80] %v839
        %v841 = vld [vmem:[%s714 + $0x110] sm:$0x80]
        %v842 = vsel %vm231, 0, %v841
        %843 = vst [vmem:[%s714 + $0x110] sm:$0x80] %v842
        %v844 = vld [vmem:[%s714 + $0x118] sm:$0x80]
        %v845 = vsel %vm231, 0, %v844
        %846 = vst [vmem:[%s714 + $0x118] sm:$0x80] %v845
        %v847 = vld [vmem:[%s714 + $0x140] sm:$0x80]
        %v848 = vsel %vm231, 0, %v847
        %849 = vst [vmem:[%s714 + $0x140] sm:$0x80] %v848
        %v850 = vld [vmem:[%s714 + $0x148] sm:$0x80]
        %v851 = vsel %vm231, 0, %v850
        %852 = vst [vmem:[%s714 + $0x148] sm:$0x80] %v851
        %v853 = vld [vmem:[%s714 + $0x170] sm:$0x80]
        %v854 = vsel %vm231, 0, %v853
        %855 = vst [vmem:[%s714 + $0x170] sm:$0x80] %v854
        %v856 = vld [vmem:[%s714 + $0x178] sm:$0x80]
        %v857 = vsel %vm231, 0, %v856
        %858 = vst [vmem:[%s714 + $0x178] sm:$0x80] %v857
        %v859 = vld [vmem:[%s714 + $0x1a0] sm:$0x80]
        %v860 = vsel %vm231, 0, %v859
        %861 = vst [vmem:[%s714 + $0x1a0] sm:$0x80] %v860
        %v862 = vld [vmem:[%s714 + $0x1a8] sm:$0x80]
        %v863 = vsel %vm231, 0, %v862
        %864 = vst [vmem:[%s714 + $0x1a8] sm:$0x80] %v863
        %v865 = vld [vmem:[%s714 + $0x1d0] sm:$0x80]
        %v866 = vsel %vm231, 0, %v865
        %867 = vst [vmem:[%s714 + $0x1d0] sm:$0x80] %v866
        %v868 = vld [vmem:[%s714 + $0x1d8] sm:$0x80]
        %v869 = vsel %vm231, 0, %v868
        %870 = vst [vmem:[%s714 + $0x1d8] sm:$0x80] %v869
        %v871 = vld [vmem:[%s714 + $0x200] sm:$0x80]
        %v872 = vsel %vm231, 0, %v871
        %873 = vst [vmem:[%s714 + $0x200] sm:$0x80] %v872
        %v874 = vld [vmem:[%s714 + $0x208] sm:$0x80]
        %v875 = vsel %vm231, 0, %v874
        %876 = vst [vmem:[%s714 + $0x208] sm:$0x80] %v875
        %v877 = vld [vmem:[%s714 + $0x230] sm:$0x80]
        %v878 = vsel %vm231, 0, %v877
        %879 = vst [vmem:[%s714 + $0x230] sm:$0x80] %v878
        %v880 = vld [vmem:[%s714 + $0x238] sm:$0x80]
        %v881 = vsel %vm231, 0, %v880
        %882 = vst [vmem:[%s714 + $0x238] sm:$0x80] %v881
        %v883 = vld [vmem:[%s714 + $0x260] sm:$0x80]
        %v884 = vsel %vm231, 0, %v883
        %885 = vst [vmem:[%s714 + $0x260] sm:$0x80] %v884
        %v886 = vld [vmem:[%s714 + $0x268] sm:$0x80]
        %v887 = vsel %vm231, 0, %v886
        %888 = vst [vmem:[%s714 + $0x268] sm:$0x80] %v887
        %v889 = vld [vmem:[%s714 + $0x290] sm:$0x80]
        %v890 = vsel %vm231, 0, %v889
        %891 = vst [vmem:[%s714 + $0x290] sm:$0x80] %v890
        %v892 = vld [vmem:[%s714 + $0x298] sm:$0x80]
        %v893 = vsel %vm231, 0, %v892
        %894 = vst [vmem:[%s714 + $0x298] sm:$0x80] %v893
        %v895 = vld [vmem:[%s714 + $0x2c0] sm:$0x80]
        %v896 = vsel %vm231, 0, %v895
        %897 = vst [vmem:[%s714 + $0x2c0] sm:$0x80] %v896
        %v898 = vld [vmem:[%s714 + $0x2c8] sm:$0x80]
        %v899 = vsel %vm231, 0, %v898
        %900 = vst [vmem:[%s714 + $0x2c8] sm:$0x80] %v899
        %v901 = vld [vmem:[%s714 + $0x2f0] sm:$0x80]
        %v902 = vsel %vm231, 0, %v901
        %903 = vst [vmem:[%s714 + $0x2f0] sm:$0x80] %v902
        %v904 = vld [vmem:[%s714 + $0x2f8] sm:$0x80]
        %v905 = vsel %vm231, 0, %v904
        %906 = vst [vmem:[%s714 + $0x2f8] sm:$0x80] %v905
        %v907 = vld [vmem:[#allocation2] sm:$0xff]
        %v908 = vld [vmem:[#allocation2 + $0x8] sm:$0xff]
        %v909 = vld [vmem:[#allocation2 + $0x10] sm:$0xff]
        %v910 = vld [vmem:[#allocation2 + $0x18] sm:$0xff]
        %v911 = vld [vmem:[#allocation2 + $0x20] sm:$0xff]
        %v912 = vld [vmem:[#allocation2 + $0x28] sm:$0xff]
        %v913 = vld [vmem:[#allocation2 + $0x30] sm:$0xff]
        %v914 = vld [vmem:[#allocation2 + $0x38] sm:$0xff]
        %v915 = vld [vmem:[#allocation2 + $0x40] sm:$0xff]
        %v916 = vld [vmem:[#allocation2 + $0x48] sm:$0xff]
        %v917 = vld [vmem:[#allocation2 + $0x50] sm:$0xff]
        %v918 = vld [vmem:[#allocation2 + $0x58] sm:$0xff]
        %v919 = vld [vmem:[#allocation2 + $0x60] sm:$0xff]
        %v920 = vld [vmem:[#allocation2 + $0x68] sm:$0xff]
        %v921 = vld [vmem:[#allocation2 + $0x70] sm:$0xff]
        %v922 = vld [vmem:[#allocation2 + $0x78] sm:$0xff]
        %v923 = vld [vmem:[#allocation2 + $0x80] sm:$0xff]
        %v924 = vld [vmem:[#allocation2 + $0x88] sm:$0xff]
        %v925 = vld [vmem:[#allocation2 + $0x90] sm:$0xff]
        %v926 = vld [vmem:[#allocation2 + $0x98] sm:$0xff]
        %v927 = vld [vmem:[#allocation2 + $0xa0] sm:$0xff]
        %v928 = vld [vmem:[#allocation2 + $0xa8] sm:$0xff]
        %v929 = vld [vmem:[#allocation2 + $0xb0] sm:$0xff]
        %v930 = vld [vmem:[#allocation2 + $0xb8] sm:$0xff]
        %v931 = vld [vmem:[#allocation2 + $0xc0] sm:$0xff]
        %v932 = vld [vmem:[#allocation2 + $0xc8] sm:$0xff]
        %v933 = vld [vmem:[#allocation2 + $0xd0] sm:$0xff]
        %v934 = vld [vmem:[#allocation2 + $0xd8] sm:$0xff]
        %v935 = vld [vmem:[#allocation2 + $0xe0] sm:$0xff]
        %v936 = vld [vmem:[#allocation2 + $0xe8] sm:$0xff]
        %v937 = vld [vmem:[#allocation2 + $0xf0] sm:$0xff]
        %v938 = vld [vmem:[#allocation2 + $0xf8] sm:$0xff]
        %v939 = vld [vmem:[#allocation2 + $0x100] sm:$0xff]
        %v940 = vld [vmem:[#allocation2 + $0x108] sm:$0xff]
        %v941 = vld [vmem:[#allocation2 + $0x110] sm:$0xff]
        %v942 = vld [vmem:[#allocation2 + $0x118] sm:$0xff]
        %v943 = vld [vmem:[#allocation2 + $0x120] sm:$0xff]
        %v944 = vld [vmem:[#allocation2 + $0x128] sm:$0xff]
        %v945 = vld [vmem:[#allocation2 + $0x130] sm:$0xff]
        %v946 = vld [vmem:[#allocation2 + $0x138] sm:$0xff]
        %v947 = vld [vmem:[#allocation2 + $0x140] sm:$0xff]
        %v948 = vld [vmem:[#allocation2 + $0x148] sm:$0xff]
        %v949 = vld [vmem:[#allocation2 + $0x150] sm:$0xff]
        %v950 = vld [vmem:[#allocation2 + $0x158] sm:$0xff]
        %v951 = vld [vmem:[#allocation2 + $0x160] sm:$0xff]
        %v952 = vld [vmem:[#allocation2 + $0x168] sm:$0xff]
        %v953 = vld [vmem:[#allocation2 + $0x170] sm:$0xff]
        %v954 = vld [vmem:[#allocation2 + $0x178] sm:$0xff]
        %v955 = vld [vmem:[%s177] sm:$0xff]
        %v956 = vld [vmem:[%s177 + $0x8] sm:$0xff]
        %v957 = vld [vmem:[%s177 + $0x10] sm:$0xff]
        %v958 = vld [vmem:[%s177 + $0x18] sm:$0xff]
        %v959 = vld [vmem:[%s177 + $0x20] sm:$0xff]
        %v960 = vld [vmem:[%s177 + $0x28] sm:$0xff]
        %v961 = vld [vmem:[%s177 + $0x30] sm:$0xff]
        %v962 = vld [vmem:[%s177 + $0x38] sm:$0xff]
        %v963 = vld [vmem:[%s177 + $0x40] sm:$0xff]
        %v964 = vld [vmem:[%s177 + $0x48] sm:$0xff]
        %v965 = vld [vmem:[%s177 + $0x50] sm:$0xff]
        %v966 = vld [vmem:[%s177 + $0x58] sm:$0xff]
        %v967 = vld [vmem:[%s177 + $0x60] sm:$0xff]
        %v968 = vld [vmem:[%s177 + $0x68] sm:$0xff]
        %v969 = vld [vmem:[%s177 + $0x70] sm:$0xff]
        %v970 = vld [vmem:[%s177 + $0x78] sm:$0xff]
        %v971 = vld [vmem:[%s177 + $0x80] sm:$0xff]
        %v972 = vld [vmem:[%s177 + $0x88] sm:$0xff]
        %v973 = vld [vmem:[%s177 + $0x90] sm:$0xff]
        %v974 = vld [vmem:[%s177 + $0x98] sm:$0xff]
        %v975 = vld [vmem:[%s177 + $0xa0] sm:$0xff]
        %v976 = vld [vmem:[%s177 + $0xa8] sm:$0xff]
        %v977 = vld [vmem:[%s177 + $0xb0] sm:$0xff]
        %v978 = vld [vmem:[%s177 + $0xb8] sm:$0xff]
        %v979 = vld [vmem:[%s177 + $0xc0] sm:$0xff]
        %v980 = vld [vmem:[%s177 + $0xc8] sm:$0xff]
        %v981 = vld [vmem:[%s177 + $0xd0] sm:$0xff]
        %v982 = vld [vmem:[%s177 + $0xd8] sm:$0xff]
        %v983 = vld [vmem:[%s177 + $0xe0] sm:$0xff]
        %v984 = vld [vmem:[%s177 + $0xe8] sm:$0xff]
        %v985 = vld [vmem:[%s177 + $0xf0] sm:$0xff]
        %v986 = vld [vmem:[%s177 + $0xf8] sm:$0xff]
        %v987 = vld [vmem:[%s177 + $0x100] sm:$0xff]
        %v988 = vld [vmem:[%s177 + $0x108] sm:$0xff]
        %v989 = vld [vmem:[%s177 + $0x110] sm:$0xff]
        %v990 = vld [vmem:[%s177 + $0x118] sm:$0xff]
        %v991 = vld [vmem:[%s177 + $0x120] sm:$0xff]
        %v992 = vld [vmem:[%s177 + $0x128] sm:$0xff]
        %v993 = vld [vmem:[%s177 + $0x130] sm:$0xff]
        %v994 = vld [vmem:[%s177 + $0x138] sm:$0xff]
        %v995 = vld [vmem:[%s177 + $0x140] sm:$0xff]
        %v996 = vld [vmem:[%s177 + $0x148] sm:$0xff]
        %v997 = vld [vmem:[%s177 + $0x150] sm:$0xff]
        %v998 = vld [vmem:[%s177 + $0x158] sm:$0xff]
        %v999 = vld [vmem:[%s177 + $0x160] sm:$0xff]
        %v1000 = vld [vmem:[%s177 + $0x168] sm:$0xff]
        %v1001 = vld [vmem:[%s177 + $0x170] sm:$0xff]
        %v1002 = vld [vmem:[%s177 + $0x178] sm:$0xff]
        %s1003 = scalar_lea.vmem [#allocation2], 48
        %v1004 = vld [vmem:[%s1003] sm:$0xff]
        %v1005 = vld [vmem:[%s1003 + $0x8] sm:$0xff]
        %v1006 = vld [vmem:[%s1003 + $0x10] sm:$0xff]
        %v1007 = vld [vmem:[%s1003 + $0x18] sm:$0xff]
        %v1008 = vld [vmem:[%s1003 + $0x20] sm:$0xff]
        %v1009 = vld [vmem:[%s1003 + $0x28] sm:$0xff]
        %v1010 = vld [vmem:[%s1003 + $0x30] sm:$0xff]
        %v1011 = vld [vmem:[%s1003 + $0x38] sm:$0xff]
        %v1012 = vld [vmem:[%s1003 + $0x40] sm:$0xff]
        %v1013 = vld [vmem:[%s1003 + $0x48] sm:$0xff]
        %v1014 = vld [vmem:[%s1003 + $0x50] sm:$0xff]
        %v1015 = vld [vmem:[%s1003 + $0x58] sm:$0xff]
        %v1016 = vld [vmem:[%s1003 + $0x60] sm:$0xff]
        %v1017 = vld [vmem:[%s1003 + $0x68] sm:$0xff]
        %v1018 = vld [vmem:[%s1003 + $0x70] sm:$0xff]
        %v1019 = vld [vmem:[%s1003 + $0x78] sm:$0xff]
        %v1020 = vld [vmem:[%s1003 + $0x80] sm:$0xff]
        %v1021 = vld [vmem:[%s1003 + $0x88] sm:$0xff]
        %v1022 = vld [vmem:[%s1003 + $0x90] sm:$0xff]
        %v1023 = vld [vmem:[%s1003 + $0x98] sm:$0xff]
        %v1024 = vld [vmem:[%s1003 + $0xa0] sm:$0xff]
        %v1025 = vld [vmem:[%s1003 + $0xa8] sm:$0xff]
        %v1026 = vld [vmem:[%s1003 + $0xb0] sm:$0xff]
        %v1027 = vld [vmem:[%s1003 + $0xb8] sm:$0xff]
        %v1028 = vld [vmem:[%s1003 + $0xc0] sm:$0xff]
        %v1029 = vld [vmem:[%s1003 + $0xc8] sm:$0xff]
        %v1030 = vld [vmem:[%s1003 + $0xd0] sm:$0xff]
        %v1031 = vld [vmem:[%s1003 + $0xd8] sm:$0xff]
        %v1032 = vld [vmem:[%s1003 + $0xe0] sm:$0xff]
        %v1033 = vld [vmem:[%s1003 + $0xe8] sm:$0xff]
        %v1034 = vld [vmem:[%s1003 + $0xf0] sm:$0xff]
        %v1035 = vld [vmem:[%s1003 + $0xf8] sm:$0xff]
        %v1036 = vld [vmem:[%s1003 + $0x100] sm:$0xff]
        %v1037 = vld [vmem:[%s1003 + $0x108] sm:$0xff]
        %v1038 = vld [vmem:[%s1003 + $0x110] sm:$0xff]
        %v1039 = vld [vmem:[%s1003 + $0x118] sm:$0xff]
        %v1040 = vld [vmem:[%s1003 + $0x120] sm:$0xff]
        %v1041 = vld [vmem:[%s1003 + $0x128] sm:$0xff]
        %v1042 = vld [vmem:[%s1003 + $0x130] sm:$0xff]
        %v1043 = vld [vmem:[%s1003 + $0x138] sm:$0xff]
        %v1044 = vld [vmem:[%s1003 + $0x140] sm:$0xff]
        %v1045 = vld [vmem:[%s1003 + $0x148] sm:$0xff]
        %v1046 = vld [vmem:[%s1003 + $0x150] sm:$0xff]
        %v1047 = vld [vmem:[%s1003 + $0x158] sm:$0xff]
        %v1048 = vld [vmem:[%s1003 + $0x160] sm:$0xff]
        %v1049 = vld [vmem:[%s1003 + $0x168] sm:$0xff]
        %v1050 = vld [vmem:[%s1003 + $0x170] sm:$0xff]
        %v1051 = vld [vmem:[%s1003 + $0x178] sm:$0xff]
        %v1052 = vld [vmem:[%s1] sm:$0xff]
        %v1053 = vld [vmem:[%s1 + $0x8] sm:$0xff]
        %v1054 = vld [vmem:[%s1 + $0x10] sm:$0xff]
        %v1055 = vld [vmem:[%s1 + $0x18] sm:$0xff]
        %v1056 = vld [vmem:[%s1 + $0x20] sm:$0xff]
        %v1057 = vld [vmem:[%s1 + $0x28] sm:$0xff]
        %v1058 = vld [vmem:[%s1 + $0x30] sm:$0xff]
        %v1059 = vld [vmem:[%s1 + $0x38] sm:$0xff]
        %v1060 = vld [vmem:[%s1 + $0x40] sm:$0xff]
        %v1061 = vld [vmem:[%s1 + $0x48] sm:$0xff]
        %v1062 = vld [vmem:[%s1 + $0x50] sm:$0xff]
        %v1063 = vld [vmem:[%s1 + $0x58] sm:$0xff]
        %v1064 = vld [vmem:[%s1 + $0x60] sm:$0xff]
        %v1065 = vld [vmem:[%s1 + $0x68] sm:$0xff]
        %v1066 = vld [vmem:[%s1 + $0x70] sm:$0xff]
        %v1067 = vld [vmem:[%s1 + $0x78] sm:$0xff]
        %v1068 = vld [vmem:[%s1 + $0x80] sm:$0xff]
        %v1069 = vld [vmem:[%s1 + $0x88] sm:$0xff]
        %v1070 = vld [vmem:[%s1 + $0x90] sm:$0xff]
        %v1071 = vld [vmem:[%s1 + $0x98] sm:$0xff]
        %v1072 = vld [vmem:[%s1 + $0xa0] sm:$0xff]
        %v1073 = vld [vmem:[%s1 + $0xa8] sm:$0xff]
        %v1074 = vld [vmem:[%s1 + $0xb0] sm:$0xff]
        %v1075 = vld [vmem:[%s1 + $0xb8] sm:$0xff]
        %v1076 = vld [vmem:[%s1 + $0xc0] sm:$0xff]
        %v1077 = vld [vmem:[%s1 + $0xc8] sm:$0xff]
        %v1078 = vld [vmem:[%s1 + $0xd0] sm:$0xff]
        %v1079 = vld [vmem:[%s1 + $0xd8] sm:$0xff]
        %v1080 = vld [vmem:[%s1 + $0xe0] sm:$0xff]
        %v1081 = vld [vmem:[%s1 + $0xe8] sm:$0xff]
        %v1082 = vld [vmem:[%s1 + $0xf0] sm:$0xff]
        %v1083 = vld [vmem:[%s1 + $0xf8] sm:$0xff]
        %v1084 = vld [vmem:[%s1 + $0x100] sm:$0xff]
        %v1085 = vld [vmem:[%s1 + $0x108] sm:$0xff]
        %v1086 = vld [vmem:[%s1 + $0x110] sm:$0xff]
        %v1087 = vld [vmem:[%s1 + $0x118] sm:$0xff]
        %v1088 = vld [vmem:[%s1 + $0x120] sm:$0xff]
        %v1089 = vld [vmem:[%s1 + $0x128] sm:$0xff]
        %v1090 = vld [vmem:[%s1 + $0x130] sm:$0xff]
        %v1091 = vld [vmem:[%s1 + $0x138] sm:$0xff]
        %v1092 = vld [vmem:[%s1 + $0x140] sm:$0xff]
        %v1093 = vld [vmem:[%s1 + $0x148] sm:$0xff]
        %v1094 = vld [vmem:[%s1 + $0x150] sm:$0xff]
        %v1095 = vld [vmem:[%s1 + $0x158] sm:$0xff]
        %v1096 = vld [vmem:[%s1 + $0x160] sm:$0xff]
        %v1097 = vld [vmem:[%s1 + $0x168] sm:$0xff]
        %v1098 = vld [vmem:[%s1 + $0x170] sm:$0xff]
        %v1099 = vld [vmem:[%s1 + $0x178] sm:$0xff]
        %s1100 = scalar_lea.vmem %s1, 384
        %v1101 = vld [vmem:[%s1100] sm:$0xff]
        %v1102 = vld [vmem:[%s1100 + $0x8] sm:$0xff]
        %v1103 = vld [vmem:[%s1100 + $0x10] sm:$0xff]
        %v1104 = vld [vmem:[%s1100 + $0x18] sm:$0xff]
        %v1105 = vld [vmem:[%s1100 + $0x20] sm:$0xff]
        %v1106 = vld [vmem:[%s1100 + $0x28] sm:$0xff]
        %v1107 = vld [vmem:[%s1100 + $0x30] sm:$0xff]
        %v1108 = vld [vmem:[%s1100 + $0x38] sm:$0xff]
        %v1109 = vld [vmem:[%s1100 + $0x40] sm:$0xff]
        %v1110 = vld [vmem:[%s1100 + $0x48] sm:$0xff]
        %v1111 = vld [vmem:[%s1100 + $0x50] sm:$0xff]
        %v1112 = vld [vmem:[%s1100 + $0x58] sm:$0xff]
        %v1113 = vld [vmem:[%s1100 + $0x60] sm:$0xff]
        %v1114 = vld [vmem:[%s1100 + $0x68] sm:$0xff]
        %v1115 = vld [vmem:[%s1100 + $0x70] sm:$0xff]
        %v1116 = vld [vmem:[%s1100 + $0x78] sm:$0xff]
        %v1117 = vld [vmem:[%s1100 + $0x80] sm:$0xff]
        %v1118 = vld [vmem:[%s1100 + $0x88] sm:$0xff]
        %v1119 = vld [vmem:[%s1100 + $0x90] sm:$0xff]
        %v1120 = vld [vmem:[%s1100 + $0x98] sm:$0xff]
        %v1121 = vld [vmem:[%s1100 + $0xa0] sm:$0xff]
        %v1122 = vld [vmem:[%s1100 + $0xa8] sm:$0xff]
        %v1123 = vld [vmem:[%s1100 + $0xb0] sm:$0xff]
        %v1124 = vld [vmem:[%s1100 + $0xb8] sm:$0xff]
        %v1125 = vld [vmem:[%s1100 + $0xc0] sm:$0xff]
        %v1126 = vld [vmem:[%s1100 + $0xc8] sm:$0xff]
        %v1127 = vld [vmem:[%s1100 + $0xd0] sm:$0xff]
        %v1128 = vld [vmem:[%s1100 + $0xd8] sm:$0xff]
        %v1129 = vld [vmem:[%s1100 + $0xe0] sm:$0xff]
        %v1130 = vld [vmem:[%s1100 + $0xe8] sm:$0xff]
        %v1131 = vld [vmem:[%s1100 + $0xf0] sm:$0xff]
        %v1132 = vld [vmem:[%s1100 + $0xf8] sm:$0xff]
        %v1133 = vld [vmem:[%s1100 + $0x100] sm:$0xff]
        %v1134 = vld [vmem:[%s1100 + $0x108] sm:$0xff]
        %v1135 = vld [vmem:[%s1100 + $0x110] sm:$0xff]
        %v1136 = vld [vmem:[%s1100 + $0x118] sm:$0xff]
        %v1137 = vld [vmem:[%s1100 + $0x120] sm:$0xff]
        %v1138 = vld [vmem:[%s1100 + $0x128] sm:$0xff]
        %v1139 = vld [vmem:[%s1100 + $0x130] sm:$0xff]
        %v1140 = vld [vmem:[%s1100 + $0x138] sm:$0xff]
        %v1141 = vld [vmem:[%s1100 + $0x140] sm:$0xff]
        %v1142 = vld [vmem:[%s1100 + $0x148] sm:$0xff]
        %v1143 = vld [vmem:[%s1100 + $0x150] sm:$0xff]
        %v1144 = vld [vmem:[%s1100 + $0x158] sm:$0xff]
        %v1145 = vld [vmem:[%s1100 + $0x160] sm:$0xff]
        %v1146 = vld [vmem:[%s1100 + $0x168] sm:$0xff]
        %v1147 = vld [vmem:[%s1100 + $0x170] sm:$0xff]
        %v1148 = vld [vmem:[%s1100 + $0x178] sm:$0xff]
        %v1197 = vunpack.c.l.b16 %v1101
        %v1198 = vunpack.c.h.b16 %v1101
        %v1199 = vunpack.c.l.b16 %v1102
        %v1200 = vunpack.c.h.b16 %v1102
        %v1201 = vunpack.c.l.b16 %v1103
        %v1202 = vunpack.c.h.b16 %v1103
        %v1203 = vunpack.c.l.b16 %v1104
        %v1204 = vunpack.c.h.b16 %v1104
        %v1205 = vunpack.c.l.b16 %v1105
        %v1206 = vunpack.c.h.b16 %v1105
        %v1207 = vunpack.c.l.b16 %v1106
        %v1208 = vunpack.c.h.b16 %v1106
        %v1209 = vunpack.c.l.b16 %v1107
        %v1210 = vunpack.c.h.b16 %v1107
        %v1211 = vunpack.c.l.b16 %v1108
        %v1212 = vunpack.c.h.b16 %v1108
        %v1213 = vunpack.c.l.b16 %v1109
        %v1214 = vunpack.c.h.b16 %v1109
        %v1215 = vunpack.c.l.b16 %v1110
        %v1216 = vunpack.c.h.b16 %v1110
        %v1217 = vunpack.c.l.b16 %v1111
        %v1218 = vunpack.c.h.b16 %v1111
        %v1219 = vunpack.c.l.b16 %v1112
        %v1220 = vunpack.c.h.b16 %v1112
        %v1221 = vunpack.c.l.b16 %v1113
        %v1222 = vunpack.c.h.b16 %v1113
        %v1223 = vunpack.c.l.b16 %v1114
        %v1224 = vunpack.c.h.b16 %v1114
        %v1225 = vunpack.c.l.b16 %v1115
        %v1226 = vunpack.c.h.b16 %v1115
        %v1227 = vunpack.c.l.b16 %v1116
        %v1228 = vunpack.c.h.b16 %v1116
        %v1229 = vunpack.c.l.b16 %v1117
        %v1230 = vunpack.c.h.b16 %v1117
        %v1231 = vunpack.c.l.b16 %v1118
        %v1232 = vunpack.c.h.b16 %v1118
        %v1233 = vunpack.c.l.b16 %v1119
        %v1234 = vunpack.c.h.b16 %v1119
        %v1235 = vunpack.c.l.b16 %v1120
        %v1236 = vunpack.c.h.b16 %v1120
        %v1237 = vunpack.c.l.b16 %v1121
        %v1238 = vunpack.c.h.b16 %v1121
        %v1239 = vunpack.c.l.b16 %v1122
        %v1240 = vunpack.c.h.b16 %v1122
        %v1241 = vunpack.c.l.b16 %v1123
        %v1242 = vunpack.c.h.b16 %v1123
        %v1243 = vunpack.c.l.b16 %v1124
        %v1244 = vunpack.c.h.b16 %v1124
        %v1245 = vunpack.c.l.b16 %v1125
        %v1246 = vunpack.c.h.b16 %v1125
        %v1247 = vunpack.c.l.b16 %v1126
        %v1248 = vunpack.c.h.b16 %v1126
        %v1249 = vunpack.c.l.b16 %v1127
        %v1250 = vunpack.c.h.b16 %v1127
        %v1251 = vunpack.c.l.b16 %v1128
        %v1252 = vunpack.c.h.b16 %v1128
        %v1253 = vunpack.c.l.b16 %v1129
        %v1254 = vunpack.c.h.b16 %v1129
        %v1255 = vunpack.c.l.b16 %v1130
        %v1256 = vunpack.c.h.b16 %v1130
        %v1257 = vunpack.c.l.b16 %v1131
        %v1258 = vunpack.c.h.b16 %v1131
        %v1259 = vunpack.c.l.b16 %v1132
        %v1260 = vunpack.c.h.b16 %v1132
        %v1261 = vunpack.c.l.b16 %v1133
        %v1262 = vunpack.c.h.b16 %v1133
        %v1263 = vunpack.c.l.b16 %v1134
        %v1264 = vunpack.c.h.b16 %v1134
        %v1265 = vunpack.c.l.b16 %v1135
        %v1266 = vunpack.c.h.b16 %v1135
        %v1267 = vunpack.c.l.b16 %v1136
        %v1268 = vunpack.c.h.b16 %v1136
        %v1269 = vunpack.c.l.b16 %v1137
        %v1270 = vunpack.c.h.b16 %v1137
        %v1271 = vunpack.c.l.b16 %v1138
        %v1272 = vunpack.c.h.b16 %v1138
        %v1273 = vunpack.c.l.b16 %v1139
        %v1274 = vunpack.c.h.b16 %v1139
        %v1275 = vunpack.c.l.b16 %v1140
        %v1276 = vunpack.c.h.b16 %v1140
        %v1277 = vunpack.c.l.b16 %v1141
        %v1278 = vunpack.c.h.b16 %v1141
        %v1279 = vunpack.c.l.b16 %v1142
        %v1280 = vunpack.c.h.b16 %v1142
        %v1281 = vunpack.c.l.b16 %v1143
        %v1282 = vunpack.c.h.b16 %v1143
        %v1283 = vunpack.c.l.b16 %v1144
        %v1284 = vunpack.c.h.b16 %v1144
        %v1285 = vunpack.c.l.b16 %v1145
        %v1286 = vunpack.c.h.b16 %v1145
        %v1287 = vunpack.c.l.b16 %v1146
        %v1288 = vunpack.c.h.b16 %v1146
        %v1289 = vunpack.c.l.b16 %v1147
        %v1290 = vunpack.c.h.b16 %v1147
        %v1291 = vunpack.c.l.b16 %v1148
        %v1292 = vunpack.c.h.b16 %v1148
        %v1293 = vpack.c.b16 %v1199, %v1197
        %v1294 = vpack.c.b16 %v1200, %v1198
        %v1295 = vpack.c.b16 %v1203, %v1201
        %v1296 = vpack.c.b16 %v1204, %v1202
        %v1297 = vpack.c.b16 %v1207, %v1205
        %v1298 = vpack.c.b16 %v1208, %v1206
        %v1299 = vpack.c.b16 %v1211, %v1209
        %v1300 = vpack.c.b16 %v1212, %v1210
        %v1301 = vpack.c.b16 %v1215, %v1213
        %v1302 = vpack.c.b16 %v1216, %v1214
        %v1303 = vpack.c.b16 %v1219, %v1217
        %v1304 = vpack.c.b16 %v1220, %v1218
        %v1305 = vpack.c.b16 %v1223, %v1221
        %v1306 = vpack.c.b16 %v1224, %v1222
        %v1307 = vpack.c.b16 %v1227, %v1225
        %v1308 = vpack.c.b16 %v1228, %v1226
        %v1309 = vpack.c.b16 %v1231, %v1229
        %v1310 = vpack.c.b16 %v1232, %v1230
        %v1311 = vpack.c.b16 %v1235, %v1233
        %v1312 = vpack.c.b16 %v1236, %v1234
        %v1313 = vpack.c.b16 %v1239, %v1237
        %v1314 = vpack.c.b16 %v1240, %v1238
        %v1315 = vpack.c.b16 %v1243, %v1241
        %v1316 = vpack.c.b16 %v1244, %v1242
        %v1317 = vpack.c.b16 %v1247, %v1245
        %v1318 = vpack.c.b16 %v1248, %v1246
        %v1319 = vpack.c.b16 %v1251, %v1249
        %v1320 = vpack.c.b16 %v1252, %v1250
        %v1321 = vpack.c.b16 %v1255, %v1253
        %v1322 = vpack.c.b16 %v1256, %v1254
        %v1323 = vpack.c.b16 %v1259, %v1257
        %v1324 = vpack.c.b16 %v1260, %v1258
        %v1325 = vpack.c.b16 %v1263, %v1261
        %v1326 = vpack.c.b16 %v1264, %v1262
        %v1327 = vpack.c.b16 %v1267, %v1265
        %v1328 = vpack.c.b16 %v1268, %v1266
        %v1329 = vpack.c.b16 %v1271, %v1269
        %v1330 = vpack.c.b16 %v1272, %v1270
        %v1331 = vpack.c.b16 %v1275, %v1273
        %v1332 = vpack.c.b16 %v1276, %v1274
        %v1333 = vpack.c.b16 %v1279, %v1277
        %v1334 = vpack.c.b16 %v1280, %v1278
        %v1335 = vpack.c.b16 %v1283, %v1281
        %v1336 = vpack.c.b16 %v1284, %v1282
        %v1337 = vpack.c.b16 %v1287, %v1285
        %v1338 = vpack.c.b16 %v1288, %v1286
        %v1339 = vpack.c.b16 %v1291, %v1289
        %v1340 = vpack.c.b16 %v1292, %v1290
        %1389 = vmatprep.subr.bf16.mxu0 %v1294
        %1390 = vmatpush1.bf16.msra.mxu0 %v1293
        %1391 = vmatprep.subr.bf16.mxu0 %v1296
        %1392 = vmatpush1.bf16.msra.mxu0 %v1295
        %1393 = vmatprep.subr.bf16.mxu0 %v1298
        %1394 = vmatpush1.bf16.msra.mxu0 %v1297
        %1395 = vmatprep.subr.bf16.mxu0 %v1300
        %1396 = vmatpush1.bf16.msra.mxu0 %v1299
        %1397 = vmatprep.subr.bf16.mxu0 %v1302
        %1398 = vmatpush1.bf16.msra.mxu0 %v1301
        %1399 = vmatprep.subr.bf16.mxu0 %v1304
        %1400 = vmatpush1.bf16.msra.mxu0 %v1303
        %1401 = vmatprep.subr.bf16.mxu0 %v1306
        %1402 = vmatpush1.bf16.msra.mxu0 %v1305
        %1403 = vmatprep.subr.bf16.mxu0 %v1308
        %1404 = vmatpush1.bf16.msra.mxu0 %v1307
        %1405 = vmatprep.subr.bf16.mxu0 %v1310
        %1406 = vmatpush1.bf16.msra.mxu0 %v1309
        %1407 = vmatprep.subr.bf16.mxu0 %v1312
        %1408 = vmatpush1.bf16.msra.mxu0 %v1311
        %1409 = vmatprep.subr.bf16.mxu0 %v1314
        %1410 = vmatpush1.bf16.msra.mxu0 %v1313
        %1411 = vmatprep.subr.bf16.mxu0 %v1316
        %1412 = vmatpush1.bf16.msra.mxu0 %v1315
        %1413 = vmatprep.subr.bf16.mxu0 %v1318
        %1414 = vmatpush1.bf16.msra.mxu0 %v1317
        %1415 = vmatprep.subr.bf16.mxu0 %v1320
        %1416 = vmatpush1.bf16.msra.mxu0 %v1319
        %1417 = vmatprep.subr.bf16.mxu0 %v1322
        %1418 = vmatpush1.bf16.msra.mxu0 %v1321
        %1419 = vmatprep.subr.bf16.mxu0 %v1324
        %1420 = vmatpush1.bf16.msra.mxu0 %v1323
        %1421 = vmatprep.mubr.bf16.mxu0 %v956
        %1422 = vmatmul.mubr.bf16.gmra.mrb[0].mxu0 %v955
        %v1423 = vpop.f32.mrb[0].mxu0
        %v1424 = vadd.f32 0.0, %v1423
        %v1425 = vpop.f32.mrb[0].mxu0
        %v1426 = vadd.f32 0.0, %v1425
        %v1427 = vpop.f32.mrb[0].mxu0
        %v1428 = vadd.f32 0.0, %v1427
        %v1429 = vpop.f32.mrb[0].mxu0
        %v1430 = vadd.f32 0.0, %v1429
        %1431 = vmatprep.mubr.bf16.mxu0 %v959
        %1432 = vmatmul.mubr.bf16.gmra.mrb[0].mxu0 %v958
        %v1433 = vpop.f32.mrb[0].mxu0
        %v1434 = vadd.f32 0.0, %v1433
        %v1435 = vpop.f32.mrb[0].mxu0
        %v1436 = vadd.f32 0.0, %v1435
        %v1437 = vpop.f32.mrb[0].mxu0
        %v1438 = vadd.f32 0.0, %v1437
        %v1439 = vpop.f32.mrb[0].mxu0
        %v1440 = vadd.f32 0.0, %v1439
        %1441 = vmatprep.mubr.bf16.mxu0 %v962
        %1442 = vmatmul.mubr.bf16.gmra.mrb[0].mxu0 %v961
        %v1443 = vpop.f32.mrb[0].mxu0
        %v1444 = vadd.f32 0.0, %v1443
        %v1445 = vpop.f32.mrb[0].mxu0
        %v1446 = vadd.f32 0.0, %v1445
        %v1447 = vpop.f32.mrb[0].mxu0
        %v1448 = vadd.f32 0.0, %v1447
        %v1449 = vpop.f32.mrb[0].mxu0
        %v1450 = vadd.f32 0.0, %v1449
        %1451 = vmatprep.mubr.bf16.mxu0 %v965
        %1452 = vmatmul.mubr.bf16.gmra.mrb[0].mxu0 %v964
        %v1453 = vpop.f32.mrb[0].mxu0
        %v1454 = vadd.f32 0.0, %v1453
        %v1455 = vpop.f32.mrb[0].mxu0
        %v1456 = vadd.f32 0.0, %v1455
        %v1457 = vpop.f32.mrb[0].mxu0
        %v1458 = vadd.f32 0.0, %v1457
        %v1459 = vpop.f32.mrb[0].mxu0
        %v1460 = vadd.f32 0.0, %v1459
        %1461 = vmatprep.mubr.bf16.mxu0 %v968
        %1462 = vmatmul.mubr.bf16.gmra.mrb[0].mxu0 %v967
        %v1463 = vpop.f32.mrb[0].mxu0
        %v1464 = vadd.f32 0.0, %v1463
        %v1465 = vpop.f32.mrb[0].mxu0
        %v1466 = vadd.f32 0.0, %v1465
        %v1467 = vpop.f32.mrb[0].mxu0
        %v1468 = vadd.f32 0.0, %v1467
        %v1469 = vpop.f32.mrb[0].mxu0
        %v1470 = vadd.f32 0.0, %v1469
        %1471 = vmatprep.mubr.bf16.mxu0 %v971
        %1472 = vmatmul.mubr.bf16.gmra.mrb[0].mxu0 %v970
        %v1473 = vpop.f32.mrb[0].mxu0
        %v1474 = vadd.f32 0.0, %v1473
        %v1475 = vpop.f32.mrb[0].mxu0
        %v1476 = vadd.f32 0.0, %v1475
        %v1477 = vpop.f32.mrb[0].mxu0
        %v1478 = vadd.f32 0.0, %v1477
        %v1479 = vpop.f32.mrb[0].mxu0
        %v1480 = vadd.f32 0.0, %v1479
        %1481 = vmatprep.mubr.bf16.mxu0 %v974
        %1482 = vmatmul.mubr.bf16.gmra.mrb[0].mxu0 %v973
        %v1483 = vpop.f32.mrb[0].mxu0
        %v1484 = vadd.f32 0.0, %v1483
        %v1485 = vpop.f32.mrb[0].mxu0
        %v1486 = vadd.f32 0.0, %v1485
        %v1487 = vpop.f32.mrb[0].mxu0
        %v1488 = vadd.f32 0.0, %v1487
        %v1489 = vpop.f32.mrb[0].mxu0
        %v1490 = vadd.f32 0.0, %v1489
        %1491 = vmatprep.mubr.bf16.mxu0 %v977
        %1492 = vmatmul.mubr.bf16.gmra.mrb[0].mxu0 %v976
        %v1493 = vpop.f32.mrb[0].mxu0
        %v1494 = vadd.f32 0.0, %v1493
        %v1495 = vpop.f32.mrb[0].mxu0
        %v1496 = vadd.f32 0.0, %v1495
        %v1497 = vpop.f32.mrb[0].mxu0
        %v1498 = vadd.f32 0.0, %v1497
        %v1499 = vpop.f32.mrb[0].mxu0
        %v1500 = vadd.f32 0.0, %v1499
        %1501 = vmatprep.mubr.bf16.mxu0 %v980
        %1502 = vmatmul.mubr.bf16.gmra.mrb[0].mxu0 %v979
        %v1503 = vpop.f32.mrb[0].mxu0
        %v1504 = vadd.f32 0.0, %v1503
        %v1505 = vpop.f32.mrb[0].mxu0
        %v1506 = vadd.f32 0.0, %v1505
        %v1507 = vpop.f32.mrb[0].mxu0
        %v1508 = vadd.f32 0.0, %v1507
        %v1509 = vpop.f32.mrb[0].mxu0
        %v1510 = vadd.f32 0.0, %v1509
        %1511 = vmatprep.mubr.bf16.mxu0 %v983
        %1512 = vmatmul.mubr.bf16.gmra.mrb[0].mxu0 %v982
        %v1513 = vpop.f32.mrb[0].mxu0
        %v1514 = vadd.f32 0.0, %v1513
        %v1515 = vpop.f32.mrb[0].mxu0
        %v1516 = vadd.f32 0.0, %v1515
        %v1517 = vpop.f32.mrb[0].mxu0
        %v1518 = vadd.f32 0.0, %v1517
        %v1519 = vpop.f32.mrb[0].mxu0
        %v1520 = vadd.f32 0.0, %v1519
        %1521 = vmatprep.mubr.bf16.mxu0 %v986
        %1522 = vmatmul.mubr.bf16.gmra.mrb[0].mxu0 %v985
        %v1523 = vpop.f32.mrb[0].mxu0
        %v1524 = vadd.f32 0.0, %v1523
        %v1525 = vpop.f32.mrb[0].mxu0
        %v1526 = vadd.f32 0.0, %v1525
        %v1527 = vpop.f32.mrb[0].mxu0
        %v1528 = vadd.f32 0.0, %v1527
        %v1529 = vpop.f32.mrb[0].mxu0
        %v1530 = vadd.f32 0.0, %v1529
        %1531 = vmatprep.mubr.bf16.mxu0 %v989
        %1532 = vmatmul.mubr.bf16.gmra.mrb[0].mxu0 %v988
        %v1533 = vpop.f32.mrb[0].mxu0
        %v1534 = vadd.f32 0.0, %v1533
        %v1535 = vpop.f32.mrb[0].mxu0
        %v1536 = vadd.f32 0.0, %v1535
        %v1537 = vpop.f32.mrb[0].mxu0
        %v1538 = vadd.f32 0.0, %v1537
        %v1539 = vpop.f32.mrb[0].mxu0
        %v1540 = vadd.f32 0.0, %v1539
        %1541 = vmatprep.mubr.bf16.mxu0 %v992
        %1542 = vmatmul.mubr.bf16.gmra.mrb[0].mxu0 %v991
        %v1543 = vpop.f32.mrb[0].mxu0
        %v1544 = vadd.f32 0.0, %v1543
        %v1545 = vpop.f32.mrb[0].mxu0
        %v1546 = vadd.f32 0.0, %v1545
        %v1547 = vpop.f32.mrb[0].mxu0
        %v1548 = vadd.f32 0.0, %v1547
        %v1549 = vpop.f32.mrb[0].mxu0
        %v1550 = vadd.f32 0.0, %v1549
        %1551 = vmatprep.mubr.bf16.mxu0 %v995
        %1552 = vmatmul.mubr.bf16.gmra.mrb[0].mxu0 %v994
        %v1553 = vpop.f32.mrb[0].mxu0
        %v1554 = vadd.f32 0.0, %v1553
        %v1555 = vpop.f32.mrb[0].mxu0
        %v1556 = vadd.f32 0.0, %v1555
        %v1557 = vpop.f32.mrb[0].mxu0
        %v1558 = vadd.f32 0.0, %v1557
        %v1559 = vpop.f32.mrb[0].mxu0
        %v1560 = vadd.f32 0.0, %v1559
        %1561 = vmatprep.mubr.bf16.mxu0 %v998
        %1562 = vmatmul.mubr.bf16.gmra.mrb[0].mxu0 %v997
        %v1563 = vpop.f32.mrb[0].mxu0
        %v1564 = vadd.f32 0.0, %v1563
        %v1565 = vpop.f32.mrb[0].mxu0
        %v1566 = vadd.f32 0.0, %v1565
        %v1567 = vpop.f32.mrb[0].mxu0
        %v1568 = vadd.f32 0.0, %v1567
        %v1569 = vpop.f32.mrb[0].mxu0
        %v1570 = vadd.f32 0.0, %v1569
        %1571 = vmatprep.mubr.bf16.mxu0 %v1001
        %1572 = vmatmul.mubr.bf16.gmra.mrb[0].mxu0 %v1000
        %v1573 = vpop.f32.mrb[0].mxu0
        %v1574 = vadd.f32 0.0, %v1573
        %v1575 = vpop.f32.mrb[0].mxu0
        %v1576 = vadd.f32 0.0, %v1575
        %v1577 = vpop.f32.mrb[0].mxu0
        %v1578 = vadd.f32 0.0, %v1577
        %v1579 = vpop.f32.mrb[0].mxu0
        %v1580 = vadd.f32 0.0, %v1579
        %1581 = vdwg.mxu0
        %1582 = vmatprep.subr.bf16.mxu0 %v1326
        %1583 = vmatpush1.bf16.msra.mxu0 %v1325
        %1584 = vmatprep.subr.bf16.mxu0 %v1328
        %1585 = vmatpush1.bf16.msra.mxu0 %v1327
        %1586 = vmatprep.subr.bf16.mxu0 %v1330
        %1587 = vmatpush1.bf16.msra.mxu0 %v1329
        %1588 = vmatprep.subr.bf16.mxu0 %v1332
        %1589 = vmatpush1.bf16.msra.mxu0 %v1331
        %1590 = vmatprep.subr.bf16.mxu0 %v1334
        %1591 = vmatpush1.bf16.msra.mxu0 %v1333
        %1592 = vmatprep.subr.bf16.mxu0 %v1336
        %1593 = vmatpush1.bf16.msra.mxu0 %v1335
        %1594 = vmatprep.subr.bf16.mxu0 %v1338
        %1595 = vmatpush1.bf16.msra.mxu0 %v1337
        %1596 = vmatprep.subr.bf16.mxu0 %v1340
        %1597 = vmatpush1.bf16.msra.mxu0 %v1339
        %1598 = vmatprep.subr.bf16.mxu0 0
        %1599 = vmatpush1.bf16.msra.mxu0 0
        %1600 = vmatprep.subr.bf16.mxu0 0
        %1601 = vmatpush1.bf16.msra.mxu0 0
        %1602 = vmatprep.subr.bf16.mxu0 0
        %1603 = vmatpush1.bf16.msra.mxu0 0
        %1604 = vmatprep.subr.bf16.mxu0 0
        %1605 = vmatpush1.bf16.msra.mxu0 0
        %1606 = vmatprep.subr.bf16.mxu0 0
        %1607 = vmatpush1.bf16.msra.mxu0 0
        %1608 = vmatprep.subr.bf16.mxu0 0
        %1609 = vmatpush1.bf16.msra.mxu0 0
        %1610 = vmatprep.subr.bf16.mxu0 0
        %1611 = vmatpush1.bf16.msra.mxu0 0
        %1612 = vmatprep.subr.bf16.mxu0 0
        %1613 = vmatpush1.bf16.msra.mxu0 0
        %1614 = vmatprep.mubr.bf16.mxu0 0
        %1615 = vmatmul.mubr.bf16.gmra.mrb[0].mxu0 %v957
        %v1616 = vpop.f32.mrb[0].mxu0
        %v1617 = vadd.f32 %v1424, %v1616
        %v1618 = vpop.f32.mrb[0].mxu0
        %v1619 = vadd.f32 %v1426, %v1618
        %v1620 = vpop.f32.mrb[0].mxu0
        %v1621 = vadd.f32 %v1428, %v1620
        %v1622 = vpop.f32.mrb[0].mxu0
        %v1623 = vadd.f32 %v1430, %v1622
        %1624 = vmatprep.mubr.bf16.mxu0 0
        %1625 = vmatmul.mubr.bf16.gmra.mrb[0].mxu0 %v960
        %v1626 = vpop.f32.mrb[0].mxu0
        %v1627 = vadd.f32 %v1434, %v1626
        %v1628 = vpop.f32.mrb[0].mxu0
        %v1629 = vadd.f32 %v1436, %v1628
        %v1630 = vpop.f32.mrb[0].mxu0
        %v1631 = vadd.f32 %v1438, %v1630
        %v1632 = vpop.f32.mrb[0].mxu0
        %v1633 = vadd.f32 %v1440, %v1632
        %1634 = vmatprep.mubr.bf16.mxu0 0
        %1635 = vmatmul.mubr.bf16.gmra.mrb[0].mxu0 %v963
        %v1636 = vpop.f32.mrb[0].mxu0
        %v1637 = vadd.f32 %v1444, %v1636
        %v1638 = vpop.f32.mrb[0].mxu0
        %v1639 = vadd.f32 %v1446, %v1638
        %v1640 = vpop.f32.mrb[0].mxu0
        %v1641 = vadd.f32 %v1448, %v1640
        %v1642 = vpop.f32.mrb[0].mxu0
        %v1643 = vadd.f32 %v1450, %v1642
        %1644 = vmatprep.mubr.bf16.mxu0 0
        %1645 = vmatmul.mubr.bf16.gmra.mrb[0].mxu0 %v966
        %v1646 = vpop.f32.mrb[0].mxu0
        %v1647 = vadd.f32 %v1454, %v1646
        %v1648 = vpop.f32.mrb[0].mxu0
        %v1649 = vadd.f32 %v1456, %v1648
        %v1650 = vpop.f32.mrb[0].mxu0
        %v1651 = vadd.f32 %v1458, %v1650
        %v1652 = vpop.f32.mrb[0].mxu0
        %v1653 = vadd.f32 %v1460, %v1652
        %1654 = vmatprep.mubr.bf16.mxu0 0
        %1655 = vmatmul.mubr.bf16.gmra.mrb[0].mxu0 %v969
        %v1656 = vpop.f32.mrb[0].mxu0
        %v1657 = vadd.f32 %v1464, %v1656
        %v1658 = vpop.f32.mrb[0].mxu0
        %v1659 = vadd.f32 %v1466, %v1658
        %v1660 = vpop.f32.mrb[0].mxu0
        %v1661 = vadd.f32 %v1468, %v1660
        %v1662 = vpop.f32.mrb[0].mxu0
        %v1663 = vadd.f32 %v1470, %v1662
        %1664 = vmatprep.mubr.bf16.mxu0 0
        %1665 = vmatmul.mubr.bf16.gmra.mrb[0].mxu0 %v972
        %v1666 = vpop.f32.mrb[0].mxu0
        %v1667 = vadd.f32 %v1474, %v1666
        %v1668 = vpop.f32.mrb[0].mxu0
        %v1669 = vadd.f32 %v1476, %v1668
        %v1670 = vpop.f32.mrb[0].mxu0
        %v1671 = vadd.f32 %v1478, %v1670
        %v1672 = vpop.f32.mrb[0].mxu0
        %v1673 = vadd.f32 %v1480, %v1672
        %1674 = vmatprep.mubr.bf16.mxu0 0
        %1675 = vmatmul.mubr.bf16.gmra.mrb[0].mxu0 %v975
        %v1676 = vpop.f32.mrb[0].mxu0
        %v1677 = vadd.f32 %v1484, %v1676
        %v1678 = vpop.f32.mrb[0].mxu0
        %v1679 = vadd.f32 %v1486, %v1678
        %v1680 = vpop.f32.mrb[0].mxu0
        %v1681 = vadd.f32 %v1488, %v1680
        %v1682 = vpop.f32.mrb[0].mxu0
        %v1683 = vadd.f32 %v1490, %v1682
        %1684 = vmatprep.mubr.bf16.mxu0 0
        %1685 = vmatmul.mubr.bf16.gmra.mrb[0].mxu0 %v978
        %v1686 = vpop.f32.mrb[0].mxu0
        %v1687 = vadd.f32 %v1494, %v1686
        %v1688 = vpop.f32.mrb[0].mxu0
        %v1689 = vadd.f32 %v1496, %v1688
        %v1690 = vpop.f32.mrb[0].mxu0
        %v1691 = vadd.f32 %v1498, %v1690
        %v1692 = vpop.f32.mrb[0].mxu0
        %v1693 = vadd.f32 %v1500, %v1692
        %1694 = vmatprep.mubr.bf16.mxu0 0
        %1695 = vmatmul.mubr.bf16.gmra.mrb[0].mxu0 %v981
        %v1696 = vpop.f32.mrb[0].mxu0
        %v1697 = vadd.f32 %v1504, %v1696
        %v1698 = vpop.f32.mrb[0].mxu0
        %v1699 = vadd.f32 %v1506, %v1698
        %v1700 = vpop.f32.mrb[0].mxu0
        %v1701 = vadd.f32 %v1508, %v1700
        %v1702 = vpop.f32.mrb[0].mxu0
        %v1703 = vadd.f32 %v1510, %v1702
        %1704 = vmatprep.mubr.bf16.mxu0 0
        %1705 = vmatmul.mubr.bf16.gmra.mrb[0].mxu0 %v984
        %v1706 = vpop.f32.mrb[0].mxu0
        %v1707 = vadd.f32 %v1514, %v1706
        %v1708 = vpop.f32.mrb[0].mxu0
        %v1709 = vadd.f32 %v1516, %v1708
        %v1710 = vpop.f32.mrb[0].mxu0
        %v1711 = vadd.f32 %v1518, %v1710
        %v1712 = vpop.f32.mrb[0].mxu0
        %v1713 = vadd.f32 %v1520, %v1712
        %1714 = vmatprep.mubr.bf16.mxu0 0
        %1715 = vmatmul.mubr.bf16.gmra.mrb[0].mxu0 %v987
        %v1716 = vpop.f32.mrb[0].mxu0
        %v1717 = vadd.f32 %v1524, %v1716
        %v1718 = vpop.f32.mrb[0].mxu0
        %v1719 = vadd.f32 %v1526, %v1718
        %v1720 = vpop.f32.mrb[0].mxu0
        %v1721 = vadd.f32 %v1528, %v1720
        %v1722 = vpop.f32.mrb[0].mxu0
        %v1723 = vadd.f32 %v1530, %v1722
        %1724 = vmatprep.mubr.bf16.mxu0 0
        %1725 = vmatmul.mubr.bf16.gmra.mrb[0].mxu0 %v990
        %v1726 = vpop.f32.mrb[0].mxu0
        %v1727 = vadd.f32 %v1534, %v1726
        %v1728 = vpop.f32.mrb[0].mxu0
        %v1729 = vadd.f32 %v1536, %v1728
        %v1730 = vpop.f32.mrb[0].mxu0
        %v1731 = vadd.f32 %v1538, %v1730
        %v1732 = vpop.f32.mrb[0].mxu0
        %v1733 = vadd.f32 %v1540, %v1732
        %1734 = vmatprep.mubr.bf16.mxu0 0
        %1735 = vmatmul.mubr.bf16.gmra.mrb[0].mxu0 %v993
        %v1736 = vpop.f32.mrb[0].mxu0
        %v1737 = vadd.f32 %v1544, %v1736
        %v1738 = vpop.f32.mrb[0].mxu0
        %v1739 = vadd.f32 %v1546, %v1738
        %v1740 = vpop.f32.mrb[0].mxu0
        %v1741 = vadd.f32 %v1548, %v1740
        %v1742 = vpop.f32.mrb[0].mxu0
        %v1743 = vadd.f32 %v1550, %v1742
        %1744 = vmatprep.mubr.bf16.mxu0 0
        %1745 = vmatmul.mubr.bf16.gmra.mrb[0].mxu0 %v996
        %v1746 = vpop.f32.mrb[0].mxu0
        %v1747 = vadd.f32 %v1554, %v1746
        %v1748 = vpop.f32.mrb[0].mxu0
        %v1749 = vadd.f32 %v1556, %v1748
        %v1750 = vpop.f32.mrb[0].mxu0
        %v1751 = vadd.f32 %v1558, %v1750
        %v1752 = vpop.f32.mrb[0].mxu0
        %v1753 = vadd.f32 %v1560, %v1752
        %1754 = vmatprep.mubr.bf16.mxu0 0
        %1755 = vmatmul.mubr.bf16.gmra.mrb[0].mxu0 %v999
        %v1756 = vpop.f32.mrb[0].mxu0
        %v1757 = vadd.f32 %v1564, %v1756
        %v1758 = vpop.f32.mrb[0].mxu0
        %v1759 = vadd.f32 %v1566, %v1758
        %v1760 = vpop.f32.mrb[0].mxu0
        %v1761 = vadd.f32 %v1568, %v1760
        %v1762 = vpop.f32.mrb[0].mxu0
        %v1763 = vadd.f32 %v1570, %v1762
        %1764 = vmatprep.mubr.bf16.mxu0 0
        %1765 = vmatmul.mubr.bf16.gmra.mrb[0].mxu0 %v1002
        %v1766 = vpop.f32.mrb[0].mxu0
        %v1767 = vadd.f32 %v1574, %v1766
        %v1768 = vpop.f32.mrb[0].mxu0
        %v1769 = vadd.f32 %v1576, %v1768
        %v1770 = vpop.f32.mrb[0].mxu0
        %v1771 = vadd.f32 %v1578, %v1770
        %v1772 = vpop.f32.mrb[0].mxu0
        %v1773 = vadd.f32 %v1580, %v1772
        %1774 = vdwg.mxu0
        %v1823 = vunpack.c.l.b16 %v1052
        %v1824 = vunpack.c.h.b16 %v1052
        %v1825 = vunpack.c.l.b16 %v1053
        %v1826 = vunpack.c.h.b16 %v1053
        %v1827 = vunpack.c.l.b16 %v1054
        %v1828 = vunpack.c.h.b16 %v1054
        %v1829 = vunpack.c.l.b16 %v1055
        %v1830 = vunpack.c.h.b16 %v1055
        %v1831 = vunpack.c.l.b16 %v1056
        %v1832 = vunpack.c.h.b16 %v1056
        %v1833 = vunpack.c.l.b16 %v1057
        %v1834 = vunpack.c.h.b16 %v1057
        %v1835 = vunpack.c.l.b16 %v1058
        %v1836 = vunpack.c.h.b16 %v1058
        %v1837 = vunpack.c.l.b16 %v1059
        %v1838 = vunpack.c.h.b16 %v1059
        %v1839 = vunpack.c.l.b16 %v1060
        %v1840 = vunpack.c.h.b16 %v1060
        %v1841 = vunpack.c.l.b16 %v1061
        %v1842 = vunpack.c.h.b16 %v1061
        %v1843 = vunpack.c.l.b16 %v1062
        %v1844 = vunpack.c.h.b16 %v1062
        %v1845 = vunpack.c.l.b16 %v1063
        %v1846 = vunpack.c.h.b16 %v1063
        %v1847 = vunpack.c.l.b16 %v1064
        %v1848 = vunpack.c.h.b16 %v1064
        %v1849 = vunpack.c.l.b16 %v1065
        %v1850 = vunpack.c.h.b16 %v1065
        %v1851 = vunpack.c.l.b16 %v1066
        %v1852 = vunpack.c.h.b16 %v1066
        %v1853 = vunpack.c.l.b16 %v1067
        %v1854 = vunpack.c.h.b16 %v1067
        %v1855 = vunpack.c.l.b16 %v1068
        %v1856 = vunpack.c.h.b16 %v1068
        %v1857 = vunpack.c.l.b16 %v1069
        %v1858 = vunpack.c.h.b16 %v1069
        %v1859 = vunpack.c.l.b16 %v1070
        %v1860 = vunpack.c.h.b16 %v1070
        %v1861 = vunpack.c.l.b16 %v1071
        %v1862 = vunpack.c.h.b16 %v1071
        %v1863 = vunpack.c.l.b16 %v1072
        %v1864 = vunpack.c.h.b16 %v1072
        %v1865 = vunpack.c.l.b16 %v1073
        %v1866 = vunpack.c.h.b16 %v1073
        %v1867 = vunpack.c.l.b16 %v1074
        %v1868 = vunpack.c.h.b16 %v1074
        %v1869 = vunpack.c.l.b16 %v1075
        %v1870 = vunpack.c.h.b16 %v1075
        %v1871 = vunpack.c.l.b16 %v1076
        %v1872 = vunpack.c.h.b16 %v1076
        %v1873 = vunpack.c.l.b16 %v1077
        %v1874 = vunpack.c.h.b16 %v1077
        %v1875 = vunpack.c.l.b16 %v1078
        %v1876 = vunpack.c.h.b16 %v1078
        %v1877 = vunpack.c.l.b16 %v1079
        %v1878 = vunpack.c.h.b16 %v1079
        %v1879 = vunpack.c.l.b16 %v1080
        %v1880 = vunpack.c.h.b16 %v1080
        %v1881 = vunpack.c.l.b16 %v1081
        %v1882 = vunpack.c.h.b16 %v1081
        %v1883 = vunpack.c.l.b16 %v1082
        %v1884 = vunpack.c.h.b16 %v1082
        %v1885 = vunpack.c.l.b16 %v1083
        %v1886 = vunpack.c.h.b16 %v1083
        %v1887 = vunpack.c.l.b16 %v1084
        %v1888 = vunpack.c.h.b16 %v1084
        %v1889 = vunpack.c.l.b16 %v1085
        %v1890 = vunpack.c.h.b16 %v1085
        %v1891 = vunpack.c.l.b16 %v1086
        %v1892 = vunpack.c.h.b16 %v1086
        %v1893 = vunpack.c.l.b16 %v1087
        %v1894 = vunpack.c.h.b16 %v1087
        %v1895 = vunpack.c.l.b16 %v1088
        %v1896 = vunpack.c.h.b16 %v1088
        %v1897 = vunpack.c.l.b16 %v1089
        %v1898 = vunpack.c.h.b16 %v1089
        %v1899 = vunpack.c.l.b16 %v1090
        %v1900 = vunpack.c.h.b16 %v1090
        %v1901 = vunpack.c.l.b16 %v1091
        %v1902 = vunpack.c.h.b16 %v1091
        %v1903 = vunpack.c.l.b16 %v1092
        %v1904 = vunpack.c.h.b16 %v1092
        %v1905 = vunpack.c.l.b16 %v1093
        %v1906 = vunpack.c.h.b16 %v1093
        %v1907 = vunpack.c.l.b16 %v1094
        %v1908 = vunpack.c.h.b16 %v1094
        %v1909 = vunpack.c.l.b16 %v1095
        %v1910 = vunpack.c.h.b16 %v1095
        %v1911 = vunpack.c.l.b16 %v1096
        %v1912 = vunpack.c.h.b16 %v1096
        %v1913 = vunpack.c.l.b16 %v1097
        %v1914 = vunpack.c.h.b16 %v1097
        %v1915 = vunpack.c.l.b16 %v1098
        %v1916 = vunpack.c.h.b16 %v1098
        %v1917 = vunpack.c.l.b16 %v1099
        %v1918 = vunpack.c.h.b16 %v1099
        %v1919 = vpack.c.b16 %v1825, %v1823
        %v1920 = vpack.c.b16 %v1826, %v1824
        %v1921 = vpack.c.b16 %v1829, %v1827
        %v1922 = vpack.c.b16 %v1830, %v1828
        %v1923 = vpack.c.b16 %v1833, %v1831
        %v1924 = vpack.c.b16 %v1834, %v1832
        %v1925 = vpack.c.b16 %v1837, %v1835
        %v1926 = vpack.c.b16 %v1838, %v1836
        %v1927 = vpack.c.b16 %v1841, %v1839
        %v1928 = vpack.c.b16 %v1842, %v1840
        %v1929 = vpack.c.b16 %v1845, %v1843
        %v1930 = vpack.c.b16 %v1846, %v1844
        %v1931 = vpack.c.b16 %v1849, %v1847
        %v1932 = vpack.c.b16 %v1850, %v1848
        %v1933 = vpack.c.b16 %v1853, %v1851
        %v1934 = vpack.c.b16 %v1854, %v1852
        %v1935 = vpack.c.b16 %v1857, %v1855
        %v1936 = vpack.c.b16 %v1858, %v1856
        %v1937 = vpack.c.b16 %v1861, %v1859
        %v1938 = vpack.c.b16 %v1862, %v1860
        %v1939 = vpack.c.b16 %v1865, %v1863
        %v1940 = vpack.c.b16 %v1866, %v1864
        %v1941 = vpack.c.b16 %v1869, %v1867
        %v1942 = vpack.c.b16 %v1870, %v1868
        %v1943 = vpack.c.b16 %v1873, %v1871
        %v1944 = vpack.c.b16 %v1874, %v1872
        %v1945 = vpack.c.b16 %v1877, %v1875
        %v1946 = vpack.c.b16 %v1878, %v1876
        %v1947 = vpack.c.b16 %v1881, %v1879
        %v1948 = vpack.c.b16 %v1882, %v1880
        %v1949 = vpack.c.b16 %v1885, %v1883
        %v1950 = vpack.c.b16 %v1886, %v1884
        %v1951 = vpack.c.b16 %v1889, %v1887
        %v1952 = vpack.c.b16 %v1890, %v1888
        %v1953 = vpack.c.b16 %v1893, %v1891
        %v1954 = vpack.c.b16 %v1894, %v1892
        %v1955 = vpack.c.b16 %v1897, %v1895
        %v1956 = vpack.c.b16 %v1898, %v1896
        %v1957 = vpack.c.b16 %v1901, %v1899
        %v1958 = vpack.c.b16 %v1902, %v1900
        %v1959 = vpack.c.b16 %v1905, %v1903
        %v1960 = vpack.c.b16 %v1906, %v1904
        %v1961 = vpack.c.b16 %v1909, %v1907
        %v1962 = vpack.c.b16 %v1910, %v1908
        %v1963 = vpack.c.b16 %v1913, %v1911
        %v1964 = vpack.c.b16 %v1914, %v1912
        %v1965 = vpack.c.b16 %v1917, %v1915
        %v1966 = vpack.c.b16 %v1918, %v1916
        %2015 = vmatprep.subr.bf16.mxu0 %v1920
        %2016 = vmatpush1.bf16.msra.mxu0 %v1919
        %2017 = vmatprep.subr.bf16.mxu0 %v1922
        %2018 = vmatpush1.bf16.msra.mxu0 %v1921
        %2019 = vmatprep.subr.bf16.mxu0 %v1924
        %2020 = vmatpush1.bf16.msra.mxu0 %v1923
        %2021 = vmatprep.subr.bf16.mxu0 %v1926
        %2022 = vmatpush1.bf16.msra.mxu0 %v1925
        %2023 = vmatprep.subr.bf16.mxu0 %v1928
        %2024 = vmatpush1.bf16.msra.mxu0 %v1927
        %2025 = vmatprep.subr.bf16.mxu0 %v1930
        %2026 = vmatpush1.bf16.msra.mxu0 %v1929
        %2027 = vmatprep.subr.bf16.mxu0 %v1932
        %2028 = vmatpush1.bf16.msra.mxu0 %v1931
        %2029 = vmatprep.subr.bf16.mxu0 %v1934
        %2030 = vmatpush1.bf16.msra.mxu0 %v1933
        %2031 = vmatprep.subr.bf16.mxu0 %v1936
        %2032 = vmatpush1.bf16.msra.mxu0 %v1935
        %2033 = vmatprep.subr.bf16.mxu0 %v1938
        %2034 = vmatpush1.bf16.msra.mxu0 %v1937
        %2035 = vmatprep.subr.bf16.mxu0 %v1940
        %2036 = vmatpush1.bf16.msra.mxu0 %v1939
        %2037 = vmatprep.subr.bf16.mxu0 %v1942
        %2038 = vmatpush1.bf16.msra.mxu0 %v1941
        %2039 = vmatprep.subr.bf16.mxu0 %v1944
        %2040 = vmatpush1.bf16.msra.mxu0 %v1943
        %2041 = vmatprep.subr.bf16.mxu0 %v1946
        %2042 = vmatpush1.bf16.msra.mxu0 %v1945
        %2043 = vmatprep.subr.bf16.mxu0 %v1948
        %2044 = vmatpush1.bf16.msra.mxu0 %v1947
        %2045 = vmatprep.subr.bf16.mxu0 %v1950
        %2046 = vmatpush1.bf16.msra.mxu0 %v1949
        %2047 = vmatprep.mubr.bf16.mxu0 %v908
        %2048 = vmatmul.mubr.bf16.gmra.mrb[0].mxu0 %v907
        %v2049 = vpop.f32.mrb[0].mxu0
        %v2050 = vadd.f32 %v1617, %v2049
        %v2051 = vpop.f32.mrb[0].mxu0
        %v2052 = vadd.f32 %v1619, %v2051
        %v2053 = vpop.f32.mrb[0].mxu0
        %v2054 = vadd.f32 %v1621, %v2053
        %v2055 = vpop.f32.mrb[0].mxu0
        %v2056 = vadd.f32 %v1623, %v2055
        %2057 = vmatprep.mubr.bf16.mxu0 %v911
        %2058 = vmatmul.mubr.bf16.gmra.mrb[0].mxu0 %v910
        %v2059 = vpop.f32.mrb[0].mxu0
        %v2060 = vadd.f32 %v1627, %v2059
        %v2061 = vpop.f32.mrb[0].mxu0
        %v2062 = vadd.f32 %v1629, %v2061
        %v2063 = vpop.f32.mrb[0].mxu0
        %v2064 = vadd.f32 %v1631, %v2063
        %v2065 = vpop.f32.mrb[0].mxu0
        %v2066 = vadd.f32 %v1633, %v2065
        %2067 = vmatprep.mubr.bf16.mxu0 %v914
        %2068 = vmatmul.mubr.bf16.gmra.mrb[0].mxu0 %v913
        %v2069 = vpop.f32.mrb[0].mxu0
        %v2070 = vadd.f32 %v1637, %v2069
        %v2071 = vpop.f32.mrb[0].mxu0
        %v2072 = vadd.f32 %v1639, %v2071
        %v2073 = vpop.f32.mrb[0].mxu0
        %v2074 = vadd.f32 %v1641, %v2073
        %v2075 = vpop.f32.mrb[0].mxu0
        %v2076 = vadd.f32 %v1643, %v2075
        %2077 = vmatprep.mubr.bf16.mxu0 %v917
        %2078 = vmatmul.mubr.bf16.gmra.mrb[0].mxu0 %v916
        %v2079 = vpop.f32.mrb[0].mxu0
        %v2080 = vadd.f32 %v1647, %v2079
        %v2081 = vpop.f32.mrb[0].mxu0
        %v2082 = vadd.f32 %v1649, %v2081
        %v2083 = vpop.f32.mrb[0].mxu0
        %v2084 = vadd.f32 %v1651, %v2083
        %v2085 = vpop.f32.mrb[0].mxu0
        %v2086 = vadd.f32 %v1653, %v2085
        %2087 = vmatprep.mubr.bf16.mxu0 %v920
        %2088 = vmatmul.mubr.bf16.gmra.mrb[0].mxu0 %v919
        %v2089 = vpop.f32.mrb[0].mxu0
        %v2090 = vadd.f32 %v1657, %v2089
        %v2091 = vpop.f32.mrb[0].mxu0
        %v2092 = vadd.f32 %v1659, %v2091
        %v2093 = vpop.f32.mrb[0].mxu0
        %v2094 = vadd.f32 %v1661, %v2093
        %v2095 = vpop.f32.mrb[0].mxu0
        %v2096 = vadd.f32 %v1663, %v2095
        %2097 = vmatprep.mubr.bf16.mxu0 %v923
        %2098 = vmatmul.mubr.bf16.gmra.mrb[0].mxu0 %v922
        %v2099 = vpop.f32.mrb[0].mxu0
        %v2100 = vadd.f32 %v1667, %v2099
        %v2101 = vpop.f32.mrb[0].mxu0
        %v2102 = vadd.f32 %v1669, %v2101
        %v2103 = vpop.f32.mrb[0].mxu0
        %v2104 = vadd.f32 %v1671, %v2103
        %v2105 = vpop.f32.mrb[0].mxu0
        %v2106 = vadd.f32 %v1673, %v2105
        %2107 = vmatprep.mubr.bf16.mxu0 %v926
        %2108 = vmatmul.mubr.bf16.gmra.mrb[0].mxu0 %v925
        %v2109 = vpop.f32.mrb[0].mxu0
        %v2110 = vadd.f32 %v1677, %v2109
        %v2111 = vpop.f32.mrb[0].mxu0
        %v2112 = vadd.f32 %v1679, %v2111
        %v2113 = vpop.f32.mrb[0].mxu0
        %v2114 = vadd.f32 %v1681, %v2113
        %v2115 = vpop.f32.mrb[0].mxu0
        %v2116 = vadd.f32 %v1683, %v2115
        %2117 = vmatprep.mubr.bf16.mxu0 %v929
        %2118 = vmatmul.mubr.bf16.gmra.mrb[0].mxu0 %v928
        %v2119 = vpop.f32.mrb[0].mxu0
        %v2120 = vadd.f32 %v1687, %v2119
        %v2121 = vpop.f32.mrb[0].mxu0
        %v2122 = vadd.f32 %v1689, %v2121
        %v2123 = vpop.f32.mrb[0].mxu0
        %v2124 = vadd.f32 %v1691, %v2123
        %v2125 = vpop.f32.mrb[0].mxu0
        %v2126 = vadd.f32 %v1693, %v2125
        %2127 = vmatprep.mubr.bf16.mxu0 %v932
        %2128 = vmatmul.mubr.bf16.gmra.mrb[0].mxu0 %v931
        %v2129 = vpop.f32.mrb[0].mxu0
        %v2130 = vadd.f32 %v1697, %v2129
        %v2131 = vpop.f32.mrb[0].mxu0
        %v2132 = vadd.f32 %v1699, %v2131
        %v2133 = vpop.f32.mrb[0].mxu0
        %v2134 = vadd.f32 %v1701, %v2133
        %v2135 = vpop.f32.mrb[0].mxu0
        %v2136 = vadd.f32 %v1703, %v2135
        %2137 = vmatprep.mubr.bf16.mxu0 %v935
        %2138 = vmatmul.mubr.bf16.gmra.mrb[0].mxu0 %v934
        %v2139 = vpop.f32.mrb[0].mxu0
        %v2140 = vadd.f32 %v1707, %v2139
        %v2141 = vpop.f32.mrb[0].mxu0
        %v2142 = vadd.f32 %v1709, %v2141
        %v2143 = vpop.f32.mrb[0].mxu0
        %v2144 = vadd.f32 %v1711, %v2143
        %v2145 = vpop.f32.mrb[0].mxu0
        %v2146 = vadd.f32 %v1713, %v2145
        %2147 = vmatprep.mubr.bf16.mxu0 %v938
        %2148 = vmatmul.mubr.bf16.gmra.mrb[0].mxu0 %v937
        %v2149 = vpop.f32.mrb[0].mxu0
        %v2150 = vadd.f32 %v1717, %v2149
        %v2151 = vpop.f32.mrb[0].mxu0
        %v2152 = vadd.f32 %v1719, %v2151
        %v2153 = vpop.f32.mrb[0].mxu0
        %v2154 = vadd.f32 %v1721, %v2153
        %v2155 = vpop.f32.mrb[0].mxu0
        %v2156 = vadd.f32 %v1723, %v2155
        %2157 = vmatprep.mubr.bf16.mxu0 %v941
        %2158 = vmatmul.mubr.bf16.gmra.mrb[0].mxu0 %v940
        %v2159 = vpop.f32.mrb[0].mxu0
        %v2160 = vadd.f32 %v1727, %v2159
        %v2161 = vpop.f32.mrb[0].mxu0
        %v2162 = vadd.f32 %v1729, %v2161
        %v2163 = vpop.f32.mrb[0].mxu0
        %v2164 = vadd.f32 %v1731, %v2163
        %v2165 = vpop.f32.mrb[0].mxu0
        %v2166 = vadd.f32 %v1733, %v2165
        %2167 = vmatprep.mubr.bf16.mxu0 %v944
        %2168 = vmatmul.mubr.bf16.gmra.mrb[0].mxu0 %v943
        %v2169 = vpop.f32.mrb[0].mxu0
        %v2170 = vadd.f32 %v1737, %v2169
        %v2171 = vpop.f32.mrb[0].mxu0
        %v2172 = vadd.f32 %v1739, %v2171
        %v2173 = vpop.f32.mrb[0].mxu0
        %v2174 = vadd.f32 %v1741, %v2173
        %v2175 = vpop.f32.mrb[0].mxu0
        %v2176 = vadd.f32 %v1743, %v2175
        %2177 = vmatprep.mubr.bf16.mxu0 %v947
        %2178 = vmatmul.mubr.bf16.gmra.mrb[0].mxu0 %v946
        %v2179 = vpop.f32.mrb[0].mxu0
        %v2180 = vadd.f32 %v1747, %v2179
        %v2181 = vpop.f32.mrb[0].mxu0
        %v2182 = vadd.f32 %v1749, %v2181
        %v2183 = vpop.f32.mrb[0].mxu0
        %v2184 = vadd.f32 %v1751, %v2183
        %v2185 = vpop.f32.mrb[0].mxu0
        %v2186 = vadd.f32 %v1753, %v2185
        %2187 = vmatprep.mubr.bf16.mxu0 %v950
        %2188 = vmatmul.mubr.bf16.gmra.mrb[0].mxu0 %v949
        %v2189 = vpop.f32.mrb[0].mxu0
        %v2190 = vadd.f32 %v1757, %v2189
        %v2191 = vpop.f32.mrb[0].mxu0
        %v2192 = vadd.f32 %v1759, %v2191
        %v2193 = vpop.f32.mrb[0].mxu0
        %v2194 = vadd.f32 %v1761, %v2193
        %v2195 = vpop.f32.mrb[0].mxu0
        %v2196 = vadd.f32 %v1763, %v2195
        %2197 = vmatprep.mubr.bf16.mxu0 %v953
        %2198 = vmatmul.mubr.bf16.gmra.mrb[0].mxu0 %v952
        %v2199 = vpop.f32.mrb[0].mxu0
        %v2200 = vadd.f32 %v1767, %v2199
        %v2201 = vpop.f32.mrb[0].mxu0
        %v2202 = vadd.f32 %v1769, %v2201
        %v2203 = vpop.f32.mrb[0].mxu0
        %v2204 = vadd.f32 %v1771, %v2203
        %v2205 = vpop.f32.mrb[0].mxu0
        %v2206 = vadd.f32 %v1773, %v2205
        %2207 = vdwg.mxu0
        %2208 = vmatprep.subr.bf16.mxu0 %v1952
        %2209 = vmatpush1.bf16.msra.mxu0 %v1951
        %2210 = vmatprep.subr.bf16.mxu0 %v1954
        %2211 = vmatpush1.bf16.msra.mxu0 %v1953
        %2212 = vmatprep.subr.bf16.mxu0 %v1956
        %2213 = vmatpush1.bf16.msra.mxu0 %v1955
        %2214 = vmatprep.subr.bf16.mxu0 %v1958
        %2215 = vmatpush1.bf16.msra.mxu0 %v1957
        %2216 = vmatprep.subr.bf16.mxu0 %v1960
        %2217 = vmatpush1.bf16.msra.mxu0 %v1959
        %2218 = vmatprep.subr.bf16.mxu0 %v1962
        %2219 = vmatpush1.bf16.msra.mxu0 %v1961
        %2220 = vmatprep.subr.bf16.mxu0 %v1964
        %2221 = vmatpush1.bf16.msra.mxu0 %v1963
        %2222 = vmatprep.subr.bf16.mxu0 %v1966
        %2223 = vmatpush1.bf16.msra.mxu0 %v1965
        %2224 = vmatprep.subr.bf16.mxu0 0
        %2225 = vmatpush1.bf16.msra.mxu0 0
        %2226 = vmatprep.subr.bf16.mxu0 0
        %2227 = vmatpush1.bf16.msra.mxu0 0
        %2228 = vmatprep.subr.bf16.mxu0 0
        %2229 = vmatpush1.bf16.msra.mxu0 0
        %2230 = vmatprep.subr.bf16.mxu0 0
        %2231 = vmatpush1.bf16.msra.mxu0 0
        %2232 = vmatprep.subr.bf16.mxu0 0
        %2233 = vmatpush1.bf16.msra.mxu0 0
        %2234 = vmatprep.subr.bf16.mxu0 0
        %2235 = vmatpush1.bf16.msra.mxu0 0
        %2236 = vmatprep.subr.bf16.mxu0 0
        %2237 = vmatpush1.bf16.msra.mxu0 0
        %2238 = vmatprep.subr.bf16.mxu0 0
        %2239 = vmatpush1.bf16.msra.mxu0 0
        %2240 = vmatprep.mubr.bf16.mxu0 0
        %2241 = vmatmul.mubr.bf16.gmra.mrb[0].mxu0 %v909
        %v2242 = vpop.f32.mrb[0].mxu0
        %v2243 = vadd.f32 %v2050, %v2242
        %v2244 = vpop.f32.mrb[0].mxu0
        %v2245 = vadd.f32 %v2052, %v2244
        %v2246 = vpop.f32.mrb[0].mxu0
        %v2247 = vadd.f32 %v2054, %v2246
        %v2248 = vpop.f32.mrb[0].mxu0
        %v2249 = vadd.f32 %v2056, %v2248
        %2250 = vmatprep.mubr.bf16.mxu0 0
        %2251 = vmatmul.mubr.bf16.gmra.mrb[0].mxu0 %v912
        %v2252 = vpop.f32.mrb[0].mxu0
        %v2253 = vadd.f32 %v2060, %v2252
        %v2254 = vpop.f32.mrb[0].mxu0
        %v2255 = vadd.f32 %v2062, %v2254
        %v2256 = vpop.f32.mrb[0].mxu0
        %v2257 = vadd.f32 %v2064, %v2256
        %v2258 = vpop.f32.mrb[0].mxu0
        %v2259 = vadd.f32 %v2066, %v2258
        %2260 = vmatprep.mubr.bf16.mxu0 0
        %2261 = vmatmul.mubr.bf16.gmra.mrb[0].mxu0 %v915
        %v2262 = vpop.f32.mrb[0].mxu0
        %v2263 = vadd.f32 %v2070, %v2262
        %v2264 = vpop.f32.mrb[0].mxu0
        %v2265 = vadd.f32 %v2072, %v2264
        %v2266 = vpop.f32.mrb[0].mxu0
        %v2267 = vadd.f32 %v2074, %v2266
        %v2268 = vpop.f32.mrb[0].mxu0
        %v2269 = vadd.f32 %v2076, %v2268
        %2270 = vmatprep.mubr.bf16.mxu0 0
        %2271 = vmatmul.mubr.bf16.gmra.mrb[0].mxu0 %v918
        %v2272 = vpop.f32.mrb[0].mxu0
        %v2273 = vadd.f32 %v2080, %v2272
        %v2274 = vpop.f32.mrb[0].mxu0
        %v2275 = vadd.f32 %v2082, %v2274
        %v2276 = vpop.f32.mrb[0].mxu0
        %v2277 = vadd.f32 %v2084, %v2276
        %v2278 = vpop.f32.mrb[0].mxu0
        %v2279 = vadd.f32 %v2086, %v2278
        %2280 = vmatprep.mubr.bf16.mxu0 0
        %2281 = vmatmul.mubr.bf16.gmra.mrb[0].mxu0 %v921
        %v2282 = vpop.f32.mrb[0].mxu0
        %v2283 = vadd.f32 %v2090, %v2282
        %v2284 = vpop.f32.mrb[0].mxu0
        %v2285 = vadd.f32 %v2092, %v2284
        %v2286 = vpop.f32.mrb[0].mxu0
        %v2287 = vadd.f32 %v2094, %v2286
        %v2288 = vpop.f32.mrb[0].mxu0
        %v2289 = vadd.f32 %v2096, %v2288
        %2290 = vmatprep.mubr.bf16.mxu0 0
        %2291 = vmatmul.mubr.bf16.gmra.mrb[0].mxu0 %v924
        %v2292 = vpop.f32.mrb[0].mxu0
        %v2293 = vadd.f32 %v2100, %v2292
        %v2294 = vpop.f32.mrb[0].mxu0
        %v2295 = vadd.f32 %v2102, %v2294
        %v2296 = vpop.f32.mrb[0].mxu0
        %v2297 = vadd.f32 %v2104, %v2296
        %v2298 = vpop.f32.mrb[0].mxu0
        %v2299 = vadd.f32 %v2106, %v2298
        %2300 = vmatprep.mubr.bf16.mxu0 0
        %2301 = vmatmul.mubr.bf16.gmra.mrb[0].mxu0 %v927
        %v2302 = vpop.f32.mrb[0].mxu0
        %v2303 = vadd.f32 %v2110, %v2302
        %v2304 = vpop.f32.mrb[0].mxu0
        %v2305 = vadd.f32 %v2112, %v2304
        %v2306 = vpop.f32.mrb[0].mxu0
        %v2307 = vadd.f32 %v2114, %v2306
        %v2308 = vpop.f32.mrb[0].mxu0
        %v2309 = vadd.f32 %v2116, %v2308
        %2310 = vmatprep.mubr.bf16.mxu0 0
        %2311 = vmatmul.mubr.bf16.gmra.mrb[0].mxu0 %v930
        %v2312 = vpop.f32.mrb[0].mxu0
        %v2313 = vadd.f32 %v2120, %v2312
        %v2314 = vpop.f32.mrb[0].mxu0
        %v2315 = vadd.f32 %v2122, %v2314
        %v2316 = vpop.f32.mrb[0].mxu0
        %v2317 = vadd.f32 %v2124, %v2316
        %v2318 = vpop.f32.mrb[0].mxu0
        %v2319 = vadd.f32 %v2126, %v2318
        %2320 = vmatprep.mubr.bf16.mxu0 0
        %2321 = vmatmul.mubr.bf16.gmra.mrb[0].mxu0 %v933
        %v2322 = vpop.f32.mrb[0].mxu0
        %v2323 = vadd.f32 %v2130, %v2322
        %v2324 = vpop.f32.mrb[0].mxu0
        %v2325 = vadd.f32 %v2132, %v2324
        %v2326 = vpop.f32.mrb[0].mxu0
        %v2327 = vadd.f32 %v2134, %v2326
        %v2328 = vpop.f32.mrb[0].mxu0
        %v2329 = vadd.f32 %v2136, %v2328
        %2330 = vmatprep.mubr.bf16.mxu0 0
        %2331 = vmatmul.mubr.bf16.gmra.mrb[0].mxu0 %v936
        %v2332 = vpop.f32.mrb[0].mxu0
        %v2333 = vadd.f32 %v2140, %v2332
        %v2334 = vpop.f32.mrb[0].mxu0
        %v2335 = vadd.f32 %v2142, %v2334
        %v2336 = vpop.f32.mrb[0].mxu0
        %v2337 = vadd.f32 %v2144, %v2336
        %v2338 = vpop.f32.mrb[0].mxu0
        %v2339 = vadd.f32 %v2146, %v2338
        %2340 = vmatprep.mubr.bf16.mxu0 0
        %2341 = vmatmul.mubr.bf16.gmra.mrb[0].mxu0 %v939
        %v2342 = vpop.f32.mrb[0].mxu0
        %v2343 = vadd.f32 %v2150, %v2342
        %v2344 = vpop.f32.mrb[0].mxu0
        %v2345 = vadd.f32 %v2152, %v2344
        %v2346 = vpop.f32.mrb[0].mxu0
        %v2347 = vadd.f32 %v2154, %v2346
        %v2348 = vpop.f32.mrb[0].mxu0
        %v2349 = vadd.f32 %v2156, %v2348
        %2350 = vmatprep.mubr.bf16.mxu0 0
        %2351 = vmatmul.mubr.bf16.gmra.mrb[0].mxu0 %v942
        %v2352 = vpop.f32.mrb[0].mxu0
        %v2353 = vadd.f32 %v2160, %v2352
        %v2354 = vpop.f32.mrb[0].mxu0
        %v2355 = vadd.f32 %v2162, %v2354
        %v2356 = vpop.f32.mrb[0].mxu0
        %v2357 = vadd.f32 %v2164, %v2356
        %v2358 = vpop.f32.mrb[0].mxu0
        %v2359 = vadd.f32 %v2166, %v2358
        %2360 = vmatprep.mubr.bf16.mxu0 0
        %2361 = vmatmul.mubr.bf16.gmra.mrb[0].mxu0 %v945
        %v2362 = vpop.f32.mrb[0].mxu0
        %v2363 = vadd.f32 %v2170, %v2362
        %v2364 = vpop.f32.mrb[0].mxu0
        %v2365 = vadd.f32 %v2172, %v2364
        %v2366 = vpop.f32.mrb[0].mxu0
        %v2367 = vadd.f32 %v2174, %v2366
        %v2368 = vpop.f32.mrb[0].mxu0
        %v2369 = vadd.f32 %v2176, %v2368
        %2370 = vmatprep.mubr.bf16.mxu0 0
        %2371 = vmatmul.mubr.bf16.gmra.mrb[0].mxu0 %v948
        %v2372 = vpop.f32.mrb[0].mxu0
        %v2373 = vadd.f32 %v2180, %v2372
        %v2374 = vpop.f32.mrb[0].mxu0
        %v2375 = vadd.f32 %v2182, %v2374
        %v2376 = vpop.f32.mrb[0].mxu0
        %v2377 = vadd.f32 %v2184, %v2376
        %v2378 = vpop.f32.mrb[0].mxu0
        %v2379 = vadd.f32 %v2186, %v2378
        %2380 = vmatprep.mubr.bf16.mxu0 0
        %2381 = vmatmul.mubr.bf16.gmra.mrb[0].mxu0 %v951
        %v2382 = vpop.f32.mrb[0].mxu0
        %v2383 = vadd.f32 %v2190, %v2382
        %v2384 = vpop.f32.mrb[0].mxu0
        %v2385 = vadd.f32 %v2192, %v2384
        %v2386 = vpop.f32.mrb[0].mxu0
        %v2387 = vadd.f32 %v2194, %v2386
        %v2388 = vpop.f32.mrb[0].mxu0
        %v2389 = vadd.f32 %v2196, %v2388
        %2390 = vmatprep.mubr.bf16.mxu0 0
        %2391 = vmatmul.mubr.bf16.gmra.mrb[0].mxu0 %v954
        %v2392 = vpop.f32.mrb[0].mxu0
        %v2393 = vadd.f32 %v2200, %v2392
        %v2394 = vpop.f32.mrb[0].mxu0
        %v2395 = vadd.f32 %v2202, %v2394
        %v2396 = vpop.f32.mrb[0].mxu0
        %v2397 = vadd.f32 %v2204, %v2396
        %v2398 = vpop.f32.mrb[0].mxu0
        %v2399 = vadd.f32 %v2206, %v2398
        %2400 = vdwg.mxu0
        %s2401 = scalar_lea.vmem %s1, 768
        %v2402 = vld [vmem:[%s2401] sm:$0xff]
        %v2403 = vld [vmem:[%s2401 + $0x8] sm:$0xff]
        %v2404 = vld [vmem:[%s2401 + $0x10] sm:$0xff]
        %v2405 = vld [vmem:[%s2401 + $0x18] sm:$0xff]
        %v2406 = vld [vmem:[%s2401 + $0x20] sm:$0xff]
        %v2407 = vld [vmem:[%s2401 + $0x28] sm:$0xff]
        %v2408 = vld [vmem:[%s2401 + $0x30] sm:$0xff]
        %v2409 = vld [vmem:[%s2401 + $0x38] sm:$0xff]
        %v2410 = vld [vmem:[%s2401 + $0x40] sm:$0xff]
        %v2411 = vld [vmem:[%s2401 + $0x48] sm:$0xff]
        %v2412 = vld [vmem:[%s2401 + $0x50] sm:$0xff]
        %v2413 = vld [vmem:[%s2401 + $0x58] sm:$0xff]
        %v2414 = vld [vmem:[%s2401 + $0x60] sm:$0xff]
        %v2415 = vld [vmem:[%s2401 + $0x68] sm:$0xff]
        %v2416 = vld [vmem:[%s2401 + $0x70] sm:$0xff]
        %v2417 = vld [vmem:[%s2401 + $0x78] sm:$0xff]
        %v2418 = vld [vmem:[%s2401 + $0x80] sm:$0xff]
        %v2419 = vld [vmem:[%s2401 + $0x88] sm:$0xff]
        %v2420 = vld [vmem:[%s2401 + $0x90] sm:$0xff]
        %v2421 = vld [vmem:[%s2401 + $0x98] sm:$0xff]
        %v2422 = vld [vmem:[%s2401 + $0xa0] sm:$0xff]
        %v2423 = vld [vmem:[%s2401 + $0xa8] sm:$0xff]
        %v2424 = vld [vmem:[%s2401 + $0xb0] sm:$0xff]
        %v2425 = vld [vmem:[%s2401 + $0xb8] sm:$0xff]
        %v2426 = vld [vmem:[%s2401 + $0xc0] sm:$0xff]
        %v2427 = vld [vmem:[%s2401 + $0xc8] sm:$0xff]
        %v2428 = vld [vmem:[%s2401 + $0xd0] sm:$0xff]
        %v2429 = vld [vmem:[%s2401 + $0xd8] sm:$0xff]
        %v2430 = vld [vmem:[%s2401 + $0xe0] sm:$0xff]
        %v2431 = vld [vmem:[%s2401 + $0xe8] sm:$0xff]
        %v2432 = vld [vmem:[%s2401 + $0xf0] sm:$0xff]
        %v2433 = vld [vmem:[%s2401 + $0xf8] sm:$0xff]
        %v2434 = vld [vmem:[%s2401 + $0x100] sm:$0xff]
        %v2435 = vld [vmem:[%s2401 + $0x108] sm:$0xff]
        %v2436 = vld [vmem:[%s2401 + $0x110] sm:$0xff]
        %v2437 = vld [vmem:[%s2401 + $0x118] sm:$0xff]
        %v2438 = vld [vmem:[%s2401 + $0x120] sm:$0xff]
        %v2439 = vld [vmem:[%s2401 + $0x128] sm:$0xff]
        %v2440 = vld [vmem:[%s2401 + $0x130] sm:$0xff]
        %v2441 = vld [vmem:[%s2401 + $0x138] sm:$0xff]
        %v2442 = vld [vmem:[%s2401 + $0x140] sm:$0xff]
        %v2443 = vld [vmem:[%s2401 + $0x148] sm:$0xff]
        %v2444 = vld [vmem:[%s2401 + $0x150] sm:$0xff]
        %v2445 = vld [vmem:[%s2401 + $0x158] sm:$0xff]
        %v2446 = vld [vmem:[%s2401 + $0x160] sm:$0xff]
        %v2447 = vld [vmem:[%s2401 + $0x168] sm:$0xff]
        %v2448 = vld [vmem:[%s2401 + $0x170] sm:$0xff]
        %v2449 = vld [vmem:[%s2401 + $0x178] sm:$0xff]
        %v2498 = vunpack.c.l.b16 %v2402
        %v2499 = vunpack.c.h.b16 %v2402
        %v2500 = vunpack.c.l.b16 %v2403
        %v2501 = vunpack.c.h.b16 %v2403
        %v2502 = vunpack.c.l.b16 %v2404
        %v2503 = vunpack.c.h.b16 %v2404
        %v2504 = vunpack.c.l.b16 %v2405
        %v2505 = vunpack.c.h.b16 %v2405
        %v2506 = vunpack.c.l.b16 %v2406
        %v2507 = vunpack.c.h.b16 %v2406
        %v2508 = vunpack.c.l.b16 %v2407
        %v2509 = vunpack.c.h.b16 %v2407
        %v2510 = vunpack.c.l.b16 %v2408
        %v2511 = vunpack.c.h.b16 %v2408
        %v2512 = vunpack.c.l.b16 %v2409
        %v2513 = vunpack.c.h.b16 %v2409
        %v2514 = vunpack.c.l.b16 %v2410
        %v2515 = vunpack.c.h.b16 %v2410
        %v2516 = vunpack.c.l.b16 %v2411
        %v2517 = vunpack.c.h.b16 %v2411
        %v2518 = vunpack.c.l.b16 %v2412
        %v2519 = vunpack.c.h.b16 %v2412
        %v2520 = vunpack.c.l.b16 %v2413
        %v2521 = vunpack.c.h.b16 %v2413
        %v2522 = vunpack.c.l.b16 %v2414
        %v2523 = vunpack.c.h.b16 %v2414
        %v2524 = vunpack.c.l.b16 %v2415
        %v2525 = vunpack.c.h.b16 %v2415
        %v2526 = vunpack.c.l.b16 %v2416
        %v2527 = vunpack.c.h.b16 %v2416
        %v2528 = vunpack.c.l.b16 %v2417
        %v2529 = vunpack.c.h.b16 %v2417
        %v2530 = vunpack.c.l.b16 %v2418
        %v2531 = vunpack.c.h.b16 %v2418
        %v2532 = vunpack.c.l.b16 %v2419
        %v2533 = vunpack.c.h.b16 %v2419
        %v2534 = vunpack.c.l.b16 %v2420
        %v2535 = vunpack.c.h.b16 %v2420
        %v2536 = vunpack.c.l.b16 %v2421
        %v2537 = vunpack.c.h.b16 %v2421
        %v2538 = vunpack.c.l.b16 %v2422
        %v2539 = vunpack.c.h.b16 %v2422
        %v2540 = vunpack.c.l.b16 %v2423
        %v2541 = vunpack.c.h.b16 %v2423
        %v2542 = vunpack.c.l.b16 %v2424
        %v2543 = vunpack.c.h.b16 %v2424
        %v2544 = vunpack.c.l.b16 %v2425
        %v2545 = vunpack.c.h.b16 %v2425
        %v2546 = vunpack.c.l.b16 %v2426
        %v2547 = vunpack.c.h.b16 %v2426
        %v2548 = vunpack.c.l.b16 %v2427
        %v2549 = vunpack.c.h.b16 %v2427
        %v2550 = vunpack.c.l.b16 %v2428
        %v2551 = vunpack.c.h.b16 %v2428
        %v2552 = vunpack.c.l.b16 %v2429
        %v2553 = vunpack.c.h.b16 %v2429
        %v2554 = vunpack.c.l.b16 %v2430
        %v2555 = vunpack.c.h.b16 %v2430
        %v2556 = vunpack.c.l.b16 %v2431
        %v2557 = vunpack.c.h.b16 %v2431
        %v2558 = vunpack.c.l.b16 %v2432
        %v2559 = vunpack.c.h.b16 %v2432
        %v2560 = vunpack.c.l.b16 %v2433
        %v2561 = vunpack.c.h.b16 %v2433
        %v2562 = vunpack.c.l.b16 %v2434
        %v2563 = vunpack.c.h.b16 %v2434
        %v2564 = vunpack.c.l.b16 %v2435
        %v2565 = vunpack.c.h.b16 %v2435
        %v2566 = vunpack.c.l.b16 %v2436
        %v2567 = vunpack.c.h.b16 %v2436
        %v2568 = vunpack.c.l.b16 %v2437
        %v2569 = vunpack.c.h.b16 %v2437
        %v2570 = vunpack.c.l.b16 %v2438
        %v2571 = vunpack.c.h.b16 %v2438
        %v2572 = vunpack.c.l.b16 %v2439
        %v2573 = vunpack.c.h.b16 %v2439
        %v2574 = vunpack.c.l.b16 %v2440
        %v2575 = vunpack.c.h.b16 %v2440
        %v2576 = vunpack.c.l.b16 %v2441
        %v2577 = vunpack.c.h.b16 %v2441
        %v2578 = vunpack.c.l.b16 %v2442
        %v2579 = vunpack.c.h.b16 %v2442
        %v2580 = vunpack.c.l.b16 %v2443
        %v2581 = vunpack.c.h.b16 %v2443
        %v2582 = vunpack.c.l.b16 %v2444
        %v2583 = vunpack.c.h.b16 %v2444
        %v2584 = vunpack.c.l.b16 %v2445
        %v2585 = vunpack.c.h.b16 %v2445
        %v2586 = vunpack.c.l.b16 %v2446
        %v2587 = vunpack.c.h.b16 %v2446
        %v2588 = vunpack.c.l.b16 %v2447
        %v2589 = vunpack.c.h.b16 %v2447
        %v2590 = vunpack.c.l.b16 %v2448
        %v2591 = vunpack.c.h.b16 %v2448
        %v2592 = vunpack.c.l.b16 %v2449
        %v2593 = vunpack.c.h.b16 %v2449
        %v2594 = vpack.c.b16 %v2500, %v2498
        %v2595 = vpack.c.b16 %v2501, %v2499
        %v2596 = vpack.c.b16 %v2504, %v2502
        %v2597 = vpack.c.b16 %v2505, %v2503
        %v2598 = vpack.c.b16 %v2508, %v2506
        %v2599 = vpack.c.b16 %v2509, %v2507
        %v2600 = vpack.c.b16 %v2512, %v2510
        %v2601 = vpack.c.b16 %v2513, %v2511
        %v2602 = vpack.c.b16 %v2516, %v2514
        %v2603 = vpack.c.b16 %v2517, %v2515
        %v2604 = vpack.c.b16 %v2520, %v2518
        %v2605 = vpack.c.b16 %v2521, %v2519
        %v2606 = vpack.c.b16 %v2524, %v2522
        %v2607 = vpack.c.b16 %v2525, %v2523
        %v2608 = vpack.c.b16 %v2528, %v2526
        %v2609 = vpack.c.b16 %v2529, %v2527
        %v2610 = vpack.c.b16 %v2532, %v2530
        %v2611 = vpack.c.b16 %v2533, %v2531
        %v2612 = vpack.c.b16 %v2536, %v2534
        %v2613 = vpack.c.b16 %v2537, %v2535
        %v2614 = vpack.c.b16 %v2540, %v2538
        %v2615 = vpack.c.b16 %v2541, %v2539
        %v2616 = vpack.c.b16 %v2544, %v2542
        %v2617 = vpack.c.b16 %v2545, %v2543
        %v2618 = vpack.c.b16 %v2548, %v2546
        %v2619 = vpack.c.b16 %v2549, %v2547
        %v2620 = vpack.c.b16 %v2552, %v2550
        %v2621 = vpack.c.b16 %v2553, %v2551
        %v2622 = vpack.c.b16 %v2556, %v2554
        %v2623 = vpack.c.b16 %v2557, %v2555
        %v2624 = vpack.c.b16 %v2560, %v2558
        %v2625 = vpack.c.b16 %v2561, %v2559
        %v2626 = vpack.c.b16 %v2564, %v2562
        %v2627 = vpack.c.b16 %v2565, %v2563
        %v2628 = vpack.c.b16 %v2568, %v2566
        %v2629 = vpack.c.b16 %v2569, %v2567
        %v2630 = vpack.c.b16 %v2572, %v2570
        %v2631 = vpack.c.b16 %v2573, %v2571
        %v2632 = vpack.c.b16 %v2576, %v2574
        %v2633 = vpack.c.b16 %v2577, %v2575
        %v2634 = vpack.c.b16 %v2580, %v2578
        %v2635 = vpack.c.b16 %v2581, %v2579
        %v2636 = vpack.c.b16 %v2584, %v2582
        %v2637 = vpack.c.b16 %v2585, %v2583
        %v2638 = vpack.c.b16 %v2588, %v2586
        %v2639 = vpack.c.b16 %v2589, %v2587
        %v2640 = vpack.c.b16 %v2592, %v2590
        %v2641 = vpack.c.b16 %v2593, %v2591
        %2690 = vmatprep.subr.bf16.mxu0 %v2595
        %2691 = vmatpush1.bf16.msra.mxu0 %v2594
        %2692 = vmatprep.subr.bf16.mxu0 %v2597
        %2693 = vmatpush1.bf16.msra.mxu0 %v2596
        %2694 = vmatprep.subr.bf16.mxu0 %v2599
        %2695 = vmatpush1.bf16.msra.mxu0 %v2598
        %2696 = vmatprep.subr.bf16.mxu0 %v2601
        %2697 = vmatpush1.bf16.msra.mxu0 %v2600
        %2698 = vmatprep.subr.bf16.mxu0 %v2603
        %2699 = vmatpush1.bf16.msra.mxu0 %v2602
        %2700 = vmatprep.subr.bf16.mxu0 %v2605
        %2701 = vmatpush1.bf16.msra.mxu0 %v2604
        %2702 = vmatprep.subr.bf16.mxu0 %v2607
        %2703 = vmatpush1.bf16.msra.mxu0 %v2606
        %2704 = vmatprep.subr.bf16.mxu0 %v2609
        %2705 = vmatpush1.bf16.msra.mxu0 %v2608
        %2706 = vmatprep.subr.bf16.mxu0 %v2611
        %2707 = vmatpush1.bf16.msra.mxu0 %v2610
        %2708 = vmatprep.subr.bf16.mxu0 %v2613
        %2709 = vmatpush1.bf16.msra.mxu0 %v2612
        %2710 = vmatprep.subr.bf16.mxu0 %v2615
        %2711 = vmatpush1.bf16.msra.mxu0 %v2614
        %2712 = vmatprep.subr.bf16.mxu0 %v2617
        %2713 = vmatpush1.bf16.msra.mxu0 %v2616
        %2714 = vmatprep.subr.bf16.mxu0 %v2619
        %2715 = vmatpush1.bf16.msra.mxu0 %v2618
        %2716 = vmatprep.subr.bf16.mxu0 %v2621
        %2717 = vmatpush1.bf16.msra.mxu0 %v2620
        %2718 = vmatprep.subr.bf16.mxu0 %v2623
        %2719 = vmatpush1.bf16.msra.mxu0 %v2622
        %2720 = vmatprep.subr.bf16.mxu0 %v2625
        %2721 = vmatpush1.bf16.msra.mxu0 %v2624
        %2722 = vmatprep.mubr.bf16.mxu0 %v1005
        %2723 = vmatmul.mubr.bf16.gmra.mrb[0].mxu0 %v1004
        %v2724 = vpop.f32.mrb[0].mxu0
        %v2725 = vadd.f32 0.0, %v2724
        %v2726 = vpop.f32.mrb[0].mxu0
        %v2727 = vadd.f32 0.0, %v2726
        %v2728 = vpop.f32.mrb[0].mxu0
        %v2729 = vadd.f32 0.0, %v2728
        %v2730 = vpop.f32.mrb[0].mxu0
        %v2731 = vadd.f32 0.0, %v2730
        %2732 = vmatprep.mubr.bf16.mxu0 %v1008
        %2733 = vmatmul.mubr.bf16.gmra.mrb[0].mxu0 %v1007
        %v2734 = vpop.f32.mrb[0].mxu0
        %v2735 = vadd.f32 0.0, %v2734
        %v2736 = vpop.f32.mrb[0].mxu0
        %v2737 = vadd.f32 0.0, %v2736
        %v2738 = vpop.f32.mrb[0].mxu0
        %v2739 = vadd.f32 0.0, %v2738
        %v2740 = vpop.f32.mrb[0].mxu0
        %v2741 = vadd.f32 0.0, %v2740
        %2742 = vmatprep.mubr.bf16.mxu0 %v1011
        %2743 = vmatmul.mubr.bf16.gmra.mrb[0].mxu0 %v1010
        %v2744 = vpop.f32.mrb[0].mxu0
        %v2745 = vadd.f32 0.0, %v2744
        %v2746 = vpop.f32.mrb[0].mxu0
        %v2747 = vadd.f32 0.0, %v2746
        %v2748 = vpop.f32.mrb[0].mxu0
        %v2749 = vadd.f32 0.0, %v2748
        %v2750 = vpop.f32.mrb[0].mxu0
        %v2751 = vadd.f32 0.0, %v2750
        %2752 = vmatprep.mubr.bf16.mxu0 %v1014
        %2753 = vmatmul.mubr.bf16.gmra.mrb[0].mxu0 %v1013
        %v2754 = vpop.f32.mrb[0].mxu0
        %v2755 = vadd.f32 0.0, %v2754
        %v2756 = vpop.f32.mrb[0].mxu0
        %v2757 = vadd.f32 0.0, %v2756
        %v2758 = vpop.f32.mrb[0].mxu0
        %v2759 = vadd.f32 0.0, %v2758
        %v2760 = vpop.f32.mrb[0].mxu0
        %v2761 = vadd.f32 0.0, %v2760
        %2762 = vmatprep.mubr.bf16.mxu0 %v1017
        %2763 = vmatmul.mubr.bf16.gmra.mrb[0].mxu0 %v1016
        %v2764 = vpop.f32.mrb[0].mxu0
        %v2765 = vadd.f32 0.0, %v2764
        %v2766 = vpop.f32.mrb[0].mxu0
        %v2767 = vadd.f32 0.0, %v2766
        %v2768 = vpop.f32.mrb[0].mxu0
        %v2769 = vadd.f32 0.0, %v2768
        %v2770 = vpop.f32.mrb[0].mxu0
        %v2771 = vadd.f32 0.0, %v2770
        %2772 = vmatprep.mubr.bf16.mxu0 %v1020
        %2773 = vmatmul.mubr.bf16.gmra.mrb[0].mxu0 %v1019
        %v2774 = vpop.f32.mrb[0].mxu0
        %v2775 = vadd.f32 0.0, %v2774
        %v2776 = vpop.f32.mrb[0].mxu0
        %v2777 = vadd.f32 0.0, %v2776
        %v2778 = vpop.f32.mrb[0].mxu0
        %v2779 = vadd.f32 0.0, %v2778
        %v2780 = vpop.f32.mrb[0].mxu0
        %v2781 = vadd.f32 0.0, %v2780
        %2782 = vmatprep.mubr.bf16.mxu0 %v1023
        %2783 = vmatmul.mubr.bf16.gmra.mrb[0].mxu0 %v1022
        %v2784 = vpop.f32.mrb[0].mxu0
        %v2785 = vadd.f32 0.0, %v2784
        %v2786 = vpop.f32.mrb[0].mxu0
        %v2787 = vadd.f32 0.0, %v2786
        %v2788 = vpop.f32.mrb[0].mxu0
        %v2789 = vadd.f32 0.0, %v2788
        %v2790 = vpop.f32.mrb[0].mxu0
        %v2791 = vadd.f32 0.0, %v2790
        %2792 = vmatprep.mubr.bf16.mxu0 %v1026
        %2793 = vmatmul.mubr.bf16.gmra.mrb[0].mxu0 %v1025
        %v2794 = vpop.f32.mrb[0].mxu0
        %v2795 = vadd.f32 0.0, %v2794
        %v2796 = vpop.f32.mrb[0].mxu0
        %v2797 = vadd.f32 0.0, %v2796
        %v2798 = vpop.f32.mrb[0].mxu0
        %v2799 = vadd.f32 0.0, %v2798
        %v2800 = vpop.f32.mrb[0].mxu0
        %v2801 = vadd.f32 0.0, %v2800
        %2802 = vmatprep.mubr.bf16.mxu0 %v1029
        %2803 = vmatmul.mubr.bf16.gmra.mrb[0].mxu0 %v1028
        %v2804 = vpop.f32.mrb[0].mxu0
        %v2805 = vadd.f32 0.0, %v2804
        %v2806 = vpop.f32.mrb[0].mxu0
        %v2807 = vadd.f32 0.0, %v2806
        %v2808 = vpop.f32.mrb[0].mxu0
        %v2809 = vadd.f32 0.0, %v2808
        %v2810 = vpop.f32.mrb[0].mxu0
        %v2811 = vadd.f32 0.0, %v2810
        %2812 = vmatprep.mubr.bf16.mxu0 %v1032
        %2813 = vmatmul.mubr.bf16.gmra.mrb[0].mxu0 %v1031
        %v2814 = vpop.f32.mrb[0].mxu0
        %v2815 = vadd.f32 0.0, %v2814
        %v2816 = vpop.f32.mrb[0].mxu0
        %v2817 = vadd.f32 0.0, %v2816
        %v2818 = vpop.f32.mrb[0].mxu0
        %v2819 = vadd.f32 0.0, %v2818
        %v2820 = vpop.f32.mrb[0].mxu0
        %v2821 = vadd.f32 0.0, %v2820
        %2822 = vmatprep.mubr.bf16.mxu0 %v1035
        %2823 = vmatmul.mubr.bf16.gmra.mrb[0].mxu0 %v1034
        %v2824 = vpop.f32.mrb[0].mxu0
        %v2825 = vadd.f32 0.0, %v2824
        %v2826 = vpop.f32.mrb[0].mxu0
        %v2827 = vadd.f32 0.0, %v2826
        %v2828 = vpop.f32.mrb[0].mxu0
        %v2829 = vadd.f32 0.0, %v2828
        %v2830 = vpop.f32.mrb[0].mxu0
        %v2831 = vadd.f32 0.0, %v2830
        %2832 = vmatprep.mubr.bf16.mxu0 %v1038
        %2833 = vmatmul.mubr.bf16.gmra.mrb[0].mxu0 %v1037
        %v2834 = vpop.f32.mrb[0].mxu0
        %v2835 = vadd.f32 0.0, %v2834
        %v2836 = vpop.f32.mrb[0].mxu0
        %v2837 = vadd.f32 0.0, %v2836
        %v2838 = vpop.f32.mrb[0].mxu0
        %v2839 = vadd.f32 0.0, %v2838
        %v2840 = vpop.f32.mrb[0].mxu0
        %v2841 = vadd.f32 0.0, %v2840
        %2842 = vmatprep.mubr.bf16.mxu0 %v1041
        %2843 = vmatmul.mubr.bf16.gmra.mrb[0].mxu0 %v1040
        %v2844 = vpop.f32.mrb[0].mxu0
        %v2845 = vadd.f32 0.0, %v2844
        %v2846 = vpop.f32.mrb[0].mxu0
        %v2847 = vadd.f32 0.0, %v2846
        %v2848 = vpop.f32.mrb[0].mxu0
        %v2849 = vadd.f32 0.0, %v2848
        %v2850 = vpop.f32.mrb[0].mxu0
        %v2851 = vadd.f32 0.0, %v2850
        %2852 = vmatprep.mubr.bf16.mxu0 %v1044
        %2853 = vmatmul.mubr.bf16.gmra.mrb[0].mxu0 %v1043
        %v2854 = vpop.f32.mrb[0].mxu0
        %v2855 = vadd.f32 0.0, %v2854
        %v2856 = vpop.f32.mrb[0].mxu0
        %v2857 = vadd.f32 0.0, %v2856
        %v2858 = vpop.f32.mrb[0].mxu0
        %v2859 = vadd.f32 0.0, %v2858
        %v2860 = vpop.f32.mrb[0].mxu0
        %v2861 = vadd.f32 0.0, %v2860
        %2862 = vmatprep.mubr.bf16.mxu0 %v1047
        %2863 = vmatmul.mubr.bf16.gmra.mrb[0].mxu0 %v1046
        %v2864 = vpop.f32.mrb[0].mxu0
        %v2865 = vadd.f32 0.0, %v2864
        %v2866 = vpop.f32.mrb[0].mxu0
        %v2867 = vadd.f32 0.0, %v2866
        %v2868 = vpop.f32.mrb[0].mxu0
        %v2869 = vadd.f32 0.0, %v2868
        %v2870 = vpop.f32.mrb[0].mxu0
        %v2871 = vadd.f32 0.0, %v2870
        %2872 = vmatprep.mubr.bf16.mxu0 %v1050
        %2873 = vmatmul.mubr.bf16.gmra.mrb[0].mxu0 %v1049
        %v2874 = vpop.f32.mrb[0].mxu0
        %v2875 = vadd.f32 0.0, %v2874
        %v2876 = vpop.f32.mrb[0].mxu0
        %v2877 = vadd.f32 0.0, %v2876
        %v2878 = vpop.f32.mrb[0].mxu0
        %v2879 = vadd.f32 0.0, %v2878
        %v2880 = vpop.f32.mrb[0].mxu0
        %v2881 = vadd.f32 0.0, %v2880
        %2882 = vdwg.mxu0
        %2883 = vmatprep.subr.bf16.mxu0 %v2627
        %2884 = vmatpush1.bf16.msra.mxu0 %v2626
        %2885 = vmatprep.subr.bf16.mxu0 %v2629
        %2886 = vmatpush1.bf16.msra.mxu0 %v2628
        %2887 = vmatprep.subr.bf16.mxu0 %v2631
        %2888 = vmatpush1.bf16.msra.mxu0 %v2630
        %2889 = vmatprep.subr.bf16.mxu0 %v2633
        %2890 = vmatpush1.bf16.msra.mxu0 %v2632
        %2891 = vmatprep.subr.bf16.mxu0 %v2635
        %2892 = vmatpush1.bf16.msra.mxu0 %v2634
        %2893 = vmatprep.subr.bf16.mxu0 %v2637
        %2894 = vmatpush1.bf16.msra.mxu0 %v2636
        %2895 = vmatprep.subr.bf16.mxu0 %v2639
        %2896 = vmatpush1.bf16.msra.mxu0 %v2638
        %2897 = vmatprep.subr.bf16.mxu0 %v2641
        %2898 = vmatpush1.bf16.msra.mxu0 %v2640
        %2899 = vmatprep.subr.bf16.mxu0 0
        %2900 = vmatpush1.bf16.msra.mxu0 0
        %2901 = vmatprep.subr.bf16.mxu0 0
        %2902 = vmatpush1.bf16.msra.mxu0 0
        %2903 = vmatprep.subr.bf16.mxu0 0
        %2904 = vmatpush1.bf16.msra.mxu0 0
        %2905 = vmatprep.subr.bf16.mxu0 0
        %2906 = vmatpush1.bf16.msra.mxu0 0
        %2907 = vmatprep.subr.bf16.mxu0 0
        %2908 = vmatpush1.bf16.msra.mxu0 0
        %2909 = vmatprep.subr.bf16.mxu0 0
        %2910 = vmatpush1.bf16.msra.mxu0 0
        %2911 = vmatprep.subr.bf16.mxu0 0
        %2912 = vmatpush1.bf16.msra.mxu0 0
        %2913 = vmatprep.subr.bf16.mxu0 0
        %2914 = vmatpush1.bf16.msra.mxu0 0
        %2915 = vmatprep.mubr.bf16.mxu0 0
        %2916 = vmatmul.mubr.bf16.gmra.mrb[0].mxu0 %v1006
        %v2917 = vpop.f32.mrb[0].mxu0
        %v2918 = vadd.f32 %v2725, %v2917
        %v2919 = vpop.f32.mrb[0].mxu0
        %v2920 = vadd.f32 %v2727, %v2919
        %v2921 = vpop.f32.mrb[0].mxu0
        %v2922 = vadd.f32 %v2729, %v2921
        %v2923 = vpop.f32.mrb[0].mxu0
        %v2924 = vadd.f32 %v2731, %v2923
        %2925 = vmatprep.mubr.bf16.mxu0 0
        %2926 = vmatmul.mubr.bf16.gmra.mrb[0].mxu0 %v1009
        %v2927 = vpop.f32.mrb[0].mxu0
        %v2928 = vadd.f32 %v2735, %v2927
        %v2929 = vpop.f32.mrb[0].mxu0
        %v2930 = vadd.f32 %v2737, %v2929
        %v2931 = vpop.f32.mrb[0].mxu0
        %v2932 = vadd.f32 %v2739, %v2931
        %v2933 = vpop.f32.mrb[0].mxu0
        %v2934 = vadd.f32 %v2741, %v2933
        %2935 = vmatprep.mubr.bf16.mxu0 0
        %2936 = vmatmul.mubr.bf16.gmra.mrb[0].mxu0 %v1012
        %v2937 = vpop.f32.mrb[0].mxu0
        %v2938 = vadd.f32 %v2745, %v2937
        %v2939 = vpop.f32.mrb[0].mxu0
        %v2940 = vadd.f32 %v2747, %v2939
        %v2941 = vpop.f32.mrb[0].mxu0
        %v2942 = vadd.f32 %v2749, %v2941
        %v2943 = vpop.f32.mrb[0].mxu0
        %v2944 = vadd.f32 %v2751, %v2943
        %2945 = vmatprep.mubr.bf16.mxu0 0
        %2946 = vmatmul.mubr.bf16.gmra.mrb[0].mxu0 %v1015
        %v2947 = vpop.f32.mrb[0].mxu0
        %v2948 = vadd.f32 %v2755, %v2947
        %v2949 = vpop.f32.mrb[0].mxu0
        %v2950 = vadd.f32 %v2757, %v2949
        %v2951 = vpop.f32.mrb[0].mxu0
        %v2952 = vadd.f32 %v2759, %v2951
        %v2953 = vpop.f32.mrb[0].mxu0
        %v2954 = vadd.f32 %v2761, %v2953
        %2955 = vmatprep.mubr.bf16.mxu0 0
        %2956 = vmatmul.mubr.bf16.gmra.mrb[0].mxu0 %v1018
        %v2957 = vpop.f32.mrb[0].mxu0
        %v2958 = vadd.f32 %v2765, %v2957
        %v2959 = vpop.f32.mrb[0].mxu0
        %v2960 = vadd.f32 %v2767, %v2959
        %v2961 = vpop.f32.mrb[0].mxu0
        %v2962 = vadd.f32 %v2769, %v2961
        %v2963 = vpop.f32.mrb[0].mxu0
        %v2964 = vadd.f32 %v2771, %v2963
        %2965 = vmatprep.mubr.bf16.mxu0 0
        %2966 = vmatmul.mubr.bf16.gmra.mrb[0].mxu0 %v1021
        %v2967 = vpop.f32.mrb[0].mxu0
        %v2968 = vadd.f32 %v2775, %v2967
        %v2969 = vpop.f32.mrb[0].mxu0
        %v2970 = vadd.f32 %v2777, %v2969
        %v2971 = vpop.f32.mrb[0].mxu0
        %v2972 = vadd.f32 %v2779, %v2971
        %v2973 = vpop.f32.mrb[0].mxu0
        %v2974 = vadd.f32 %v2781, %v2973
        %2975 = vmatprep.mubr.bf16.mxu0 0
        %2976 = vmatmul.mubr.bf16.gmra.mrb[0].mxu0 %v1024
        %v2977 = vpop.f32.mrb[0].mxu0
        %v2978 = vadd.f32 %v2785, %v2977
        %v2979 = vpop.f32.mrb[0].mxu0
        %v2980 = vadd.f32 %v2787, %v2979
        %v2981 = vpop.f32.mrb[0].mxu0
        %v2982 = vadd.f32 %v2789, %v2981
        %v2983 = vpop.f32.mrb[0].mxu0
        %v2984 = vadd.f32 %v2791, %v2983
        %2985 = vmatprep.mubr.bf16.mxu0 0
        %2986 = vmatmul.mubr.bf16.gmra.mrb[0].mxu0 %v1027
        %v2987 = vpop.f32.mrb[0].mxu0
        %v2988 = vadd.f32 %v2795, %v2987
        %v2989 = vpop.f32.mrb[0].mxu0
        %v2990 = vadd.f32 %v2797, %v2989
        %v2991 = vpop.f32.mrb[0].mxu0
        %v2992 = vadd.f32 %v2799, %v2991
        %v2993 = vpop.f32.mrb[0].mxu0
        %v2994 = vadd.f32 %v2801, %v2993
        %2995 = vmatprep.mubr.bf16.mxu0 0
        %2996 = vmatmul.mubr.bf16.gmra.mrb[0].mxu0 %v1030
        %v2997 = vpop.f32.mrb[0].mxu0
        %v2998 = vadd.f32 %v2805, %v2997
        %v2999 = vpop.f32.mrb[0].mxu0
        %v3000 = vadd.f32 %v2807, %v2999
        %v3001 = vpop.f32.mrb[0].mxu0
        %v3002 = vadd.f32 %v2809, %v3001
        %v3003 = vpop.f32.mrb[0].mxu0
        %v3004 = vadd.f32 %v2811, %v3003
        %3005 = vmatprep.mubr.bf16.mxu0 0
        %3006 = vmatmul.mubr.bf16.gmra.mrb[0].mxu0 %v1033
        %v3007 = vpop.f32.mrb[0].mxu0
        %v3008 = vadd.f32 %v2815, %v3007
        %v3009 = vpop.f32.mrb[0].mxu0
        %v3010 = vadd.f32 %v2817, %v3009
        %v3011 = vpop.f32.mrb[0].mxu0
        %v3012 = vadd.f32 %v2819, %v3011
        %v3013 = vpop.f32.mrb[0].mxu0
        %v3014 = vadd.f32 %v2821, %v3013
        %3015 = vmatprep.mubr.bf16.mxu0 0
        %3016 = vmatmul.mubr.bf16.gmra.mrb[0].mxu0 %v1036
        %v3017 = vpop.f32.mrb[0].mxu0
        %v3018 = vadd.f32 %v2825, %v3017
        %v3019 = vpop.f32.mrb[0].mxu0
        %v3020 = vadd.f32 %v2827, %v3019
        %v3021 = vpop.f32.mrb[0].mxu0
        %v3022 = vadd.f32 %v2829, %v3021
        %v3023 = vpop.f32.mrb[0].mxu0
        %v3024 = vadd.f32 %v2831, %v3023
        %3025 = vmatprep.mubr.bf16.mxu0 0
        %3026 = vmatmul.mubr.bf16.gmra.mrb[0].mxu0 %v1039
        %v3027 = vpop.f32.mrb[0].mxu0
        %v3028 = vadd.f32 %v2835, %v3027
        %v3029 = vpop.f32.mrb[0].mxu0
        %v3030 = vadd.f32 %v2837, %v3029
        %v3031 = vpop.f32.mrb[0].mxu0
        %v3032 = vadd.f32 %v2839, %v3031
        %v3033 = vpop.f32.mrb[0].mxu0
        %v3034 = vadd.f32 %v2841, %v3033
        %3035 = vmatprep.mubr.bf16.mxu0 0
        %3036 = vmatmul.mubr.bf16.gmra.mrb[0].mxu0 %v1042
        %v3037 = vpop.f32.mrb[0].mxu0
        %v3038 = vadd.f32 %v2845, %v3037
        %v3039 = vpop.f32.mrb[0].mxu0
        %v3040 = vadd.f32 %v2847, %v3039
        %v3041 = vpop.f32.mrb[0].mxu0
        %v3042 = vadd.f32 %v2849, %v3041
        %v3043 = vpop.f32.mrb[0].mxu0
        %v3044 = vadd.f32 %v2851, %v3043
        %3045 = vmatprep.mubr.bf16.mxu0 0
        %3046 = vmatmul.mubr.bf16.gmra.mrb[0].mxu0 %v1045
        %v3047 = vpop.f32.mrb[0].mxu0
        %v3048 = vadd.f32 %v2855, %v3047
        %v3049 = vpop.f32.mrb[0].mxu0
        %v3050 = vadd.f32 %v2857, %v3049
        %v3051 = vpop.f32.mrb[0].mxu0
        %v3052 = vadd.f32 %v2859, %v3051
        %v3053 = vpop.f32.mrb[0].mxu0
        %v3054 = vadd.f32 %v2861, %v3053
        %3055 = vmatprep.mubr.bf16.mxu0 0
        %3056 = vmatmul.mubr.bf16.gmra.mrb[0].mxu0 %v1048
        %v3057 = vpop.f32.mrb[0].mxu0
        %v3058 = vadd.f32 %v2865, %v3057
        %v3059 = vpop.f32.mrb[0].mxu0
        %v3060 = vadd.f32 %v2867, %v3059
        %v3061 = vpop.f32.mrb[0].mxu0
        %v3062 = vadd.f32 %v2869, %v3061
        %v3063 = vpop.f32.mrb[0].mxu0
        %v3064 = vadd.f32 %v2871, %v3063
        %3065 = vmatprep.mubr.bf16.mxu0 0
        %3066 = vmatmul.mubr.bf16.gmra.mrb[0].mxu0 %v1051
        %v3067 = vpop.f32.mrb[0].mxu0
        %v3068 = vadd.f32 %v2875, %v3067
        %v3069 = vpop.f32.mrb[0].mxu0
        %v3070 = vadd.f32 %v2877, %v3069
        %v3071 = vpop.f32.mrb[0].mxu0
        %v3072 = vadd.f32 %v2879, %v3071
        %v3073 = vpop.f32.mrb[0].mxu0
        %v3074 = vadd.f32 %v2881, %v3073
        %3075 = vdwg.mxu0
        %v3076 = vadd.f32 %v2243, %v2918
        %v3077 = vadd.f32 %v2245, %v2920
        %v3078 = vadd.f32 %v2247, %v2922
        %v3079 = vadd.f32 %v2249, %v2924
        %v3080 = vadd.f32 %v2253, %v2928
        %v3081 = vadd.f32 %v2255, %v2930
        %v3082 = vadd.f32 %v2257, %v2932
        %v3083 = vadd.f32 %v2259, %v2934
        %v3084 = vadd.f32 %v2263, %v2938
        %v3085 = vadd.f32 %v2265, %v2940
        %v3086 = vadd.f32 %v2267, %v2942
        %v3087 = vadd.f32 %v2269, %v2944
        %v3088 = vadd.f32 %v2273, %v2948
        %v3089 = vadd.f32 %v2275, %v2950
        %v3090 = vadd.f32 %v2277, %v2952
        %v3091 = vadd.f32 %v2279, %v2954
        %v3092 = vadd.f32 %v2283, %v2958
        %v3093 = vadd.f32 %v2285, %v2960
        %v3094 = vadd.f32 %v2287, %v2962
        %v3095 = vadd.f32 %v2289, %v2964
        %v3096 = vadd.f32 %v2293, %v2968
        %v3097 = vadd.f32 %v2295, %v2970
        %v3098 = vadd.f32 %v2297, %v2972
        %v3099 = vadd.f32 %v2299, %v2974
        %v3100 = vadd.f32 %v2303, %v2978
        %v3101 = vadd.f32 %v2305, %v2980
        %v3102 = vadd.f32 %v2307, %v2982
        %v3103 = vadd.f32 %v2309, %v2984
        %v3104 = vadd.f32 %v2313, %v2988
        %v3105 = vadd.f32 %v2315, %v2990
        %v3106 = vadd.f32 %v2317, %v2992
        %v3107 = vadd.f32 %v2319, %v2994
        %v3108 = vadd.f32 %v2323, %v2998
        %v3109 = vadd.f32 %v2325, %v3000
        %v3110 = vadd.f32 %v2327, %v3002
        %v3111 = vadd.f32 %v2329, %v3004
        %v3112 = vadd.f32 %v2333, %v3008
        %v3113 = vadd.f32 %v2335, %v3010
        %v3114 = vadd.f32 %v2337, %v3012
        %v3115 = vadd.f32 %v2339, %v3014
        %v3116 = vadd.f32 %v2343, %v3018
        %v3117 = vadd.f32 %v2345, %v3020
        %v3118 = vadd.f32 %v2347, %v3022
        %v3119 = vadd.f32 %v2349, %v3024
        %v3120 = vadd.f32 %v2353, %v3028
        %v3121 = vadd.f32 %v2355, %v3030
        %v3122 = vadd.f32 %v2357, %v3032
        %v3123 = vadd.f32 %v2359, %v3034
        %v3124 = vadd.f32 %v2363, %v3038
        %v3125 = vadd.f32 %v2365, %v3040
        %v3126 = vadd.f32 %v2367, %v3042
        %v3127 = vadd.f32 %v2369, %v3044
        %v3128 = vadd.f32 %v2373, %v3048
        %v3129 = vadd.f32 %v2375, %v3050
        %v3130 = vadd.f32 %v2377, %v3052
        %v3131 = vadd.f32 %v2379, %v3054
        %v3132 = vadd.f32 %v2383, %v3058
        %v3133 = vadd.f32 %v2385, %v3060
        %v3134 = vadd.f32 %v2387, %v3062
        %v3135 = vadd.f32 %v2389, %v3064
        %v3136 = vadd.f32 %v2393, %v3068
        %v3137 = vadd.f32 %v2395, %v3070
        %v3138 = vadd.f32 %v2397, %v3072
        %v3139 = vadd.f32 %v2399, %v3074
        %v3140 = vpack.c.bf16 %v3078, %v3076
        %v3141 = vpack.c.bf16 %v3079, %v3077
        %v3142 = vpack.c.bf16 %v3082, %v3080
        %v3143 = vpack.c.bf16 %v3083, %v3081
        %v3144 = vpack.c.bf16 %v3086, %v3084
        %v3145 = vpack.c.bf16 %v3087, %v3085
        %v3146 = vpack.c.bf16 %v3090, %v3088
        %v3147 = vpack.c.bf16 %v3091, %v3089
        %v3148 = vpack.c.bf16 %v3094, %v3092
        %v3149 = vpack.c.bf16 %v3095, %v3093
        %v3150 = vpack.c.bf16 %v3098, %v3096
        %v3151 = vpack.c.bf16 %v3099, %v3097
        %v3152 = vpack.c.bf16 %v3102, %v3100
        %v3153 = vpack.c.bf16 %v3103, %v3101
        %v3154 = vpack.c.bf16 %v3106, %v3104
        %v3155 = vpack.c.bf16 %v3107, %v3105
        %v3156 = vpack.c.bf16 %v3110, %v3108
        %v3157 = vpack.c.bf16 %v3111, %v3109
        %v3158 = vpack.c.bf16 %v3114, %v3112
        %v3159 = vpack.c.bf16 %v3115, %v3113
        %v3160 = vpack.c.bf16 %v3118, %v3116
        %v3161 = vpack.c.bf16 %v3119, %v3117
        %v3162 = vpack.c.bf16 %v3122, %v3120
        %v3163 = vpack.c.bf16 %v3123, %v3121
        %v3164 = vpack.c.bf16 %v3126, %v3124
        %v3165 = vpack.c.bf16 %v3127, %v3125
        %v3166 = vpack.c.bf16 %v3130, %v3128
        %v3167 = vpack.c.bf16 %v3131, %v3129
        %v3168 = vpack.c.bf16 %v3134, %v3132
        %v3169 = vpack.c.bf16 %v3135, %v3133
        %v3170 = vpack.c.bf16 %v3138, %v3136
        %v3171 = vpack.c.bf16 %v3139, %v3137
        %v3172 = vmax.bf16 %v3140, 0
        %v3173 = vmax.bf16 %v3141, 0
        %v3174 = vmax.bf16 %v3142, 0
        %v3175 = vmax.bf16 %v3143, 0
        %v3176 = vmax.bf16 %v3144, 0
        %v3177 = vmax.bf16 %v3145, 0
        %v3178 = vmax.bf16 %v3146, 0
        %v3179 = vmax.bf16 %v3147, 0
        %v3180 = vmax.bf16 %v3148, 0
        %v3181 = vmax.bf16 %v3149, 0
        %v3182 = vmax.bf16 %v3150, 0
        %v3183 = vmax.bf16 %v3151, 0
        %v3184 = vmax.bf16 %v3152, 0
        %v3185 = vmax.bf16 %v3153, 0
        %v3186 = vmax.bf16 %v3154, 0
        %v3187 = vmax.bf16 %v3155, 0
        %v3188 = vmax.bf16 %v3156, 0
        %v3189 = vmax.bf16 %v3157, 0
        %v3190 = vmax.bf16 %v3158, 0
        %v3191 = vmax.bf16 %v3159, 0
        %v3192 = vmax.bf16 %v3160, 0
        %v3193 = vmax.bf16 %v3161, 0
        %v3194 = vmax.bf16 %v3162, 0
        %v3195 = vmax.bf16 %v3163, 0
        %v3196 = vmax.bf16 %v3164, 0
        %v3197 = vmax.bf16 %v3165, 0
        %v3198 = vmax.bf16 %v3166, 0
        %v3199 = vmax.bf16 %v3167, 0
        %v3200 = vmax.bf16 %v3168, 0
        %v3201 = vmax.bf16 %v3169, 0
        %v3202 = vmax.bf16 %v3170, 0
        %v3203 = vmax.bf16 %v3171, 0
        %3204 = vst [vmem:[%s714 + $0x10] sm:$0xff] %v3172
        %3205 = vst [vmem:[%s714 + $0x18] sm:$0xff] %v3173
        %3206 = vst [vmem:[%s714 + $0x40] sm:$0xff] %v3174
        %3207 = vst [vmem:[%s714 + $0x48] sm:$0xff] %v3175
        %3208 = vst [vmem:[%s714 + $0x70] sm:$0xff] %v3176
        %3209 = vst [vmem:[%s714 + $0x78] sm:$0xff] %v3177
        %3210 = vst [vmem:[%s714 + $0xa0] sm:$0xff] %v3178
        %3211 = vst [vmem:[%s714 + $0xa8] sm:$0xff] %v3179
        %3212 = vst [vmem:[%s714 + $0xd0] sm:$0xff] %v3180
        %3213 = vst [vmem:[%s714 + $0xd8] sm:$0xff] %v3181
        %3214 = vst [vmem:[%s714 + $0x100] sm:$0xff] %v3182
        %3215 = vst [vmem:[%s714 + $0x108] sm:$0xff] %v3183
        %3216 = vst [vmem:[%s714 + $0x130] sm:$0xff] %v3184
        %3217 = vst [vmem:[%s714 + $0x138] sm:$0xff] %v3185
        %3218 = vst [vmem:[%s714 + $0x160] sm:$0xff] %v3186
        %3219 = vst [vmem:[%s714 + $0x168] sm:$0xff] %v3187
        %3220 = vst [vmem:[%s714 + $0x190] sm:$0xff] %v3188
        %3221 = vst [vmem:[%s714 + $0x198] sm:$0xff] %v3189
        %3222 = vst [vmem:[%s714 + $0x1c0] sm:$0xff] %v3190
        %3223 = vst [vmem:[%s714 + $0x1c8] sm:$0xff] %v3191
        %3224 = vst [vmem:[%s714 + $0x1f0] sm:$0xff] %v3192
        %3225 = vst [vmem:[%s714 + $0x1f8] sm:$0xff] %v3193
        %3226 = vst [vmem:[%s714 + $0x220] sm:$0xff] %v3194
        %3227 = vst [vmem:[%s714 + $0x228] sm:$0xff] %v3195
        %3228 = vst [vmem:[%s714 + $0x250] sm:$0xff] %v3196
        %3229 = vst [vmem:[%s714 + $0x258] sm:$0xff] %v3197
        %3230 = vst [vmem:[%s714 + $0x280] sm:$0xff] %v3198
        %3231 = vst [vmem:[%s714 + $0x288] sm:$0xff] %v3199
        %3232 = vst [vmem:[%s714 + $0x2b0] sm:$0xff] %v3200
        %3233 = vst [vmem:[%s714 + $0x2b8] sm:$0xff] %v3201
        %3234 = vst [vmem:[%s714 + $0x2e0] sm:$0xff] %v3202
        %3235 = vst [vmem:[%s714 + $0x2e8] sm:$0xff] %v3203
        %v3237 = vshrl.u32 %v3172, 16
        %v3239 = vrot.slane %v3237, 7
        %v3240 = vshll.u32 %v3172, 16
        %v3242 = vor.u32 %v3239, %v3240
        %v3244 = vshrl.u32 %v3173, 16
        %v3246 = vrot.slane %v3244, 7
        %v3247 = vshll.u32 %v3173, 16
        %v3249 = vor.u32 %v3246, %v3247
        %v3251 = vshrl.u32 %v3174, 16
        %v3253 = vrot.slane %v3251, 7
        %v3254 = vshll.u32 %v3174, 16
        %v3256 = vor.u32 %v3253, %v3254
        %v3258 = vshrl.u32 %v3175, 16
        %v3260 = vrot.slane %v3258, 7
        %v3261 = vshll.u32 %v3175, 16
        %v3263 = vor.u32 %v3260, %v3261
        %v3265 = vshrl.u32 %v3176, 16
        %v3267 = vrot.slane %v3265, 7
        %v3268 = vshll.u32 %v3176, 16
        %v3270 = vor.u32 %v3267, %v3268
        %v3272 = vshrl.u32 %v3177, 16
        %v3274 = vrot.slane %v3272, 7
        %v3275 = vshll.u32 %v3177, 16
        %v3277 = vor.u32 %v3274, %v3275
        %v3279 = vshrl.u32 %v3178, 16
        %v3281 = vrot.slane %v3279, 7
        %v3282 = vshll.u32 %v3178, 16
        %v3284 = vor.u32 %v3281, %v3282
        %v3286 = vshrl.u32 %v3179, 16
        %v3288 = vrot.slane %v3286, 7
        %v3289 = vshll.u32 %v3179, 16
        %v3291 = vor.u32 %v3288, %v3289
        %v3293 = vshrl.u32 %v3180, 16
        %v3295 = vrot.slane %v3293, 7
        %v3296 = vshll.u32 %v3180, 16
        %v3298 = vor.u32 %v3295, %v3296
        %v3300 = vshrl.u32 %v3181, 16
        %v3302 = vrot.slane %v3300, 7
        %v3303 = vshll.u32 %v3181, 16
        %v3305 = vor.u32 %v3302, %v3303
        %v3307 = vshrl.u32 %v3182, 16
        %v3309 = vrot.slane %v3307, 7
        %v3310 = vshll.u32 %v3182, 16
        %v3312 = vor.u32 %v3309, %v3310
        %v3314 = vshrl.u32 %v3183, 16
        %v3316 = vrot.slane %v3314, 7
        %v3317 = vshll.u32 %v3183, 16
        %v3319 = vor.u32 %v3316, %v3317
        %v3321 = vshrl.u32 %v3184, 16
        %v3323 = vrot.slane %v3321, 7
        %v3324 = vshll.u32 %v3184, 16
        %v3326 = vor.u32 %v3323, %v3324
        %v3328 = vshrl.u32 %v3185, 16
        %v3330 = vrot.slane %v3328, 7
        %v3331 = vshll.u32 %v3185, 16
        %v3333 = vor.u32 %v3330, %v3331
        %v3335 = vshrl.u32 %v3186, 16
        %v3337 = vrot.slane %v3335, 7
        %v3338 = vshll.u32 %v3186, 16
        %v3340 = vor.u32 %v3337, %v3338
        %v3342 = vshrl.u32 %v3187, 16
        %v3344 = vrot.slane %v3342, 7
        %v3345 = vshll.u32 %v3187, 16
        %v3347 = vor.u32 %v3344, %v3345
        %v3349 = vshrl.u32 %v3188, 16
        %v3351 = vrot.slane %v3349, 7
        %v3352 = vshll.u32 %v3188, 16
        %v3354 = vor.u32 %v3351, %v3352
        %v3356 = vshrl.u32 %v3189, 16
        %v3358 = vrot.slane %v3356, 7
        %v3359 = vshll.u32 %v3189, 16
        %v3361 = vor.u32 %v3358, %v3359
        %v3363 = vshrl.u32 %v3190, 16
        %v3365 = vrot.slane %v3363, 7
        %v3366 = vshll.u32 %v3190, 16
        %v3368 = vor.u32 %v3365, %v3366
        %v3370 = vshrl.u32 %v3191, 16
        %v3372 = vrot.slane %v3370, 7
        %v3373 = vshll.u32 %v3191, 16
        %v3375 = vor.u32 %v3372, %v3373
        %v3377 = vshrl.u32 %v3192, 16
        %v3379 = vrot.slane %v3377, 7
        %v3380 = vshll.u32 %v3192, 16
        %v3382 = vor.u32 %v3379, %v3380
        %v3384 = vshrl.u32 %v3193, 16
        %v3386 = vrot.slane %v3384, 7
        %v3387 = vshll.u32 %v3193, 16
        %v3389 = vor.u32 %v3386, %v3387
        %v3391 = vshrl.u32 %v3194, 16
        %v3393 = vrot.slane %v3391, 7
        %v3394 = vshll.u32 %v3194, 16
        %v3396 = vor.u32 %v3393, %v3394
        %v3398 = vshrl.u32 %v3195, 16
        %v3400 = vrot.slane %v3398, 7
        %v3401 = vshll.u32 %v3195, 16
        %v3403 = vor.u32 %v3400, %v3401
        %v3405 = vshrl.u32 %v3196, 16
        %v3407 = vrot.slane %v3405, 7
        %v3408 = vshll.u32 %v3196, 16
        %v3410 = vor.u32 %v3407, %v3408
        %v3412 = vshrl.u32 %v3197, 16
        %v3414 = vrot.slane %v3412, 7
        %v3415 = vshll.u32 %v3197, 16
        %v3417 = vor.u32 %v3414, %v3415
        %v3419 = vshrl.u32 %v3198, 16
        %v3421 = vrot.slane %v3419, 7
        %v3422 = vshll.u32 %v3198, 16
        %v3424 = vor.u32 %v3421, %v3422
        %v3426 = vshrl.u32 %v3199, 16
        %v3428 = vrot.slane %v3426, 7
        %v3429 = vshll.u32 %v3199, 16
        %v3431 = vor.u32 %v3428, %v3429
        %v3433 = vshrl.u32 %v3200, 16
        %v3435 = vrot.slane %v3433, 7
        %v3436 = vshll.u32 %v3200, 16
        %v3438 = vor.u32 %v3435, %v3436
        %v3440 = vshrl.u32 %v3201, 16
        %v3442 = vrot.slane %v3440, 7
        %v3443 = vshll.u32 %v3201, 16
        %v3445 = vor.u32 %v3442, %v3443
        %v3447 = vshrl.u32 %v3202, 16
        %v3449 = vrot.slane %v3447, 7
        %v3450 = vshll.u32 %v3202, 16
        %v3452 = vor.u32 %v3449, %v3450
        %v3454 = vshrl.u32 %v3203, 16
        %v3456 = vrot.slane %v3454, 7
        %v3457 = vshll.u32 %v3203, 16
        %v3459 = vor.u32 %v3456, %v3457
        %v3492 = vld [vmem:[%s714] sm:$0xff]
        %v3493 = vsel %vm554, %v3242, %v3492
        %3494 = vst [vmem:[%s714] sm:$0xff] %v3493
        %v3495 = vld [vmem:[%s714 + $0x8] sm:$0xff]
        %v3496 = vsel %vm554, %v3249, %v3495
        %3497 = vst [vmem:[%s714 + $0x8] sm:$0xff] %v3496
        %v3498 = vld [vmem:[%s714 + $0x30] sm:$0xff]
        %v3499 = vsel %vm554, %v3256, %v3498
        %3500 = vst [vmem:[%s714 + $0x30] sm:$0xff] %v3499
        %v3501 = vld [vmem:[%s714 + $0x38] sm:$0xff]
        %v3502 = vsel %vm554, %v3263, %v3501
        %3503 = vst [vmem:[%s714 + $0x38] sm:$0xff] %v3502
        %v3504 = vld [vmem:[%s714 + $0x60] sm:$0xff]
        %v3505 = vsel %vm554, %v3270, %v3504
        %3506 = vst [vmem:[%s714 + $0x60] sm:$0xff] %v3505
        %v3507 = vld [vmem:[%s714 + $0x68] sm:$0xff]
        %v3508 = vsel %vm554, %v3277, %v3507
        %3509 = vst [vmem:[%s714 + $0x68] sm:$0xff] %v3508
        %v3510 = vld [vmem:[%s714 + $0x90] sm:$0xff]
        %v3511 = vsel %vm554, %v3284, %v3510
        %3512 = vst [vmem:[%s714 + $0x90] sm:$0xff] %v3511
        %v3513 = vld [vmem:[%s714 + $0x98] sm:$0xff]
        %v3514 = vsel %vm554, %v3291, %v3513
        %3515 = vst [vmem:[%s714 + $0x98] sm:$0xff] %v3514
        %v3516 = vld [vmem:[%s714 + $0xc0] sm:$0xff]
        %v3517 = vsel %vm554, %v3298, %v3516
        %3518 = vst [vmem:[%s714 + $0xc0] sm:$0xff] %v3517
        %v3519 = vld [vmem:[%s714 + $0xc8] sm:$0xff]
        %v3520 = vsel %vm554, %v3305, %v3519
        %3521 = vst [vmem:[%s714 + $0xc8] sm:$0xff] %v3520
        %v3522 = vld [vmem:[%s714 + $0xf0] sm:$0xff]
        %v3523 = vsel %vm554, %v3312, %v3522
        %3524 = vst [vmem:[%s714 + $0xf0] sm:$0xff] %v3523
        %v3525 = vld [vmem:[%s714 + $0xf8] sm:$0xff]
        %v3526 = vsel %vm554, %v3319, %v3525
        %3527 = vst [vmem:[%s714 + $0xf8] sm:$0xff] %v3526
        %v3528 = vld [vmem:[%s714 + $0x120] sm:$0xff]
        %v3529 = vsel %vm554, %v3326, %v3528
        %3530 = vst [vmem:[%s714 + $0x120] sm:$0xff] %v3529
        %v3531 = vld [vmem:[%s714 + $0x128] sm:$0xff]
        %v3532 = vsel %vm554, %v3333, %v3531
        %3533 = vst [vmem:[%s714 + $0x128] sm:$0xff] %v3532
        %v3534 = vld [vmem:[%s714 + $0x150] sm:$0xff]
        %v3535 = vsel %vm554, %v3340, %v3534
        %3536 = vst [vmem:[%s714 + $0x150] sm:$0xff] %v3535
        %v3537 = vld [vmem:[%s714 + $0x158] sm:$0xff]
        %v3538 = vsel %vm554, %v3347, %v3537
        %3539 = vst [vmem:[%s714 + $0x158] sm:$0xff] %v3538
        %v3540 = vld [vmem:[%s714 + $0x180] sm:$0xff]
        %v3541 = vsel %vm554, %v3354, %v3540
        %3542 = vst [vmem:[%s714 + $0x180] sm:$0xff] %v3541
        %v3543 = vld [vmem:[%s714 + $0x188] sm:$0xff]
        %v3544 = vsel %vm554, %v3361, %v3543
        %3545 = vst [vmem:[%s714 + $0x188] sm:$0xff] %v3544
        %v3546 = vld [vmem:[%s714 + $0x1b0] sm:$0xff]
        %v3547 = vsel %vm554, %v3368, %v3546
        %3548 = vst [vmem:[%s714 + $0x1b0] sm:$0xff] %v3547
        %v3549 = vld [vmem:[%s714 + $0x1b8] sm:$0xff]
        %v3550 = vsel %vm554, %v3375, %v3549
        %3551 = vst [vmem:[%s714 + $0x1b8] sm:$0xff] %v3550
        %v3552 = vld [vmem:[%s714 + $0x1e0] sm:$0xff]
        %v3553 = vsel %vm554, %v3382, %v3552
        %3554 = vst [vmem:[%s714 + $0x1e0] sm:$0xff] %v3553
        %v3555 = vld [vmem:[%s714 + $0x1e8] sm:$0xff]
        %v3556 = vsel %vm554, %v3389, %v3555
        %3557 = vst [vmem:[%s714 + $0x1e8] sm:$0xff] %v3556
        %v3558 = vld [vmem:[%s714 + $0x210] sm:$0xff]
        %v3559 = vsel %vm554, %v3396, %v3558
        %3560 = vst [vmem:[%s714 + $0x210] sm:$0xff] %v3559
        %v3561 = vld [vmem:[%s714 + $0x218] sm:$0xff]
        %v3562 = vsel %vm554, %v3403, %v3561
        %3563 = vst [vmem:[%s714 + $0x218] sm:$0xff] %v3562
        %v3564 = vld [vmem:[%s714 + $0x240] sm:$0xff]
        %v3565 = vsel %vm554, %v3410, %v3564
        %3566 = vst [vmem:[%s714 + $0x240] sm:$0xff] %v3565
        %v3567 = vld [vmem:[%s714 + $0x248] sm:$0xff]
        %v3568 = vsel %vm554, %v3417, %v3567
        %3569 = vst [vmem:[%s714 + $0x248] sm:$0xff] %v3568
        %v3570 = vld [vmem:[%s714 + $0x270] sm:$0xff]
        %v3571 = vsel %vm554, %v3424, %v3570
        %3572 = vst [vmem:[%s714 + $0x270] sm:$0xff] %v3571
        %v3573 = vld [vmem:[%s714 + $0x278] sm:$0xff]
        %v3574 = vsel %vm554, %v3431, %v3573
        %3575 = vst [vmem:[%s714 + $0x278] sm:$0xff] %v3574
        %v3576 = vld [vmem:[%s714 + $0x2a0] sm:$0xff]
        %v3577 = vsel %vm554, %v3438, %v3576
        %3578 = vst [vmem:[%s714 + $0x2a0] sm:$0xff] %v3577
        %v3579 = vld [vmem:[%s714 + $0x2a8] sm:$0xff]
        %v3580 = vsel %vm554, %v3445, %v3579
        %3581 = vst [vmem:[%s714 + $0x2a8] sm:$0xff] %v3580
        %v3582 = vld [vmem:[%s714 + $0x2d0] sm:$0xff]
        %v3583 = vsel %vm554, %v3452, %v3582
        %3584 = vst [vmem:[%s714 + $0x2d0] sm:$0xff] %v3583
        %v3585 = vld [vmem:[%s714 + $0x2d8] sm:$0xff]
        %v3586 = vsel %vm554, %v3459, %v3585
        %3587 = vst [vmem:[%s714 + $0x2d8] sm:$0xff] %v3586
        %v3588 = vrot.slane %v3240, 1
        %v3589 = vor.u32 %v3237, %v3588
        %v3590 = vrot.slane %v3247, 1
        %v3591 = vor.u32 %v3244, %v3590
        %v3592 = vrot.slane %v3254, 1
        %v3593 = vor.u32 %v3251, %v3592
        %v3594 = vrot.slane %v3261, 1
        %v3595 = vor.u32 %v3258, %v3594
        %v3596 = vrot.slane %v3268, 1
        %v3597 = vor.u32 %v3265, %v3596
        %v3598 = vrot.slane %v3275, 1
        %v3599 = vor.u32 %v3272, %v3598
        %v3600 = vrot.slane %v3282, 1
        %v3601 = vor.u32 %v3279, %v3600
        %v3602 = vrot.slane %v3289, 1
        %v3603 = vor.u32 %v3286, %v3602
        %v3604 = vrot.slane %v3296, 1
        %v3605 = vor.u32 %v3293, %v3604
        %v3606 = vrot.slane %v3303, 1
        %v3607 = vor.u32 %v3300, %v3606
        %v3608 = vrot.slane %v3310, 1
        %v3609 = vor.u32 %v3307, %v3608
        %v3610 = vrot.slane %v3317, 1
        %v3611 = vor.u32 %v3314, %v3610
        %v3612 = vrot.slane %v3324, 1
        %v3613 = vor.u32 %v3321, %v3612
        %v3614 = vrot.slane %v3331, 1
        %v3615 = vor.u32 %v3328, %v3614
        %v3616 = vrot.slane %v3338, 1
        %v3617 = vor.u32 %v3335, %v3616
        %v3618 = vrot.slane %v3345, 1
        %v3619 = vor.u32 %v3342, %v3618
        %v3620 = vrot.slane %v3352, 1
        %v3621 = vor.u32 %v3349, %v3620
        %v3622 = vrot.slane %v3359, 1
        %v3623 = vor.u32 %v3356, %v3622
        %v3624 = vrot.slane %v3366, 1
        %v3625 = vor.u32 %v3363, %v3624
        %v3626 = vrot.slane %v3373, 1
        %v3627 = vor.u32 %v3370, %v3626
        %v3628 = vrot.slane %v3380, 1
        %v3629 = vor.u32 %v3377, %v3628
        %v3630 = vrot.slane %v3387, 1
        %v3631 = vor.u32 %v3384, %v3630
        %v3632 = vrot.slane %v3394, 1
        %v3633 = vor.u32 %v3391, %v3632
        %v3634 = vrot.slane %v3401, 1
        %v3635 = vor.u32 %v3398, %v3634
        %v3636 = vrot.slane %v3408, 1
        %v3637 = vor.u32 %v3405, %v3636
        %v3638 = vrot.slane %v3415, 1
        %v3639 = vor.u32 %v3412, %v3638
        %v3640 = vrot.slane %v3422, 1
        %v3641 = vor.u32 %v3419, %v3640
        %v3642 = vrot.slane %v3429, 1
        %v3643 = vor.u32 %v3426, %v3642
        %v3644 = vrot.slane %v3436, 1
        %v3645 = vor.u32 %v3433, %v3644
        %v3646 = vrot.slane %v3443, 1
        %v3647 = vor.u32 %v3440, %v3646
        %v3648 = vrot.slane %v3450, 1
        %v3649 = vor.u32 %v3447, %v3648
        %v3650 = vrot.slane %v3457, 1
        %v3651 = vor.u32 %v3454, %v3650
        %v3684 = vld [vmem:[%s714 + $0x20] sm:$0xff]
        %v3685 = vsel %vm652, %v3589, %v3684
        %3686 = vst [vmem:[%s714 + $0x20] sm:$0xff] %v3685
        %v3687 = vld [vmem:[%s714 + $0x28] sm:$0xff]
        %v3688 = vsel %vm652, %v3591, %v3687
        %3689 = vst [vmem:[%s714 + $0x28] sm:$0xff] %v3688
        %v3690 = vld [vmem:[%s714 + $0x50] sm:$0xff]
        %v3691 = vsel %vm652, %v3593, %v3690
        %3692 = vst [vmem:[%s714 + $0x50] sm:$0xff] %v3691
        %v3693 = vld [vmem:[%s714 + $0x58] sm:$0xff]
        %v3694 = vsel %vm652, %v3595, %v3693
        %3695 = vst [vmem:[%s714 + $0x58] sm:$0xff] %v3694
        %v3696 = vld [vmem:[%s714 + $0x80] sm:$0xff]
        %v3697 = vsel %vm652, %v3597, %v3696
        %3698 = vst [vmem:[%s714 + $0x80] sm:$0xff] %v3697
        %v3699 = vld [vmem:[%s714 + $0x88] sm:$0xff]
        %v3700 = vsel %vm652, %v3599, %v3699
        %3701 = vst [vmem:[%s714 + $0x88] sm:$0xff] %v3700
        %v3702 = vld [vmem:[%s714 + $0xb0] sm:$0xff]
        %v3703 = vsel %vm652, %v3601, %v3702
        %3704 = vst [vmem:[%s714 + $0xb0] sm:$0xff] %v3703
        %v3705 = vld [vmem:[%s714 + $0xb8] sm:$0xff]
        %v3706 = vsel %vm652, %v3603, %v3705
        %3707 = vst [vmem:[%s714 + $0xb8] sm:$0xff] %v3706
        %v3708 = vld [vmem:[%s714 + $0xe0] sm:$0xff]
        %v3709 = vsel %vm652, %v3605, %v3708
        %3710 = vst [vmem:[%s714 + $0xe0] sm:$0xff] %v3709
        %v3711 = vld [vmem:[%s714 + $0xe8] sm:$0xff]
        %v3712 = vsel %vm652, %v3607, %v3711
        %3713 = vst [vmem:[%s714 + $0xe8] sm:$0xff] %v3712
        %v3714 = vld [vmem:[%s714 + $0x110] sm:$0xff]
        %v3715 = vsel %vm652, %v3609, %v3714
        %3716 = vst [vmem:[%s714 + $0x110] sm:$0xff] %v3715
        %v3717 = vld [vmem:[%s714 + $0x118] sm:$0xff]
        %v3718 = vsel %vm652, %v3611, %v3717
        %3719 = vst [vmem:[%s714 + $0x118] sm:$0xff] %v3718
        %v3720 = vld [vmem:[%s714 + $0x140] sm:$0xff]
        %v3721 = vsel %vm652, %v3613, %v3720
        %3722 = vst [vmem:[%s714 + $0x140] sm:$0xff] %v3721
        %v3723 = vld [vmem:[%s714 + $0x148] sm:$0xff]
        %v3724 = vsel %vm652, %v3615, %v3723
        %3725 = vst [vmem:[%s714 + $0x148] sm:$0xff] %v3724
        %v3726 = vld [vmem:[%s714 + $0x170] sm:$0xff]
        %v3727 = vsel %vm652, %v3617, %v3726
        %3728 = vst [vmem:[%s714 + $0x170] sm:$0xff] %v3727
        %v3729 = vld [vmem:[%s714 + $0x178] sm:$0xff]
        %v3730 = vsel %vm652, %v3619, %v3729
        %3731 = vst [vmem:[%s714 + $0x178] sm:$0xff] %v3730
        %v3732 = vld [vmem:[%s714 + $0x1a0] sm:$0xff]
        %v3733 = vsel %vm652, %v3621, %v3732
        %3734 = vst [vmem:[%s714 + $0x1a0] sm:$0xff] %v3733
        %v3735 = vld [vmem:[%s714 + $0x1a8] sm:$0xff]
        %v3736 = vsel %vm652, %v3623, %v3735
        %3737 = vst [vmem:[%s714 + $0x1a8] sm:$0xff] %v3736
        %v3738 = vld [vmem:[%s714 + $0x1d0] sm:$0xff]
        %v3739 = vsel %vm652, %v3625, %v3738
        %3740 = vst [vmem:[%s714 + $0x1d0] sm:$0xff] %v3739
        %v3741 = vld [vmem:[%s714 + $0x1d8] sm:$0xff]
        %v3742 = vsel %vm652, %v3627, %v3741
        %3743 = vst [vmem:[%s714 + $0x1d8] sm:$0xff] %v3742
        %v3744 = vld [vmem:[%s714 + $0x200] sm:$0xff]
        %v3745 = vsel %vm652, %v3629, %v3744
        %3746 = vst [vmem:[%s714 + $0x200] sm:$0xff] %v3745
        %v3747 = vld [vmem:[%s714 + $0x208] sm:$0xff]
        %v3748 = vsel %vm652, %v3631, %v3747
        %3749 = vst [vmem:[%s714 + $0x208] sm:$0xff] %v3748
        %v3750 = vld [vmem:[%s714 + $0x230] sm:$0xff]
        %v3751 = vsel %vm652, %v3633, %v3750
        %3752 = vst [vmem:[%s714 + $0x230] sm:$0xff] %v3751
        %v3753 = vld [vmem:[%s714 + $0x238] sm:$0xff]
        %v3754 = vsel %vm652, %v3635, %v3753
        %3755 = vst [vmem:[%s714 + $0x238] sm:$0xff] %v3754
        %v3756 = vld [vmem:[%s714 + $0x260] sm:$0xff]
        %v3757 = vsel %vm652, %v3637, %v3756
        %3758 = vst [vmem:[%s714 + $0x260] sm:$0xff] %v3757
        %v3759 = vld [vmem:[%s714 + $0x268] sm:$0xff]
        %v3760 = vsel %vm652, %v3639, %v3759
        %3761 = vst [vmem:[%s714 + $0x268] sm:$0xff] %v3760
        %v3762 = vld [vmem:[%s714 + $0x290] sm:$0xff]
        %v3763 = vsel %vm652, %v3641, %v3762
        %3764 = vst [vmem:[%s714 + $0x290] sm:$0xff] %v3763
        %v3765 = vld [vmem:[%s714 + $0x298] sm:$0xff]
        %v3766 = vsel %vm652, %v3643, %v3765
        %3767 = vst [vmem:[%s714 + $0x298] sm:$0xff] %v3766
        %v3768 = vld [vmem:[%s714 + $0x2c0] sm:$0xff]
        %v3769 = vsel %vm652, %v3645, %v3768
        %3770 = vst [vmem:[%s714 + $0x2c0] sm:$0xff] %v3769
        %v3771 = vld [vmem:[%s714 + $0x2c8] sm:$0xff]
        %v3772 = vsel %vm652, %v3647, %v3771
        %3773 = vst [vmem:[%s714 + $0x2c8] sm:$0xff] %v3772
        %v3774 = vld [vmem:[%s714 + $0x2f0] sm:$0xff]
        %v3775 = vsel %vm652, %v3649, %v3774
        %3776 = vst [vmem:[%s714 + $0x2f0] sm:$0xff] %v3775
        %v3777 = vld [vmem:[%s714 + $0x2f8] sm:$0xff]
        %v3778 = vsel %vm652, %v3651, %v3777
        %3779 = vst [vmem:[%s714 + $0x2f8] sm:$0xff] %v3778
        %v3780 = vld [vmem:[#allocation3] sm:$0xff]
        %v3781 = vld [vmem:[#allocation3 + $0x8] sm:$0xff]
        %v3782 = vld [vmem:[#allocation3 + $0x10] sm:$0xff]
        %v3783 = vld [vmem:[#allocation3 + $0x18] sm:$0xff]
        %v3784 = vld [vmem:[#allocation3 + $0x20] sm:$0xff]
        %v3785 = vld [vmem:[#allocation3 + $0x28] sm:$0xff]
        %v3786 = vld [vmem:[#allocation3 + $0x30] sm:$0xff]
        %v3787 = vld [vmem:[#allocation3 + $0x38] sm:$0xff]
        %v3788 = vld [vmem:[#allocation3 + $0x40] sm:$0xff]
        %v3789 = vld [vmem:[#allocation3 + $0x48] sm:$0xff]
        %v3790 = vld [vmem:[#allocation3 + $0x50] sm:$0xff]
        %v3791 = vld [vmem:[#allocation3 + $0x58] sm:$0xff]
        %v3792 = vld [vmem:[#allocation3 + $0x60] sm:$0xff]
        %v3793 = vld [vmem:[#allocation3 + $0x68] sm:$0xff]
        %v3794 = vld [vmem:[#allocation3 + $0x70] sm:$0xff]
        %v3795 = vld [vmem:[#allocation3 + $0x78] sm:$0xff]
        %v3796 = vld [vmem:[#allocation3 + $0x80] sm:$0xff]
        %v3797 = vld [vmem:[#allocation3 + $0x88] sm:$0xff]
        %v3798 = vld [vmem:[#allocation3 + $0x90] sm:$0xff]
        %v3799 = vld [vmem:[#allocation3 + $0x98] sm:$0xff]
        %v3800 = vld [vmem:[#allocation3 + $0xa0] sm:$0xff]
        %v3801 = vld [vmem:[#allocation3 + $0xa8] sm:$0xff]
        %v3802 = vld [vmem:[#allocation3 + $0xb0] sm:$0xff]
        %v3803 = vld [vmem:[#allocation3 + $0xb8] sm:$0xff]
        %v3804 = vld [vmem:[#allocation3 + $0xc0] sm:$0xff]
        %v3805 = vld [vmem:[#allocation3 + $0xc8] sm:$0xff]
        %v3806 = vld [vmem:[#allocation3 + $0xd0] sm:$0xff]
        %v3807 = vld [vmem:[#allocation3 + $0xd8] sm:$0xff]
        %v3808 = vld [vmem:[#allocation3 + $0xe0] sm:$0xff]
        %v3809 = vld [vmem:[#allocation3 + $0xe8] sm:$0xff]
        %v3810 = vld [vmem:[#allocation3 + $0xf0] sm:$0xff]
        %v3811 = vld [vmem:[#allocation3 + $0xf8] sm:$0xff]
        %v3812 = vld [vmem:[#allocation3 + $0x100] sm:$0xff]
        %v3813 = vld [vmem:[#allocation3 + $0x108] sm:$0xff]
        %v3814 = vld [vmem:[#allocation3 + $0x110] sm:$0xff]
        %v3815 = vld [vmem:[#allocation3 + $0x118] sm:$0xff]
        %v3816 = vld [vmem:[#allocation3 + $0x120] sm:$0xff]
        %v3817 = vld [vmem:[#allocation3 + $0x128] sm:$0xff]
        %v3818 = vld [vmem:[#allocation3 + $0x130] sm:$0xff]
        %v3819 = vld [vmem:[#allocation3 + $0x138] sm:$0xff]
        %v3820 = vld [vmem:[#allocation3 + $0x140] sm:$0xff]
        %v3821 = vld [vmem:[#allocation3 + $0x148] sm:$0xff]
        %v3822 = vld [vmem:[#allocation3 + $0x150] sm:$0xff]
        %v3823 = vld [vmem:[#allocation3 + $0x158] sm:$0xff]
        %v3824 = vld [vmem:[#allocation3 + $0x160] sm:$0xff]
        %v3825 = vld [vmem:[#allocation3 + $0x168] sm:$0xff]
        %v3826 = vld [vmem:[#allocation3 + $0x170] sm:$0xff]
        %v3827 = vld [vmem:[#allocation3 + $0x178] sm:$0xff]
        %v3828 = vld [vmem:[#allocation3 + $0x180] sm:$0xff]
        %v3829 = vld [vmem:[#allocation3 + $0x188] sm:$0xff]
        %v3830 = vld [vmem:[#allocation3 + $0x190] sm:$0xff]
        %v3831 = vld [vmem:[#allocation3 + $0x198] sm:$0xff]
        %v3832 = vld [vmem:[#allocation3 + $0x1a0] sm:$0xff]
        %v3833 = vld [vmem:[#allocation3 + $0x1a8] sm:$0xff]
        %v3834 = vld [vmem:[#allocation3 + $0x1b0] sm:$0xff]
        %v3835 = vld [vmem:[#allocation3 + $0x1b8] sm:$0xff]
        %v3836 = vld [vmem:[#allocation3 + $0x1c0] sm:$0xff]
        %v3837 = vld [vmem:[#allocation3 + $0x1c8] sm:$0xff]
        %v3838 = vld [vmem:[#allocation3 + $0x1d0] sm:$0xff]
        %v3839 = vld [vmem:[#allocation3 + $0x1d8] sm:$0xff]
        %v3840 = vld [vmem:[#allocation3 + $0x1e0] sm:$0xff]
        %v3841 = vld [vmem:[#allocation3 + $0x1e8] sm:$0xff]
        %v3842 = vld [vmem:[#allocation3 + $0x1f0] sm:$0xff]
        %v3843 = vld [vmem:[#allocation3 + $0x1f8] sm:$0xff]
        %v3844 = vld [vmem:[#allocation3 + $0x200] sm:$0xff]
        %v3845 = vld [vmem:[#allocation3 + $0x208] sm:$0xff]
        %v3846 = vld [vmem:[#allocation3 + $0x210] sm:$0xff]
        %v3847 = vld [vmem:[#allocation3 + $0x218] sm:$0xff]
        %v3848 = vld [vmem:[#allocation3 + $0x220] sm:$0xff]
        %v3849 = vld [vmem:[#allocation3 + $0x228] sm:$0xff]
        %v3850 = vld [vmem:[#allocation3 + $0x230] sm:$0xff]
        %v3851 = vld [vmem:[#allocation3 + $0x238] sm:$0xff]
        %v3852 = vld [vmem:[#allocation3 + $0x240] sm:$0xff]
        %v3853 = vld [vmem:[#allocation3 + $0x248] sm:$0xff]
        %v3854 = vld [vmem:[#allocation3 + $0x250] sm:$0xff]
        %v3855 = vld [vmem:[#allocation3 + $0x258] sm:$0xff]
        %v3856 = vld [vmem:[#allocation3 + $0x260] sm:$0xff]
        %v3857 = vld [vmem:[#allocation3 + $0x268] sm:$0xff]
        %v3858 = vld [vmem:[#allocation3 + $0x270] sm:$0xff]
        %v3859 = vld [vmem:[#allocation3 + $0x278] sm:$0xff]
        %v3860 = vld [vmem:[#allocation3 + $0x280] sm:$0xff]
        %v3861 = vld [vmem:[#allocation3 + $0x288] sm:$0xff]
        %v3862 = vld [vmem:[#allocation3 + $0x290] sm:$0xff]
        %v3863 = vld [vmem:[#allocation3 + $0x298] sm:$0xff]
        %v3864 = vld [vmem:[#allocation3 + $0x2a0] sm:$0xff]
        %v3865 = vld [vmem:[#allocation3 + $0x2a8] sm:$0xff]
        %v3866 = vld [vmem:[#allocation3 + $0x2b0] sm:$0xff]
        %v3867 = vld [vmem:[#allocation3 + $0x2b8] sm:$0xff]
        %v3868 = vld [vmem:[#allocation3 + $0x2c0] sm:$0xff]
        %v3869 = vld [vmem:[#allocation3 + $0x2c8] sm:$0xff]
        %v3870 = vld [vmem:[#allocation3 + $0x2d0] sm:$0xff]
        %v3871 = vld [vmem:[#allocation3 + $0x2d8] sm:$0xff]
        %v3872 = vld [vmem:[#allocation3 + $0x2e0] sm:$0xff]
        %v3873 = vld [vmem:[#allocation3 + $0x2e8] sm:$0xff]
        %v3874 = vld [vmem:[#allocation3 + $0x2f0] sm:$0xff]
        %v3875 = vld [vmem:[#allocation3 + $0x2f8] sm:$0xff]
        %v3876 = vld [vmem:[%s714] sm:$0xff]
        %v3877 = vld [vmem:[%s714 + $0x8] sm:$0xff]
        %v3878 = vld [vmem:[%s714 + $0x10] sm:$0xff]
        %v3879 = vld [vmem:[%s714 + $0x18] sm:$0xff]
        %v3880 = vld [vmem:[%s714 + $0x20] sm:$0xff]
        %v3881 = vld [vmem:[%s714 + $0x28] sm:$0xff]
        %v3882 = vld [vmem:[%s714 + $0x30] sm:$0xff]
        %v3883 = vld [vmem:[%s714 + $0x38] sm:$0xff]
        %v3884 = vld [vmem:[%s714 + $0x40] sm:$0xff]
        %v3885 = vld [vmem:[%s714 + $0x48] sm:$0xff]
        %v3886 = vld [vmem:[%s714 + $0x50] sm:$0xff]
        %v3887 = vld [vmem:[%s714 + $0x58] sm:$0xff]
        %v3888 = vld [vmem:[%s714 + $0x60] sm:$0xff]
        %v3889 = vld [vmem:[%s714 + $0x68] sm:$0xff]
        %v3890 = vld [vmem:[%s714 + $0x70] sm:$0xff]
        %v3891 = vld [vmem:[%s714 + $0x78] sm:$0xff]
        %v3892 = vld [vmem:[%s714 + $0x80] sm:$0xff]
        %v3893 = vld [vmem:[%s714 + $0x88] sm:$0xff]
        %v3894 = vld [vmem:[%s714 + $0x90] sm:$0xff]
        %v3895 = vld [vmem:[%s714 + $0x98] sm:$0xff]
        %v3896 = vld [vmem:[%s714 + $0xa0] sm:$0xff]
        %v3897 = vld [vmem:[%s714 + $0xa8] sm:$0xff]
        %v3898 = vld [vmem:[%s714 + $0xb0] sm:$0xff]
        %v3899 = vld [vmem:[%s714 + $0xb8] sm:$0xff]
        %v3900 = vld [vmem:[%s714 + $0xc0] sm:$0xff]
        %v3901 = vld [vmem:[%s714 + $0xc8] sm:$0xff]
        %v3902 = vld [vmem:[%s714 + $0xd0] sm:$0xff]
        %v3903 = vld [vmem:[%s714 + $0xd8] sm:$0xff]
        %v3904 = vld [vmem:[%s714 + $0xe0] sm:$0xff]
        %v3905 = vld [vmem:[%s714 + $0xe8] sm:$0xff]
        %v3906 = vld [vmem:[%s714 + $0xf0] sm:$0xff]
        %v3907 = vld [vmem:[%s714 + $0xf8] sm:$0xff]
        %v3908 = vld [vmem:[%s714 + $0x100] sm:$0xff]
        %v3909 = vld [vmem:[%s714 + $0x108] sm:$0xff]
        %v3910 = vld [vmem:[%s714 + $0x110] sm:$0xff]
        %v3911 = vld [vmem:[%s714 + $0x118] sm:$0xff]
        %v3912 = vld [vmem:[%s714 + $0x120] sm:$0xff]
        %v3913 = vld [vmem:[%s714 + $0x128] sm:$0xff]
        %v3914 = vld [vmem:[%s714 + $0x130] sm:$0xff]
        %v3915 = vld [vmem:[%s714 + $0x138] sm:$0xff]
        %v3916 = vld [vmem:[%s714 + $0x140] sm:$0xff]
        %v3917 = vld [vmem:[%s714 + $0x148] sm:$0xff]
        %v3918 = vld [vmem:[%s714 + $0x150] sm:$0xff]
        %v3919 = vld [vmem:[%s714 + $0x158] sm:$0xff]
        %v3920 = vld [vmem:[%s714 + $0x160] sm:$0xff]
        %v3921 = vld [vmem:[%s714 + $0x168] sm:$0xff]
        %v3922 = vld [vmem:[%s714 + $0x170] sm:$0xff]
        %v3923 = vld [vmem:[%s714 + $0x178] sm:$0xff]
        %v3924 = vld [vmem:[%s714 + $0x180] sm:$0xff]
        %v3925 = vld [vmem:[%s714 + $0x188] sm:$0xff]
        %v3926 = vld [vmem:[%s714 + $0x190] sm:$0xff]
        %v3927 = vld [vmem:[%s714 + $0x198] sm:$0xff]
        %v3928 = vld [vmem:[%s714 + $0x1a0] sm:$0xff]
        %v3929 = vld [vmem:[%s714 + $0x1a8] sm:$0xff]
        %v3930 = vld [vmem:[%s714 + $0x1b0] sm:$0xff]
        %v3931 = vld [vmem:[%s714 + $0x1b8] sm:$0xff]
        %v3932 = vld [vmem:[%s714 + $0x1c0] sm:$0xff]
        %v3933 = vld [vmem:[%s714 + $0x1c8] sm:$0xff]
        %v3934 = vld [vmem:[%s714 + $0x1d0] sm:$0xff]
        %v3935 = vld [vmem:[%s714 + $0x1d8] sm:$0xff]
        %v3936 = vld [vmem:[%s714 + $0x1e0] sm:$0xff]
        %v3937 = vld [vmem:[%s714 + $0x1e8] sm:$0xff]
        %v3938 = vld [vmem:[%s714 + $0x1f0] sm:$0xff]
        %v3939 = vld [vmem:[%s714 + $0x1f8] sm:$0xff]
        %v3940 = vld [vmem:[%s714 + $0x200] sm:$0xff]
        %v3941 = vld [vmem:[%s714 + $0x208] sm:$0xff]
        %v3942 = vld [vmem:[%s714 + $0x210] sm:$0xff]
        %v3943 = vld [vmem:[%s714 + $0x218] sm:$0xff]
        %v3944 = vld [vmem:[%s714 + $0x220] sm:$0xff]
        %v3945 = vld [vmem:[%s714 + $0x228] sm:$0xff]
        %v3946 = vld [vmem:[%s714 + $0x230] sm:$0xff]
        %v3947 = vld [vmem:[%s714 + $0x238] sm:$0xff]
        %v3948 = vld [vmem:[%s714 + $0x240] sm:$0xff]
        %v3949 = vld [vmem:[%s714 + $0x248] sm:$0xff]
        %v3950 = vld [vmem:[%s714 + $0x250] sm:$0xff]
        %v3951 = vld [vmem:[%s714 + $0x258] sm:$0xff]
        %v3952 = vld [vmem:[%s714 + $0x260] sm:$0xff]
        %v3953 = vld [vmem:[%s714 + $0x268] sm:$0xff]
        %v3954 = vld [vmem:[%s714 + $0x270] sm:$0xff]
        %v3955 = vld [vmem:[%s714 + $0x278] sm:$0xff]
        %v3956 = vld [vmem:[%s714 + $0x280] sm:$0xff]
        %v3957 = vld [vmem:[%s714 + $0x288] sm:$0xff]
        %v3958 = vld [vmem:[%s714 + $0x290] sm:$0xff]
        %v3959 = vld [vmem:[%s714 + $0x298] sm:$0xff]
        %v3960 = vld [vmem:[%s714 + $0x2a0] sm:$0xff]
        %v3961 = vld [vmem:[%s714 + $0x2a8] sm:$0xff]
        %v3962 = vld [vmem:[%s714 + $0x2b0] sm:$0xff]
        %v3963 = vld [vmem:[%s714 + $0x2b8] sm:$0xff]
        %v3964 = vld [vmem:[%s714 + $0x2c0] sm:$0xff]
        %v3965 = vld [vmem:[%s714 + $0x2c8] sm:$0xff]
        %v3966 = vld [vmem:[%s714 + $0x2d0] sm:$0xff]
        %v3967 = vld [vmem:[%s714 + $0x2d8] sm:$0xff]
        %v3968 = vld [vmem:[%s714 + $0x2e0] sm:$0xff]
        %v3969 = vld [vmem:[%s714 + $0x2e8] sm:$0xff]
        %v3970 = vld [vmem:[%s714 + $0x2f0] sm:$0xff]
        %v3971 = vld [vmem:[%s714 + $0x2f8] sm:$0xff]
        %s3972 = scalar_lea.vmem [#allocation3], 96
        %v3973 = vld [vmem:[%s3972] sm:$0xff]
        %v3974 = vld [vmem:[%s3972 + $0x8] sm:$0xff]
        %v3975 = vld [vmem:[%s3972 + $0x10] sm:$0xff]
        %v3976 = vld [vmem:[%s3972 + $0x18] sm:$0xff]
        %v3977 = vld [vmem:[%s3972 + $0x20] sm:$0xff]
        %v3978 = vld [vmem:[%s3972 + $0x28] sm:$0xff]
        %v3979 = vld [vmem:[%s3972 + $0x30] sm:$0xff]
        %v3980 = vld [vmem:[%s3972 + $0x38] sm:$0xff]
        %v3981 = vld [vmem:[%s3972 + $0x40] sm:$0xff]
        %v3982 = vld [vmem:[%s3972 + $0x48] sm:$0xff]
        %v3983 = vld [vmem:[%s3972 + $0x50] sm:$0xff]
        %v3984 = vld [vmem:[%s3972 + $0x58] sm:$0xff]
        %v3985 = vld [vmem:[%s3972 + $0x60] sm:$0xff]
        %v3986 = vld [vmem:[%s3972 + $0x68] sm:$0xff]
        %v3987 = vld [vmem:[%s3972 + $0x70] sm:$0xff]
        %v3988 = vld [vmem:[%s3972 + $0x78] sm:$0xff]
        %v3989 = vld [vmem:[%s3972 + $0x80] sm:$0xff]
        %v3990 = vld [vmem:[%s3972 + $0x88] sm:$0xff]
        %v3991 = vld [vmem:[%s3972 + $0x90] sm:$0xff]
        %v3992 = vld [vmem:[%s3972 + $0x98] sm:$0xff]
        %v3993 = vld [vmem:[%s3972 + $0xa0] sm:$0xff]
        %v3994 = vld [vmem:[%s3972 + $0xa8] sm:$0xff]
        %v3995 = vld [vmem:[%s3972 + $0xb0] sm:$0xff]
        %v3996 = vld [vmem:[%s3972 + $0xb8] sm:$0xff]
        %v3997 = vld [vmem:[%s3972 + $0xc0] sm:$0xff]
        %v3998 = vld [vmem:[%s3972 + $0xc8] sm:$0xff]
        %v3999 = vld [vmem:[%s3972 + $0xd0] sm:$0xff]
        %v4000 = vld [vmem:[%s3972 + $0xd8] sm:$0xff]
        %v4001 = vld [vmem:[%s3972 + $0xe0] sm:$0xff]
        %v4002 = vld [vmem:[%s3972 + $0xe8] sm:$0xff]
        %v4003 = vld [vmem:[%s3972 + $0xf0] sm:$0xff]
        %v4004 = vld [vmem:[%s3972 + $0xf8] sm:$0xff]
        %v4005 = vld [vmem:[%s3972 + $0x100] sm:$0xff]
        %v4006 = vld [vmem:[%s3972 + $0x108] sm:$0xff]
        %v4007 = vld [vmem:[%s3972 + $0x110] sm:$0xff]
        %v4008 = vld [vmem:[%s3972 + $0x118] sm:$0xff]
        %v4009 = vld [vmem:[%s3972 + $0x120] sm:$0xff]
        %v4010 = vld [vmem:[%s3972 + $0x128] sm:$0xff]
        %v4011 = vld [vmem:[%s3972 + $0x130] sm:$0xff]
        %v4012 = vld [vmem:[%s3972 + $0x138] sm:$0xff]
        %v4013 = vld [vmem:[%s3972 + $0x140] sm:$0xff]
        %v4014 = vld [vmem:[%s3972 + $0x148] sm:$0xff]
        %v4015 = vld [vmem:[%s3972 + $0x150] sm:$0xff]
        %v4016 = vld [vmem:[%s3972 + $0x158] sm:$0xff]
        %v4017 = vld [vmem:[%s3972 + $0x160] sm:$0xff]
        %v4018 = vld [vmem:[%s3972 + $0x168] sm:$0xff]
        %v4019 = vld [vmem:[%s3972 + $0x170] sm:$0xff]
        %v4020 = vld [vmem:[%s3972 + $0x178] sm:$0xff]
        %v4021 = vld [vmem:[%s3972 + $0x180] sm:$0xff]
        %v4022 = vld [vmem:[%s3972 + $0x188] sm:$0xff]
        %v4023 = vld [vmem:[%s3972 + $0x190] sm:$0xff]
        %v4024 = vld [vmem:[%s3972 + $0x198] sm:$0xff]
        %v4025 = vld [vmem:[%s3972 + $0x1a0] sm:$0xff]
        %v4026 = vld [vmem:[%s3972 + $0x1a8] sm:$0xff]
        %v4027 = vld [vmem:[%s3972 + $0x1b0] sm:$0xff]
        %v4028 = vld [vmem:[%s3972 + $0x1b8] sm:$0xff]
        %v4029 = vld [vmem:[%s3972 + $0x1c0] sm:$0xff]
        %v4030 = vld [vmem:[%s3972 + $0x1c8] sm:$0xff]
        %v4031 = vld [vmem:[%s3972 + $0x1d0] sm:$0xff]
        %v4032 = vld [vmem:[%s3972 + $0x1d8] sm:$0xff]
        %v4033 = vld [vmem:[%s3972 + $0x1e0] sm:$0xff]
        %v4034 = vld [vmem:[%s3972 + $0x1e8] sm:$0xff]
        %v4035 = vld [vmem:[%s3972 + $0x1f0] sm:$0xff]
        %v4036 = vld [vmem:[%s3972 + $0x1f8] sm:$0xff]
        %v4037 = vld [vmem:[%s3972 + $0x200] sm:$0xff]
        %v4038 = vld [vmem:[%s3972 + $0x208] sm:$0xff]
        %v4039 = vld [vmem:[%s3972 + $0x210] sm:$0xff]
        %v4040 = vld [vmem:[%s3972 + $0x218] sm:$0xff]
        %v4041 = vld [vmem:[%s3972 + $0x220] sm:$0xff]
        %v4042 = vld [vmem:[%s3972 + $0x228] sm:$0xff]
        %v4043 = vld [vmem:[%s3972 + $0x230] sm:$0xff]
        %v4044 = vld [vmem:[%s3972 + $0x238] sm:$0xff]
        %v4045 = vld [vmem:[%s3972 + $0x240] sm:$0xff]
        %v4046 = vld [vmem:[%s3972 + $0x248] sm:$0xff]
        %v4047 = vld [vmem:[%s3972 + $0x250] sm:$0xff]
        %v4048 = vld [vmem:[%s3972 + $0x258] sm:$0xff]
        %v4049 = vld [vmem:[%s3972 + $0x260] sm:$0xff]
        %v4050 = vld [vmem:[%s3972 + $0x268] sm:$0xff]
        %v4051 = vld [vmem:[%s3972 + $0x270] sm:$0xff]
        %v4052 = vld [vmem:[%s3972 + $0x278] sm:$0xff]
        %v4053 = vld [vmem:[%s3972 + $0x280] sm:$0xff]
        %v4054 = vld [vmem:[%s3972 + $0x288] sm:$0xff]
        %v4055 = vld [vmem:[%s3972 + $0x290] sm:$0xff]
        %v4056 = vld [vmem:[%s3972 + $0x298] sm:$0xff]
        %v4057 = vld [vmem:[%s3972 + $0x2a0] sm:$0xff]
        %v4058 = vld [vmem:[%s3972 + $0x2a8] sm:$0xff]
        %v4059 = vld [vmem:[%s3972 + $0x2b0] sm:$0xff]
        %v4060 = vld [vmem:[%s3972 + $0x2b8] sm:$0xff]
        %v4061 = vld [vmem:[%s3972 + $0x2c0] sm:$0xff]
        %v4062 = vld [vmem:[%s3972 + $0x2c8] sm:$0xff]
        %v4063 = vld [vmem:[%s3972 + $0x2d0] sm:$0xff]
        %v4064 = vld [vmem:[%s3972 + $0x2d8] sm:$0xff]
        %v4065 = vld [vmem:[%s3972 + $0x2e0] sm:$0xff]
        %v4066 = vld [vmem:[%s3972 + $0x2e8] sm:$0xff]
        %v4067 = vld [vmem:[%s3972 + $0x2f0] sm:$0xff]
        %v4068 = vld [vmem:[%s3972 + $0x2f8] sm:$0xff]
        %v4069 = vld [vmem:[%s2] sm:$0xff]
        %v4070 = vld [vmem:[%s2 + $0x8] sm:$0xff]
        %v4071 = vld [vmem:[%s2 + $0x10] sm:$0xff]
        %v4072 = vld [vmem:[%s2 + $0x18] sm:$0xff]
        %v4073 = vld [vmem:[%s2 + $0x20] sm:$0xff]
        %v4074 = vld [vmem:[%s2 + $0x28] sm:$0xff]
        %v4075 = vld [vmem:[%s2 + $0x30] sm:$0xff]
        %v4076 = vld [vmem:[%s2 + $0x38] sm:$0xff]
        %v4077 = vld [vmem:[%s2 + $0x40] sm:$0xff]
        %v4078 = vld [vmem:[%s2 + $0x48] sm:$0xff]
        %v4079 = vld [vmem:[%s2 + $0x50] sm:$0xff]
        %v4080 = vld [vmem:[%s2 + $0x58] sm:$0xff]
        %v4081 = vld [vmem:[%s2 + $0x60] sm:$0xff]
        %v4082 = vld [vmem:[%s2 + $0x68] sm:$0xff]
        %v4083 = vld [vmem:[%s2 + $0x70] sm:$0xff]
        %v4084 = vld [vmem:[%s2 + $0x78] sm:$0xff]
        %v4085 = vld [vmem:[%s2 + $0x80] sm:$0xff]
        %v4086 = vld [vmem:[%s2 + $0x88] sm:$0xff]
        %v4087 = vld [vmem:[%s2 + $0x90] sm:$0xff]
        %v4088 = vld [vmem:[%s2 + $0x98] sm:$0xff]
        %v4089 = vld [vmem:[%s2 + $0xa0] sm:$0xff]
        %v4090 = vld [vmem:[%s2 + $0xa8] sm:$0xff]
        %v4091 = vld [vmem:[%s2 + $0xb0] sm:$0xff]
        %v4092 = vld [vmem:[%s2 + $0xb8] sm:$0xff]
        %v4093 = vld [vmem:[%s2 + $0xc0] sm:$0xff]
        %v4094 = vld [vmem:[%s2 + $0xc8] sm:$0xff]
        %v4095 = vld [vmem:[%s2 + $0xd0] sm:$0xff]
        %v4096 = vld [vmem:[%s2 + $0xd8] sm:$0xff]
        %v4097 = vld [vmem:[%s2 + $0xe0] sm:$0xff]
        %v4098 = vld [vmem:[%s2 + $0xe8] sm:$0xff]
        %v4099 = vld [vmem:[%s2 + $0xf0] sm:$0xff]
        %v4100 = vld [vmem:[%s2 + $0xf8] sm:$0xff]
        %v4101 = vld [vmem:[%s2 + $0x100] sm:$0xff]
        %v4102 = vld [vmem:[%s2 + $0x108] sm:$0xff]
        %v4103 = vld [vmem:[%s2 + $0x110] sm:$0xff]
        %v4104 = vld [vmem:[%s2 + $0x118] sm:$0xff]
        %v4105 = vld [vmem:[%s2 + $0x120] sm:$0xff]
        %v4106 = vld [vmem:[%s2 + $0x128] sm:$0xff]
        %v4107 = vld [vmem:[%s2 + $0x130] sm:$0xff]
        %v4108 = vld [vmem:[%s2 + $0x138] sm:$0xff]
        %v4109 = vld [vmem:[%s2 + $0x140] sm:$0xff]
        %v4110 = vld [vmem:[%s2 + $0x148] sm:$0xff]
        %v4111 = vld [vmem:[%s2 + $0x150] sm:$0xff]
        %v4112 = vld [vmem:[%s2 + $0x158] sm:$0xff]
        %v4113 = vld [vmem:[%s2 + $0x160] sm:$0xff]
        %v4114 = vld [vmem:[%s2 + $0x168] sm:$0xff]
        %v4115 = vld [vmem:[%s2 + $0x170] sm:$0xff]
        %v4116 = vld [vmem:[%s2 + $0x178] sm:$0xff]
        %v4117 = vld [vmem:[%s2 + $0x180] sm:$0xff]
        %v4118 = vld [vmem:[%s2 + $0x188] sm:$0xff]
        %v4119 = vld [vmem:[%s2 + $0x190] sm:$0xff]
        %v4120 = vld [vmem:[%s2 + $0x198] sm:$0xff]
        %v4121 = vld [vmem:[%s2 + $0x1a0] sm:$0xff]
        %v4122 = vld [vmem:[%s2 + $0x1a8] sm:$0xff]
        %v4123 = vld [vmem:[%s2 + $0x1b0] sm:$0xff]
        %v4124 = vld [vmem:[%s2 + $0x1b8] sm:$0xff]
        %v4125 = vld [vmem:[%s2 + $0x1c0] sm:$0xff]
        %v4126 = vld [vmem:[%s2 + $0x1c8] sm:$0xff]
        %v4127 = vld [vmem:[%s2 + $0x1d0] sm:$0xff]
        %v4128 = vld [vmem:[%s2 + $0x1d8] sm:$0xff]
        %v4129 = vld [vmem:[%s2 + $0x1e0] sm:$0xff]
        %v4130 = vld [vmem:[%s2 + $0x1e8] sm:$0xff]
        %v4131 = vld [vmem:[%s2 + $0x1f0] sm:$0xff]
        %v4132 = vld [vmem:[%s2 + $0x1f8] sm:$0xff]
        %v4133 = vld [vmem:[%s2 + $0x200] sm:$0xff]
        %v4134 = vld [vmem:[%s2 + $0x208] sm:$0xff]
        %v4135 = vld [vmem:[%s2 + $0x210] sm:$0xff]
        %v4136 = vld [vmem:[%s2 + $0x218] sm:$0xff]
        %v4137 = vld [vmem:[%s2 + $0x220] sm:$0xff]
        %v4138 = vld [vmem:[%s2 + $0x228] sm:$0xff]
        %v4139 = vld [vmem:[%s2 + $0x230] sm:$0xff]
        %v4140 = vld [vmem:[%s2 + $0x238] sm:$0xff]
        %v4141 = vld [vmem:[%s2 + $0x240] sm:$0xff]
        %v4142 = vld [vmem:[%s2 + $0x248] sm:$0xff]
        %v4143 = vld [vmem:[%s2 + $0x250] sm:$0xff]
        %v4144 = vld [vmem:[%s2 + $0x258] sm:$0xff]
        %v4145 = vld [vmem:[%s2 + $0x260] sm:$0xff]
        %v4146 = vld [vmem:[%s2 + $0x268] sm:$0xff]
        %v4147 = vld [vmem:[%s2 + $0x270] sm:$0xff]
        %v4148 = vld [vmem:[%s2 + $0x278] sm:$0xff]
        %v4149 = vld [vmem:[%s2 + $0x280] sm:$0xff]
        %v4150 = vld [vmem:[%s2 + $0x288] sm:$0xff]
        %v4151 = vld [vmem:[%s2 + $0x290] sm:$0xff]
        %v4152 = vld [vmem:[%s2 + $0x298] sm:$0xff]
        %v4153 = vld [vmem:[%s2 + $0x2a0] sm:$0xff]
        %v4154 = vld [vmem:[%s2 + $0x2a8] sm:$0xff]
        %v4155 = vld [vmem:[%s2 + $0x2b0] sm:$0xff]
        %v4156 = vld [vmem:[%s2 + $0x2b8] sm:$0xff]
        %v4157 = vld [vmem:[%s2 + $0x2c0] sm:$0xff]
        %v4158 = vld [vmem:[%s2 + $0x2c8] sm:$0xff]
        %v4159 = vld [vmem:[%s2 + $0x2d0] sm:$0xff]
        %v4160 = vld [vmem:[%s2 + $0x2d8] sm:$0xff]
        %v4161 = vld [vmem:[%s2 + $0x2e0] sm:$0xff]
        %v4162 = vld [vmem:[%s2 + $0x2e8] sm:$0xff]
        %v4163 = vld [vmem:[%s2 + $0x2f0] sm:$0xff]
        %v4164 = vld [vmem:[%s2 + $0x2f8] sm:$0xff]
        %s4165 = scalar_lea.vmem %s2, 768
        %v4166 = vld [vmem:[%s4165] sm:$0xff]
        %v4167 = vld [vmem:[%s4165 + $0x8] sm:$0xff]
        %v4168 = vld [vmem:[%s4165 + $0x10] sm:$0xff]
        %v4169 = vld [vmem:[%s4165 + $0x18] sm:$0xff]
        %v4170 = vld [vmem:[%s4165 + $0x20] sm:$0xff]
        %v4171 = vld [vmem:[%s4165 + $0x28] sm:$0xff]
        %v4172 = vld [vmem:[%s4165 + $0x30] sm:$0xff]
        %v4173 = vld [vmem:[%s4165 + $0x38] sm:$0xff]
        %v4174 = vld [vmem:[%s4165 + $0x40] sm:$0xff]
        %v4175 = vld [vmem:[%s4165 + $0x48] sm:$0xff]
        %v4176 = vld [vmem:[%s4165 + $0x50] sm:$0xff]
        %v4177 = vld [vmem:[%s4165 + $0x58] sm:$0xff]
        %v4178 = vld [vmem:[%s4165 + $0x60] sm:$0xff]
        %v4179 = vld [vmem:[%s4165 + $0x68] sm:$0xff]
        %v4180 = vld [vmem:[%s4165 + $0x70] sm:$0xff]
        %v4181 = vld [vmem:[%s4165 + $0x78] sm:$0xff]
        %v4182 = vld [vmem:[%s4165 + $0x80] sm:$0xff]
        %v4183 = vld [vmem:[%s4165 + $0x88] sm:$0xff]
        %v4184 = vld [vmem:[%s4165 + $0x90] sm:$0xff]
        %v4185 = vld [vmem:[%s4165 + $0x98] sm:$0xff]
        %v4186 = vld [vmem:[%s4165 + $0xa0] sm:$0xff]
        %v4187 = vld [vmem:[%s4165 + $0xa8] sm:$0xff]
        %v4188 = vld [vmem:[%s4165 + $0xb0] sm:$0xff]
        %v4189 = vld [vmem:[%s4165 + $0xb8] sm:$0xff]
        %v4190 = vld [vmem:[%s4165 + $0xc0] sm:$0xff]
        %v4191 = vld [vmem:[%s4165 + $0xc8] sm:$0xff]
        %v4192 = vld [vmem:[%s4165 + $0xd0] sm:$0xff]
        %v4193 = vld [vmem:[%s4165 + $0xd8] sm:$0xff]
        %v4194 = vld [vmem:[%s4165 + $0xe0] sm:$0xff]
        %v4195 = vld [vmem:[%s4165 + $0xe8] sm:$0xff]
        %v4196 = vld [vmem:[%s4165 + $0xf0] sm:$0xff]
        %v4197 = vld [vmem:[%s4165 + $0xf8] sm:$0xff]
        %v4198 = vld [vmem:[%s4165 + $0x100] sm:$0xff]
        %v4199 = vld [vmem:[%s4165 + $0x108] sm:$0xff]
        %v4200 = vld [vmem:[%s4165 + $0x110] sm:$0xff]
        %v4201 = vld [vmem:[%s4165 + $0x118] sm:$0xff]
        %v4202 = vld [vmem:[%s4165 + $0x120] sm:$0xff]
        %v4203 = vld [vmem:[%s4165 + $0x128] sm:$0xff]
        %v4204 = vld [vmem:[%s4165 + $0x130] sm:$0xff]
        %v4205 = vld [vmem:[%s4165 + $0x138] sm:$0xff]
        %v4206 = vld [vmem:[%s4165 + $0x140] sm:$0xff]
        %v4207 = vld [vmem:[%s4165 + $0x148] sm:$0xff]
        %v4208 = vld [vmem:[%s4165 + $0x150] sm:$0xff]
        %v4209 = vld [vmem:[%s4165 + $0x158] sm:$0xff]
        %v4210 = vld [vmem:[%s4165 + $0x160] sm:$0xff]
        %v4211 = vld [vmem:[%s4165 + $0x168] sm:$0xff]
        %v4212 = vld [vmem:[%s4165 + $0x170] sm:$0xff]
        %v4213 = vld [vmem:[%s4165 + $0x178] sm:$0xff]
        %v4214 = vld [vmem:[%s4165 + $0x180] sm:$0xff]
        %v4215 = vld [vmem:[%s4165 + $0x188] sm:$0xff]
        %v4216 = vld [vmem:[%s4165 + $0x190] sm:$0xff]
        %v4217 = vld [vmem:[%s4165 + $0x198] sm:$0xff]
        %v4218 = vld [vmem:[%s4165 + $0x1a0] sm:$0xff]
        %v4219 = vld [vmem:[%s4165 + $0x1a8] sm:$0xff]
        %v4220 = vld [vmem:[%s4165 + $0x1b0] sm:$0xff]
        %v4221 = vld [vmem:[%s4165 + $0x1b8] sm:$0xff]
        %v4222 = vld [vmem:[%s4165 + $0x1c0] sm:$0xff]
        %v4223 = vld [vmem:[%s4165 + $0x1c8] sm:$0xff]
        %v4224 = vld [vmem:[%s4165 + $0x1d0] sm:$0xff]
        %v4225 = vld [vmem:[%s4165 + $0x1d8] sm:$0xff]
        %v4226 = vld [vmem:[%s4165 + $0x1e0] sm:$0xff]
        %v4227 = vld [vmem:[%s4165 + $0x1e8] sm:$0xff]
        %v4228 = vld [vmem:[%s4165 + $0x1f0] sm:$0xff]
        %v4229 = vld [vmem:[%s4165 + $0x1f8] sm:$0xff]
        %v4230 = vld [vmem:[%s4165 + $0x200] sm:$0xff]
        %v4231 = vld [vmem:[%s4165 + $0x208] sm:$0xff]
        %v4232 = vld [vmem:[%s4165 + $0x210] sm:$0xff]
        %v4233 = vld [vmem:[%s4165 + $0x218] sm:$0xff]
        %v4234 = vld [vmem:[%s4165 + $0x220] sm:$0xff]
        %v4235 = vld [vmem:[%s4165 + $0x228] sm:$0xff]
        %v4236 = vld [vmem:[%s4165 + $0x230] sm:$0xff]
        %v4237 = vld [vmem:[%s4165 + $0x238] sm:$0xff]
        %v4238 = vld [vmem:[%s4165 + $0x240] sm:$0xff]
        %v4239 = vld [vmem:[%s4165 + $0x248] sm:$0xff]
        %v4240 = vld [vmem:[%s4165 + $0x250] sm:$0xff]
        %v4241 = vld [vmem:[%s4165 + $0x258] sm:$0xff]
        %v4242 = vld [vmem:[%s4165 + $0x260] sm:$0xff]
        %v4243 = vld [vmem:[%s4165 + $0x268] sm:$0xff]
        %v4244 = vld [vmem:[%s4165 + $0x270] sm:$0xff]
        %v4245 = vld [vmem:[%s4165 + $0x278] sm:$0xff]
        %v4246 = vld [vmem:[%s4165 + $0x280] sm:$0xff]
        %v4247 = vld [vmem:[%s4165 + $0x288] sm:$0xff]
        %v4248 = vld [vmem:[%s4165 + $0x290] sm:$0xff]
        %v4249 = vld [vmem:[%s4165 + $0x298] sm:$0xff]
        %v4250 = vld [vmem:[%s4165 + $0x2a0] sm:$0xff]
        %v4251 = vld [vmem:[%s4165 + $0x2a8] sm:$0xff]
        %v4252 = vld [vmem:[%s4165 + $0x2b0] sm:$0xff]
        %v4253 = vld [vmem:[%s4165 + $0x2b8] sm:$0xff]
        %v4254 = vld [vmem:[%s4165 + $0x2c0] sm:$0xff]
        %v4255 = vld [vmem:[%s4165 + $0x2c8] sm:$0xff]
        %v4256 = vld [vmem:[%s4165 + $0x2d0] sm:$0xff]
        %v4257 = vld [vmem:[%s4165 + $0x2d8] sm:$0xff]
        %v4258 = vld [vmem:[%s4165 + $0x2e0] sm:$0xff]
        %v4259 = vld [vmem:[%s4165 + $0x2e8] sm:$0xff]
        %v4260 = vld [vmem:[%s4165 + $0x2f0] sm:$0xff]
        %v4261 = vld [vmem:[%s4165 + $0x2f8] sm:$0xff]
        %v4358 = vunpack.c.l.b16 %v4166
        %v4359 = vunpack.c.h.b16 %v4166
        %v4360 = vunpack.c.l.b16 %v4167
        %v4361 = vunpack.c.h.b16 %v4167
        %v4362 = vunpack.c.l.b16 %v4168
        %v4363 = vunpack.c.h.b16 %v4168
        %v4364 = vunpack.c.l.b16 %v4169
        %v4365 = vunpack.c.h.b16 %v4169
        %v4366 = vunpack.c.l.b16 %v4170
        %v4367 = vunpack.c.h.b16 %v4170
        %v4368 = vunpack.c.l.b16 %v4171
        %v4369 = vunpack.c.h.b16 %v4171
        %v4370 = vunpack.c.l.b16 %v4172
        %v4371 = vunpack.c.h.b16 %v4172
        %v4372 = vunpack.c.l.b16 %v4173
        %v4373 = vunpack.c.h.b16 %v4173
        %v4374 = vunpack.c.l.b16 %v4174
        %v4375 = vunpack.c.h.b16 %v4174
        %v4376 = vunpack.c.l.b16 %v4175
        %v4377 = vunpack.c.h.b16 %v4175
        %v4378 = vunpack.c.l.b16 %v4176
        %v4379 = vunpack.c.h.b16 %v4176
        %v4380 = vunpack.c.l.b16 %v4177
        %v4381 = vunpack.c.h.b16 %v4177
        %v4382 = vunpack.c.l.b16 %v4178
        %v4383 = vunpack.c.h.b16 %v4178
        %v4384 = vunpack.c.l.b16 %v4179
        %v4385 = vunpack.c.h.b16 %v4179
        %v4386 = vunpack.c.l.b16 %v4180
        %v4387 = vunpack.c.h.b16 %v4180
        %v4388 = vunpack.c.l.b16 %v4181
        %v4389 = vunpack.c.h.b16 %v4181
        %v4390 = vunpack.c.l.b16 %v4182
        %v4391 = vunpack.c.h.b16 %v4182
        %v4392 = vunpack.c.l.b16 %v4183
        %v4393 = vunpack.c.h.b16 %v4183
        %v4394 = vunpack.c.l.b16 %v4184
        %v4395 = vunpack.c.h.b16 %v4184
        %v4396 = vunpack.c.l.b16 %v4185
        %v4397 = vunpack.c.h.b16 %v4185
        %v4398 = vunpack.c.l.b16 %v4186
        %v4399 = vunpack.c.h.b16 %v4186
        %v4400 = vunpack.c.l.b16 %v4187
        %v4401 = vunpack.c.h.b16 %v4187
        %v4402 = vunpack.c.l.b16 %v4188
        %v4403 = vunpack.c.h.b16 %v4188
        %v4404 = vunpack.c.l.b16 %v4189
        %v4405 = vunpack.c.h.b16 %v4189
        %v4406 = vunpack.c.l.b16 %v4190
        %v4407 = vunpack.c.h.b16 %v4190
        %v4408 = vunpack.c.l.b16 %v4191
        %v4409 = vunpack.c.h.b16 %v4191
        %v4410 = vunpack.c.l.b16 %v4192
        %v4411 = vunpack.c.h.b16 %v4192
        %v4412 = vunpack.c.l.b16 %v4193
        %v4413 = vunpack.c.h.b16 %v4193
        %v4414 = vunpack.c.l.b16 %v4194
        %v4415 = vunpack.c.h.b16 %v4194
        %v4416 = vunpack.c.l.b16 %v4195
        %v4417 = vunpack.c.h.b16 %v4195
        %v4418 = vunpack.c.l.b16 %v4196
        %v4419 = vunpack.c.h.b16 %v4196
        %v4420 = vunpack.c.l.b16 %v4197
        %v4421 = vunpack.c.h.b16 %v4197
        %v4422 = vunpack.c.l.b16 %v4198
        %v4423 = vunpack.c.h.b16 %v4198
        %v4424 = vunpack.c.l.b16 %v4199
        %v4425 = vunpack.c.h.b16 %v4199
        %v4426 = vunpack.c.l.b16 %v4200
        %v4427 = vunpack.c.h.b16 %v4200
        %v4428 = vunpack.c.l.b16 %v4201
        %v4429 = vunpack.c.h.b16 %v4201
        %v4430 = vunpack.c.l.b16 %v4202
        %v4431 = vunpack.c.h.b16 %v4202
        %v4432 = vunpack.c.l.b16 %v4203
        %v4433 = vunpack.c.h.b16 %v4203
        %v4434 = vunpack.c.l.b16 %v4204
        %v4435 = vunpack.c.h.b16 %v4204
        %v4436 = vunpack.c.l.b16 %v4205
        %v4437 = vunpack.c.h.b16 %v4205
        %v4438 = vunpack.c.l.b16 %v4206
        %v4439 = vunpack.c.h.b16 %v4206
        %v4440 = vunpack.c.l.b16 %v4207
        %v4441 = vunpack.c.h.b16 %v4207
        %v4442 = vunpack.c.l.b16 %v4208
        %v4443 = vunpack.c.h.b16 %v4208
        %v4444 = vunpack.c.l.b16 %v4209
        %v4445 = vunpack.c.h.b16 %v4209
        %v4446 = vunpack.c.l.b16 %v4210
        %v4447 = vunpack.c.h.b16 %v4210
        %v4448 = vunpack.c.l.b16 %v4211
        %v4449 = vunpack.c.h.b16 %v4211
        %v4450 = vunpack.c.l.b16 %v4212
        %v4451 = vunpack.c.h.b16 %v4212
        %v4452 = vunpack.c.l.b16 %v4213
        %v4453 = vunpack.c.h.b16 %v4213
        %v4454 = vunpack.c.l.b16 %v4214
        %v4455 = vunpack.c.h.b16 %v4214
        %v4456 = vunpack.c.l.b16 %v4215
        %v4457 = vunpack.c.h.b16 %v4215
        %v4458 = vunpack.c.l.b16 %v4216
        %v4459 = vunpack.c.h.b16 %v4216
        %v4460 = vunpack.c.l.b16 %v4217
        %v4461 = vunpack.c.h.b16 %v4217
        %v4462 = vunpack.c.l.b16 %v4218
        %v4463 = vunpack.c.h.b16 %v4218
        %v4464 = vunpack.c.l.b16 %v4219
        %v4465 = vunpack.c.h.b16 %v4219
        %v4466 = vunpack.c.l.b16 %v4220
        %v4467 = vunpack.c.h.b16 %v4220
        %v4468 = vunpack.c.l.b16 %v4221
        %v4469 = vunpack.c.h.b16 %v4221
        %v4470 = vunpack.c.l.b16 %v4222
        %v4471 = vunpack.c.h.b16 %v4222
        %v4472 = vunpack.c.l.b16 %v4223
        %v4473 = vunpack.c.h.b16 %v4223
        %v4474 = vunpack.c.l.b16 %v4224
        %v4475 = vunpack.c.h.b16 %v4224
        %v4476 = vunpack.c.l.b16 %v4225
        %v4477 = vunpack.c.h.b16 %v4225
        %v4478 = vunpack.c.l.b16 %v4226
        %v4479 = vunpack.c.h.b16 %v4226
        %v4480 = vunpack.c.l.b16 %v4227
        %v4481 = vunpack.c.h.b16 %v4227
        %v4482 = vunpack.c.l.b16 %v4228
        %v4483 = vunpack.c.h.b16 %v4228
        %v4484 = vunpack.c.l.b16 %v4229
        %v4485 = vunpack.c.h.b16 %v4229
        %v4486 = vunpack.c.l.b16 %v4230
        %v4487 = vunpack.c.h.b16 %v4230
        %v4488 = vunpack.c.l.b16 %v4231
        %v4489 = vunpack.c.h.b16 %v4231
        %v4490 = vunpack.c.l.b16 %v4232
        %v4491 = vunpack.c.h.b16 %v4232
        %v4492 = vunpack.c.l.b16 %v4233
        %v4493 = vunpack.c.h.b16 %v4233
        %v4494 = vunpack.c.l.b16 %v4234
        %v4495 = vunpack.c.h.b16 %v4234
        %v4496 = vunpack.c.l.b16 %v4235
        %v4497 = vunpack.c.h.b16 %v4235
        %v4498 = vunpack.c.l.b16 %v4236
        %v4499 = vunpack.c.h.b16 %v4236
        %v4500 = vunpack.c.l.b16 %v4237
        %v4501 = vunpack.c.h.b16 %v4237
        %v4502 = vunpack.c.l.b16 %v4238
        %v4503 = vunpack.c.h.b16 %v4238
        %v4504 = vunpack.c.l.b16 %v4239
        %v4505 = vunpack.c.h.b16 %v4239
        %v4506 = vunpack.c.l.b16 %v4240
        %v4507 = vunpack.c.h.b16 %v4240
        %v4508 = vunpack.c.l.b16 %v4241
        %v4509 = vunpack.c.h.b16 %v4241
        %v4510 = vunpack.c.l.b16 %v4242
        %v4511 = vunpack.c.h.b16 %v4242
        %v4512 = vunpack.c.l.b16 %v4243
        %v4513 = vunpack.c.h.b16 %v4243
        %v4514 = vunpack.c.l.b16 %v4244
        %v4515 = vunpack.c.h.b16 %v4244
        %v4516 = vunpack.c.l.b16 %v4245
        %v4517 = vunpack.c.h.b16 %v4245
        %v4518 = vunpack.c.l.b16 %v4246
        %v4519 = vunpack.c.h.b16 %v4246
        %v4520 = vunpack.c.l.b16 %v4247
        %v4521 = vunpack.c.h.b16 %v4247
        %v4522 = vunpack.c.l.b16 %v4248
        %v4523 = vunpack.c.h.b16 %v4248
        %v4524 = vunpack.c.l.b16 %v4249
        %v4525 = vunpack.c.h.b16 %v4249
        %v4526 = vunpack.c.l.b16 %v4250
        %v4527 = vunpack.c.h.b16 %v4250
        %v4528 = vunpack.c.l.b16 %v4251
        %v4529 = vunpack.c.h.b16 %v4251
        %v4530 = vunpack.c.l.b16 %v4252
        %v4531 = vunpack.c.h.b16 %v4252
        %v4532 = vunpack.c.l.b16 %v4253
        %v4533 = vunpack.c.h.b16 %v4253
        %v4534 = vunpack.c.l.b16 %v4254
        %v4535 = vunpack.c.h.b16 %v4254
        %v4536 = vunpack.c.l.b16 %v4255
        %v4537 = vunpack.c.h.b16 %v4255
        %v4538 = vunpack.c.l.b16 %v4256
        %v4539 = vunpack.c.h.b16 %v4256
        %v4540 = vunpack.c.l.b16 %v4257
        %v4541 = vunpack.c.h.b16 %v4257
        %v4542 = vunpack.c.l.b16 %v4258
        %v4543 = vunpack.c.h.b16 %v4258
        %v4544 = vunpack.c.l.b16 %v4259
        %v4545 = vunpack.c.h.b16 %v4259
        %v4546 = vunpack.c.l.b16 %v4260
        %v4547 = vunpack.c.h.b16 %v4260
        %v4548 = vunpack.c.l.b16 %v4261
        %v4549 = vunpack.c.h.b16 %v4261
        %v4550 = vpack.c.b16 %v4360, %v4358
        %v4551 = vpack.c.b16 %v4361, %v4359
        %v4552 = vpack.c.b16 %v4364, %v4362
        %v4553 = vpack.c.b16 %v4365, %v4363
        %v4554 = vpack.c.b16 %v4368, %v4366
        %v4555 = vpack.c.b16 %v4369, %v4367
        %v4556 = vpack.c.b16 %v4372, %v4370
        %v4557 = vpack.c.b16 %v4373, %v4371
        %v4558 = vpack.c.b16 %v4376, %v4374
        %v4559 = vpack.c.b16 %v4377, %v4375
        %v4560 = vpack.c.b16 %v4380, %v4378
        %v4561 = vpack.c.b16 %v4381, %v4379
        %v4562 = vpack.c.b16 %v4384, %v4382
        %v4563 = vpack.c.b16 %v4385, %v4383
        %v4564 = vpack.c.b16 %v4388, %v4386
        %v4565 = vpack.c.b16 %v4389, %v4387
        %v4566 = vpack.c.b16 %v4392, %v4390
        %v4567 = vpack.c.b16 %v4393, %v4391
        %v4568 = vpack.c.b16 %v4396, %v4394
        %v4569 = vpack.c.b16 %v4397, %v4395
        %v4570 = vpack.c.b16 %v4400, %v4398
        %v4571 = vpack.c.b16 %v4401, %v4399
        %v4572 = vpack.c.b16 %v4404, %v4402
        %v4573 = vpack.c.b16 %v4405, %v4403
        %v4574 = vpack.c.b16 %v4408, %v4406
        %v4575 = vpack.c.b16 %v4409, %v4407
        %v4576 = vpack.c.b16 %v4412, %v4410
        %v4577 = vpack.c.b16 %v4413, %v4411
        %v4578 = vpack.c.b16 %v4416, %v4414
        %v4579 = vpack.c.b16 %v4417, %v4415
        %v4580 = vpack.c.b16 %v4420, %v4418
        %v4581 = vpack.c.b16 %v4421, %v4419
        %v4582 = vpack.c.b16 %v4424, %v4422
        %v4583 = vpack.c.b16 %v4425, %v4423
        %v4584 = vpack.c.b16 %v4428, %v4426
        %v4585 = vpack.c.b16 %v4429, %v4427
        %v4586 = vpack.c.b16 %v4432, %v4430
        %v4587 = vpack.c.b16 %v4433, %v4431
        %v4588 = vpack.c.b16 %v4436, %v4434
        %v4589 = vpack.c.b16 %v4437, %v4435
        %v4590 = vpack.c.b16 %v4440, %v4438
        %v4591 = vpack.c.b16 %v4441, %v4439
        %v4592 = vpack.c.b16 %v4444, %v4442
        %v4593 = vpack.c.b16 %v4445, %v4443
        %v4594 = vpack.c.b16 %v4448, %v4446
        %v4595 = vpack.c.b16 %v4449, %v4447
        %v4596 = vpack.c.b16 %v4452, %v4450
        %v4597 = vpack.c.b16 %v4453, %v4451
        %v4598 = vpack.c.b16 %v4456, %v4454
        %v4599 = vpack.c.b16 %v4457, %v4455
        %v4600 = vpack.c.b16 %v4460, %v4458
        %v4601 = vpack.c.b16 %v4461, %v4459
        %v4602 = vpack.c.b16 %v4464, %v4462
        %v4603 = vpack.c.b16 %v4465, %v4463
        %v4604 = vpack.c.b16 %v4468, %v4466
        %v4605 = vpack.c.b16 %v4469, %v4467
        %v4606 = vpack.c.b16 %v4472, %v4470
        %v4607 = vpack.c.b16 %v4473, %v4471
        %v4608 = vpack.c.b16 %v4476, %v4474
        %v4609 = vpack.c.b16 %v4477, %v4475
        %v4610 = vpack.c.b16 %v4480, %v4478
        %v4611 = vpack.c.b16 %v4481, %v4479
        %v4612 = vpack.c.b16 %v4484, %v4482
        %v4613 = vpack.c.b16 %v4485, %v4483
        %v4614 = vpack.c.b16 %v4488, %v4486
        %v4615 = vpack.c.b16 %v4489, %v4487
        %v4616 = vpack.c.b16 %v4492, %v4490
        %v4617 = vpack.c.b16 %v4493, %v4491
        %v4618 = vpack.c.b16 %v4496, %v4494
        %v4619 = vpack.c.b16 %v4497, %v4495
        %v4620 = vpack.c.b16 %v4500, %v4498
        %v4621 = vpack.c.b16 %v4501, %v4499
        %v4622 = vpack.c.b16 %v4504, %v4502
        %v4623 = vpack.c.b16 %v4505, %v4503
        %v4624 = vpack.c.b16 %v4508, %v4506
        %v4625 = vpack.c.b16 %v4509, %v4507
        %v4626 = vpack.c.b16 %v4512, %v4510
        %v4627 = vpack.c.b16 %v4513, %v4511
        %v4628 = vpack.c.b16 %v4516, %v4514
        %v4629 = vpack.c.b16 %v4517, %v4515
        %v4630 = vpack.c.b16 %v4520, %v4518
        %v4631 = vpack.c.b16 %v4521, %v4519
        %v4632 = vpack.c.b16 %v4524, %v4522
        %v4633 = vpack.c.b16 %v4525, %v4523
        %v4634 = vpack.c.b16 %v4528, %v4526
        %v4635 = vpack.c.b16 %v4529, %v4527
        %v4636 = vpack.c.b16 %v4532, %v4530
        %v4637 = vpack.c.b16 %v4533, %v4531
        %v4638 = vpack.c.b16 %v4536, %v4534
        %v4639 = vpack.c.b16 %v4537, %v4535
        %v4640 = vpack.c.b16 %v4540, %v4538
        %v4641 = vpack.c.b16 %v4541, %v4539
        %v4642 = vpack.c.b16 %v4544, %v4542
        %v4643 = vpack.c.b16 %v4545, %v4543
        %v4644 = vpack.c.b16 %v4548, %v4546
        %v4645 = vpack.c.b16 %v4549, %v4547
        %4742 = vmatprep.subr.bf16.mxu0 %v4551
        %4743 = vmatpush1.bf16.msra.mxu0 %v4550
        %4744 = vmatprep.subr.bf16.mxu0 %v4553
        %4745 = vmatpush1.bf16.msra.mxu0 %v4552
        %4746 = vmatprep.subr.bf16.mxu0 %v4555
        %4747 = vmatpush1.bf16.msra.mxu0 %v4554
        %4748 = vmatprep.subr.bf16.mxu0 %v4557
        %4749 = vmatpush1.bf16.msra.mxu0 %v4556
        %4750 = vmatprep.subr.bf16.mxu0 %v4559
        %4751 = vmatpush1.bf16.msra.mxu0 %v4558
        %4752 = vmatprep.subr.bf16.mxu0 %v4561
        %4753 = vmatpush1.bf16.msra.mxu0 %v4560
        %4754 = vmatprep.subr.bf16.mxu0 %v4563
        %4755 = vmatpush1.bf16.msra.mxu0 %v4562
        %4756 = vmatprep.subr.bf16.mxu0 %v4565
        %4757 = vmatpush1.bf16.msra.mxu0 %v4564
        %4758 = vmatprep.subr.bf16.mxu0 %v4567
        %4759 = vmatpush1.bf16.msra.mxu0 %v4566
        %4760 = vmatprep.subr.bf16.mxu0 %v4569
        %4761 = vmatpush1.bf16.msra.mxu0 %v4568
        %4762 = vmatprep.subr.bf16.mxu0 %v4571
        %4763 = vmatpush1.bf16.msra.mxu0 %v4570
        %4764 = vmatprep.subr.bf16.mxu0 %v4573
        %4765 = vmatpush1.bf16.msra.mxu0 %v4572
        %4766 = vmatprep.subr.bf16.mxu0 %v4575
        %4767 = vmatpush1.bf16.msra.mxu0 %v4574
        %4768 = vmatprep.subr.bf16.mxu0 %v4577
        %4769 = vmatpush1.bf16.msra.mxu0 %v4576
        %4770 = vmatprep.subr.bf16.mxu0 %v4579
        %4771 = vmatpush1.bf16.msra.mxu0 %v4578
        %4772 = vmatprep.subr.bf16.mxu0 %v4581
        %4773 = vmatpush1.bf16.msra.mxu0 %v4580
        %4774 = vmatprep.mubr.bf16.mxu0 %v3877
        %4775 = vmatmul.mubr.bf16.gmra.mrb[0].mxu0 %v3876
        %v4776 = vpop.f32.mrb[0].mxu0
        %v4777 = vadd.f32 0.0, %v4776
        %v4778 = vpop.f32.mrb[0].mxu0
        %v4779 = vadd.f32 0.0, %v4778
        %v4780 = vpop.f32.mrb[0].mxu0
        %v4781 = vadd.f32 0.0, %v4780
        %v4782 = vpop.f32.mrb[0].mxu0
        %v4783 = vadd.f32 0.0, %v4782
        %4784 = vmatprep.mubr.bf16.mxu0 %v3883
        %4785 = vmatmul.mubr.bf16.gmra.mrb[0].mxu0 %v3882
        %v4786 = vpop.f32.mrb[0].mxu0
        %v4787 = vadd.f32 0.0, %v4786
        %v4788 = vpop.f32.mrb[0].mxu0
        %v4789 = vadd.f32 0.0, %v4788
        %v4790 = vpop.f32.mrb[0].mxu0
        %v4791 = vadd.f32 0.0, %v4790
        %v4792 = vpop.f32.mrb[0].mxu0
        %v4793 = vadd.f32 0.0, %v4792
        %4794 = vmatprep.mubr.bf16.mxu0 %v3889
        %4795 = vmatmul.mubr.bf16.gmra.mrb[0].mxu0 %v3888
        %v4796 = vpop.f32.mrb[0].mxu0
        %v4797 = vadd.f32 0.0, %v4796
        %v4798 = vpop.f32.mrb[0].mxu0
        %v4799 = vadd.f32 0.0, %v4798
        %v4800 = vpop.f32.mrb[0].mxu0
        %v4801 = vadd.f32 0.0, %v4800
        %v4802 = vpop.f32.mrb[0].mxu0
        %v4803 = vadd.f32 0.0, %v4802
        %4804 = vmatprep.mubr.bf16.mxu0 %v3895
        %4805 = vmatmul.mubr.bf16.gmra.mrb[0].mxu0 %v3894
        %v4806 = vpop.f32.mrb[0].mxu0
        %v4807 = vadd.f32 0.0, %v4806
        %v4808 = vpop.f32.mrb[0].mxu0
        %v4809 = vadd.f32 0.0, %v4808
        %v4810 = vpop.f32.mrb[0].mxu0
        %v4811 = vadd.f32 0.0, %v4810
        %v4812 = vpop.f32.mrb[0].mxu0
        %v4813 = vadd.f32 0.0, %v4812
        %4814 = vmatprep.mubr.bf16.mxu0 %v3901
        %4815 = vmatmul.mubr.bf16.gmra.mrb[0].mxu0 %v3900
        %v4816 = vpop.f32.mrb[0].mxu0
        %v4817 = vadd.f32 0.0, %v4816
        %v4818 = vpop.f32.mrb[0].mxu0
        %v4819 = vadd.f32 0.0, %v4818
        %v4820 = vpop.f32.mrb[0].mxu0
        %v4821 = vadd.f32 0.0, %v4820
        %v4822 = vpop.f32.mrb[0].mxu0
        %v4823 = vadd.f32 0.0, %v4822
        %4824 = vmatprep.mubr.bf16.mxu0 %v3907
        %4825 = vmatmul.mubr.bf16.gmra.mrb[0].mxu0 %v3906
        %v4826 = vpop.f32.mrb[0].mxu0
        %v4827 = vadd.f32 0.0, %v4826
        %v4828 = vpop.f32.mrb[0].mxu0
        %v4829 = vadd.f32 0.0, %v4828
        %v4830 = vpop.f32.mrb[0].mxu0
        %v4831 = vadd.f32 0.0, %v4830
        %v4832 = vpop.f32.mrb[0].mxu0
        %v4833 = vadd.f32 0.0, %v4832
        %4834 = vmatprep.mubr.bf16.mxu0 %v3913
        %4835 = vmatmul.mubr.bf16.gmra.mrb[0].mxu0 %v3912
        %v4836 = vpop.f32.mrb[0].mxu0
        %v4837 = vadd.f32 0.0, %v4836
        %v4838 = vpop.f32.mrb[0].mxu0
        %v4839 = vadd.f32 0.0, %v4838
        %v4840 = vpop.f32.mrb[0].mxu0
        %v4841 = vadd.f32 0.0, %v4840
        %v4842 = vpop.f32.mrb[0].mxu0
        %v4843 = vadd.f32 0.0, %v4842
        %4844 = vmatprep.mubr.bf16.mxu0 %v3919
        %4845 = vmatmul.mubr.bf16.gmra.mrb[0].mxu0 %v3918
        %v4846 = vpop.f32.mrb[0].mxu0
        %v4847 = vadd.f32 0.0, %v4846
        %v4848 = vpop.f32.mrb[0].mxu0
        %v4849 = vadd.f32 0.0, %v4848
        %v4850 = vpop.f32.mrb[0].mxu0
        %v4851 = vadd.f32 0.0, %v4850
        %v4852 = vpop.f32.mrb[0].mxu0
        %v4853 = vadd.f32 0.0, %v4852
        %4854 = vmatprep.mubr.bf16.mxu0 %v3925
        %4855 = vmatmul.mubr.bf16.gmra.mrb[0].mxu0 %v3924
        %v4856 = vpop.f32.mrb[0].mxu0
        %v4857 = vadd.f32 0.0, %v4856
        %v4858 = vpop.f32.mrb[0].mxu0
        %v4859 = vadd.f32 0.0, %v4858
        %v4860 = vpop.f32.mrb[0].mxu0
        %v4861 = vadd.f32 0.0, %v4860
        %v4862 = vpop.f32.mrb[0].mxu0
        %v4863 = vadd.f32 0.0, %v4862
        %4864 = vmatprep.mubr.bf16.mxu0 %v3931
        %4865 = vmatmul.mubr.bf16.gmra.mrb[0].mxu0 %v3930
        %v4866 = vpop.f32.mrb[0].mxu0
        %v4867 = vadd.f32 0.0, %v4866
        %v4868 = vpop.f32.mrb[0].mxu0
        %v4869 = vadd.f32 0.0, %v4868
        %v4870 = vpop.f32.mrb[0].mxu0
        %v4871 = vadd.f32 0.0, %v4870
        %v4872 = vpop.f32.mrb[0].mxu0
        %v4873 = vadd.f32 0.0, %v4872
        %4874 = vmatprep.mubr.bf16.mxu0 %v3937
        %4875 = vmatmul.mubr.bf16.gmra.mrb[0].mxu0 %v3936
        %v4876 = vpop.f32.mrb[0].mxu0
        %v4877 = vadd.f32 0.0, %v4876
        %v4878 = vpop.f32.mrb[0].mxu0
        %v4879 = vadd.f32 0.0, %v4878
        %v4880 = vpop.f32.mrb[0].mxu0
        %v4881 = vadd.f32 0.0, %v4880
        %v4882 = vpop.f32.mrb[0].mxu0
        %v4883 = vadd.f32 0.0, %v4882
        %4884 = vmatprep.mubr.bf16.mxu0 %v3943
        %4885 = vmatmul.mubr.bf16.gmra.mrb[0].mxu0 %v3942
        %v4886 = vpop.f32.mrb[0].mxu0
        %v4887 = vadd.f32 0.0, %v4886
        %v4888 = vpop.f32.mrb[0].mxu0
        %v4889 = vadd.f32 0.0, %v4888
        %v4890 = vpop.f32.mrb[0].mxu0
        %v4891 = vadd.f32 0.0, %v4890
        %v4892 = vpop.f32.mrb[0].mxu0
        %v4893 = vadd.f32 0.0, %v4892
        %4894 = vmatprep.mubr.bf16.mxu0 %v3949
        %4895 = vmatmul.mubr.bf16.gmra.mrb[0].mxu0 %v3948
        %v4896 = vpop.f32.mrb[0].mxu0
        %v4897 = vadd.f32 0.0, %v4896
        %v4898 = vpop.f32.mrb[0].mxu0
        %v4899 = vadd.f32 0.0, %v4898
        %v4900 = vpop.f32.mrb[0].mxu0
        %v4901 = vadd.f32 0.0, %v4900
        %v4902 = vpop.f32.mrb[0].mxu0
        %v4903 = vadd.f32 0.0, %v4902
        %4904 = vmatprep.mubr.bf16.mxu0 %v3955
        %4905 = vmatmul.mubr.bf16.gmra.mrb[0].mxu0 %v3954
        %v4906 = vpop.f32.mrb[0].mxu0
        %v4907 = vadd.f32 0.0, %v4906
        %v4908 = vpop.f32.mrb[0].mxu0
        %v4909 = vadd.f32 0.0, %v4908
        %v4910 = vpop.f32.mrb[0].mxu0
        %v4911 = vadd.f32 0.0, %v4910
        %v4912 = vpop.f32.mrb[0].mxu0
        %v4913 = vadd.f32 0.0, %v4912
        %4914 = vmatprep.mubr.bf16.mxu0 %v3961
        %4915 = vmatmul.mubr.bf16.gmra.mrb[0].mxu0 %v3960
        %v4916 = vpop.f32.mrb[0].mxu0
        %v4917 = vadd.f32 0.0, %v4916
        %v4918 = vpop.f32.mrb[0].mxu0
        %v4919 = vadd.f32 0.0, %v4918
        %v4920 = vpop.f32.mrb[0].mxu0
        %v4921 = vadd.f32 0.0, %v4920
        %v4922 = vpop.f32.mrb[0].mxu0
        %v4923 = vadd.f32 0.0, %v4922
        %4924 = vmatprep.mubr.bf16.mxu0 %v3967
        %4925 = vmatmul.mubr.bf16.gmra.mrb[0].mxu0 %v3966
        %v4926 = vpop.f32.mrb[0].mxu0
        %v4927 = vadd.f32 0.0, %v4926
        %v4928 = vpop.f32.mrb[0].mxu0
        %v4929 = vadd.f32 0.0, %v4928
        %v4930 = vpop.f32.mrb[0].mxu0
        %v4931 = vadd.f32 0.0, %v4930
        %v4932 = vpop.f32.mrb[0].mxu0
        %v4933 = vadd.f32 0.0, %v4932
        %4934 = vdwg.mxu0
        %4935 = vmatprep.subr.bf16.mxu0 %v4583
        %4936 = vmatpush1.bf16.msra.mxu0 %v4582
        %4937 = vmatprep.subr.bf16.mxu0 %v4585
        %4938 = vmatpush1.bf16.msra.mxu0 %v4584
        %4939 = vmatprep.subr.bf16.mxu0 %v4587
        %4940 = vmatpush1.bf16.msra.mxu0 %v4586
        %4941 = vmatprep.subr.bf16.mxu0 %v4589
        %4942 = vmatpush1.bf16.msra.mxu0 %v4588
        %4943 = vmatprep.subr.bf16.mxu0 %v4591
        %4944 = vmatpush1.bf16.msra.mxu0 %v4590
        %4945 = vmatprep.subr.bf16.mxu0 %v4593
        %4946 = vmatpush1.bf16.msra.mxu0 %v4592
        %4947 = vmatprep.subr.bf16.mxu0 %v4595
        %4948 = vmatpush1.bf16.msra.mxu0 %v4594
        %4949 = vmatprep.subr.bf16.mxu0 %v4597
        %4950 = vmatpush1.bf16.msra.mxu0 %v4596
        %4951 = vmatprep.subr.bf16.mxu0 %v4599
        %4952 = vmatpush1.bf16.msra.mxu0 %v4598
        %4953 = vmatprep.subr.bf16.mxu0 %v4601
        %4954 = vmatpush1.bf16.msra.mxu0 %v4600
        %4955 = vmatprep.subr.bf16.mxu0 %v4603
        %4956 = vmatpush1.bf16.msra.mxu0 %v4602
        %4957 = vmatprep.subr.bf16.mxu0 %v4605
        %4958 = vmatpush1.bf16.msra.mxu0 %v4604
        %4959 = vmatprep.subr.bf16.mxu0 %v4607
        %4960 = vmatpush1.bf16.msra.mxu0 %v4606
        %4961 = vmatprep.subr.bf16.mxu0 %v4609
        %4962 = vmatpush1.bf16.msra.mxu0 %v4608
        %4963 = vmatprep.subr.bf16.mxu0 %v4611
        %4964 = vmatpush1.bf16.msra.mxu0 %v4610
        %4965 = vmatprep.subr.bf16.mxu0 %v4613
        %4966 = vmatpush1.bf16.msra.mxu0 %v4612
        %4967 = vmatprep.mubr.bf16.mxu0 %v3879
        %4968 = vmatmul.mubr.bf16.gmra.mrb[0].mxu0 %v3878
        %v4969 = vpop.f32.mrb[0].mxu0
        %v4970 = vadd.f32 %v4777, %v4969
        %v4971 = vpop.f32.mrb[0].mxu0
        %v4972 = vadd.f32 %v4779, %v4971
        %v4973 = vpop.f32.mrb[0].mxu0
        %v4974 = vadd.f32 %v4781, %v4973
        %v4975 = vpop.f32.mrb[0].mxu0
        %v4976 = vadd.f32 %v4783, %v4975
        %4977 = vmatprep.mubr.bf16.mxu0 %v3885
        %4978 = vmatmul.mubr.bf16.gmra.mrb[0].mxu0 %v3884
        %v4979 = vpop.f32.mrb[0].mxu0
        %v4980 = vadd.f32 %v4787, %v4979
        %v4981 = vpop.f32.mrb[0].mxu0
        %v4982 = vadd.f32 %v4789, %v4981
        %v4983 = vpop.f32.mrb[0].mxu0
        %v4984 = vadd.f32 %v4791, %v4983
        %v4985 = vpop.f32.mrb[0].mxu0
        %v4986 = vadd.f32 %v4793, %v4985
        %4987 = vmatprep.mubr.bf16.mxu0 %v3891
        %4988 = vmatmul.mubr.bf16.gmra.mrb[0].mxu0 %v3890
        %v4989 = vpop.f32.mrb[0].mxu0
        %v4990 = vadd.f32 %v4797, %v4989
        %v4991 = vpop.f32.mrb[0].mxu0
        %v4992 = vadd.f32 %v4799, %v4991
        %v4993 = vpop.f32.mrb[0].mxu0
        %v4994 = vadd.f32 %v4801, %v4993
        %v4995 = vpop.f32.mrb[0].mxu0
        %v4996 = vadd.f32 %v4803, %v4995
        %4997 = vmatprep.mubr.bf16.mxu0 %v3897
        %4998 = vmatmul.mubr.bf16.gmra.mrb[0].mxu0 %v3896
        %v4999 = vpop.f32.mrb[0].mxu0
        %v5000 = vadd.f32 %v4807, %v4999
        %v5001 = vpop.f32.mrb[0].mxu0
        %v5002 = vadd.f32 %v4809, %v5001
        %v5003 = vpop.f32.mrb[0].mxu0
        %v5004 = vadd.f32 %v4811, %v5003
        %v5005 = vpop.f32.mrb[0].mxu0
        %v5006 = vadd.f32 %v4813, %v5005
        %5007 = vmatprep.mubr.bf16.mxu0 %v3903
        %5008 = vmatmul.mubr.bf16.gmra.mrb[0].mxu0 %v3902
        %v5009 = vpop.f32.mrb[0].mxu0
        %v5010 = vadd.f32 %v4817, %v5009
        %v5011 = vpop.f32.mrb[0].mxu0
        %v5012 = vadd.f32 %v4819, %v5011
        %v5013 = vpop.f32.mrb[0].mxu0
        %v5014 = vadd.f32 %v4821, %v5013
        %v5015 = vpop.f32.mrb[0].mxu0
        %v5016 = vadd.f32 %v4823, %v5015
        %5017 = vmatprep.mubr.bf16.mxu0 %v3909
        %5018 = vmatmul.mubr.bf16.gmra.mrb[0].mxu0 %v3908
        %v5019 = vpop.f32.mrb[0].mxu0
        %v5020 = vadd.f32 %v4827, %v5019
        %v5021 = vpop.f32.mrb[0].mxu0
        %v5022 = vadd.f32 %v4829, %v5021
        %v5023 = vpop.f32.mrb[0].mxu0
        %v5024 = vadd.f32 %v4831, %v5023
        %v5025 = vpop.f32.mrb[0].mxu0
        %v5026 = vadd.f32 %v4833, %v5025
        %5027 = vmatprep.mubr.bf16.mxu0 %v3915
        %5028 = vmatmul.mubr.bf16.gmra.mrb[0].mxu0 %v3914
        %v5029 = vpop.f32.mrb[0].mxu0
        %v5030 = vadd.f32 %v4837, %v5029
        %v5031 = vpop.f32.mrb[0].mxu0
        %v5032 = vadd.f32 %v4839, %v5031
        %v5033 = vpop.f32.mrb[0].mxu0
        %v5034 = vadd.f32 %v4841, %v5033
        %v5035 = vpop.f32.mrb[0].mxu0
        %v5036 = vadd.f32 %v4843, %v5035
        %5037 = vmatprep.mubr.bf16.mxu0 %v3921
        %5038 = vmatmul.mubr.bf16.gmra.mrb[0].mxu0 %v3920
        %v5039 = vpop.f32.mrb[0].mxu0
        %v5040 = vadd.f32 %v4847, %v5039
        %v5041 = vpop.f32.mrb[0].mxu0
        %v5042 = vadd.f32 %v4849, %v5041
        %v5043 = vpop.f32.mrb[0].mxu0
        %v5044 = vadd.f32 %v4851, %v5043
        %v5045 = vpop.f32.mrb[0].mxu0
        %v5046 = vadd.f32 %v4853, %v5045
        %5047 = vmatprep.mubr.bf16.mxu0 %v3927
        %5048 = vmatmul.mubr.bf16.gmra.mrb[0].mxu0 %v3926
        %v5049 = vpop.f32.mrb[0].mxu0
        %v5050 = vadd.f32 %v4857, %v5049
        %v5051 = vpop.f32.mrb[0].mxu0
        %v5052 = vadd.f32 %v4859, %v5051
        %v5053 = vpop.f32.mrb[0].mxu0
        %v5054 = vadd.f32 %v4861, %v5053
        %v5055 = vpop.f32.mrb[0].mxu0
        %v5056 = vadd.f32 %v4863, %v5055
        %5057 = vmatprep.mubr.bf16.mxu0 %v3933
        %5058 = vmatmul.mubr.bf16.gmra.mrb[0].mxu0 %v3932
        %v5059 = vpop.f32.mrb[0].mxu0
        %v5060 = vadd.f32 %v4867, %v5059
        %v5061 = vpop.f32.mrb[0].mxu0
        %v5062 = vadd.f32 %v4869, %v5061
        %v5063 = vpop.f32.mrb[0].mxu0
        %v5064 = vadd.f32 %v4871, %v5063
        %v5065 = vpop.f32.mrb[0].mxu0
        %v5066 = vadd.f32 %v4873, %v5065
        %5067 = vmatprep.mubr.bf16.mxu0 %v3939
        %5068 = vmatmul.mubr.bf16.gmra.mrb[0].mxu0 %v3938
        %v5069 = vpop.f32.mrb[0].mxu0
        %v5070 = vadd.f32 %v4877, %v5069
        %v5071 = vpop.f32.mrb[0].mxu0
        %v5072 = vadd.f32 %v4879, %v5071
        %v5073 = vpop.f32.mrb[0].mxu0
        %v5074 = vadd.f32 %v4881, %v5073
        %v5075 = vpop.f32.mrb[0].mxu0
        %v5076 = vadd.f32 %v4883, %v5075
        %5077 = vmatprep.mubr.bf16.mxu0 %v3945
        %5078 = vmatmul.mubr.bf16.gmra.mrb[0].mxu0 %v3944
        %v5079 = vpop.f32.mrb[0].mxu0
        %v5080 = vadd.f32 %v4887, %v5079
        %v5081 = vpop.f32.mrb[0].mxu0
        %v5082 = vadd.f32 %v4889, %v5081
        %v5083 = vpop.f32.mrb[0].mxu0
        %v5084 = vadd.f32 %v4891, %v5083
        %v5085 = vpop.f32.mrb[0].mxu0
        %v5086 = vadd.f32 %v4893, %v5085
        %5087 = vmatprep.mubr.bf16.mxu0 %v3951
        %5088 = vmatmul.mubr.bf16.gmra.mrb[0].mxu0 %v3950
        %v5089 = vpop.f32.mrb[0].mxu0
        %v5090 = vadd.f32 %v4897, %v5089
        %v5091 = vpop.f32.mrb[0].mxu0
        %v5092 = vadd.f32 %v4899, %v5091
        %v5093 = vpop.f32.mrb[0].mxu0
        %v5094 = vadd.f32 %v4901, %v5093
        %v5095 = vpop.f32.mrb[0].mxu0
        %v5096 = vadd.f32 %v4903, %v5095
        %5097 = vmatprep.mubr.bf16.mxu0 %v3957
        %5098 = vmatmul.mubr.bf16.gmra.mrb[0].mxu0 %v3956
        %v5099 = vpop.f32.mrb[0].mxu0
        %v5100 = vadd.f32 %v4907, %v5099
        %v5101 = vpop.f32.mrb[0].mxu0
        %v5102 = vadd.f32 %v4909, %v5101
        %v5103 = vpop.f32.mrb[0].mxu0
        %v5104 = vadd.f32 %v4911, %v5103
        %v5105 = vpop.f32.mrb[0].mxu0
        %v5106 = vadd.f32 %v4913, %v5105
        %5107 = vmatprep.mubr.bf16.mxu0 %v3963
        %5108 = vmatmul.mubr.bf16.gmra.mrb[0].mxu0 %v3962
        %v5109 = vpop.f32.mrb[0].mxu0
        %v5110 = vadd.f32 %v4917, %v5109
        %v5111 = vpop.f32.mrb[0].mxu0
        %v5112 = vadd.f32 %v4919, %v5111
        %v5113 = vpop.f32.mrb[0].mxu0
        %v5114 = vadd.f32 %v4921, %v5113
        %v5115 = vpop.f32.mrb[0].mxu0
        %v5116 = vadd.f32 %v4923, %v5115
        %5117 = vmatprep.mubr.bf16.mxu0 %v3969
        %5118 = vmatmul.mubr.bf16.gmra.mrb[0].mxu0 %v3968
        %v5119 = vpop.f32.mrb[0].mxu0
        %v5120 = vadd.f32 %v4927, %v5119
        %v5121 = vpop.f32.mrb[0].mxu0
        %v5122 = vadd.f32 %v4929, %v5121
        %v5123 = vpop.f32.mrb[0].mxu0
        %v5124 = vadd.f32 %v4931, %v5123
        %v5125 = vpop.f32.mrb[0].mxu0
        %v5126 = vadd.f32 %v4933, %v5125
        %5127 = vdwg.mxu0
        %5128 = vmatprep.subr.bf16.mxu0 %v4615
        %5129 = vmatpush1.bf16.msra.mxu0 %v4614
        %5130 = vmatprep.subr.bf16.mxu0 %v4617
        %5131 = vmatpush1.bf16.msra.mxu0 %v4616
        %5132 = vmatprep.subr.bf16.mxu0 %v4619
        %5133 = vmatpush1.bf16.msra.mxu0 %v4618
        %5134 = vmatprep.subr.bf16.mxu0 %v4621
        %5135 = vmatpush1.bf16.msra.mxu0 %v4620
        %5136 = vmatprep.subr.bf16.mxu0 %v4623
        %5137 = vmatpush1.bf16.msra.mxu0 %v4622
        %5138 = vmatprep.subr.bf16.mxu0 %v4625
        %5139 = vmatpush1.bf16.msra.mxu0 %v4624
        %5140 = vmatprep.subr.bf16.mxu0 %v4627
        %5141 = vmatpush1.bf16.msra.mxu0 %v4626
        %5142 = vmatprep.subr.bf16.mxu0 %v4629
        %5143 = vmatpush1.bf16.msra.mxu0 %v4628
        %5144 = vmatprep.subr.bf16.mxu0 %v4631
        %5145 = vmatpush1.bf16.msra.mxu0 %v4630
        %5146 = vmatprep.subr.bf16.mxu0 %v4633
        %5147 = vmatpush1.bf16.msra.mxu0 %v4632
        %5148 = vmatprep.subr.bf16.mxu0 %v4635
        %5149 = vmatpush1.bf16.msra.mxu0 %v4634
        %5150 = vmatprep.subr.bf16.mxu0 %v4637
        %5151 = vmatpush1.bf16.msra.mxu0 %v4636
        %5152 = vmatprep.subr.bf16.mxu0 %v4639
        %5153 = vmatpush1.bf16.msra.mxu0 %v4638
        %5154 = vmatprep.subr.bf16.mxu0 %v4641
        %5155 = vmatpush1.bf16.msra.mxu0 %v4640
        %5156 = vmatprep.subr.bf16.mxu0 %v4643
        %5157 = vmatpush1.bf16.msra.mxu0 %v4642
        %5158 = vmatprep.subr.bf16.mxu0 %v4645
        %5159 = vmatpush1.bf16.msra.mxu0 %v4644
        %5160 = vmatprep.mubr.bf16.mxu0 %v3881
        %5161 = vmatmul.mubr.bf16.gmra.mrb[0].mxu0 %v3880
        %v5162 = vpop.f32.mrb[0].mxu0
        %v5163 = vadd.f32 %v4970, %v5162
        %v5164 = vpop.f32.mrb[0].mxu0
        %v5165 = vadd.f32 %v4972, %v5164
        %v5166 = vpop.f32.mrb[0].mxu0
        %v5167 = vadd.f32 %v4974, %v5166
        %v5168 = vpop.f32.mrb[0].mxu0
        %v5169 = vadd.f32 %v4976, %v5168
        %5170 = vmatprep.mubr.bf16.mxu0 %v3887
        %5171 = vmatmul.mubr.bf16.gmra.mrb[0].mxu0 %v3886
        %v5172 = vpop.f32.mrb[0].mxu0
        %v5173 = vadd.f32 %v4980, %v5172
        %v5174 = vpop.f32.mrb[0].mxu0
        %v5175 = vadd.f32 %v4982, %v5174
        %v5176 = vpop.f32.mrb[0].mxu0
        %v5177 = vadd.f32 %v4984, %v5176
        %v5178 = vpop.f32.mrb[0].mxu0
        %v5179 = vadd.f32 %v4986, %v5178
        %5180 = vmatprep.mubr.bf16.mxu0 %v3893
        %5181 = vmatmul.mubr.bf16.gmra.mrb[0].mxu0 %v3892
        %v5182 = vpop.f32.mrb[0].mxu0
        %v5183 = vadd.f32 %v4990, %v5182
        %v5184 = vpop.f32.mrb[0].mxu0
        %v5185 = vadd.f32 %v4992, %v5184
        %v5186 = vpop.f32.mrb[0].mxu0
        %v5187 = vadd.f32 %v4994, %v5186
        %v5188 = vpop.f32.mrb[0].mxu0
        %v5189 = vadd.f32 %v4996, %v5188
        %5190 = vmatprep.mubr.bf16.mxu0 %v3899
        %5191 = vmatmul.mubr.bf16.gmra.mrb[0].mxu0 %v3898
        %v5192 = vpop.f32.mrb[0].mxu0
        %v5193 = vadd.f32 %v5000, %v5192
        %v5194 = vpop.f32.mrb[0].mxu0
        %v5195 = vadd.f32 %v5002, %v5194
        %v5196 = vpop.f32.mrb[0].mxu0
        %v5197 = vadd.f32 %v5004, %v5196
        %v5198 = vpop.f32.mrb[0].mxu0
        %v5199 = vadd.f32 %v5006, %v5198
        %5200 = vmatprep.mubr.bf16.mxu0 %v3905
        %5201 = vmatmul.mubr.bf16.gmra.mrb[0].mxu0 %v3904
        %v5202 = vpop.f32.mrb[0].mxu0
        %v5203 = vadd.f32 %v5010, %v5202
        %v5204 = vpop.f32.mrb[0].mxu0
        %v5205 = vadd.f32 %v5012, %v5204
        %v5206 = vpop.f32.mrb[0].mxu0
        %v5207 = vadd.f32 %v5014, %v5206
        %v5208 = vpop.f32.mrb[0].mxu0
        %v5209 = vadd.f32 %v5016, %v5208
        %5210 = vmatprep.mubr.bf16.mxu0 %v3911
        %5211 = vmatmul.mubr.bf16.gmra.mrb[0].mxu0 %v3910
        %v5212 = vpop.f32.mrb[0].mxu0
        %v5213 = vadd.f32 %v5020, %v5212
        %v5214 = vpop.f32.mrb[0].mxu0
        %v5215 = vadd.f32 %v5022, %v5214
        %v5216 = vpop.f32.mrb[0].mxu0
        %v5217 = vadd.f32 %v5024, %v5216
        %v5218 = vpop.f32.mrb[0].mxu0
        %v5219 = vadd.f32 %v5026, %v5218
        %5220 = vmatprep.mubr.bf16.mxu0 %v3917
        %5221 = vmatmul.mubr.bf16.gmra.mrb[0].mxu0 %v3916
        %v5222 = vpop.f32.mrb[0].mxu0
        %v5223 = vadd.f32 %v5030, %v5222
        %v5224 = vpop.f32.mrb[0].mxu0
        %v5225 = vadd.f32 %v5032, %v5224
        %v5226 = vpop.f32.mrb[0].mxu0
        %v5227 = vadd.f32 %v5034, %v5226
        %v5228 = vpop.f32.mrb[0].mxu0
        %v5229 = vadd.f32 %v5036, %v5228
        %5230 = vmatprep.mubr.bf16.mxu0 %v3923
        %5231 = vmatmul.mubr.bf16.gmra.mrb[0].mxu0 %v3922
        %v5232 = vpop.f32.mrb[0].mxu0
        %v5233 = vadd.f32 %v5040, %v5232
        %v5234 = vpop.f32.mrb[0].mxu0
        %v5235 = vadd.f32 %v5042, %v5234
        %v5236 = vpop.f32.mrb[0].mxu0
        %v5237 = vadd.f32 %v5044, %v5236
        %v5238 = vpop.f32.mrb[0].mxu0
        %v5239 = vadd.f32 %v5046, %v5238
        %5240 = vmatprep.mubr.bf16.mxu0 %v3929
        %5241 = vmatmul.mubr.bf16.gmra.mrb[0].mxu0 %v3928
        %v5242 = vpop.f32.mrb[0].mxu0
        %v5243 = vadd.f32 %v5050, %v5242
        %v5244 = vpop.f32.mrb[0].mxu0
        %v5245 = vadd.f32 %v5052, %v5244
        %v5246 = vpop.f32.mrb[0].mxu0
        %v5247 = vadd.f32 %v5054, %v5246
        %v5248 = vpop.f32.mrb[0].mxu0
        %v5249 = vadd.f32 %v5056, %v5248
        %5250 = vmatprep.mubr.bf16.mxu0 %v3935
        %5251 = vmatmul.mubr.bf16.gmra.mrb[0].mxu0 %v3934
        %v5252 = vpop.f32.mrb[0].mxu0
        %v5253 = vadd.f32 %v5060, %v5252
        %v5254 = vpop.f32.mrb[0].mxu0
        %v5255 = vadd.f32 %v5062, %v5254
        %v5256 = vpop.f32.mrb[0].mxu0
        %v5257 = vadd.f32 %v5064, %v5256
        %v5258 = vpop.f32.mrb[0].mxu0
        %v5259 = vadd.f32 %v5066, %v5258
        %5260 = vmatprep.mubr.bf16.mxu0 %v3941
        %5261 = vmatmul.mubr.bf16.gmra.mrb[0].mxu0 %v3940
        %v5262 = vpop.f32.mrb[0].mxu0
        %v5263 = vadd.f32 %v5070, %v5262
        %v5264 = vpop.f32.mrb[0].mxu0
        %v5265 = vadd.f32 %v5072, %v5264
        %v5266 = vpop.f32.mrb[0].mxu0
        %v5267 = vadd.f32 %v5074, %v5266
        %v5268 = vpop.f32.mrb[0].mxu0
        %v5269 = vadd.f32 %v5076, %v5268
        %5270 = vmatprep.mubr.bf16.mxu0 %v3947
        %5271 = vmatmul.mubr.bf16.gmra.mrb[0].mxu0 %v3946
        %v5272 = vpop.f32.mrb[0].mxu0
        %v5273 = vadd.f32 %v5080, %v5272
        %v5274 = vpop.f32.mrb[0].mxu0
        %v5275 = vadd.f32 %v5082, %v5274
        %v5276 = vpop.f32.mrb[0].mxu0
        %v5277 = vadd.f32 %v5084, %v5276
        %v5278 = vpop.f32.mrb[0].mxu0
        %v5279 = vadd.f32 %v5086, %v5278
        %5280 = vmatprep.mubr.bf16.mxu0 %v3953
        %5281 = vmatmul.mubr.bf16.gmra.mrb[0].mxu0 %v3952
        %v5282 = vpop.f32.mrb[0].mxu0
        %v5283 = vadd.f32 %v5090, %v5282
        %v5284 = vpop.f32.mrb[0].mxu0
        %v5285 = vadd.f32 %v5092, %v5284
        %v5286 = vpop.f32.mrb[0].mxu0
        %v5287 = vadd.f32 %v5094, %v5286
        %v5288 = vpop.f32.mrb[0].mxu0
        %v5289 = vadd.f32 %v5096, %v5288
        %5290 = vmatprep.mubr.bf16.mxu0 %v3959
        %5291 = vmatmul.mubr.bf16.gmra.mrb[0].mxu0 %v3958
        %v5292 = vpop.f32.mrb[0].mxu0
        %v5293 = vadd.f32 %v5100, %v5292
        %v5294 = vpop.f32.mrb[0].mxu0
        %v5295 = vadd.f32 %v5102, %v5294
        %v5296 = vpop.f32.mrb[0].mxu0
        %v5297 = vadd.f32 %v5104, %v5296
        %v5298 = vpop.f32.mrb[0].mxu0
        %v5299 = vadd.f32 %v5106, %v5298
        %5300 = vmatprep.mubr.bf16.mxu0 %v3965
        %5301 = vmatmul.mubr.bf16.gmra.mrb[0].mxu0 %v3964
        %v5302 = vpop.f32.mrb[0].mxu0
        %v5303 = vadd.f32 %v5110, %v5302
        %v5304 = vpop.f32.mrb[0].mxu0
        %v5305 = vadd.f32 %v5112, %v5304
        %v5306 = vpop.f32.mrb[0].mxu0
        %v5307 = vadd.f32 %v5114, %v5306
        %v5308 = vpop.f32.mrb[0].mxu0
        %v5309 = vadd.f32 %v5116, %v5308
        %5310 = vmatprep.mubr.bf16.mxu0 %v3971
        %5311 = vmatmul.mubr.bf16.gmra.mrb[0].mxu0 %v3970
        %v5312 = vpop.f32.mrb[0].mxu0
        %v5313 = vadd.f32 %v5120, %v5312
        %v5314 = vpop.f32.mrb[0].mxu0
        %v5315 = vadd.f32 %v5122, %v5314
        %v5316 = vpop.f32.mrb[0].mxu0
        %v5317 = vadd.f32 %v5124, %v5316
        %v5318 = vpop.f32.mrb[0].mxu0
        %v5319 = vadd.f32 %v5126, %v5318
        %5320 = vdwg.mxu0
        %v5417 = vunpack.c.l.b16 %v4069
        %v5418 = vunpack.c.h.b16 %v4069
        %v5419 = vunpack.c.l.b16 %v4070
        %v5420 = vunpack.c.h.b16 %v4070
        %v5421 = vunpack.c.l.b16 %v4071
        %v5422 = vunpack.c.h.b16 %v4071
        %v5423 = vunpack.c.l.b16 %v4072
        %v5424 = vunpack.c.h.b16 %v4072
        %v5425 = vunpack.c.l.b16 %v4073
        %v5426 = vunpack.c.h.b16 %v4073
        %v5427 = vunpack.c.l.b16 %v4074
        %v5428 = vunpack.c.h.b16 %v4074
        %v5429 = vunpack.c.l.b16 %v4075
        %v5430 = vunpack.c.h.b16 %v4075
        %v5431 = vunpack.c.l.b16 %v4076
        %v5432 = vunpack.c.h.b16 %v4076
        %v5433 = vunpack.c.l.b16 %v4077
        %v5434 = vunpack.c.h.b16 %v4077
        %v5435 = vunpack.c.l.b16 %v4078
        %v5436 = vunpack.c.h.b16 %v4078
        %v5437 = vunpack.c.l.b16 %v4079
        %v5438 = vunpack.c.h.b16 %v4079
        %v5439 = vunpack.c.l.b16 %v4080
        %v5440 = vunpack.c.h.b16 %v4080
        %v5441 = vunpack.c.l.b16 %v4081
        %v5442 = vunpack.c.h.b16 %v4081
        %v5443 = vunpack.c.l.b16 %v4082
        %v5444 = vunpack.c.h.b16 %v4082
        %v5445 = vunpack.c.l.b16 %v4083
        %v5446 = vunpack.c.h.b16 %v4083
        %v5447 = vunpack.c.l.b16 %v4084
        %v5448 = vunpack.c.h.b16 %v4084
        %v5449 = vunpack.c.l.b16 %v4085
        %v5450 = vunpack.c.h.b16 %v4085
        %v5451 = vunpack.c.l.b16 %v4086
        %v5452 = vunpack.c.h.b16 %v4086
        %v5453 = vunpack.c.l.b16 %v4087
        %v5454 = vunpack.c.h.b16 %v4087
        %v5455 = vunpack.c.l.b16 %v4088
        %v5456 = vunpack.c.h.b16 %v4088
        %v5457 = vunpack.c.l.b16 %v4089
        %v5458 = vunpack.c.h.b16 %v4089
        %v5459 = vunpack.c.l.b16 %v4090
        %v5460 = vunpack.c.h.b16 %v4090
        %v5461 = vunpack.c.l.b16 %v4091
        %v5462 = vunpack.c.h.b16 %v4091
        %v5463 = vunpack.c.l.b16 %v4092
        %v5464 = vunpack.c.h.b16 %v4092
        %v5465 = vunpack.c.l.b16 %v4093
        %v5466 = vunpack.c.h.b16 %v4093
        %v5467 = vunpack.c.l.b16 %v4094
        %v5468 = vunpack.c.h.b16 %v4094
        %v5469 = vunpack.c.l.b16 %v4095
        %v5470 = vunpack.c.h.b16 %v4095
        %v5471 = vunpack.c.l.b16 %v4096
        %v5472 = vunpack.c.h.b16 %v4096
        %v5473 = vunpack.c.l.b16 %v4097
        %v5474 = vunpack.c.h.b16 %v4097
        %v5475 = vunpack.c.l.b16 %v4098
        %v5476 = vunpack.c.h.b16 %v4098
        %v5477 = vunpack.c.l.b16 %v4099
        %v5478 = vunpack.c.h.b16 %v4099
        %v5479 = vunpack.c.l.b16 %v4100
        %v5480 = vunpack.c.h.b16 %v4100
        %v5481 = vunpack.c.l.b16 %v4101
        %v5482 = vunpack.c.h.b16 %v4101
        %v5483 = vunpack.c.l.b16 %v4102
        %v5484 = vunpack.c.h.b16 %v4102
        %v5485 = vunpack.c.l.b16 %v4103
        %v5486 = vunpack.c.h.b16 %v4103
        %v5487 = vunpack.c.l.b16 %v4104
        %v5488 = vunpack.c.h.b16 %v4104
        %v5489 = vunpack.c.l.b16 %v4105
        %v5490 = vunpack.c.h.b16 %v4105
        %v5491 = vunpack.c.l.b16 %v4106
        %v5492 = vunpack.c.h.b16 %v4106
        %v5493 = vunpack.c.l.b16 %v4107
        %v5494 = vunpack.c.h.b16 %v4107
        %v5495 = vunpack.c.l.b16 %v4108
        %v5496 = vunpack.c.h.b16 %v4108
        %v5497 = vunpack.c.l.b16 %v4109
        %v5498 = vunpack.c.h.b16 %v4109
        %v5499 = vunpack.c.l.b16 %v4110
        %v5500 = vunpack.c.h.b16 %v4110
        %v5501 = vunpack.c.l.b16 %v4111
        %v5502 = vunpack.c.h.b16 %v4111
        %v5503 = vunpack.c.l.b16 %v4112
        %v5504 = vunpack.c.h.b16 %v4112
        %v5505 = vunpack.c.l.b16 %v4113
        %v5506 = vunpack.c.h.b16 %v4113
        %v5507 = vunpack.c.l.b16 %v4114
        %v5508 = vunpack.c.h.b16 %v4114
        %v5509 = vunpack.c.l.b16 %v4115
        %v5510 = vunpack.c.h.b16 %v4115
        %v5511 = vunpack.c.l.b16 %v4116
        %v5512 = vunpack.c.h.b16 %v4116
        %v5513 = vunpack.c.l.b16 %v4117
        %v5514 = vunpack.c.h.b16 %v4117
        %v5515 = vunpack.c.l.b16 %v4118
        %v5516 = vunpack.c.h.b16 %v4118
        %v5517 = vunpack.c.l.b16 %v4119
        %v5518 = vunpack.c.h.b16 %v4119
        %v5519 = vunpack.c.l.b16 %v4120
        %v5520 = vunpack.c.h.b16 %v4120
        %v5521 = vunpack.c.l.b16 %v4121
        %v5522 = vunpack.c.h.b16 %v4121
        %v5523 = vunpack.c.l.b16 %v4122
        %v5524 = vunpack.c.h.b16 %v4122
        %v5525 = vunpack.c.l.b16 %v4123
        %v5526 = vunpack.c.h.b16 %v4123
        %v5527 = vunpack.c.l.b16 %v4124
        %v5528 = vunpack.c.h.b16 %v4124
        %v5529 = vunpack.c.l.b16 %v4125
        %v5530 = vunpack.c.h.b16 %v4125
        %v5531 = vunpack.c.l.b16 %v4126
        %v5532 = vunpack.c.h.b16 %v4126
        %v5533 = vunpack.c.l.b16 %v4127
        %v5534 = vunpack.c.h.b16 %v4127
        %v5535 = vunpack.c.l.b16 %v4128
        %v5536 = vunpack.c.h.b16 %v4128
        %v5537 = vunpack.c.l.b16 %v4129
        %v5538 = vunpack.c.h.b16 %v4129
        %v5539 = vunpack.c.l.b16 %v4130
        %v5540 = vunpack.c.h.b16 %v4130
        %v5541 = vunpack.c.l.b16 %v4131
        %v5542 = vunpack.c.h.b16 %v4131
        %v5543 = vunpack.c.l.b16 %v4132
        %v5544 = vunpack.c.h.b16 %v4132
        %v5545 = vunpack.c.l.b16 %v4133
        %v5546 = vunpack.c.h.b16 %v4133
        %v5547 = vunpack.c.l.b16 %v4134
        %v5548 = vunpack.c.h.b16 %v4134
        %v5549 = vunpack.c.l.b16 %v4135
        %v5550 = vunpack.c.h.b16 %v4135
        %v5551 = vunpack.c.l.b16 %v4136
        %v5552 = vunpack.c.h.b16 %v4136
        %v5553 = vunpack.c.l.b16 %v4137
        %v5554 = vunpack.c.h.b16 %v4137
        %v5555 = vunpack.c.l.b16 %v4138
        %v5556 = vunpack.c.h.b16 %v4138
        %v5557 = vunpack.c.l.b16 %v4139
        %v5558 = vunpack.c.h.b16 %v4139
        %v5559 = vunpack.c.l.b16 %v4140
        %v5560 = vunpack.c.h.b16 %v4140
        %v5561 = vunpack.c.l.b16 %v4141
        %v5562 = vunpack.c.h.b16 %v4141
        %v5563 = vunpack.c.l.b16 %v4142
        %v5564 = vunpack.c.h.b16 %v4142
        %v5565 = vunpack.c.l.b16 %v4143
        %v5566 = vunpack.c.h.b16 %v4143
        %v5567 = vunpack.c.l.b16 %v4144
        %v5568 = vunpack.c.h.b16 %v4144
        %v5569 = vunpack.c.l.b16 %v4145
        %v5570 = vunpack.c.h.b16 %v4145
        %v5571 = vunpack.c.l.b16 %v4146
        %v5572 = vunpack.c.h.b16 %v4146
        %v5573 = vunpack.c.l.b16 %v4147
        %v5574 = vunpack.c.h.b16 %v4147
        %v5575 = vunpack.c.l.b16 %v4148
        %v5576 = vunpack.c.h.b16 %v4148
        %v5577 = vunpack.c.l.b16 %v4149
        %v5578 = vunpack.c.h.b16 %v4149
        %v5579 = vunpack.c.l.b16 %v4150
        %v5580 = vunpack.c.h.b16 %v4150
        %v5581 = vunpack.c.l.b16 %v4151
        %v5582 = vunpack.c.h.b16 %v4151
        %v5583 = vunpack.c.l.b16 %v4152
        %v5584 = vunpack.c.h.b16 %v4152
        %v5585 = vunpack.c.l.b16 %v4153
        %v5586 = vunpack.c.h.b16 %v4153
        %v5587 = vunpack.c.l.b16 %v4154
        %v5588 = vunpack.c.h.b16 %v4154
        %v5589 = vunpack.c.l.b16 %v4155
        %v5590 = vunpack.c.h.b16 %v4155
        %v5591 = vunpack.c.l.b16 %v4156
        %v5592 = vunpack.c.h.b16 %v4156
        %v5593 = vunpack.c.l.b16 %v4157
        %v5594 = vunpack.c.h.b16 %v4157
        %v5595 = vunpack.c.l.b16 %v4158
        %v5596 = vunpack.c.h.b16 %v4158
        %v5597 = vunpack.c.l.b16 %v4159
        %v5598 = vunpack.c.h.b16 %v4159
        %v5599 = vunpack.c.l.b16 %v4160
        %v5600 = vunpack.c.h.b16 %v4160
        %v5601 = vunpack.c.l.b16 %v4161
        %v5602 = vunpack.c.h.b16 %v4161
        %v5603 = vunpack.c.l.b16 %v4162
        %v5604 = vunpack.c.h.b16 %v4162
        %v5605 = vunpack.c.l.b16 %v4163
        %v5606 = vunpack.c.h.b16 %v4163
        %v5607 = vunpack.c.l.b16 %v4164
        %v5608 = vunpack.c.h.b16 %v4164
        %v5609 = vpack.c.b16 %v5419, %v5417
        %v5610 = vpack.c.b16 %v5420, %v5418
        %v5611 = vpack.c.b16 %v5423, %v5421
        %v5612 = vpack.c.b16 %v5424, %v5422
        %v5613 = vpack.c.b16 %v5427, %v5425
        %v5614 = vpack.c.b16 %v5428, %v5426
        %v5615 = vpack.c.b16 %v5431, %v5429
        %v5616 = vpack.c.b16 %v5432, %v5430
        %v5617 = vpack.c.b16 %v5435, %v5433
        %v5618 = vpack.c.b16 %v5436, %v5434
        %v5619 = vpack.c.b16 %v5439, %v5437
        %v5620 = vpack.c.b16 %v5440, %v5438
        %v5621 = vpack.c.b16 %v5443, %v5441
        %v5622 = vpack.c.b16 %v5444, %v5442
        %v5623 = vpack.c.b16 %v5447, %v5445
        %v5624 = vpack.c.b16 %v5448, %v5446
        %v5625 = vpack.c.b16 %v5451, %v5449
        %v5626 = vpack.c.b16 %v5452, %v5450
        %v5627 = vpack.c.b16 %v5455, %v5453
        %v5628 = vpack.c.b16 %v5456, %v5454
        %v5629 = vpack.c.b16 %v5459, %v5457
        %v5630 = vpack.c.b16 %v5460, %v5458
        %v5631 = vpack.c.b16 %v5463, %v5461
        %v5632 = vpack.c.b16 %v5464, %v5462
        %v5633 = vpack.c.b16 %v5467, %v5465
        %v5634 = vpack.c.b16 %v5468, %v5466
        %v5635 = vpack.c.b16 %v5471, %v5469
        %v5636 = vpack.c.b16 %v5472, %v5470
        %v5637 = vpack.c.b16 %v5475, %v5473
        %v5638 = vpack.c.b16 %v5476, %v5474
        %v5639 = vpack.c.b16 %v5479, %v5477
        %v5640 = vpack.c.b16 %v5480, %v5478
        %v5641 = vpack.c.b16 %v5483, %v5481
        %v5642 = vpack.c.b16 %v5484, %v5482
        %v5643 = vpack.c.b16 %v5487, %v5485
        %v5644 = vpack.c.b16 %v5488, %v5486
        %v5645 = vpack.c.b16 %v5491, %v5489
        %v5646 = vpack.c.b16 %v5492, %v5490
        %v5647 = vpack.c.b16 %v5495, %v5493
        %v5648 = vpack.c.b16 %v5496, %v5494
        %v5649 = vpack.c.b16 %v5499, %v5497
        %v5650 = vpack.c.b16 %v5500, %v5498
        %v5651 = vpack.c.b16 %v5503, %v5501
        %v5652 = vpack.c.b16 %v5504, %v5502
        %v5653 = vpack.c.b16 %v5507, %v5505
        %v5654 = vpack.c.b16 %v5508, %v5506
        %v5655 = vpack.c.b16 %v5511, %v5509
        %v5656 = vpack.c.b16 %v5512, %v5510
        %v5657 = vpack.c.b16 %v5515, %v5513
        %v5658 = vpack.c.b16 %v5516, %v5514
        %v5659 = vpack.c.b16 %v5519, %v5517
        %v5660 = vpack.c.b16 %v5520, %v5518
        %v5661 = vpack.c.b16 %v5523, %v5521
        %v5662 = vpack.c.b16 %v5524, %v5522
        %v5663 = vpack.c.b16 %v5527, %v5525
        %v5664 = vpack.c.b16 %v5528, %v5526
        %v5665 = vpack.c.b16 %v5531, %v5529
        %v5666 = vpack.c.b16 %v5532, %v5530
        %v5667 = vpack.c.b16 %v5535, %v5533
        %v5668 = vpack.c.b16 %v5536, %v5534
        %v5669 = vpack.c.b16 %v5539, %v5537
        %v5670 = vpack.c.b16 %v5540, %v5538
        %v5671 = vpack.c.b16 %v5543, %v5541
        %v5672 = vpack.c.b16 %v5544, %v5542
        %v5673 = vpack.c.b16 %v5547, %v5545
        %v5674 = vpack.c.b16 %v5548, %v5546
        %v5675 = vpack.c.b16 %v5551, %v5549
        %v5676 = vpack.c.b16 %v5552, %v5550
        %v5677 = vpack.c.b16 %v5555, %v5553
        %v5678 = vpack.c.b16 %v5556, %v5554
        %v5679 = vpack.c.b16 %v5559, %v5557
        %v5680 = vpack.c.b16 %v5560, %v5558
        %v5681 = vpack.c.b16 %v5563, %v5561
        %v5682 = vpack.c.b16 %v5564, %v5562
        %v5683 = vpack.c.b16 %v5567, %v5565
        %v5684 = vpack.c.b16 %v5568, %v5566
        %v5685 = vpack.c.b16 %v5571, %v5569
        %v5686 = vpack.c.b16 %v5572, %v5570
        %v5687 = vpack.c.b16 %v5575, %v5573
        %v5688 = vpack.c.b16 %v5576, %v5574
        %v5689 = vpack.c.b16 %v5579, %v5577
        %v5690 = vpack.c.b16 %v5580, %v5578
        %v5691 = vpack.c.b16 %v5583, %v5581
        %v5692 = vpack.c.b16 %v5584, %v5582
        %v5693 = vpack.c.b16 %v5587, %v5585
        %v5694 = vpack.c.b16 %v5588, %v5586
        %v5695 = vpack.c.b16 %v5591, %v5589
        %v5696 = vpack.c.b16 %v5592, %v5590
        %v5697 = vpack.c.b16 %v5595, %v5593
        %v5698 = vpack.c.b16 %v5596, %v5594
        %v5699 = vpack.c.b16 %v5599, %v5597
        %v5700 = vpack.c.b16 %v5600, %v5598
        %v5701 = vpack.c.b16 %v5603, %v5601
        %v5702 = vpack.c.b16 %v5604, %v5602
        %v5703 = vpack.c.b16 %v5607, %v5605
        %v5704 = vpack.c.b16 %v5608, %v5606
        %5801 = vmatprep.subr.bf16.mxu0 %v5610
        %5802 = vmatpush1.bf16.msra.mxu0 %v5609
        %5803 = vmatprep.subr.bf16.mxu0 %v5612
        %5804 = vmatpush1.bf16.msra.mxu0 %v5611
        %5805 = vmatprep.subr.bf16.mxu0 %v5614
        %5806 = vmatpush1.bf16.msra.mxu0 %v5613
        %5807 = vmatprep.subr.bf16.mxu0 %v5616
        %5808 = vmatpush1.bf16.msra.mxu0 %v5615
        %5809 = vmatprep.subr.bf16.mxu0 %v5618
        %5810 = vmatpush1.bf16.msra.mxu0 %v5617
        %5811 = vmatprep.subr.bf16.mxu0 %v5620
        %5812 = vmatpush1.bf16.msra.mxu0 %v5619
        %5813 = vmatprep.subr.bf16.mxu0 %v5622
        %5814 = vmatpush1.bf16.msra.mxu0 %v5621
        %5815 = vmatprep.subr.bf16.mxu0 %v5624
        %5816 = vmatpush1.bf16.msra.mxu0 %v5623
        %5817 = vmatprep.subr.bf16.mxu0 %v5626
        %5818 = vmatpush1.bf16.msra.mxu0 %v5625
        %5819 = vmatprep.subr.bf16.mxu0 %v5628
        %5820 = vmatpush1.bf16.msra.mxu0 %v5627
        %5821 = vmatprep.subr.bf16.mxu0 %v5630
        %5822 = vmatpush1.bf16.msra.mxu0 %v5629
        %5823 = vmatprep.subr.bf16.mxu0 %v5632
        %5824 = vmatpush1.bf16.msra.mxu0 %v5631
        %5825 = vmatprep.subr.bf16.mxu0 %v5634
        %5826 = vmatpush1.bf16.msra.mxu0 %v5633
        %5827 = vmatprep.subr.bf16.mxu0 %v5636
        %5828 = vmatpush1.bf16.msra.mxu0 %v5635
        %5829 = vmatprep.subr.bf16.mxu0 %v5638
        %5830 = vmatpush1.bf16.msra.mxu0 %v5637
        %5831 = vmatprep.subr.bf16.mxu0 %v5640
        %5832 = vmatpush1.bf16.msra.mxu0 %v5639
        %5833 = vmatprep.mubr.bf16.mxu0 %v3781
        %5834 = vmatmul.mubr.bf16.gmra.mrb[0].mxu0 %v3780
        %v5835 = vpop.f32.mrb[0].mxu0
        %v5836 = vadd.f32 %v5163, %v5835
        %v5837 = vpop.f32.mrb[0].mxu0
        %v5838 = vadd.f32 %v5165, %v5837
        %v5839 = vpop.f32.mrb[0].mxu0
        %v5840 = vadd.f32 %v5167, %v5839
        %v5841 = vpop.f32.mrb[0].mxu0
        %v5842 = vadd.f32 %v5169, %v5841
        %5843 = vmatprep.mubr.bf16.mxu0 %v3787
        %5844 = vmatmul.mubr.bf16.gmra.mrb[0].mxu0 %v3786
        %v5845 = vpop.f32.mrb[0].mxu0
        %v5846 = vadd.f32 %v5173, %v5845
        %v5847 = vpop.f32.mrb[0].mxu0
        %v5848 = vadd.f32 %v5175, %v5847
        %v5849 = vpop.f32.mrb[0].mxu0
        %v5850 = vadd.f32 %v5177, %v5849
        %v5851 = vpop.f32.mrb[0].mxu0
        %v5852 = vadd.f32 %v5179, %v5851
        %5853 = vmatprep.mubr.bf16.mxu0 %v3793
        %5854 = vmatmul.mubr.bf16.gmra.mrb[0].mxu0 %v3792
        %v5855 = vpop.f32.mrb[0].mxu0
        %v5856 = vadd.f32 %v5183, %v5855
        %v5857 = vpop.f32.mrb[0].mxu0
        %v5858 = vadd.f32 %v5185, %v5857
        %v5859 = vpop.f32.mrb[0].mxu0
        %v5860 = vadd.f32 %v5187, %v5859
        %v5861 = vpop.f32.mrb[0].mxu0
        %v5862 = vadd.f32 %v5189, %v5861
        %5863 = vmatprep.mubr.bf16.mxu0 %v3799
        %5864 = vmatmul.mubr.bf16.gmra.mrb[0].mxu0 %v3798
        %v5865 = vpop.f32.mrb[0].mxu0
        %v5866 = vadd.f32 %v5193, %v5865
        %v5867 = vpop.f32.mrb[0].mxu0
        %v5868 = vadd.f32 %v5195, %v5867
        %v5869 = vpop.f32.mrb[0].mxu0
        %v5870 = vadd.f32 %v5197, %v5869
        %v5871 = vpop.f32.mrb[0].mxu0
        %v5872 = vadd.f32 %v5199, %v5871
        %5873 = vmatprep.mubr.bf16.mxu0 %v3805
        %5874 = vmatmul.mubr.bf16.gmra.mrb[0].mxu0 %v3804
        %v5875 = vpop.f32.mrb[0].mxu0
        %v5876 = vadd.f32 %v5203, %v5875
        %v5877 = vpop.f32.mrb[0].mxu0
        %v5878 = vadd.f32 %v5205, %v5877
        %v5879 = vpop.f32.mrb[0].mxu0
        %v5880 = vadd.f32 %v5207, %v5879
        %v5881 = vpop.f32.mrb[0].mxu0
        %v5882 = vadd.f32 %v5209, %v5881
        %5883 = vmatprep.mubr.bf16.mxu0 %v3811
        %5884 = vmatmul.mubr.bf16.gmra.mrb[0].mxu0 %v3810
        %v5885 = vpop.f32.mrb[0].mxu0
        %v5886 = vadd.f32 %v5213, %v5885
        %v5887 = vpop.f32.mrb[0].mxu0
        %v5888 = vadd.f32 %v5215, %v5887
        %v5889 = vpop.f32.mrb[0].mxu0
        %v5890 = vadd.f32 %v5217, %v5889
        %v5891 = vpop.f32.mrb[0].mxu0
        %v5892 = vadd.f32 %v5219, %v5891
        %5893 = vmatprep.mubr.bf16.mxu0 %v3817
        %5894 = vmatmul.mubr.bf16.gmra.mrb[0].mxu0 %v3816
        %v5895 = vpop.f32.mrb[0].mxu0
        %v5896 = vadd.f32 %v5223, %v5895
        %v5897 = vpop.f32.mrb[0].mxu0
        %v5898 = vadd.f32 %v5225, %v5897
        %v5899 = vpop.f32.mrb[0].mxu0
        %v5900 = vadd.f32 %v5227, %v5899
        %v5901 = vpop.f32.mrb[0].mxu0
        %v5902 = vadd.f32 %v5229, %v5901
        %5903 = vmatprep.mubr.bf16.mxu0 %v3823
        %5904 = vmatmul.mubr.bf16.gmra.mrb[0].mxu0 %v3822
        %v5905 = vpop.f32.mrb[0].mxu0
        %v5906 = vadd.f32 %v5233, %v5905
        %v5907 = vpop.f32.mrb[0].mxu0
        %v5908 = vadd.f32 %v5235, %v5907
        %v5909 = vpop.f32.mrb[0].mxu0
        %v5910 = vadd.f32 %v5237, %v5909
        %v5911 = vpop.f32.mrb[0].mxu0
        %v5912 = vadd.f32 %v5239, %v5911
        %5913 = vmatprep.mubr.bf16.mxu0 %v3829
        %5914 = vmatmul.mubr.bf16.gmra.mrb[0].mxu0 %v3828
        %v5915 = vpop.f32.mrb[0].mxu0
        %v5916 = vadd.f32 %v5243, %v5915
        %v5917 = vpop.f32.mrb[0].mxu0
        %v5918 = vadd.f32 %v5245, %v5917
        %v5919 = vpop.f32.mrb[0].mxu0
        %v5920 = vadd.f32 %v5247, %v5919
        %v5921 = vpop.f32.mrb[0].mxu0
        %v5922 = vadd.f32 %v5249, %v5921
        %5923 = vmatprep.mubr.bf16.mxu0 %v3835
        %5924 = vmatmul.mubr.bf16.gmra.mrb[0].mxu0 %v3834
        %v5925 = vpop.f32.mrb[0].mxu0
        %v5926 = vadd.f32 %v5253, %v5925
        %v5927 = vpop.f32.mrb[0].mxu0
        %v5928 = vadd.f32 %v5255, %v5927
        %v5929 = vpop.f32.mrb[0].mxu0
        %v5930 = vadd.f32 %v5257, %v5929
        %v5931 = vpop.f32.mrb[0].mxu0
        %v5932 = vadd.f32 %v5259, %v5931
        %5933 = vmatprep.mubr.bf16.mxu0 %v3841
        %5934 = vmatmul.mubr.bf16.gmra.mrb[0].mxu0 %v3840
        %v5935 = vpop.f32.mrb[0].mxu0
        %v5936 = vadd.f32 %v5263, %v5935
        %v5937 = vpop.f32.mrb[0].mxu0
        %v5938 = vadd.f32 %v5265, %v5937
        %v5939 = vpop.f32.mrb[0].mxu0
        %v5940 = vadd.f32 %v5267, %v5939
        %v5941 = vpop.f32.mrb[0].mxu0
        %v5942 = vadd.f32 %v5269, %v5941
        %5943 = vmatprep.mubr.bf16.mxu0 %v3847
        %5944 = vmatmul.mubr.bf16.gmra.mrb[0].mxu0 %v3846
        %v5945 = vpop.f32.mrb[0].mxu0
        %v5946 = vadd.f32 %v5273, %v5945
        %v5947 = vpop.f32.mrb[0].mxu0
        %v5948 = vadd.f32 %v5275, %v5947
        %v5949 = vpop.f32.mrb[0].mxu0
        %v5950 = vadd.f32 %v5277, %v5949
        %v5951 = vpop.f32.mrb[0].mxu0
        %v5952 = vadd.f32 %v5279, %v5951
        %5953 = vmatprep.mubr.bf16.mxu0 %v3853
        %5954 = vmatmul.mubr.bf16.gmra.mrb[0].mxu0 %v3852
        %v5955 = vpop.f32.mrb[0].mxu0
        %v5956 = vadd.f32 %v5283, %v5955
        %v5957 = vpop.f32.mrb[0].mxu0
        %v5958 = vadd.f32 %v5285, %v5957
        %v5959 = vpop.f32.mrb[0].mxu0
        %v5960 = vadd.f32 %v5287, %v5959
        %v5961 = vpop.f32.mrb[0].mxu0
        %v5962 = vadd.f32 %v5289, %v5961
        %5963 = vmatprep.mubr.bf16.mxu0 %v3859
        %5964 = vmatmul.mubr.bf16.gmra.mrb[0].mxu0 %v3858
        %v5965 = vpop.f32.mrb[0].mxu0
        %v5966 = vadd.f32 %v5293, %v5965
        %v5967 = vpop.f32.mrb[0].mxu0
        %v5968 = vadd.f32 %v5295, %v5967
        %v5969 = vpop.f32.mrb[0].mxu0
        %v5970 = vadd.f32 %v5297, %v5969
        %v5971 = vpop.f32.mrb[0].mxu0
        %v5972 = vadd.f32 %v5299, %v5971
        %5973 = vmatprep.mubr.bf16.mxu0 %v3865
        %5974 = vmatmul.mubr.bf16.gmra.mrb[0].mxu0 %v3864
        %v5975 = vpop.f32.mrb[0].mxu0
        %v5976 = vadd.f32 %v5303, %v5975
        %v5977 = vpop.f32.mrb[0].mxu0
        %v5978 = vadd.f32 %v5305, %v5977
        %v5979 = vpop.f32.mrb[0].mxu0
        %v5980 = vadd.f32 %v5307, %v5979
        %v5981 = vpop.f32.mrb[0].mxu0
        %v5982 = vadd.f32 %v5309, %v5981
        %5983 = vmatprep.mubr.bf16.mxu0 %v3871
        %5984 = vmatmul.mubr.bf16.gmra.mrb[0].mxu0 %v3870
        %v5985 = vpop.f32.mrb[0].mxu0
        %v5986 = vadd.f32 %v5313, %v5985
        %v5987 = vpop.f32.mrb[0].mxu0
        %v5988 = vadd.f32 %v5315, %v5987
        %v5989 = vpop.f32.mrb[0].mxu0
        %v5990 = vadd.f32 %v5317, %v5989
        %v5991 = vpop.f32.mrb[0].mxu0
        %v5992 = vadd.f32 %v5319, %v5991
        %5993 = vdwg.mxu0
        %5994 = vmatprep.subr.bf16.mxu0 %v5642
        %5995 = vmatpush1.bf16.msra.mxu0 %v5641
        %5996 = vmatprep.subr.bf16.mxu0 %v5644
        %5997 = vmatpush1.bf16.msra.mxu0 %v5643
        %5998 = vmatprep.subr.bf16.mxu0 %v5646
        %5999 = vmatpush1.bf16.msra.mxu0 %v5645
        %6000 = vmatprep.subr.bf16.mxu0 %v5648
        %6001 = vmatpush1.bf16.msra.mxu0 %v5647
        %6002 = vmatprep.subr.bf16.mxu0 %v5650
        %6003 = vmatpush1.bf16.msra.mxu0 %v5649
        %6004 = vmatprep.subr.bf16.mxu0 %v5652
        %6005 = vmatpush1.bf16.msra.mxu0 %v5651
        %6006 = vmatprep.subr.bf16.mxu0 %v5654
        %6007 = vmatpush1.bf16.msra.mxu0 %v5653
        %6008 = vmatprep.subr.bf16.mxu0 %v5656
        %6009 = vmatpush1.bf16.msra.mxu0 %v5655
        %6010 = vmatprep.subr.bf16.mxu0 %v5658
        %6011 = vmatpush1.bf16.msra.mxu0 %v5657
        %6012 = vmatprep.subr.bf16.mxu0 %v5660
        %6013 = vmatpush1.bf16.msra.mxu0 %v5659
        %6014 = vmatprep.subr.bf16.mxu0 %v5662
        %6015 = vmatpush1.bf16.msra.mxu0 %v5661
        %6016 = vmatprep.subr.bf16.mxu0 %v5664
        %6017 = vmatpush1.bf16.msra.mxu0 %v5663
        %6018 = vmatprep.subr.bf16.mxu0 %v5666
        %6019 = vmatpush1.bf16.msra.mxu0 %v5665
        %6020 = vmatprep.subr.bf16.mxu0 %v5668
        %6021 = vmatpush1.bf16.msra.mxu0 %v5667
        %6022 = vmatprep.subr.bf16.mxu0 %v5670
        %6023 = vmatpush1.bf16.msra.mxu0 %v5669
        %6024 = vmatprep.subr.bf16.mxu0 %v5672
        %6025 = vmatpush1.bf16.msra.mxu0 %v5671
        %6026 = vmatprep.mubr.bf16.mxu0 %v3783
        %6027 = vmatmul.mubr.bf16.gmra.mrb[0].mxu0 %v3782
        %v6028 = vpop.f32.mrb[0].mxu0
        %v6029 = vadd.f32 %v5836, %v6028
        %v6030 = vpop.f32.mrb[0].mxu0
        %v6031 = vadd.f32 %v5838, %v6030
        %v6032 = vpop.f32.mrb[0].mxu0
        %v6033 = vadd.f32 %v5840, %v6032
        %v6034 = vpop.f32.mrb[0].mxu0
        %v6035 = vadd.f32 %v5842, %v6034
        %6036 = vmatprep.mubr.bf16.mxu0 %v3789
        %6037 = vmatmul.mubr.bf16.gmra.mrb[0].mxu0 %v3788
        %v6038 = vpop.f32.mrb[0].mxu0
        %v6039 = vadd.f32 %v5846, %v6038
        %v6040 = vpop.f32.mrb[0].mxu0
        %v6041 = vadd.f32 %v5848, %v6040
        %v6042 = vpop.f32.mrb[0].mxu0
        %v6043 = vadd.f32 %v5850, %v6042
        %v6044 = vpop.f32.mrb[0].mxu0
        %v6045 = vadd.f32 %v5852, %v6044
        %6046 = vmatprep.mubr.bf16.mxu0 %v3795
        %6047 = vmatmul.mubr.bf16.gmra.mrb[0].mxu0 %v3794
        %v6048 = vpop.f32.mrb[0].mxu0
        %v6049 = vadd.f32 %v5856, %v6048
        %v6050 = vpop.f32.mrb[0].mxu0
        %v6051 = vadd.f32 %v5858, %v6050
        %v6052 = vpop.f32.mrb[0].mxu0
        %v6053 = vadd.f32 %v5860, %v6052
        %v6054 = vpop.f32.mrb[0].mxu0
        %v6055 = vadd.f32 %v5862, %v6054
        %6056 = vmatprep.mubr.bf16.mxu0 %v3801
        %6057 = vmatmul.mubr.bf16.gmra.mrb[0].mxu0 %v3800
        %v6058 = vpop.f32.mrb[0].mxu0
        %v6059 = vadd.f32 %v5866, %v6058
        %v6060 = vpop.f32.mrb[0].mxu0
        %v6061 = vadd.f32 %v5868, %v6060
        %v6062 = vpop.f32.mrb[0].mxu0
        %v6063 = vadd.f32 %v5870, %v6062
        %v6064 = vpop.f32.mrb[0].mxu0
        %v6065 = vadd.f32 %v5872, %v6064
        %6066 = vmatprep.mubr.bf16.mxu0 %v3807
        %6067 = vmatmul.mubr.bf16.gmra.mrb[0].mxu0 %v3806
        %v6068 = vpop.f32.mrb[0].mxu0
        %v6069 = vadd.f32 %v5876, %v6068
        %v6070 = vpop.f32.mrb[0].mxu0
        %v6071 = vadd.f32 %v5878, %v6070
        %v6072 = vpop.f32.mrb[0].mxu0
        %v6073 = vadd.f32 %v5880, %v6072
        %v6074 = vpop.f32.mrb[0].mxu0
        %v6075 = vadd.f32 %v5882, %v6074
        %6076 = vmatprep.mubr.bf16.mxu0 %v3813
        %6077 = vmatmul.mubr.bf16.gmra.mrb[0].mxu0 %v3812
        %v6078 = vpop.f32.mrb[0].mxu0
        %v6079 = vadd.f32 %v5886, %v6078
        %v6080 = vpop.f32.mrb[0].mxu0
        %v6081 = vadd.f32 %v5888, %v6080
        %v6082 = vpop.f32.mrb[0].mxu0
        %v6083 = vadd.f32 %v5890, %v6082
        %v6084 = vpop.f32.mrb[0].mxu0
        %v6085 = vadd.f32 %v5892, %v6084
        %6086 = vmatprep.mubr.bf16.mxu0 %v3819
        %6087 = vmatmul.mubr.bf16.gmra.mrb[0].mxu0 %v3818
        %v6088 = vpop.f32.mrb[0].mxu0
        %v6089 = vadd.f32 %v5896, %v6088
        %v6090 = vpop.f32.mrb[0].mxu0
        %v6091 = vadd.f32 %v5898, %v6090
        %v6092 = vpop.f32.mrb[0].mxu0
        %v6093 = vadd.f32 %v5900, %v6092
        %v6094 = vpop.f32.mrb[0].mxu0
        %v6095 = vadd.f32 %v5902, %v6094
        %6096 = vmatprep.mubr.bf16.mxu0 %v3825
        %6097 = vmatmul.mubr.bf16.gmra.mrb[0].mxu0 %v3824
        %v6098 = vpop.f32.mrb[0].mxu0
        %v6099 = vadd.f32 %v5906, %v6098
        %v6100 = vpop.f32.mrb[0].mxu0
        %v6101 = vadd.f32 %v5908, %v6100
        %v6102 = vpop.f32.mrb[0].mxu0
        %v6103 = vadd.f32 %v5910, %v6102
        %v6104 = vpop.f32.mrb[0].mxu0
        %v6105 = vadd.f32 %v5912, %v6104
        %6106 = vmatprep.mubr.bf16.mxu0 %v3831
        %6107 = vmatmul.mubr.bf16.gmra.mrb[0].mxu0 %v3830
        %v6108 = vpop.f32.mrb[0].mxu0
        %v6109 = vadd.f32 %v5916, %v6108
        %v6110 = vpop.f32.mrb[0].mxu0
        %v6111 = vadd.f32 %v5918, %v6110
        %v6112 = vpop.f32.mrb[0].mxu0
        %v6113 = vadd.f32 %v5920, %v6112
        %v6114 = vpop.f32.mrb[0].mxu0
        %v6115 = vadd.f32 %v5922, %v6114
        %6116 = vmatprep.mubr.bf16.mxu0 %v3837
        %6117 = vmatmul.mubr.bf16.gmra.mrb[0].mxu0 %v3836
        %v6118 = vpop.f32.mrb[0].mxu0
        %v6119 = vadd.f32 %v5926, %v6118
        %v6120 = vpop.f32.mrb[0].mxu0
        %v6121 = vadd.f32 %v5928, %v6120
        %v6122 = vpop.f32.mrb[0].mxu0
        %v6123 = vadd.f32 %v5930, %v6122
        %v6124 = vpop.f32.mrb[0].mxu0
        %v6125 = vadd.f32 %v5932, %v6124
        %6126 = vmatprep.mubr.bf16.mxu0 %v3843
        %6127 = vmatmul.mubr.bf16.gmra.mrb[0].mxu0 %v3842
        %v6128 = vpop.f32.mrb[0].mxu0
        %v6129 = vadd.f32 %v5936, %v6128
        %v6130 = vpop.f32.mrb[0].mxu0
        %v6131 = vadd.f32 %v5938, %v6130
        %v6132 = vpop.f32.mrb[0].mxu0
        %v6133 = vadd.f32 %v5940, %v6132
        %v6134 = vpop.f32.mrb[0].mxu0
        %v6135 = vadd.f32 %v5942, %v6134
        %6136 = vmatprep.mubr.bf16.mxu0 %v3849
        %6137 = vmatmul.mubr.bf16.gmra.mrb[0].mxu0 %v3848
        %v6138 = vpop.f32.mrb[0].mxu0
        %v6139 = vadd.f32 %v5946, %v6138
        %v6140 = vpop.f32.mrb[0].mxu0
        %v6141 = vadd.f32 %v5948, %v6140
        %v6142 = vpop.f32.mrb[0].mxu0
        %v6143 = vadd.f32 %v5950, %v6142
        %v6144 = vpop.f32.mrb[0].mxu0
        %v6145 = vadd.f32 %v5952, %v6144
        %6146 = vmatprep.mubr.bf16.mxu0 %v3855
        %6147 = vmatmul.mubr.bf16.gmra.mrb[0].mxu0 %v3854
        %v6148 = vpop.f32.mrb[0].mxu0
        %v6149 = vadd.f32 %v5956, %v6148
        %v6150 = vpop.f32.mrb[0].mxu0
        %v6151 = vadd.f32 %v5958, %v6150
        %v6152 = vpop.f32.mrb[0].mxu0
        %v6153 = vadd.f32 %v5960, %v6152
        %v6154 = vpop.f32.mrb[0].mxu0
        %v6155 = vadd.f32 %v5962, %v6154
        %6156 = vmatprep.mubr.bf16.mxu0 %v3861
        %6157 = vmatmul.mubr.bf16.gmra.mrb[0].mxu0 %v3860
        %v6158 = vpop.f32.mrb[0].mxu0
        %v6159 = vadd.f32 %v5966, %v6158
        %v6160 = vpop.f32.mrb[0].mxu0
        %v6161 = vadd.f32 %v5968, %v6160
        %v6162 = vpop.f32.mrb[0].mxu0
        %v6163 = vadd.f32 %v5970, %v6162
        %v6164 = vpop.f32.mrb[0].mxu0
        %v6165 = vadd.f32 %v5972, %v6164
        %6166 = vmatprep.mubr.bf16.mxu0 %v3867
        %6167 = vmatmul.mubr.bf16.gmra.mrb[0].mxu0 %v3866
        %v6168 = vpop.f32.mrb[0].mxu0
        %v6169 = vadd.f32 %v5976, %v6168
        %v6170 = vpop.f32.mrb[0].mxu0
        %v6171 = vadd.f32 %v5978, %v6170
        %v6172 = vpop.f32.mrb[0].mxu0
        %v6173 = vadd.f32 %v5980, %v6172
        %v6174 = vpop.f32.mrb[0].mxu0
        %v6175 = vadd.f32 %v5982, %v6174
        %6176 = vmatprep.mubr.bf16.mxu0 %v3873
        %6177 = vmatmul.mubr.bf16.gmra.mrb[0].mxu0 %v3872
        %v6178 = vpop.f32.mrb[0].mxu0
        %v6179 = vadd.f32 %v5986, %v6178
        %v6180 = vpop.f32.mrb[0].mxu0
        %v6181 = vadd.f32 %v5988, %v6180
        %v6182 = vpop.f32.mrb[0].mxu0
        %v6183 = vadd.f32 %v5990, %v6182
        %v6184 = vpop.f32.mrb[0].mxu0
        %v6185 = vadd.f32 %v5992, %v6184
        %6186 = vdwg.mxu0
        %6187 = vmatprep.subr.bf16.mxu0 %v5674
        %6188 = vmatpush1.bf16.msra.mxu0 %v5673
        %6189 = vmatprep.subr.bf16.mxu0 %v5676
        %6190 = vmatpush1.bf16.msra.mxu0 %v5675
        %6191 = vmatprep.subr.bf16.mxu0 %v5678
        %6192 = vmatpush1.bf16.msra.mxu0 %v5677
        %6193 = vmatprep.subr.bf16.mxu0 %v5680
        %6194 = vmatpush1.bf16.msra.mxu0 %v5679
        %6195 = vmatprep.subr.bf16.mxu0 %v5682
        %6196 = vmatpush1.bf16.msra.mxu0 %v5681
        %6197 = vmatprep.subr.bf16.mxu0 %v5684
        %6198 = vmatpush1.bf16.msra.mxu0 %v5683
        %6199 = vmatprep.subr.bf16.mxu0 %v5686
        %6200 = vmatpush1.bf16.msra.mxu0 %v5685
        %6201 = vmatprep.subr.bf16.mxu0 %v5688
        %6202 = vmatpush1.bf16.msra.mxu0 %v5687
        %6203 = vmatprep.subr.bf16.mxu0 %v5690
        %6204 = vmatpush1.bf16.msra.mxu0 %v5689
        %6205 = vmatprep.subr.bf16.mxu0 %v5692
        %6206 = vmatpush1.bf16.msra.mxu0 %v5691
        %6207 = vmatprep.subr.bf16.mxu0 %v5694
        %6208 = vmatpush1.bf16.msra.mxu0 %v5693
        %6209 = vmatprep.subr.bf16.mxu0 %v5696
        %6210 = vmatpush1.bf16.msra.mxu0 %v5695
        %6211 = vmatprep.subr.bf16.mxu0 %v5698
        %6212 = vmatpush1.bf16.msra.mxu0 %v5697
        %6213 = vmatprep.subr.bf16.mxu0 %v5700
        %6214 = vmatpush1.bf16.msra.mxu0 %v5699
        %6215 = vmatprep.subr.bf16.mxu0 %v5702
        %6216 = vmatpush1.bf16.msra.mxu0 %v5701
        %6217 = vmatprep.subr.bf16.mxu0 %v5704
        %6218 = vmatpush1.bf16.msra.mxu0 %v5703
        %6219 = vmatprep.mubr.bf16.mxu0 %v3785
        %6220 = vmatmul.mubr.bf16.gmra.mrb[0].mxu0 %v3784
        %v6221 = vpop.f32.mrb[0].mxu0
        %v6222 = vadd.f32 %v6029, %v6221
        %v6223 = vpop.f32.mrb[0].mxu0
        %v6224 = vadd.f32 %v6031, %v6223
        %v6225 = vpop.f32.mrb[0].mxu0
        %v6226 = vadd.f32 %v6033, %v6225
        %v6227 = vpop.f32.mrb[0].mxu0
        %v6228 = vadd.f32 %v6035, %v6227
        %6229 = vmatprep.mubr.bf16.mxu0 %v3791
        %6230 = vmatmul.mubr.bf16.gmra.mrb[0].mxu0 %v3790
        %v6231 = vpop.f32.mrb[0].mxu0
        %v6232 = vadd.f32 %v6039, %v6231
        %v6233 = vpop.f32.mrb[0].mxu0
        %v6234 = vadd.f32 %v6041, %v6233
        %v6235 = vpop.f32.mrb[0].mxu0
        %v6236 = vadd.f32 %v6043, %v6235
        %v6237 = vpop.f32.mrb[0].mxu0
        %v6238 = vadd.f32 %v6045, %v6237
        %6239 = vmatprep.mubr.bf16.mxu0 %v3797
        %6240 = vmatmul.mubr.bf16.gmra.mrb[0].mxu0 %v3796
        %v6241 = vpop.f32.mrb[0].mxu0
        %v6242 = vadd.f32 %v6049, %v6241
        %v6243 = vpop.f32.mrb[0].mxu0
        %v6244 = vadd.f32 %v6051, %v6243
        %v6245 = vpop.f32.mrb[0].mxu0
        %v6246 = vadd.f32 %v6053, %v6245
        %v6247 = vpop.f32.mrb[0].mxu0
        %v6248 = vadd.f32 %v6055, %v6247
        %6249 = vmatprep.mubr.bf16.mxu0 %v3803
        %6250 = vmatmul.mubr.bf16.gmra.mrb[0].mxu0 %v3802
        %v6251 = vpop.f32.mrb[0].mxu0
        %v6252 = vadd.f32 %v6059, %v6251
        %v6253 = vpop.f32.mrb[0].mxu0
        %v6254 = vadd.f32 %v6061, %v6253
        %v6255 = vpop.f32.mrb[0].mxu0
        %v6256 = vadd.f32 %v6063, %v6255
        %v6257 = vpop.f32.mrb[0].mxu0
        %v6258 = vadd.f32 %v6065, %v6257
        %6259 = vmatprep.mubr.bf16.mxu0 %v3809
        %6260 = vmatmul.mubr.bf16.gmra.mrb[0].mxu0 %v3808
        %v6261 = vpop.f32.mrb[0].mxu0
        %v6262 = vadd.f32 %v6069, %v6261
        %v6263 = vpop.f32.mrb[0].mxu0
        %v6264 = vadd.f32 %v6071, %v6263
        %v6265 = vpop.f32.mrb[0].mxu0
        %v6266 = vadd.f32 %v6073, %v6265
        %v6267 = vpop.f32.mrb[0].mxu0
        %v6268 = vadd.f32 %v6075, %v6267
        %6269 = vmatprep.mubr.bf16.mxu0 %v3815
        %6270 = vmatmul.mubr.bf16.gmra.mrb[0].mxu0 %v3814
        %v6271 = vpop.f32.mrb[0].mxu0
        %v6272 = vadd.f32 %v6079, %v6271
        %v6273 = vpop.f32.mrb[0].mxu0
        %v6274 = vadd.f32 %v6081, %v6273
        %v6275 = vpop.f32.mrb[0].mxu0
        %v6276 = vadd.f32 %v6083, %v6275
        %v6277 = vpop.f32.mrb[0].mxu0
        %v6278 = vadd.f32 %v6085, %v6277
        %6279 = vmatprep.mubr.bf16.mxu0 %v3821
        %6280 = vmatmul.mubr.bf16.gmra.mrb[0].mxu0 %v3820
        %v6281 = vpop.f32.mrb[0].mxu0
        %v6282 = vadd.f32 %v6089, %v6281
        %v6283 = vpop.f32.mrb[0].mxu0
        %v6284 = vadd.f32 %v6091, %v6283
        %v6285 = vpop.f32.mrb[0].mxu0
        %v6286 = vadd.f32 %v6093, %v6285
        %v6287 = vpop.f32.mrb[0].mxu0
        %v6288 = vadd.f32 %v6095, %v6287
        %6289 = vmatprep.mubr.bf16.mxu0 %v3827
        %6290 = vmatmul.mubr.bf16.gmra.mrb[0].mxu0 %v3826
        %v6291 = vpop.f32.mrb[0].mxu0
        %v6292 = vadd.f32 %v6099, %v6291
        %v6293 = vpop.f32.mrb[0].mxu0
        %v6294 = vadd.f32 %v6101, %v6293
        %v6295 = vpop.f32.mrb[0].mxu0
        %v6296 = vadd.f32 %v6103, %v6295
        %v6297 = vpop.f32.mrb[0].mxu0
        %v6298 = vadd.f32 %v6105, %v6297
        %6299 = vmatprep.mubr.bf16.mxu0 %v3833
        %6300 = vmatmul.mubr.bf16.gmra.mrb[0].mxu0 %v3832
        %v6301 = vpop.f32.mrb[0].mxu0
        %v6302 = vadd.f32 %v6109, %v6301
        %v6303 = vpop.f32.mrb[0].mxu0
        %v6304 = vadd.f32 %v6111, %v6303
        %v6305 = vpop.f32.mrb[0].mxu0
        %v6306 = vadd.f32 %v6113, %v6305
        %v6307 = vpop.f32.mrb[0].mxu0
        %v6308 = vadd.f32 %v6115, %v6307
        %6309 = vmatprep.mubr.bf16.mxu0 %v3839
        %6310 = vmatmul.mubr.bf16.gmra.mrb[0].mxu0 %v3838
        %v6311 = vpop.f32.mrb[0].mxu0
        %v6312 = vadd.f32 %v6119, %v6311
        %v6313 = vpop.f32.mrb[0].mxu0
        %v6314 = vadd.f32 %v6121, %v6313
        %v6315 = vpop.f32.mrb[0].mxu0
        %v6316 = vadd.f32 %v6123, %v6315
        %v6317 = vpop.f32.mrb[0].mxu0
        %v6318 = vadd.f32 %v6125, %v6317
        %6319 = vmatprep.mubr.bf16.mxu0 %v3845
        %6320 = vmatmul.mubr.bf16.gmra.mrb[0].mxu0 %v3844
        %v6321 = vpop.f32.mrb[0].mxu0
        %v6322 = vadd.f32 %v6129, %v6321
        %v6323 = vpop.f32.mrb[0].mxu0
        %v6324 = vadd.f32 %v6131, %v6323
        %v6325 = vpop.f32.mrb[0].mxu0
        %v6326 = vadd.f32 %v6133, %v6325
        %v6327 = vpop.f32.mrb[0].mxu0
        %v6328 = vadd.f32 %v6135, %v6327
        %6329 = vmatprep.mubr.bf16.mxu0 %v3851
        %6330 = vmatmul.mubr.bf16.gmra.mrb[0].mxu0 %v3850
        %v6331 = vpop.f32.mrb[0].mxu0
        %v6332 = vadd.f32 %v6139, %v6331
        %v6333 = vpop.f32.mrb[0].mxu0
        %v6334 = vadd.f32 %v6141, %v6333
        %v6335 = vpop.f32.mrb[0].mxu0
        %v6336 = vadd.f32 %v6143, %v6335
        %v6337 = vpop.f32.mrb[0].mxu0
        %v6338 = vadd.f32 %v6145, %v6337
        %6339 = vmatprep.mubr.bf16.mxu0 %v3857
        %6340 = vmatmul.mubr.bf16.gmra.mrb[0].mxu0 %v3856
        %v6341 = vpop.f32.mrb[0].mxu0
        %v6342 = vadd.f32 %v6149, %v6341
        %v6343 = vpop.f32.mrb[0].mxu0
        %v6344 = vadd.f32 %v6151, %v6343
        %v6345 = vpop.f32.mrb[0].mxu0
        %v6346 = vadd.f32 %v6153, %v6345
        %v6347 = vpop.f32.mrb[0].mxu0
        %v6348 = vadd.f32 %v6155, %v6347
        %6349 = vmatprep.mubr.bf16.mxu0 %v3863
        %6350 = vmatmul.mubr.bf16.gmra.mrb[0].mxu0 %v3862
        %v6351 = vpop.f32.mrb[0].mxu0
        %v6352 = vadd.f32 %v6159, %v6351
        %v6353 = vpop.f32.mrb[0].mxu0
        %v6354 = vadd.f32 %v6161, %v6353
        %v6355 = vpop.f32.mrb[0].mxu0
        %v6356 = vadd.f32 %v6163, %v6355
        %v6357 = vpop.f32.mrb[0].mxu0
        %v6358 = vadd.f32 %v6165, %v6357
        %6359 = vmatprep.mubr.bf16.mxu0 %v3869
        %6360 = vmatmul.mubr.bf16.gmra.mrb[0].mxu0 %v3868
        %v6361 = vpop.f32.mrb[0].mxu0
        %v6362 = vadd.f32 %v6169, %v6361
        %v6363 = vpop.f32.mrb[0].mxu0
        %v6364 = vadd.f32 %v6171, %v6363
        %v6365 = vpop.f32.mrb[0].mxu0
        %v6366 = vadd.f32 %v6173, %v6365
        %v6367 = vpop.f32.mrb[0].mxu0
        %v6368 = vadd.f32 %v6175, %v6367
        %6369 = vmatprep.mubr.bf16.mxu0 %v3875
        %6370 = vmatmul.mubr.bf16.gmra.mrb[0].mxu0 %v3874
        %v6371 = vpop.f32.mrb[0].mxu0
        %v6372 = vadd.f32 %v6179, %v6371
        %v6373 = vpop.f32.mrb[0].mxu0
        %v6374 = vadd.f32 %v6181, %v6373
        %v6375 = vpop.f32.mrb[0].mxu0
        %v6376 = vadd.f32 %v6183, %v6375
        %v6377 = vpop.f32.mrb[0].mxu0
        %v6378 = vadd.f32 %v6185, %v6377
        %6379 = vdwg.mxu0
        %s6380 = scalar_lea.vmem %s2, 1536
        %v6381 = vld [vmem:[%s6380] sm:$0xff]
        %v6382 = vld [vmem:[%s6380 + $0x8] sm:$0xff]
        %v6383 = vld [vmem:[%s6380 + $0x10] sm:$0xff]
        %v6384 = vld [vmem:[%s6380 + $0x18] sm:$0xff]
        %v6385 = vld [vmem:[%s6380 + $0x20] sm:$0xff]
        %v6386 = vld [vmem:[%s6380 + $0x28] sm:$0xff]
        %v6387 = vld [vmem:[%s6380 + $0x30] sm:$0xff]
        %v6388 = vld [vmem:[%s6380 + $0x38] sm:$0xff]
        %v6389 = vld [vmem:[%s6380 + $0x40] sm:$0xff]
        %v6390 = vld [vmem:[%s6380 + $0x48] sm:$0xff]
        %v6391 = vld [vmem:[%s6380 + $0x50] sm:$0xff]
        %v6392 = vld [vmem:[%s6380 + $0x58] sm:$0xff]
        %v6393 = vld [vmem:[%s6380 + $0x60] sm:$0xff]
        %v6394 = vld [vmem:[%s6380 + $0x68] sm:$0xff]
        %v6395 = vld [vmem:[%s6380 + $0x70] sm:$0xff]
        %v6396 = vld [vmem:[%s6380 + $0x78] sm:$0xff]
        %v6397 = vld [vmem:[%s6380 + $0x80] sm:$0xff]
        %v6398 = vld [vmem:[%s6380 + $0x88] sm:$0xff]
        %v6399 = vld [vmem:[%s6380 + $0x90] sm:$0xff]
        %v6400 = vld [vmem:[%s6380 + $0x98] sm:$0xff]
        %v6401 = vld [vmem:[%s6380 + $0xa0] sm:$0xff]
        %v6402 = vld [vmem:[%s6380 + $0xa8] sm:$0xff]
        %v6403 = vld [vmem:[%s6380 + $0xb0] sm:$0xff]
        %v6404 = vld [vmem:[%s6380 + $0xb8] sm:$0xff]
        %v6405 = vld [vmem:[%s6380 + $0xc0] sm:$0xff]
        %v6406 = vld [vmem:[%s6380 + $0xc8] sm:$0xff]
        %v6407 = vld [vmem:[%s6380 + $0xd0] sm:$0xff]
        %v6408 = vld [vmem:[%s6380 + $0xd8] sm:$0xff]
        %v6409 = vld [vmem:[%s6380 + $0xe0] sm:$0xff]
        %v6410 = vld [vmem:[%s6380 + $0xe8] sm:$0xff]
        %v6411 = vld [vmem:[%s6380 + $0xf0] sm:$0xff]
        %v6412 = vld [vmem:[%s6380 + $0xf8] sm:$0xff]
        %v6413 = vld [vmem:[%s6380 + $0x100] sm:$0xff]
        %v6414 = vld [vmem:[%s6380 + $0x108] sm:$0xff]
        %v6415 = vld [vmem:[%s6380 + $0x110] sm:$0xff]
        %v6416 = vld [vmem:[%s6380 + $0x118] sm:$0xff]
        %v6417 = vld [vmem:[%s6380 + $0x120] sm:$0xff]
        %v6418 = vld [vmem:[%s6380 + $0x128] sm:$0xff]
        %v6419 = vld [vmem:[%s6380 + $0x130] sm:$0xff]
        %v6420 = vld [vmem:[%s6380 + $0x138] sm:$0xff]
        %v6421 = vld [vmem:[%s6380 + $0x140] sm:$0xff]
        %v6422 = vld [vmem:[%s6380 + $0x148] sm:$0xff]
        %v6423 = vld [vmem:[%s6380 + $0x150] sm:$0xff]
        %v6424 = vld [vmem:[%s6380 + $0x158] sm:$0xff]
        %v6425 = vld [vmem:[%s6380 + $0x160] sm:$0xff]
        %v6426 = vld [vmem:[%s6380 + $0x168] sm:$0xff]
        %v6427 = vld [vmem:[%s6380 + $0x170] sm:$0xff]
        %v6428 = vld [vmem:[%s6380 + $0x178] sm:$0xff]
        %v6429 = vld [vmem:[%s6380 + $0x180] sm:$0xff]
        %v6430 = vld [vmem:[%s6380 + $0x188] sm:$0xff]
        %v6431 = vld [vmem:[%s6380 + $0x190] sm:$0xff]
        %v6432 = vld [vmem:[%s6380 + $0x198] sm:$0xff]
        %v6433 = vld [vmem:[%s6380 + $0x1a0] sm:$0xff]
        %v6434 = vld [vmem:[%s6380 + $0x1a8] sm:$0xff]
        %v6435 = vld [vmem:[%s6380 + $0x1b0] sm:$0xff]
        %v6436 = vld [vmem:[%s6380 + $0x1b8] sm:$0xff]
        %v6437 = vld [vmem:[%s6380 + $0x1c0] sm:$0xff]
        %v6438 = vld [vmem:[%s6380 + $0x1c8] sm:$0xff]
        %v6439 = vld [vmem:[%s6380 + $0x1d0] sm:$0xff]
        %v6440 = vld [vmem:[%s6380 + $0x1d8] sm:$0xff]
        %v6441 = vld [vmem:[%s6380 + $0x1e0] sm:$0xff]
        %v6442 = vld [vmem:[%s6380 + $0x1e8] sm:$0xff]
        %v6443 = vld [vmem:[%s6380 + $0x1f0] sm:$0xff]
        %v6444 = vld [vmem:[%s6380 + $0x1f8] sm:$0xff]
        %v6445 = vld [vmem:[%s6380 + $0x200] sm:$0xff]
        %v6446 = vld [vmem:[%s6380 + $0x208] sm:$0xff]
        %v6447 = vld [vmem:[%s6380 + $0x210] sm:$0xff]
        %v6448 = vld [vmem:[%s6380 + $0x218] sm:$0xff]
        %v6449 = vld [vmem:[%s6380 + $0x220] sm:$0xff]
        %v6450 = vld [vmem:[%s6380 + $0x228] sm:$0xff]
        %v6451 = vld [vmem:[%s6380 + $0x230] sm:$0xff]
        %v6452 = vld [vmem:[%s6380 + $0x238] sm:$0xff]
        %v6453 = vld [vmem:[%s6380 + $0x240] sm:$0xff]
        %v6454 = vld [vmem:[%s6380 + $0x248] sm:$0xff]
        %v6455 = vld [vmem:[%s6380 + $0x250] sm:$0xff]
        %v6456 = vld [vmem:[%s6380 + $0x258] sm:$0xff]
        %v6457 = vld [vmem:[%s6380 + $0x260] sm:$0xff]
        %v6458 = vld [vmem:[%s6380 + $0x268] sm:$0xff]
        %v6459 = vld [vmem:[%s6380 + $0x270] sm:$0xff]
        %v6460 = vld [vmem:[%s6380 + $0x278] sm:$0xff]
        %v6461 = vld [vmem:[%s6380 + $0x280] sm:$0xff]
        %v6462 = vld [vmem:[%s6380 + $0x288] sm:$0xff]
        %v6463 = vld [vmem:[%s6380 + $0x290] sm:$0xff]
        %v6464 = vld [vmem:[%s6380 + $0x298] sm:$0xff]
        %v6465 = vld [vmem:[%s6380 + $0x2a0] sm:$0xff]
        %v6466 = vld [vmem:[%s6380 + $0x2a8] sm:$0xff]
        %v6467 = vld [vmem:[%s6380 + $0x2b0] sm:$0xff]
        %v6468 = vld [vmem:[%s6380 + $0x2b8] sm:$0xff]
        %v6469 = vld [vmem:[%s6380 + $0x2c0] sm:$0xff]
        %v6470 = vld [vmem:[%s6380 + $0x2c8] sm:$0xff]
        %v6471 = vld [vmem:[%s6380 + $0x2d0] sm:$0xff]
        %v6472 = vld [vmem:[%s6380 + $0x2d8] sm:$0xff]
        %v6473 = vld [vmem:[%s6380 + $0x2e0] sm:$0xff]
        %v6474 = vld [vmem:[%s6380 + $0x2e8] sm:$0xff]
        %v6475 = vld [vmem:[%s6380 + $0x2f0] sm:$0xff]
        %v6476 = vld [vmem:[%s6380 + $0x2f8] sm:$0xff]
        %v6573 = vunpack.c.l.b16 %v6381
        %v6574 = vunpack.c.h.b16 %v6381
        %v6575 = vunpack.c.l.b16 %v6382
        %v6576 = vunpack.c.h.b16 %v6382
        %v6577 = vunpack.c.l.b16 %v6383
        %v6578 = vunpack.c.h.b16 %v6383
        %v6579 = vunpack.c.l.b16 %v6384
        %v6580 = vunpack.c.h.b16 %v6384
        %v6581 = vunpack.c.l.b16 %v6385
        %v6582 = vunpack.c.h.b16 %v6385
        %v6583 = vunpack.c.l.b16 %v6386
        %v6584 = vunpack.c.h.b16 %v6386
        %v6585 = vunpack.c.l.b16 %v6387
        %v6586 = vunpack.c.h.b16 %v6387
        %v6587 = vunpack.c.l.b16 %v6388
        %v6588 = vunpack.c.h.b16 %v6388
        %v6589 = vunpack.c.l.b16 %v6389
        %v6590 = vunpack.c.h.b16 %v6389
        %v6591 = vunpack.c.l.b16 %v6390
        %v6592 = vunpack.c.h.b16 %v6390
        %v6593 = vunpack.c.l.b16 %v6391
        %v6594 = vunpack.c.h.b16 %v6391
        %v6595 = vunpack.c.l.b16 %v6392
        %v6596 = vunpack.c.h.b16 %v6392
        %v6597 = vunpack.c.l.b16 %v6393
        %v6598 = vunpack.c.h.b16 %v6393
        %v6599 = vunpack.c.l.b16 %v6394
        %v6600 = vunpack.c.h.b16 %v6394
        %v6601 = vunpack.c.l.b16 %v6395
        %v6602 = vunpack.c.h.b16 %v6395
        %v6603 = vunpack.c.l.b16 %v6396
        %v6604 = vunpack.c.h.b16 %v6396
        %v6605 = vunpack.c.l.b16 %v6397
        %v6606 = vunpack.c.h.b16 %v6397
        %v6607 = vunpack.c.l.b16 %v6398
        %v6608 = vunpack.c.h.b16 %v6398
        %v6609 = vunpack.c.l.b16 %v6399
        %v6610 = vunpack.c.h.b16 %v6399
        %v6611 = vunpack.c.l.b16 %v6400
        %v6612 = vunpack.c.h.b16 %v6400
        %v6613 = vunpack.c.l.b16 %v6401
        %v6614 = vunpack.c.h.b16 %v6401
        %v6615 = vunpack.c.l.b16 %v6402
        %v6616 = vunpack.c.h.b16 %v6402
        %v6617 = vunpack.c.l.b16 %v6403
        %v6618 = vunpack.c.h.b16 %v6403
        %v6619 = vunpack.c.l.b16 %v6404
        %v6620 = vunpack.c.h.b16 %v6404
        %v6621 = vunpack.c.l.b16 %v6405
        %v6622 = vunpack.c.h.b16 %v6405
        %v6623 = vunpack.c.l.b16 %v6406
        %v6624 = vunpack.c.h.b16 %v6406
        %v6625 = vunpack.c.l.b16 %v6407
        %v6626 = vunpack.c.h.b16 %v6407
        %v6627 = vunpack.c.l.b16 %v6408
        %v6628 = vunpack.c.h.b16 %v6408
        %v6629 = vunpack.c.l.b16 %v6409
        %v6630 = vunpack.c.h.b16 %v6409
        %v6631 = vunpack.c.l.b16 %v6410
        %v6632 = vunpack.c.h.b16 %v6410
        %v6633 = vunpack.c.l.b16 %v6411
        %v6634 = vunpack.c.h.b16 %v6411
        %v6635 = vunpack.c.l.b16 %v6412
        %v6636 = vunpack.c.h.b16 %v6412
        %v6637 = vunpack.c.l.b16 %v6413
        %v6638 = vunpack.c.h.b16 %v6413
        %v6639 = vunpack.c.l.b16 %v6414
        %v6640 = vunpack.c.h.b16 %v6414
        %v6641 = vunpack.c.l.b16 %v6415
        %v6642 = vunpack.c.h.b16 %v6415
        %v6643 = vunpack.c.l.b16 %v6416
        %v6644 = vunpack.c.h.b16 %v6416
        %v6645 = vunpack.c.l.b16 %v6417
        %v6646 = vunpack.c.h.b16 %v6417
        %v6647 = vunpack.c.l.b16 %v6418
        %v6648 = vunpack.c.h.b16 %v6418
        %v6649 = vunpack.c.l.b16 %v6419
        %v6650 = vunpack.c.h.b16 %v6419
        %v6651 = vunpack.c.l.b16 %v6420
        %v6652 = vunpack.c.h.b16 %v6420
        %v6653 = vunpack.c.l.b16 %v6421
        %v6654 = vunpack.c.h.b16 %v6421
        %v6655 = vunpack.c.l.b16 %v6422
        %v6656 = vunpack.c.h.b16 %v6422
        %v6657 = vunpack.c.l.b16 %v6423
        %v6658 = vunpack.c.h.b16 %v6423
        %v6659 = vunpack.c.l.b16 %v6424
        %v6660 = vunpack.c.h.b16 %v6424
        %v6661 = vunpack.c.l.b16 %v6425
        %v6662 = vunpack.c.h.b16 %v6425
        %v6663 = vunpack.c.l.b16 %v6426
        %v6664 = vunpack.c.h.b16 %v6426
        %v6665 = vunpack.c.l.b16 %v6427
        %v6666 = vunpack.c.h.b16 %v6427
        %v6667 = vunpack.c.l.b16 %v6428
        %v6668 = vunpack.c.h.b16 %v6428
        %v6669 = vunpack.c.l.b16 %v6429
        %v6670 = vunpack.c.h.b16 %v6429
        %v6671 = vunpack.c.l.b16 %v6430
        %v6672 = vunpack.c.h.b16 %v6430
        %v6673 = vunpack.c.l.b16 %v6431
        %v6674 = vunpack.c.h.b16 %v6431
        %v6675 = vunpack.c.l.b16 %v6432
        %v6676 = vunpack.c.h.b16 %v6432
        %v6677 = vunpack.c.l.b16 %v6433
        %v6678 = vunpack.c.h.b16 %v6433
        %v6679 = vunpack.c.l.b16 %v6434
        %v6680 = vunpack.c.h.b16 %v6434
        %v6681 = vunpack.c.l.b16 %v6435
        %v6682 = vunpack.c.h.b16 %v6435
        %v6683 = vunpack.c.l.b16 %v6436
        %v6684 = vunpack.c.h.b16 %v6436
        %v6685 = vunpack.c.l.b16 %v6437
        %v6686 = vunpack.c.h.b16 %v6437
        %v6687 = vunpack.c.l.b16 %v6438
        %v6688 = vunpack.c.h.b16 %v6438
        %v6689 = vunpack.c.l.b16 %v6439
        %v6690 = vunpack.c.h.b16 %v6439
        %v6691 = vunpack.c.l.b16 %v6440
        %v6692 = vunpack.c.h.b16 %v6440
        %v6693 = vunpack.c.l.b16 %v6441
        %v6694 = vunpack.c.h.b16 %v6441
        %v6695 = vunpack.c.l.b16 %v6442
        %v6696 = vunpack.c.h.b16 %v6442
        %v6697 = vunpack.c.l.b16 %v6443
        %v6698 = vunpack.c.h.b16 %v6443
        %v6699 = vunpack.c.l.b16 %v6444
        %v6700 = vunpack.c.h.b16 %v6444
        %v6701 = vunpack.c.l.b16 %v6445
        %v6702 = vunpack.c.h.b16 %v6445
        %v6703 = vunpack.c.l.b16 %v6446
        %v6704 = vunpack.c.h.b16 %v6446
        %v6705 = vunpack.c.l.b16 %v6447
        %v6706 = vunpack.c.h.b16 %v6447
        %v6707 = vunpack.c.l.b16 %v6448
        %v6708 = vunpack.c.h.b16 %v6448
        %v6709 = vunpack.c.l.b16 %v6449
        %v6710 = vunpack.c.h.b16 %v6449
        %v6711 = vunpack.c.l.b16 %v6450
        %v6712 = vunpack.c.h.b16 %v6450
        %v6713 = vunpack.c.l.b16 %v6451
        %v6714 = vunpack.c.h.b16 %v6451
        %v6715 = vunpack.c.l.b16 %v6452
        %v6716 = vunpack.c.h.b16 %v6452
        %v6717 = vunpack.c.l.b16 %v6453
        %v6718 = vunpack.c.h.b16 %v6453
        %v6719 = vunpack.c.l.b16 %v6454
        %v6720 = vunpack.c.h.b16 %v6454
        %v6721 = vunpack.c.l.b16 %v6455
        %v6722 = vunpack.c.h.b16 %v6455
        %v6723 = vunpack.c.l.b16 %v6456
        %v6724 = vunpack.c.h.b16 %v6456
        %v6725 = vunpack.c.l.b16 %v6457
        %v6726 = vunpack.c.h.b16 %v6457
        %v6727 = vunpack.c.l.b16 %v6458
        %v6728 = vunpack.c.h.b16 %v6458
        %v6729 = vunpack.c.l.b16 %v6459
        %v6730 = vunpack.c.h.b16 %v6459
        %v6731 = vunpack.c.l.b16 %v6460
        %v6732 = vunpack.c.h.b16 %v6460
        %v6733 = vunpack.c.l.b16 %v6461
        %v6734 = vunpack.c.h.b16 %v6461
        %v6735 = vunpack.c.l.b16 %v6462
        %v6736 = vunpack.c.h.b16 %v6462
        %v6737 = vunpack.c.l.b16 %v6463
        %v6738 = vunpack.c.h.b16 %v6463
        %v6739 = vunpack.c.l.b16 %v6464
        %v6740 = vunpack.c.h.b16 %v6464
        %v6741 = vunpack.c.l.b16 %v6465
        %v6742 = vunpack.c.h.b16 %v6465
        %v6743 = vunpack.c.l.b16 %v6466
        %v6744 = vunpack.c.h.b16 %v6466
        %v6745 = vunpack.c.l.b16 %v6467
        %v6746 = vunpack.c.h.b16 %v6467
        %v6747 = vunpack.c.l.b16 %v6468
        %v6748 = vunpack.c.h.b16 %v6468
        %v6749 = vunpack.c.l.b16 %v6469
        %v6750 = vunpack.c.h.b16 %v6469
        %v6751 = vunpack.c.l.b16 %v6470
        %v6752 = vunpack.c.h.b16 %v6470
        %v6753 = vunpack.c.l.b16 %v6471
        %v6754 = vunpack.c.h.b16 %v6471
        %v6755 = vunpack.c.l.b16 %v6472
        %v6756 = vunpack.c.h.b16 %v6472
        %v6757 = vunpack.c.l.b16 %v6473
        %v6758 = vunpack.c.h.b16 %v6473
        %v6759 = vunpack.c.l.b16 %v6474
        %v6760 = vunpack.c.h.b16 %v6474
        %v6761 = vunpack.c.l.b16 %v6475
        %v6762 = vunpack.c.h.b16 %v6475
        %v6763 = vunpack.c.l.b16 %v6476
        %v6764 = vunpack.c.h.b16 %v6476
        %v6765 = vpack.c.b16 %v6575, %v6573
        %v6766 = vpack.c.b16 %v6576, %v6574
        %v6767 = vpack.c.b16 %v6579, %v6577
        %v6768 = vpack.c.b16 %v6580, %v6578
        %v6769 = vpack.c.b16 %v6583, %v6581
        %v6770 = vpack.c.b16 %v6584, %v6582
        %v6771 = vpack.c.b16 %v6587, %v6585
        %v6772 = vpack.c.b16 %v6588, %v6586
        %v6773 = vpack.c.b16 %v6591, %v6589
        %v6774 = vpack.c.b16 %v6592, %v6590
        %v6775 = vpack.c.b16 %v6595, %v6593
        %v6776 = vpack.c.b16 %v6596, %v6594
        %v6777 = vpack.c.b16 %v6599, %v6597
        %v6778 = vpack.c.b16 %v6600, %v6598
        %v6779 = vpack.c.b16 %v6603, %v6601
        %v6780 = vpack.c.b16 %v6604, %v6602
        %v6781 = vpack.c.b16 %v6607, %v6605
        %v6782 = vpack.c.b16 %v6608, %v6606
        %v6783 = vpack.c.b16 %v6611, %v6609
        %v6784 = vpack.c.b16 %v6612, %v6610
        %v6785 = vpack.c.b16 %v6615, %v6613
        %v6786 = vpack.c.b16 %v6616, %v6614
        %v6787 = vpack.c.b16 %v6619, %v6617
        %v6788 = vpack.c.b16 %v6620, %v6618
        %v6789 = vpack.c.b16 %v6623, %v6621
        %v6790 = vpack.c.b16 %v6624, %v6622
        %v6791 = vpack.c.b16 %v6627, %v6625
        %v6792 = vpack.c.b16 %v6628, %v6626
        %v6793 = vpack.c.b16 %v6631, %v6629
        %v6794 = vpack.c.b16 %v6632, %v6630
        %v6795 = vpack.c.b16 %v6635, %v6633
        %v6796 = vpack.c.b16 %v6636, %v6634
        %v6797 = vpack.c.b16 %v6639, %v6637
        %v6798 = vpack.c.b16 %v6640, %v6638
        %v6799 = vpack.c.b16 %v6643, %v6641
        %v6800 = vpack.c.b16 %v6644, %v6642
        %v6801 = vpack.c.b16 %v6647, %v6645
        %v6802 = vpack.c.b16 %v6648, %v6646
        %v6803 = vpack.c.b16 %v6651, %v6649
        %v6804 = vpack.c.b16 %v6652, %v6650
        %v6805 = vpack.c.b16 %v6655, %v6653
        %v6806 = vpack.c.b16 %v6656, %v6654
        %v6807 = vpack.c.b16 %v6659, %v6657
        %v6808 = vpack.c.b16 %v6660, %v6658
        %v6809 = vpack.c.b16 %v6663, %v6661
        %v6810 = vpack.c.b16 %v6664, %v6662
        %v6811 = vpack.c.b16 %v6667, %v6665
        %v6812 = vpack.c.b16 %v6668, %v6666
        %v6813 = vpack.c.b16 %v6671, %v6669
        %v6814 = vpack.c.b16 %v6672, %v6670
        %v6815 = vpack.c.b16 %v6675, %v6673
        %v6816 = vpack.c.b16 %v6676, %v6674
        %v6817 = vpack.c.b16 %v6679, %v6677
        %v6818 = vpack.c.b16 %v6680, %v6678
        %v6819 = vpack.c.b16 %v6683, %v6681
        %v6820 = vpack.c.b16 %v6684, %v6682
        %v6821 = vpack.c.b16 %v6687, %v6685
        %v6822 = vpack.c.b16 %v6688, %v6686
        %v6823 = vpack.c.b16 %v6691, %v6689
        %v6824 = vpack.c.b16 %v6692, %v6690
        %v6825 = vpack.c.b16 %v6695, %v6693
        %v6826 = vpack.c.b16 %v6696, %v6694
        %v6827 = vpack.c.b16 %v6699, %v6697
        %v6828 = vpack.c.b16 %v6700, %v6698
        %v6829 = vpack.c.b16 %v6703, %v6701
        %v6830 = vpack.c.b16 %v6704, %v6702
        %v6831 = vpack.c.b16 %v6707, %v6705
        %v6832 = vpack.c.b16 %v6708, %v6706
        %v6833 = vpack.c.b16 %v6711, %v6709
        %v6834 = vpack.c.b16 %v6712, %v6710
        %v6835 = vpack.c.b16 %v6715, %v6713
        %v6836 = vpack.c.b16 %v6716, %v6714
        %v6837 = vpack.c.b16 %v6719, %v6717
        %v6838 = vpack.c.b16 %v6720, %v6718
        %v6839 = vpack.c.b16 %v6723, %v6721
        %v6840 = vpack.c.b16 %v6724, %v6722
        %v6841 = vpack.c.b16 %v6727, %v6725
        %v6842 = vpack.c.b16 %v6728, %v6726
        %v6843 = vpack.c.b16 %v6731, %v6729
        %v6844 = vpack.c.b16 %v6732, %v6730
        %v6845 = vpack.c.b16 %v6735, %v6733
        %v6846 = vpack.c.b16 %v6736, %v6734
        %v6847 = vpack.c.b16 %v6739, %v6737
        %v6848 = vpack.c.b16 %v6740, %v6738
        %v6849 = vpack.c.b16 %v6743, %v6741
        %v6850 = vpack.c.b16 %v6744, %v6742
        %v6851 = vpack.c.b16 %v6747, %v6745
        %v6852 = vpack.c.b16 %v6748, %v6746
        %v6853 = vpack.c.b16 %v6751, %v6749
        %v6854 = vpack.c.b16 %v6752, %v6750
        %v6855 = vpack.c.b16 %v6755, %v6753
        %v6856 = vpack.c.b16 %v6756, %v6754
        %v6857 = vpack.c.b16 %v6759, %v6757
        %v6858 = vpack.c.b16 %v6760, %v6758
        %v6859 = vpack.c.b16 %v6763, %v6761
        %v6860 = vpack.c.b16 %v6764, %v6762
        %6957 = vmatprep.subr.bf16.mxu0 %v6766
        %6958 = vmatpush1.bf16.msra.mxu0 %v6765
        %6959 = vmatprep.subr.bf16.mxu0 %v6768
        %6960 = vmatpush1.bf16.msra.mxu0 %v6767
        %6961 = vmatprep.subr.bf16.mxu0 %v6770
        %6962 = vmatpush1.bf16.msra.mxu0 %v6769
        %6963 = vmatprep.subr.bf16.mxu0 %v6772
        %6964 = vmatpush1.bf16.msra.mxu0 %v6771
        %6965 = vmatprep.subr.bf16.mxu0 %v6774
        %6966 = vmatpush1.bf16.msra.mxu0 %v6773
        %6967 = vmatprep.subr.bf16.mxu0 %v6776
        %6968 = vmatpush1.bf16.msra.mxu0 %v6775
        %6969 = vmatprep.subr.bf16.mxu0 %v6778
        %6970 = vmatpush1.bf16.msra.mxu0 %v6777
        %6971 = vmatprep.subr.bf16.mxu0 %v6780
        %6972 = vmatpush1.bf16.msra.mxu0 %v6779
        %6973 = vmatprep.subr.bf16.mxu0 %v6782
        %6974 = vmatpush1.bf16.msra.mxu0 %v6781
        %6975 = vmatprep.subr.bf16.mxu0 %v6784
        %6976 = vmatpush1.bf16.msra.mxu0 %v6783
        %6977 = vmatprep.subr.bf16.mxu0 %v6786
        %6978 = vmatpush1.bf16.msra.mxu0 %v6785
        %6979 = vmatprep.subr.bf16.mxu0 %v6788
        %6980 = vmatpush1.bf16.msra.mxu0 %v6787
        %6981 = vmatprep.subr.bf16.mxu0 %v6790
        %6982 = vmatpush1.bf16.msra.mxu0 %v6789
        %6983 = vmatprep.subr.bf16.mxu0 %v6792
        %6984 = vmatpush1.bf16.msra.mxu0 %v6791
        %6985 = vmatprep.subr.bf16.mxu0 %v6794
        %6986 = vmatpush1.bf16.msra.mxu0 %v6793
        %6987 = vmatprep.subr.bf16.mxu0 %v6796
        %6988 = vmatpush1.bf16.msra.mxu0 %v6795
        %6989 = vmatprep.mubr.bf16.mxu0 %v3974
        %6990 = vmatmul.mubr.bf16.gmra.mrb[0].mxu0 %v3973
        %v6991 = vpop.f32.mrb[0].mxu0
        %v6992 = vadd.f32 0.0, %v6991
        %v6993 = vpop.f32.mrb[0].mxu0
        %v6994 = vadd.f32 0.0, %v6993
        %v6995 = vpop.f32.mrb[0].mxu0
        %v6996 = vadd.f32 0.0, %v6995
        %v6997 = vpop.f32.mrb[0].mxu0
        %v6998 = vadd.f32 0.0, %v6997
        %6999 = vmatprep.mubr.bf16.mxu0 %v3980
        %7000 = vmatmul.mubr.bf16.gmra.mrb[0].mxu0 %v3979
        %v7001 = vpop.f32.mrb[0].mxu0
        %v7002 = vadd.f32 0.0, %v7001
        %v7003 = vpop.f32.mrb[0].mxu0
        %v7004 = vadd.f32 0.0, %v7003
        %v7005 = vpop.f32.mrb[0].mxu0
        %v7006 = vadd.f32 0.0, %v7005
        %v7007 = vpop.f32.mrb[0].mxu0
        %v7008 = vadd.f32 0.0, %v7007
        %7009 = vmatprep.mubr.bf16.mxu0 %v3986
        %7010 = vmatmul.mubr.bf16.gmra.mrb[0].mxu0 %v3985
        %v7011 = vpop.f32.mrb[0].mxu0
        %v7012 = vadd.f32 0.0, %v7011
        %v7013 = vpop.f32.mrb[0].mxu0
        %v7014 = vadd.f32 0.0, %v7013
        %v7015 = vpop.f32.mrb[0].mxu0
        %v7016 = vadd.f32 0.0, %v7015
        %v7017 = vpop.f32.mrb[0].mxu0
        %v7018 = vadd.f32 0.0, %v7017
        %7019 = vmatprep.mubr.bf16.mxu0 %v3992
        %7020 = vmatmul.mubr.bf16.gmra.mrb[0].mxu0 %v3991
        %v7021 = vpop.f32.mrb[0].mxu0
        %v7022 = vadd.f32 0.0, %v7021
        %v7023 = vpop.f32.mrb[0].mxu0
        %v7024 = vadd.f32 0.0, %v7023
        %v7025 = vpop.f32.mrb[0].mxu0
        %v7026 = vadd.f32 0.0, %v7025
        %v7027 = vpop.f32.mrb[0].mxu0
        %v7028 = vadd.f32 0.0, %v7027
        %7029 = vmatprep.mubr.bf16.mxu0 %v3998
        %7030 = vmatmul.mubr.bf16.gmra.mrb[0].mxu0 %v3997
        %v7031 = vpop.f32.mrb[0].mxu0
        %v7032 = vadd.f32 0.0, %v7031
        %v7033 = vpop.f32.mrb[0].mxu0
        %v7034 = vadd.f32 0.0, %v7033
        %v7035 = vpop.f32.mrb[0].mxu0
        %v7036 = vadd.f32 0.0, %v7035
        %v7037 = vpop.f32.mrb[0].mxu0
        %v7038 = vadd.f32 0.0, %v7037
        %7039 = vmatprep.mubr.bf16.mxu0 %v4004
        %7040 = vmatmul.mubr.bf16.gmra.mrb[0].mxu0 %v4003
        %v7041 = vpop.f32.mrb[0].mxu0
        %v7042 = vadd.f32 0.0, %v7041
        %v7043 = vpop.f32.mrb[0].mxu0
        %v7044 = vadd.f32 0.0, %v7043
        %v7045 = vpop.f32.mrb[0].mxu0
        %v7046 = vadd.f32 0.0, %v7045
        %v7047 = vpop.f32.mrb[0].mxu0
        %v7048 = vadd.f32 0.0, %v7047
        %7049 = vmatprep.mubr.bf16.mxu0 %v4010
        %7050 = vmatmul.mubr.bf16.gmra.mrb[0].mxu0 %v4009
        %v7051 = vpop.f32.mrb[0].mxu0
        %v7052 = vadd.f32 0.0, %v7051
        %v7053 = vpop.f32.mrb[0].mxu0
        %v7054 = vadd.f32 0.0, %v7053
        %v7055 = vpop.f32.mrb[0].mxu0
        %v7056 = vadd.f32 0.0, %v7055
        %v7057 = vpop.f32.mrb[0].mxu0
        %v7058 = vadd.f32 0.0, %v7057
        %7059 = vmatprep.mubr.bf16.mxu0 %v4016
        %7060 = vmatmul.mubr.bf16.gmra.mrb[0].mxu0 %v4015
        %v7061 = vpop.f32.mrb[0].mxu0
        %v7062 = vadd.f32 0.0, %v7061
        %v7063 = vpop.f32.mrb[0].mxu0
        %v7064 = vadd.f32 0.0, %v7063
        %v7065 = vpop.f32.mrb[0].mxu0
        %v7066 = vadd.f32 0.0, %v7065
        %v7067 = vpop.f32.mrb[0].mxu0
        %v7068 = vadd.f32 0.0, %v7067
        %7069 = vmatprep.mubr.bf16.mxu0 %v4022
        %7070 = vmatmul.mubr.bf16.gmra.mrb[0].mxu0 %v4021
        %v7071 = vpop.f32.mrb[0].mxu0
        %v7072 = vadd.f32 0.0, %v7071
        %v7073 = vpop.f32.mrb[0].mxu0
        %v7074 = vadd.f32 0.0, %v7073
        %v7075 = vpop.f32.mrb[0].mxu0
        %v7076 = vadd.f32 0.0, %v7075
        %v7077 = vpop.f32.mrb[0].mxu0
        %v7078 = vadd.f32 0.0, %v7077
        %7079 = vmatprep.mubr.bf16.mxu0 %v4028
        %7080 = vmatmul.mubr.bf16.gmra.mrb[0].mxu0 %v4027
        %v7081 = vpop.f32.mrb[0].mxu0
        %v7082 = vadd.f32 0.0, %v7081
        %v7083 = vpop.f32.mrb[0].mxu0
        %v7084 = vadd.f32 0.0, %v7083
        %v7085 = vpop.f32.mrb[0].mxu0
        %v7086 = vadd.f32 0.0, %v7085
        %v7087 = vpop.f32.mrb[0].mxu0
        %v7088 = vadd.f32 0.0, %v7087
        %7089 = vmatprep.mubr.bf16.mxu0 %v4034
        %7090 = vmatmul.mubr.bf16.gmra.mrb[0].mxu0 %v4033
        %v7091 = vpop.f32.mrb[0].mxu0
        %v7092 = vadd.f32 0.0, %v7091
        %v7093 = vpop.f32.mrb[0].mxu0
        %v7094 = vadd.f32 0.0, %v7093
        %v7095 = vpop.f32.mrb[0].mxu0
        %v7096 = vadd.f32 0.0, %v7095
        %v7097 = vpop.f32.mrb[0].mxu0
        %v7098 = vadd.f32 0.0, %v7097
        %7099 = vmatprep.mubr.bf16.mxu0 %v4040
        %7100 = vmatmul.mubr.bf16.gmra.mrb[0].mxu0 %v4039
        %v7101 = vpop.f32.mrb[0].mxu0
        %v7102 = vadd.f32 0.0, %v7101
        %v7103 = vpop.f32.mrb[0].mxu0
        %v7104 = vadd.f32 0.0, %v7103
        %v7105 = vpop.f32.mrb[0].mxu0
        %v7106 = vadd.f32 0.0, %v7105
        %v7107 = vpop.f32.mrb[0].mxu0
        %v7108 = vadd.f32 0.0, %v7107
        %7109 = vmatprep.mubr.bf16.mxu0 %v4046
        %7110 = vmatmul.mubr.bf16.gmra.mrb[0].mxu0 %v4045
        %v7111 = vpop.f32.mrb[0].mxu0
        %v7112 = vadd.f32 0.0, %v7111
        %v7113 = vpop.f32.mrb[0].mxu0
        %v7114 = vadd.f32 0.0, %v7113
        %v7115 = vpop.f32.mrb[0].mxu0
        %v7116 = vadd.f32 0.0, %v7115
        %v7117 = vpop.f32.mrb[0].mxu0
        %v7118 = vadd.f32 0.0, %v7117
        %7119 = vmatprep.mubr.bf16.mxu0 %v4052
        %7120 = vmatmul.mubr.bf16.gmra.mrb[0].mxu0 %v4051
        %v7121 = vpop.f32.mrb[0].mxu0
        %v7122 = vadd.f32 0.0, %v7121
        %v7123 = vpop.f32.mrb[0].mxu0
        %v7124 = vadd.f32 0.0, %v7123
        %v7125 = vpop.f32.mrb[0].mxu0
        %v7126 = vadd.f32 0.0, %v7125
        %v7127 = vpop.f32.mrb[0].mxu0
        %v7128 = vadd.f32 0.0, %v7127
        %7129 = vmatprep.mubr.bf16.mxu0 %v4058
        %7130 = vmatmul.mubr.bf16.gmra.mrb[0].mxu0 %v4057
        %v7131 = vpop.f32.mrb[0].mxu0
        %v7132 = vadd.f32 0.0, %v7131
        %v7133 = vpop.f32.mrb[0].mxu0
        %v7134 = vadd.f32 0.0, %v7133
        %v7135 = vpop.f32.mrb[0].mxu0
        %v7136 = vadd.f32 0.0, %v7135
        %v7137 = vpop.f32.mrb[0].mxu0
        %v7138 = vadd.f32 0.0, %v7137
        %7139 = vmatprep.mubr.bf16.mxu0 %v4064
        %7140 = vmatmul.mubr.bf16.gmra.mrb[0].mxu0 %v4063
        %v7141 = vpop.f32.mrb[0].mxu0
        %v7142 = vadd.f32 0.0, %v7141
        %v7143 = vpop.f32.mrb[0].mxu0
        %v7144 = vadd.f32 0.0, %v7143
        %v7145 = vpop.f32.mrb[0].mxu0
        %v7146 = vadd.f32 0.0, %v7145
        %v7147 = vpop.f32.mrb[0].mxu0
        %v7148 = vadd.f32 0.0, %v7147
        %7149 = vdwg.mxu0
        %7150 = vmatprep.subr.bf16.mxu0 %v6798
        %7151 = vmatpush1.bf16.msra.mxu0 %v6797
        %7152 = vmatprep.subr.bf16.mxu0 %v6800
        %7153 = vmatpush1.bf16.msra.mxu0 %v6799
        %7154 = vmatprep.subr.bf16.mxu0 %v6802
        %7155 = vmatpush1.bf16.msra.mxu0 %v6801
        %7156 = vmatprep.subr.bf16.mxu0 %v6804
        %7157 = vmatpush1.bf16.msra.mxu0 %v6803
        %7158 = vmatprep.subr.bf16.mxu0 %v6806
        %7159 = vmatpush1.bf16.msra.mxu0 %v6805
        %7160 = vmatprep.subr.bf16.mxu0 %v6808
        %7161 = vmatpush1.bf16.msra.mxu0 %v6807
        %7162 = vmatprep.subr.bf16.mxu0 %v6810
        %7163 = vmatpush1.bf16.msra.mxu0 %v6809
        %7164 = vmatprep.subr.bf16.mxu0 %v6812
        %7165 = vmatpush1.bf16.msra.mxu0 %v6811
        %7166 = vmatprep.subr.bf16.mxu0 %v6814
        %7167 = vmatpush1.bf16.msra.mxu0 %v6813
        %7168 = vmatprep.subr.bf16.mxu0 %v6816
        %7169 = vmatpush1.bf16.msra.mxu0 %v6815
        %7170 = vmatprep.subr.bf16.mxu0 %v6818
        %7171 = vmatpush1.bf16.msra.mxu0 %v6817
        %7172 = vmatprep.subr.bf16.mxu0 %v6820
        %7173 = vmatpush1.bf16.msra.mxu0 %v6819
        %7174 = vmatprep.subr.bf16.mxu0 %v6822
        %7175 = vmatpush1.bf16.msra.mxu0 %v6821
        %7176 = vmatprep.subr.bf16.mxu0 %v6824
        %7177 = vmatpush1.bf16.msra.mxu0 %v6823
        %7178 = vmatprep.subr.bf16.mxu0 %v6826
        %7179 = vmatpush1.bf16.msra.mxu0 %v6825
        %7180 = vmatprep.subr.bf16.mxu0 %v6828
        %7181 = vmatpush1.bf16.msra.mxu0 %v6827
        %7182 = vmatprep.mubr.bf16.mxu0 %v3976
        %7183 = vmatmul.mubr.bf16.gmra.mrb[0].mxu0 %v3975
        %v7184 = vpop.f32.mrb[0].mxu0
        %v7185 = vadd.f32 %v6992, %v7184
        %v7186 = vpop.f32.mrb[0].mxu0
        %v7187 = vadd.f32 %v6994, %v7186
        %v7188 = vpop.f32.mrb[0].mxu0
        %v7189 = vadd.f32 %v6996, %v7188
        %v7190 = vpop.f32.mrb[0].mxu0
        %v7191 = vadd.f32 %v6998, %v7190
        %7192 = vmatprep.mubr.bf16.mxu0 %v3982
        %7193 = vmatmul.mubr.bf16.gmra.mrb[0].mxu0 %v3981
        %v7194 = vpop.f32.mrb[0].mxu0
        %v7195 = vadd.f32 %v7002, %v7194
        %v7196 = vpop.f32.mrb[0].mxu0
        %v7197 = vadd.f32 %v7004, %v7196
        %v7198 = vpop.f32.mrb[0].mxu0
        %v7199 = vadd.f32 %v7006, %v7198
        %v7200 = vpop.f32.mrb[0].mxu0
        %v7201 = vadd.f32 %v7008, %v7200
        %7202 = vmatprep.mubr.bf16.mxu0 %v3988
        %7203 = vmatmul.mubr.bf16.gmra.mrb[0].mxu0 %v3987
        %v7204 = vpop.f32.mrb[0].mxu0
        %v7205 = vadd.f32 %v7012, %v7204
        %v7206 = vpop.f32.mrb[0].mxu0
        %v7207 = vadd.f32 %v7014, %v7206
        %v7208 = vpop.f32.mrb[0].mxu0
        %v7209 = vadd.f32 %v7016, %v7208
        %v7210 = vpop.f32.mrb[0].mxu0
        %v7211 = vadd.f32 %v7018, %v7210
        %7212 = vmatprep.mubr.bf16.mxu0 %v3994
        %7213 = vmatmul.mubr.bf16.gmra.mrb[0].mxu0 %v3993
        %v7214 = vpop.f32.mrb[0].mxu0
        %v7215 = vadd.f32 %v7022, %v7214
        %v7216 = vpop.f32.mrb[0].mxu0
        %v7217 = vadd.f32 %v7024, %v7216
        %v7218 = vpop.f32.mrb[0].mxu0
        %v7219 = vadd.f32 %v7026, %v7218
        %v7220 = vpop.f32.mrb[0].mxu0
        %v7221 = vadd.f32 %v7028, %v7220
        %7222 = vmatprep.mubr.bf16.mxu0 %v4000
        %7223 = vmatmul.mubr.bf16.gmra.mrb[0].mxu0 %v3999
        %v7224 = vpop.f32.mrb[0].mxu0
        %v7225 = vadd.f32 %v7032, %v7224
        %v7226 = vpop.f32.mrb[0].mxu0
        %v7227 = vadd.f32 %v7034, %v7226
        %v7228 = vpop.f32.mrb[0].mxu0
        %v7229 = vadd.f32 %v7036, %v7228
        %v7230 = vpop.f32.mrb[0].mxu0
        %v7231 = vadd.f32 %v7038, %v7230
        %7232 = vmatprep.mubr.bf16.mxu0 %v4006
        %7233 = vmatmul.mubr.bf16.gmra.mrb[0].mxu0 %v4005
        %v7234 = vpop.f32.mrb[0].mxu0
        %v7235 = vadd.f32 %v7042, %v7234
        %v7236 = vpop.f32.mrb[0].mxu0
        %v7237 = vadd.f32 %v7044, %v7236
        %v7238 = vpop.f32.mrb[0].mxu0
        %v7239 = vadd.f32 %v7046, %v7238
        %v7240 = vpop.f32.mrb[0].mxu0
        %v7241 = vadd.f32 %v7048, %v7240
        %7242 = vmatprep.mubr.bf16.mxu0 %v4012
        %7243 = vmatmul.mubr.bf16.gmra.mrb[0].mxu0 %v4011
        %v7244 = vpop.f32.mrb[0].mxu0
        %v7245 = vadd.f32 %v7052, %v7244
        %v7246 = vpop.f32.mrb[0].mxu0
        %v7247 = vadd.f32 %v7054, %v7246
        %v7248 = vpop.f32.mrb[0].mxu0
        %v7249 = vadd.f32 %v7056, %v7248
        %v7250 = vpop.f32.mrb[0].mxu0
        %v7251 = vadd.f32 %v7058, %v7250
        %7252 = vmatprep.mubr.bf16.mxu0 %v4018
        %7253 = vmatmul.mubr.bf16.gmra.mrb[0].mxu0 %v4017
        %v7254 = vpop.f32.mrb[0].mxu0
        %v7255 = vadd.f32 %v7062, %v7254
        %v7256 = vpop.f32.mrb[0].mxu0
        %v7257 = vadd.f32 %v7064, %v7256
        %v7258 = vpop.f32.mrb[0].mxu0
        %v7259 = vadd.f32 %v7066, %v7258
        %v7260 = vpop.f32.mrb[0].mxu0
        %v7261 = vadd.f32 %v7068, %v7260
        %7262 = vmatprep.mubr.bf16.mxu0 %v4024
        %7263 = vmatmul.mubr.bf16.gmra.mrb[0].mxu0 %v4023
        %v7264 = vpop.f32.mrb[0].mxu0
        %v7265 = vadd.f32 %v7072, %v7264
        %v7266 = vpop.f32.mrb[0].mxu0
        %v7267 = vadd.f32 %v7074, %v7266
        %v7268 = vpop.f32.mrb[0].mxu0
        %v7269 = vadd.f32 %v7076, %v7268
        %v7270 = vpop.f32.mrb[0].mxu0
        %v7271 = vadd.f32 %v7078, %v7270
        %7272 = vmatprep.mubr.bf16.mxu0 %v4030
        %7273 = vmatmul.mubr.bf16.gmra.mrb[0].mxu0 %v4029
        %v7274 = vpop.f32.mrb[0].mxu0
        %v7275 = vadd.f32 %v7082, %v7274
        %v7276 = vpop.f32.mrb[0].mxu0
        %v7277 = vadd.f32 %v7084, %v7276
        %v7278 = vpop.f32.mrb[0].mxu0
        %v7279 = vadd.f32 %v7086, %v7278
        %v7280 = vpop.f32.mrb[0].mxu0
        %v7281 = vadd.f32 %v7088, %v7280
        %7282 = vmatprep.mubr.bf16.mxu0 %v4036
        %7283 = vmatmul.mubr.bf16.gmra.mrb[0].mxu0 %v4035
        %v7284 = vpop.f32.mrb[0].mxu0
        %v7285 = vadd.f32 %v7092, %v7284
        %v7286 = vpop.f32.mrb[0].mxu0
        %v7287 = vadd.f32 %v7094, %v7286
        %v7288 = vpop.f32.mrb[0].mxu0
        %v7289 = vadd.f32 %v7096, %v7288
        %v7290 = vpop.f32.mrb[0].mxu0
        %v7291 = vadd.f32 %v7098, %v7290
        %7292 = vmatprep.mubr.bf16.mxu0 %v4042
        %7293 = vmatmul.mubr.bf16.gmra.mrb[0].mxu0 %v4041
        %v7294 = vpop.f32.mrb[0].mxu0
        %v7295 = vadd.f32 %v7102, %v7294
        %v7296 = vpop.f32.mrb[0].mxu0
        %v7297 = vadd.f32 %v7104, %v7296
        %v7298 = vpop.f32.mrb[0].mxu0
        %v7299 = vadd.f32 %v7106, %v7298
        %v7300 = vpop.f32.mrb[0].mxu0
        %v7301 = vadd.f32 %v7108, %v7300
        %7302 = vmatprep.mubr.bf16.mxu0 %v4048
        %7303 = vmatmul.mubr.bf16.gmra.mrb[0].mxu0 %v4047
        %v7304 = vpop.f32.mrb[0].mxu0
        %v7305 = vadd.f32 %v7112, %v7304
        %v7306 = vpop.f32.mrb[0].mxu0
        %v7307 = vadd.f32 %v7114, %v7306
        %v7308 = vpop.f32.mrb[0].mxu0
        %v7309 = vadd.f32 %v7116, %v7308
        %v7310 = vpop.f32.mrb[0].mxu0
        %v7311 = vadd.f32 %v7118, %v7310
        %7312 = vmatprep.mubr.bf16.mxu0 %v4054
        %7313 = vmatmul.mubr.bf16.gmra.mrb[0].mxu0 %v4053
        %v7314 = vpop.f32.mrb[0].mxu0
        %v7315 = vadd.f32 %v7122, %v7314
        %v7316 = vpop.f32.mrb[0].mxu0
        %v7317 = vadd.f32 %v7124, %v7316
        %v7318 = vpop.f32.mrb[0].mxu0
        %v7319 = vadd.f32 %v7126, %v7318
        %v7320 = vpop.f32.mrb[0].mxu0
        %v7321 = vadd.f32 %v7128, %v7320
        %7322 = vmatprep.mubr.bf16.mxu0 %v4060
        %7323 = vmatmul.mubr.bf16.gmra.mrb[0].mxu0 %v4059
        %v7324 = vpop.f32.mrb[0].mxu0
        %v7325 = vadd.f32 %v7132, %v7324
        %v7326 = vpop.f32.mrb[0].mxu0
        %v7327 = vadd.f32 %v7134, %v7326
        %v7328 = vpop.f32.mrb[0].mxu0
        %v7329 = vadd.f32 %v7136, %v7328
        %v7330 = vpop.f32.mrb[0].mxu0
        %v7331 = vadd.f32 %v7138, %v7330
        %7332 = vmatprep.mubr.bf16.mxu0 %v4066
        %7333 = vmatmul.mubr.bf16.gmra.mrb[0].mxu0 %v4065
        %v7334 = vpop.f32.mrb[0].mxu0
        %v7335 = vadd.f32 %v7142, %v7334
        %v7336 = vpop.f32.mrb[0].mxu0
        %v7337 = vadd.f32 %v7144, %v7336
        %v7338 = vpop.f32.mrb[0].mxu0
        %v7339 = vadd.f32 %v7146, %v7338
        %v7340 = vpop.f32.mrb[0].mxu0
        %v7341 = vadd.f32 %v7148, %v7340
        %7342 = vdwg.mxu0
        %7343 = vmatprep.subr.bf16.mxu0 %v6830
        %7344 = vmatpush1.bf16.msra.mxu0 %v6829
        %7345 = vmatprep.subr.bf16.mxu0 %v6832
        %7346 = vmatpush1.bf16.msra.mxu0 %v6831
        %7347 = vmatprep.subr.bf16.mxu0 %v6834
        %7348 = vmatpush1.bf16.msra.mxu0 %v6833
        %7349 = vmatprep.subr.bf16.mxu0 %v6836
        %7350 = vmatpush1.bf16.msra.mxu0 %v6835
        %7351 = vmatprep.subr.bf16.mxu0 %v6838
        %7352 = vmatpush1.bf16.msra.mxu0 %v6837
        %7353 = vmatprep.subr.bf16.mxu0 %v6840
        %7354 = vmatpush1.bf16.msra.mxu0 %v6839
        %7355 = vmatprep.subr.bf16.mxu0 %v6842
        %7356 = vmatpush1.bf16.msra.mxu0 %v6841
        %7357 = vmatprep.subr.bf16.mxu0 %v6844
        %7358 = vmatpush1.bf16.msra.mxu0 %v6843
        %7359 = vmatprep.subr.bf16.mxu0 %v6846
        %7360 = vmatpush1.bf16.msra.mxu0 %v6845
        %7361 = vmatprep.subr.bf16.mxu0 %v6848
        %7362 = vmatpush1.bf16.msra.mxu0 %v6847
        %7363 = vmatprep.subr.bf16.mxu0 %v6850
        %7364 = vmatpush1.bf16.msra.mxu0 %v6849
        %7365 = vmatprep.subr.bf16.mxu0 %v6852
        %7366 = vmatpush1.bf16.msra.mxu0 %v6851
        %7367 = vmatprep.subr.bf16.mxu0 %v6854
        %7368 = vmatpush1.bf16.msra.mxu0 %v6853
        %7369 = vmatprep.subr.bf16.mxu0 %v6856
        %7370 = vmatpush1.bf16.msra.mxu0 %v6855
        %7371 = vmatprep.subr.bf16.mxu0 %v6858
        %7372 = vmatpush1.bf16.msra.mxu0 %v6857
        %7373 = vmatprep.subr.bf16.mxu0 %v6860
        %7374 = vmatpush1.bf16.msra.mxu0 %v6859
        %7375 = vmatprep.mubr.bf16.mxu0 %v3978
        %7376 = vmatmul.mubr.bf16.gmra.mrb[0].mxu0 %v3977
        %v7377 = vpop.f32.mrb[0].mxu0
        %v7378 = vadd.f32 %v7185, %v7377
        %v7379 = vpop.f32.mrb[0].mxu0
        %v7380 = vadd.f32 %v7187, %v7379
        %v7381 = vpop.f32.mrb[0].mxu0
        %v7382 = vadd.f32 %v7189, %v7381
        %v7383 = vpop.f32.mrb[0].mxu0
        %v7384 = vadd.f32 %v7191, %v7383
        %7385 = vmatprep.mubr.bf16.mxu0 %v3984
        %7386 = vmatmul.mubr.bf16.gmra.mrb[0].mxu0 %v3983
        %v7387 = vpop.f32.mrb[0].mxu0
        %v7388 = vadd.f32 %v7195, %v7387
        %v7389 = vpop.f32.mrb[0].mxu0
        %v7390 = vadd.f32 %v7197, %v7389
        %v7391 = vpop.f32.mrb[0].mxu0
        %v7392 = vadd.f32 %v7199, %v7391
        %v7393 = vpop.f32.mrb[0].mxu0
        %v7394 = vadd.f32 %v7201, %v7393
        %7395 = vmatprep.mubr.bf16.mxu0 %v3990
        %7396 = vmatmul.mubr.bf16.gmra.mrb[0].mxu0 %v3989
        %v7397 = vpop.f32.mrb[0].mxu0
        %v7398 = vadd.f32 %v7205, %v7397
        %v7399 = vpop.f32.mrb[0].mxu0
        %v7400 = vadd.f32 %v7207, %v7399
        %v7401 = vpop.f32.mrb[0].mxu0
        %v7402 = vadd.f32 %v7209, %v7401
        %v7403 = vpop.f32.mrb[0].mxu0
        %v7404 = vadd.f32 %v7211, %v7403
        %7405 = vmatprep.mubr.bf16.mxu0 %v3996
        %7406 = vmatmul.mubr.bf16.gmra.mrb[0].mxu0 %v3995
        %v7407 = vpop.f32.mrb[0].mxu0
        %v7408 = vadd.f32 %v7215, %v7407
        %v7409 = vpop.f32.mrb[0].mxu0
        %v7410 = vadd.f32 %v7217, %v7409
        %v7411 = vpop.f32.mrb[0].mxu0
        %v7412 = vadd.f32 %v7219, %v7411
        %v7413 = vpop.f32.mrb[0].mxu0
        %v7414 = vadd.f32 %v7221, %v7413
        %7415 = vmatprep.mubr.bf16.mxu0 %v4002
        %7416 = vmatmul.mubr.bf16.gmra.mrb[0].mxu0 %v4001
        %v7417 = vpop.f32.mrb[0].mxu0
        %v7418 = vadd.f32 %v7225, %v7417
        %v7419 = vpop.f32.mrb[0].mxu0
        %v7420 = vadd.f32 %v7227, %v7419
        %v7421 = vpop.f32.mrb[0].mxu0
        %v7422 = vadd.f32 %v7229, %v7421
        %v7423 = vpop.f32.mrb[0].mxu0
        %v7424 = vadd.f32 %v7231, %v7423
        %7425 = vmatprep.mubr.bf16.mxu0 %v4008
        %7426 = vmatmul.mubr.bf16.gmra.mrb[0].mxu0 %v4007
        %v7427 = vpop.f32.mrb[0].mxu0
        %v7428 = vadd.f32 %v7235, %v7427
        %v7429 = vpop.f32.mrb[0].mxu0
        %v7430 = vadd.f32 %v7237, %v7429
        %v7431 = vpop.f32.mrb[0].mxu0
        %v7432 = vadd.f32 %v7239, %v7431
        %v7433 = vpop.f32.mrb[0].mxu0
        %v7434 = vadd.f32 %v7241, %v7433
        %7435 = vmatprep.mubr.bf16.mxu0 %v4014
        %7436 = vmatmul.mubr.bf16.gmra.mrb[0].mxu0 %v4013
        %v7437 = vpop.f32.mrb[0].mxu0
        %v7438 = vadd.f32 %v7245, %v7437
        %v7439 = vpop.f32.mrb[0].mxu0
        %v7440 = vadd.f32 %v7247, %v7439
        %v7441 = vpop.f32.mrb[0].mxu0
        %v7442 = vadd.f32 %v7249, %v7441
        %v7443 = vpop.f32.mrb[0].mxu0
        %v7444 = vadd.f32 %v7251, %v7443
        %7445 = vmatprep.mubr.bf16.mxu0 %v4020
        %7446 = vmatmul.mubr.bf16.gmra.mrb[0].mxu0 %v4019
        %v7447 = vpop.f32.mrb[0].mxu0
        %v7448 = vadd.f32 %v7255, %v7447
        %v7449 = vpop.f32.mrb[0].mxu0
        %v7450 = vadd.f32 %v7257, %v7449
        %v7451 = vpop.f32.mrb[0].mxu0
        %v7452 = vadd.f32 %v7259, %v7451
        %v7453 = vpop.f32.mrb[0].mxu0
        %v7454 = vadd.f32 %v7261, %v7453
        %7455 = vmatprep.mubr.bf16.mxu0 %v4026
        %7456 = vmatmul.mubr.bf16.gmra.mrb[0].mxu0 %v4025
        %v7457 = vpop.f32.mrb[0].mxu0
        %v7458 = vadd.f32 %v7265, %v7457
        %v7459 = vpop.f32.mrb[0].mxu0
        %v7460 = vadd.f32 %v7267, %v7459
        %v7461 = vpop.f32.mrb[0].mxu0
        %v7462 = vadd.f32 %v7269, %v7461
        %v7463 = vpop.f32.mrb[0].mxu0
        %v7464 = vadd.f32 %v7271, %v7463
        %7465 = vmatprep.mubr.bf16.mxu0 %v4032
        %7466 = vmatmul.mubr.bf16.gmra.mrb[0].mxu0 %v4031
        %v7467 = vpop.f32.mrb[0].mxu0
        %v7468 = vadd.f32 %v7275, %v7467
        %v7469 = vpop.f32.mrb[0].mxu0
        %v7470 = vadd.f32 %v7277, %v7469
        %v7471 = vpop.f32.mrb[0].mxu0
        %v7472 = vadd.f32 %v7279, %v7471
        %v7473 = vpop.f32.mrb[0].mxu0
        %v7474 = vadd.f32 %v7281, %v7473
        %7475 = vmatprep.mubr.bf16.mxu0 %v4038
        %7476 = vmatmul.mubr.bf16.gmra.mrb[0].mxu0 %v4037
        %v7477 = vpop.f32.mrb[0].mxu0
        %v7478 = vadd.f32 %v7285, %v7477
        %v7479 = vpop.f32.mrb[0].mxu0
        %v7480 = vadd.f32 %v7287, %v7479
        %v7481 = vpop.f32.mrb[0].mxu0
        %v7482 = vadd.f32 %v7289, %v7481
        %v7483 = vpop.f32.mrb[0].mxu0
        %v7484 = vadd.f32 %v7291, %v7483
        %7485 = vmatprep.mubr.bf16.mxu0 %v4044
        %7486 = vmatmul.mubr.bf16.gmra.mrb[0].mxu0 %v4043
        %v7487 = vpop.f32.mrb[0].mxu0
        %v7488 = vadd.f32 %v7295, %v7487
        %v7489 = vpop.f32.mrb[0].mxu0
        %v7490 = vadd.f32 %v7297, %v7489
        %v7491 = vpop.f32.mrb[0].mxu0
        %v7492 = vadd.f32 %v7299, %v7491
        %v7493 = vpop.f32.mrb[0].mxu0
        %v7494 = vadd.f32 %v7301, %v7493
        %7495 = vmatprep.mubr.bf16.mxu0 %v4050
        %7496 = vmatmul.mubr.bf16.gmra.mrb[0].mxu0 %v4049
        %v7497 = vpop.f32.mrb[0].mxu0
        %v7498 = vadd.f32 %v7305, %v7497
        %v7499 = vpop.f32.mrb[0].mxu0
        %v7500 = vadd.f32 %v7307, %v7499
        %v7501 = vpop.f32.mrb[0].mxu0
        %v7502 = vadd.f32 %v7309, %v7501
        %v7503 = vpop.f32.mrb[0].mxu0
        %v7504 = vadd.f32 %v7311, %v7503
        %7505 = vmatprep.mubr.bf16.mxu0 %v4056
        %7506 = vmatmul.mubr.bf16.gmra.mrb[0].mxu0 %v4055
        %v7507 = vpop.f32.mrb[0].mxu0
        %v7508 = vadd.f32 %v7315, %v7507
        %v7509 = vpop.f32.mrb[0].mxu0
        %v7510 = vadd.f32 %v7317, %v7509
        %v7511 = vpop.f32.mrb[0].mxu0
        %v7512 = vadd.f32 %v7319, %v7511
        %v7513 = vpop.f32.mrb[0].mxu0
        %v7514 = vadd.f32 %v7321, %v7513
        %7515 = vmatprep.mubr.bf16.mxu0 %v4062
        %7516 = vmatmul.mubr.bf16.gmra.mrb[0].mxu0 %v4061
        %v7517 = vpop.f32.mrb[0].mxu0
        %v7518 = vadd.f32 %v7325, %v7517
        %v7519 = vpop.f32.mrb[0].mxu0
        %v7520 = vadd.f32 %v7327, %v7519
        %v7521 = vpop.f32.mrb[0].mxu0
        %v7522 = vadd.f32 %v7329, %v7521
        %v7523 = vpop.f32.mrb[0].mxu0
        %v7524 = vadd.f32 %v7331, %v7523
        %7525 = vmatprep.mubr.bf16.mxu0 %v4068
        %7526 = vmatmul.mubr.bf16.gmra.mrb[0].mxu0 %v4067
        %v7527 = vpop.f32.mrb[0].mxu0
        %v7528 = vadd.f32 %v7335, %v7527
        %v7529 = vpop.f32.mrb[0].mxu0
        %v7530 = vadd.f32 %v7337, %v7529
        %v7531 = vpop.f32.mrb[0].mxu0
        %v7532 = vadd.f32 %v7339, %v7531
        %v7533 = vpop.f32.mrb[0].mxu0
        %v7534 = vadd.f32 %v7341, %v7533
        %7535 = vdwg.mxu0
        %v7536 = vadd.f32 %v6222, %v7378
        %v7537 = vadd.f32 %v6224, %v7380
        %v7538 = vadd.f32 %v6226, %v7382
        %v7539 = vadd.f32 %v6228, %v7384
        %v7540 = vadd.f32 %v6232, %v7388
        %v7541 = vadd.f32 %v6234, %v7390
        %v7542 = vadd.f32 %v6236, %v7392
        %v7543 = vadd.f32 %v6238, %v7394
        %v7544 = vadd.f32 %v6242, %v7398
        %v7545 = vadd.f32 %v6244, %v7400
        %v7546 = vadd.f32 %v6246, %v7402
        %v7547 = vadd.f32 %v6248, %v7404
        %v7548 = vadd.f32 %v6252, %v7408
        %v7549 = vadd.f32 %v6254, %v7410
        %v7550 = vadd.f32 %v6256, %v7412
        %v7551 = vadd.f32 %v6258, %v7414
        %v7552 = vadd.f32 %v6262, %v7418
        %v7553 = vadd.f32 %v6264, %v7420
        %v7554 = vadd.f32 %v6266, %v7422
        %v7555 = vadd.f32 %v6268, %v7424
        %v7556 = vadd.f32 %v6272, %v7428
        %v7557 = vadd.f32 %v6274, %v7430
        %v7558 = vadd.f32 %v6276, %v7432
        %v7559 = vadd.f32 %v6278, %v7434
        %v7560 = vadd.f32 %v6282, %v7438
        %v7561 = vadd.f32 %v6284, %v7440
        %v7562 = vadd.f32 %v6286, %v7442
        %v7563 = vadd.f32 %v6288, %v7444
        %v7564 = vadd.f32 %v6292, %v7448
        %v7565 = vadd.f32 %v6294, %v7450
        %v7566 = vadd.f32 %v6296, %v7452
        %v7567 = vadd.f32 %v6298, %v7454
        %v7568 = vadd.f32 %v6302, %v7458
        %v7569 = vadd.f32 %v6304, %v7460
        %v7570 = vadd.f32 %v6306, %v7462
        %v7571 = vadd.f32 %v6308, %v7464
        %v7572 = vadd.f32 %v6312, %v7468
        %v7573 = vadd.f32 %v6314, %v7470
        %v7574 = vadd.f32 %v6316, %v7472
        %v7575 = vadd.f32 %v6318, %v7474
        %v7576 = vadd.f32 %v6322, %v7478
        %v7577 = vadd.f32 %v6324, %v7480
        %v7578 = vadd.f32 %v6326, %v7482
        %v7579 = vadd.f32 %v6328, %v7484
        %v7580 = vadd.f32 %v6332, %v7488
        %v7581 = vadd.f32 %v6334, %v7490
        %v7582 = vadd.f32 %v6336, %v7492
        %v7583 = vadd.f32 %v6338, %v7494
        %v7584 = vadd.f32 %v6342, %v7498
        %v7585 = vadd.f32 %v6344, %v7500
        %v7586 = vadd.f32 %v6346, %v7502
        %v7587 = vadd.f32 %v6348, %v7504
        %v7588 = vadd.f32 %v6352, %v7508
        %v7589 = vadd.f32 %v6354, %v7510
        %v7590 = vadd.f32 %v6356, %v7512
        %v7591 = vadd.f32 %v6358, %v7514
        %v7592 = vadd.f32 %v6362, %v7518
        %v7593 = vadd.f32 %v6364, %v7520
        %v7594 = vadd.f32 %v6366, %v7522
        %v7595 = vadd.f32 %v6368, %v7524
        %v7596 = vadd.f32 %v6372, %v7528
        %v7597 = vadd.f32 %v6374, %v7530
        %v7598 = vadd.f32 %v6376, %v7532
        %v7599 = vadd.f32 %v6378, %v7534
        %v7600 = vmax.f32 %v7536, 0.0
        %v7601 = vmax.f32 %v7537, 0.0
        %v7602 = vmax.f32 %v7538, 0.0
        %v7603 = vmax.f32 %v7539, 0.0
        %v7604 = vmax.f32 %v7540, 0.0
        %v7605 = vmax.f32 %v7541, 0.0
        %v7606 = vmax.f32 %v7542, 0.0
        %v7607 = vmax.f32 %v7543, 0.0
        %v7608 = vmax.f32 %v7544, 0.0
        %v7609 = vmax.f32 %v7545, 0.0
        %v7610 = vmax.f32 %v7546, 0.0
        %v7611 = vmax.f32 %v7547, 0.0
        %v7612 = vmax.f32 %v7548, 0.0
        %v7613 = vmax.f32 %v7549, 0.0
        %v7614 = vmax.f32 %v7550, 0.0
        %v7615 = vmax.f32 %v7551, 0.0
        %v7616 = vmax.f32 %v7552, 0.0
        %v7617 = vmax.f32 %v7553, 0.0
        %v7618 = vmax.f32 %v7554, 0.0
        %v7619 = vmax.f32 %v7555, 0.0
        %v7620 = vmax.f32 %v7556, 0.0
        %v7621 = vmax.f32 %v7557, 0.0
        %v7622 = vmax.f32 %v7558, 0.0
        %v7623 = vmax.f32 %v7559, 0.0
        %v7624 = vmax.f32 %v7560, 0.0
        %v7625 = vmax.f32 %v7561, 0.0
        %v7626 = vmax.f32 %v7562, 0.0
        %v7627 = vmax.f32 %v7563, 0.0
        %v7628 = vmax.f32 %v7564, 0.0
        %v7629 = vmax.f32 %v7565, 0.0
        %v7630 = vmax.f32 %v7566, 0.0
        %v7631 = vmax.f32 %v7567, 0.0
        %v7632 = vmax.f32 %v7568, 0.0
        %v7633 = vmax.f32 %v7569, 0.0
        %v7634 = vmax.f32 %v7570, 0.0
        %v7635 = vmax.f32 %v7571, 0.0
        %v7636 = vmax.f32 %v7572, 0.0
        %v7637 = vmax.f32 %v7573, 0.0
        %v7638 = vmax.f32 %v7574, 0.0
        %v7639 = vmax.f32 %v7575, 0.0
        %v7640 = vmax.f32 %v7576, 0.0
        %v7641 = vmax.f32 %v7577, 0.0
        %v7642 = vmax.f32 %v7578, 0.0
        %v7643 = vmax.f32 %v7579, 0.0
        %v7644 = vmax.f32 %v7580, 0.0
        %v7645 = vmax.f32 %v7581, 0.0
        %v7646 = vmax.f32 %v7582, 0.0
        %v7647 = vmax.f32 %v7583, 0.0
        %v7648 = vmax.f32 %v7584, 0.0
        %v7649 = vmax.f32 %v7585, 0.0
        %v7650 = vmax.f32 %v7586, 0.0
        %v7651 = vmax.f32 %v7587, 0.0
        %v7652 = vmax.f32 %v7588, 0.0
        %v7653 = vmax.f32 %v7589, 0.0
        %v7654 = vmax.f32 %v7590, 0.0
        %v7655 = vmax.f32 %v7591, 0.0
        %v7656 = vmax.f32 %v7592, 0.0
        %v7657 = vmax.f32 %v7593, 0.0
        %v7658 = vmax.f32 %v7594, 0.0
        %v7659 = vmax.f32 %v7595, 0.0
        %v7660 = vmax.f32 %v7596, 0.0
        %v7661 = vmax.f32 %v7597, 0.0
        %v7662 = vmax.f32 %v7598, 0.0
        %v7663 = vmax.f32 %v7599, 0.0
        %7664 = vst [vmem:[%s163] sm:$0xff] %v7600
        %7665 = vst [vmem:[%s163 + $0x8] sm:$0xff] %v7601
        %7666 = vst [vmem:[%s163 + $0x10] sm:$0xff] %v7602
        %7667 = vst [vmem:[%s163 + $0x18] sm:$0xff] %v7603
        %7668 = vst [vmem:[%s163 + $0x20] sm:$0xff] %v7604
        %7669 = vst [vmem:[%s163 + $0x28] sm:$0xff] %v7605
        %7670 = vst [vmem:[%s163 + $0x30] sm:$0xff] %v7606
        %7671 = vst [vmem:[%s163 + $0x38] sm:$0xff] %v7607
        %7672 = vst [vmem:[%s163 + $0x40] sm:$0xff] %v7608
        %7673 = vst [vmem:[%s163 + $0x48] sm:$0xff] %v7609
        %7674 = vst [vmem:[%s163 + $0x50] sm:$0xff] %v7610
        %7675 = vst [vmem:[%s163 + $0x58] sm:$0xff] %v7611
        %7676 = vst [vmem:[%s163 + $0x60] sm:$0xff] %v7612
        %7677 = vst [vmem:[%s163 + $0x68] sm:$0xff] %v7613
        %7678 = vst [vmem:[%s163 + $0x70] sm:$0xff] %v7614
        %7679 = vst [vmem:[%s163 + $0x78] sm:$0xff] %v7615
        %7680 = vst [vmem:[%s163 + $0x80] sm:$0xff] %v7616
        %7681 = vst [vmem:[%s163 + $0x88] sm:$0xff] %v7617
        %7682 = vst [vmem:[%s163 + $0x90] sm:$0xff] %v7618
        %7683 = vst [vmem:[%s163 + $0x98] sm:$0xff] %v7619
        %7684 = vst [vmem:[%s163 + $0xa0] sm:$0xff] %v7620
        %7685 = vst [vmem:[%s163 + $0xa8] sm:$0xff] %v7621
        %7686 = vst [vmem:[%s163 + $0xb0] sm:$0xff] %v7622
        %7687 = vst [vmem:[%s163 + $0xb8] sm:$0xff] %v7623
        %7688 = vst [vmem:[%s163 + $0xc0] sm:$0xff] %v7624
        %7689 = vst [vmem:[%s163 + $0xc8] sm:$0xff] %v7625
        %7690 = vst [vmem:[%s163 + $0xd0] sm:$0xff] %v7626
        %7691 = vst [vmem:[%s163 + $0xd8] sm:$0xff] %v7627
        %7692 = vst [vmem:[%s163 + $0xe0] sm:$0xff] %v7628
        %7693 = vst [vmem:[%s163 + $0xe8] sm:$0xff] %v7629
        %7694 = vst [vmem:[%s163 + $0xf0] sm:$0xff] %v7630
        %7695 = vst [vmem:[%s163 + $0xf8] sm:$0xff] %v7631
        %7696 = vst [vmem:[%s163 + $0x100] sm:$0xff] %v7632
        %7697 = vst [vmem:[%s163 + $0x108] sm:$0xff] %v7633
        %7698 = vst [vmem:[%s163 + $0x110] sm:$0xff] %v7634
        %7699 = vst [vmem:[%s163 + $0x118] sm:$0xff] %v7635
        %7700 = vst [vmem:[%s163 + $0x120] sm:$0xff] %v7636
        %7701 = vst [vmem:[%s163 + $0x128] sm:$0xff] %v7637
        %7702 = vst [vmem:[%s163 + $0x130] sm:$0xff] %v7638
        %7703 = vst [vmem:[%s163 + $0x138] sm:$0xff] %v7639
        %7704 = vst [vmem:[%s163 + $0x140] sm:$0xff] %v7640
        %7705 = vst [vmem:[%s163 + $0x148] sm:$0xff] %v7641
        %7706 = vst [vmem:[%s163 + $0x150] sm:$0xff] %v7642
        %7707 = vst [vmem:[%s163 + $0x158] sm:$0xff] %v7643
        %7708 = vst [vmem:[%s163 + $0x160] sm:$0xff] %v7644
        %7709 = vst [vmem:[%s163 + $0x168] sm:$0xff] %v7645
        %7710 = vst [vmem:[%s163 + $0x170] sm:$0xff] %v7646
        %7711 = vst [vmem:[%s163 + $0x178] sm:$0xff] %v7647
        %7712 = vst [vmem:[%s163 + $0x180] sm:$0xff] %v7648
        %7713 = vst [vmem:[%s163 + $0x188] sm:$0xff] %v7649
        %7714 = vst [vmem:[%s163 + $0x190] sm:$0xff] %v7650
        %7715 = vst [vmem:[%s163 + $0x198] sm:$0xff] %v7651
        %7716 = vst [vmem:[%s163 + $0x1a0] sm:$0xff] %v7652
        %7717 = vst [vmem:[%s163 + $0x1a8] sm:$0xff] %v7653
        %7718 = vst [vmem:[%s163 + $0x1b0] sm:$0xff] %v7654
        %7719 = vst [vmem:[%s163 + $0x1b8] sm:$0xff] %v7655
        %7720 = vst [vmem:[%s163 + $0x1c0] sm:$0xff] %v7656
        %7721 = vst [vmem:[%s163 + $0x1c8] sm:$0xff] %v7657
        %7722 = vst [vmem:[%s163 + $0x1d0] sm:$0xff] %v7658
        %7723 = vst [vmem:[%s163 + $0x1d8] sm:$0xff] %v7659
        %7724 = vst [vmem:[%s163 + $0x1e0] sm:$0xff] %v7660
        %7725 = vst [vmem:[%s163 + $0x1e8] sm:$0xff] %v7661
        %7726 = vst [vmem:[%s163 + $0x1f0] sm:$0xff] %v7662
        %7727 = vst [vmem:[%s163 + $0x1f8] sm:$0xff] %v7663
        %s7728 = sand.u32 %s93, 1
        %s7729 = scalar_lea.sflag [#allocation5], %s7728
        %s7730 = sand.u32 %s93, 1
        %s7731 = smul.addr %s7730, 512
        %s7732 = scalar_lea.vmem [#allocation4], %s7731
        // Predicated region
        $region33: #{conv_forward.1} parent=31 // pred_check
          %p7733 = pneg %p103
        $region34: #{conv_forward.1} parent=31 // pred_check_branch
          %7735 = sbr.rel (%p7733) target = $region36
        $region35: #{conv_forward.1} parent=31 // pred_region
          %s7737 = ssub.s32 8192, 8192
          %7738 = vsyncadd %s7729, %s7737
          %s7739 = smul.addr %s17, 64
          %s7740 = smul.addr %s7739, 128
          %s7741 = scalar_lea.hbm %s3, %s7740
          %s7742 = sshll.u32 %s7732, 4
          %s7743 = int_to_ptr.vmem [resolvable:$true] %s7742
          %7748 = dma.vmem_to_hbm [thread:$0]  %s7743, 8192, %s7741, %s7729, 256, 256, 16
        $region36: #{conv_forward.1} parent=31 // pred_fallthru
          _
      $region32: #{conv_forward.1} parent=5 // pred_fallthru
        _
      %p7749 = scmp.le.s32.totalorder 2, %s12
      // Predicated region
      $region37: #{conv_forward.1} parent=5 // pred_check
        %p7750 = pneg %p7749
      $region38: #{conv_forward.1} parent=5 // pred_check_branch
        %7752 = sbr.rel (%p7750) target = $region40
      $region39: #{conv_forward.1} parent=5 // pred_region
        %s7753 = ssub.s32 %s12, 2
        // Predicated region
        $region41: #{conv_forward.1} parent=39 // pred_check
          %p7754 = pneg %p109
        $region42: #{conv_forward.1} parent=39 // pred_check_branch
          %7756 = sbr.rel (%p7754) target = $region44
        $region43: #{conv_forward.1} parent=39 // pred_region
          %s7757 = sand.u32 %s94, 1
          %s7758 = scalar_lea.sflag [#allocation5], %s7757
          %s7759 = sand.u32 %s94, 1
          %s7760 = smul.addr %s7759, 512
          %s7761 = scalar_lea.vmem [#allocation4], %s7760
          %7762 = dma.done %s7758, 8192
        $region44: #{conv_forward.1} parent=39 // pred_fallthru
          _
      $region40: #{conv_forward.1} parent=5 // pred_fallthru
        _
    $region6: #{conv_forward.1} parent=1 // loop_footer
      %s16 = sadd.s32 1, %s12
    $region7: #{conv_forward.1} parent=1 // loop_footer_branch
      %11 = sbr.rel target = $region3
    $region8: #{conv_forward.1} parent=1 // loop_exit
      _
    %7763 = vsyncpa [#allocation5], 1
    %s7764 = scalar_lea.sflag [#allocation5], 1
    %7765 = vsyncpa %s7764, 1

</llo_original>
